<compile_context>
chip_gen: v5e
topology: v5e:2x2
jax: 0.10.0
libtpu: 0.0.40
codegen_flags: <defaults>
</compile_context>

<pallas_src>
import jax
import jax.numpy as jnp
from jax import lax
from jax.experimental import pallas as pl
from jax.experimental.pallas import tpu as pltpu

EXPANSION = 4
BN_EPS = 1e-5


# --------------------------------------------------------------------------------
# Parameter preparation (one-time, outside the hot path)
# --------------------------------------------------------------------------------
def _fold_bn(gamma, beta, mean, var):
    scale = gamma / jnp.sqrt(var + BN_EPS)
    bias = beta - mean * scale
    return scale[None, :].astype(jnp.float32), bias[None, :].astype(jnp.float32)


def _prepare_arrays(params, in_planes, planes, stride, compute_dtype=jnp.bfloat16):
    cout = EXPANSION * planes
    has_shortcut = (stride != 1) or (in_planes != cout)

    w1 = jnp.transpose(params["conv1_w"][:, :, 0, 0], (1, 0)).astype(compute_dtype)   # (Cin, P)
    s1, b1 = _fold_bn(*params["bn1"])
    # conv2: OIHW -> (ky, kx, I, O) -> (9*P, P) so the kernel does ONE im2col matmul
    w2 = jnp.transpose(params["conv2_w"], (2, 3, 1, 0)).reshape(9 * planes, planes)
    w2 = w2.astype(compute_dtype)
    s2, b2 = _fold_bn(*params["bn2"])
    w3 = jnp.transpose(params["conv3_w"][:, :, 0, 0], (1, 0)).astype(compute_dtype)    # (P, 4P)
    s3, b3 = _fold_bn(*params["bn3"])
    arrays = [w1, s1, b1, w2, s2, b2, w3, s3, b3]
    if has_shortcut:
        wsc = jnp.transpose(params["sc_w"][:, :, 0, 0], (1, 0)).astype(compute_dtype)  # (Cin, 4P)
        ssc, bsc = _fold_bn(*params["sc_bn"])
        arrays += [wsc, ssc, bsc]
    return tuple(arrays), has_shortcut


def prepare_bottleneck_params(params, in_planes, planes, stride, compute_dtype=jnp.bfloat16):
    arrays, has_shortcut = _prepare_arrays(params, in_planes, planes, stride, compute_dtype)
    return {"arrays": arrays, "has_shortcut": has_shortcut, "stride": stride,
            "planes": planes, "in_planes": in_planes}


def init_params(key, in_planes, planes):
    """Deterministic synthetic parameters (PyTorch Bottleneck.__init__ shapes, OIHW)."""
    cout = EXPANSION * planes
    ks = jax.random.split(key, 16)

    def bn(k, c):
        k1, k2, k3, k4 = jax.random.split(k, 4)
        gamma = 1.0 + 0.1 * jax.random.normal(k1, (c,), jnp.float32)
        beta = 0.1 * jax.random.normal(k2, (c,), jnp.float32)
        mean = 0.1 * jax.random.normal(k3, (c,), jnp.float32)
        var = 0.5 + 0.1 * jnp.abs(jax.random.normal(k4, (c,), jnp.float32))
        return gamma, beta, mean, var

    return {
        "conv1_w": 0.1 * jax.random.normal(ks[0], (planes, in_planes, 1, 1), jnp.float32),
        "bn1": bn(ks[1], planes),
        "conv2_w": 0.1 * jax.random.normal(ks[2], (planes, planes, 3, 3), jnp.float32),
        "bn2": bn(ks[3], planes),
        "conv3_w": 0.1 * jax.random.normal(ks[4], (cout, planes, 1, 1), jnp.float32),
        "bn3": bn(ks[5], cout),
        "sc_w": 0.1 * jax.random.normal(ks[6], (cout, in_planes, 1, 1), jnp.float32),
        "sc_bn": bn(ks[7], cout),
    }


# --------------------------------------------------------------------------------
# Pallas kernel
# --------------------------------------------------------------------------------
def _make_kernel(*, stride, row_tile, has_shortcut, is_last, W, Cin, P, Cout):
    To = row_tile
    Wo = W // stride
    M = To * Wo
    bf16 = jnp.bfloat16
    f32 = jnp.float32

    def kernel(*refs):
        it = iter(refs)
        x_ref = next(it)                                   # (1, stride*To, W, Cin) bf16
        xt_ref = next(it)                                  # (1, 1, W, Cin) top halo row
        xb_ref = next(it) if stride == 1 else None         # (1, 1, W, Cin) bottom halo row
        w1_ref, s1_ref, b1_ref = next(it), next(it), next(it)
        w2_ref, s2_ref, b2_ref = next(it), next(it), next(it)   # w2: (9P, P)
        w3_ref, s3_ref, b3_ref = next(it), next(it), next(it)
        if has_shortcut:
            wsc_ref, ssc_ref, bsc_ref = next(it), next(it), next(it)
        out_ref = next(it)                                  # (1, To*Wo, Cout) lane-dense
        preact_ref = next(it) if is_last else None
        h1p_ref = next(it) if stride == 1 else None         # VMEM scratch (To+2, W+2, P)

        r = pl.program_id(1)
        n_r = pl.num_programs(1)

        def conv1_bn_relu(x2d):                            # (m, Cin) bf16 -> (m, P) f32
            h = jnp.dot(x2d, w1_ref[...], preferred_element_type=f32)
            return jnp.maximum(h * s1_ref[...] + b1_ref[...], 0.0)

        xm = x_ref[0]                                      # (stride*To, W, Cin)

        if stride == 1:
            # ---- conv1 folded over [top halo; main rows; bottom halo]: one matmul ----
            x_all = jnp.concatenate([xt_ref[0], xm, xb_ref[0]], axis=0)   # (To+2, W, Cin)
            h1 = conv1_bn_relu(x_all.reshape((To + 2) * W, Cin)).astype(bf16)

            # ---- padded conv1 activations live in a VMEM scratch ref ------------------
            # Every element of the scratch is (re)written each grid step, so there is no
            # cross-iteration dependence (safe with parallel dimension_semantics).
            h1p_ref[:, 1:W + 1, :] = h1.reshape(To + 2, W, P)
            zcol = jnp.zeros((To + 2, 1, P), bf16)
            h1p_ref[:, 0:1, :] = zcol                       # left zero padding
            h1p_ref[:, W + 1:W + 2, :] = zcol               # right zero padding

            @pl.when(r == 0)                                # image-top zero padding
            def _():
                h1p_ref[0:1, :, :] = jnp.zeros((1, W + 2, P), bf16)

            @pl.when(r == n_r - 1)                          # image-bottom zero padding
            def _():
                h1p_ref[To + 1:To + 2, :, :] = jnp.zeros((1, W + 2, P), bf16)

            # nine 3x3 taps as plain slice loads from the padded scratch
            pieces = [h1p_ref[ky:ky + To, kx:kx + W, :]
                      for ky in range(3) for kx in range(3)]
        else:
            # ---- stride == 2: folded conv1, then parity/phase-split patches ----------
            # TODO(synk): the stride-2 padding/phase split is still value-level (one
            # sublane concat per phase set); stride-2 blocks are a small minority of a
            # resnet_big network so this was left as-is.
            x_all = jnp.concatenate([xt_ref[0], xm], axis=0)              # (2To+1, W, Cin)
            h1 = conv1_bn_relu(x_all.reshape((2 * To + 1) * W, Cin)).astype(bf16)
            h1 = h1.reshape(2 * To + 1, W, P)

            keep_top = jnp.where(r == 0, 0.0, 1.0).astype(bf16)
            h1t = h1[0:1] * keep_top                                       # (1, W, P)
            h1m4 = h1[1:].reshape(To, 2, W, P)
            rows_e = jnp.concatenate([h1t, h1m4[:, 1]], axis=0)            # (To+1, W, P)
            rows_o = h1m4[:, 0]                                            # (To,   W, P)

            def col_split(rows):      # (R, W, P) -> even/odd padded column phases
                R = rows.shape[0]
                zc = jnp.zeros((R, 1, P), bf16)
                p = jnp.concatenate([zc, rows, zc], axis=1).reshape(R, Wo + 1, 2, P)
                return p[:, :, 0, :], p[:, :, 1, :]

            Ee, Eo = col_split(rows_e)
            Oe, Oo = col_split(rows_o)

            def get_patch(ky, kx):
                ce, co = (Oe, Oo) if ky == 1 else (Ee, Eo)
                roff = ky // 2
                if kx == 1:
                    return co[roff:roff + To, 0:Wo, :]
                return ce[roff:roff + To, kx // 2:kx // 2 + Wo, :]

            pieces = [get_patch(ky, kx) for ky in range(3) for kx in range(3)]

        # ---- conv2 (3x3, pad=1): ONE im2col matmul with K = 9*P ---------------------
        patches = jnp.concatenate(pieces, axis=-1).reshape(M, 9 * P)       # (M, 9P) bf16
        h2 = jnp.dot(patches, w2_ref[...], preferred_element_type=f32)
        h2 = jnp.maximum(h2 * s2_ref[...] + b2_ref[...], 0.0).astype(bf16)

        # ---- conv3 (1x1) + bn3 -------------------------------------------------------
        h3 = jnp.dot(h2, w3_ref[...], preferred_element_type=f32)
        h3 = h3 * s3_ref[...] + b3_ref[...]

        # ---- shortcut ----------------------------------------------------------------
        if has_shortcut:
            if stride == 1:
                xs = xm.reshape(M, Cin)
            else:
                xs = xm.reshape(To, 2, Wo, 2, Cin)[:, 0, :, 0, :].reshape(M, Cin)
            sc = jnp.dot(xs, wsc_ref[...], preferred_element_type=f32)
            sc = sc * ssc_ref[...] + bsc_ref[...]
        else:
            # identity shortcut only happens for stride==1 and Cin == Cout
            sc = xm.reshape(M, Cout).astype(f32)

        pre = h3 + sc                                                       # (M, Cout) f32
        out_ref[...] = jnp.maximum(pre, 0.0).reshape(1, M, Cout).astype(out_ref.dtype)
        if is_last:
            preact_ref[...] = pre.reshape(1, M, Cout).astype(preact_ref.dtype)

    return kernel


# --------------------------------------------------------------------------------
# Wrappers
# --------------------------------------------------------------------------------
def _weight_spec(a, single_buffer):
    """Resident (grid-invariant) operand. Single-buffered when the runtime supports
    pipeline_mode=pl.Buffered(1) (halves weight VMEM residency, important on v7x)."""
    zeros = (0,) * a.ndim
    idx = lambda n, r, _z=zeros: _z  # noqa: E731
    if single_buffer and hasattr(pl, "Buffered"):
        try:
            return pl.BlockSpec(a.shape, idx, pipeline_mode=pl.Buffered(1))
        except Exception:
            pass
    return pl.BlockSpec(a.shape, idx)


def _default_vmem_limit():
    """Generation-aware scoped-VMEM limit: ~3/4 of physical, capped at 96 MiB
    (=> ~96 MiB on v5e/v6e's 128 MiB, ~48 MiB on v7x's 64 MiB)."""
    try:
        info = pltpu.get_tpu_info()
        cap = int(getattr(info, "vmem_capacity_bytes", 0) or 0)
        if cap > 0:
            return int(min((cap * 3) // 4, 96 * 1024 * 1024))
    except Exception:
        pass
    return 64 * 1024 * 1024


def _auto_row_tile(Ho, W, Cin, planes, Cout, stride, is_last, out_bytes,
                   weight_bytes, vmem_limit):
    """Largest output-row tile whose per-step VMEM footprint fits the budget
    (bf16 streams, f32 intermediates, double-buffered x/out, resident weights)."""
    Wo = W // stride
    budget = vmem_limit - 2 * weight_bytes - (4 << 20)      # weights + compiler headroom
    budget = max(budget, 1 << 20)

    def step_bytes(t):
        bf = 2                                              # activations stream as bf16
        x_blk = (stride * t + 2) * W * Cin * bf             # main rows + halo rows
        out_blk = t * Wo * Cout * out_bytes * (2 if is_last else 1)
        h1 = (stride * t + 2) * (W + 2) * planes * bf       # padded conv1 activations
        patches = t * Wo * 9 * planes * bf                  # im2col operand
        f32_tmp = t * Wo * (planes + 2 * Cout) * 4          # h2 / h3 / shortcut accum
        return 2 * (x_blk + out_blk) + h1 + patches + f32_tmp

    cands = [t for t in range(1, Ho + 1)
             if Ho % t == 0 and ((t * Wo) % 8 == 0 or t == Ho)]
    fitting = [t for t in cands if step_bytes(t) <= budget]
    if fitting:
        return max(fitting)
    return min(cands) if cands else Ho


def bottleneck_forward_nhwc(x_nhwc, prep, *, is_last=False, row_tile=None,
                            out_dtype=None, single_buffer_weights=True,
                            vmem_limit_bytes=None):
    """NHWC hot path. Pass out_dtype=jnp.bfloat16 (or feed bf16 inputs) in a network
    to halve HBM writeback on memory-bound layers."""
    arrays, has_shortcut = prep["arrays"], prep["has_shortcut"]
    stride, planes = prep["stride"], prep["planes"]
    N, H, W, Cin = x_nhwc.shape
    assert Cin == prep["in_planes"]
    Cout = EXPANSION * planes
    # TODO(synk): odd H/W with stride=2 (PyTorch floor-division output size) is not
    # supported by this tiling; resnet_big always has even spatial dims at stride-2.
    assert H % stride == 0 and W % stride == 0
    Ho, Wo = H // stride, W // stride

    out_dtype = x_nhwc.dtype if out_dtype is None else out_dtype
    out_bytes = jnp.dtype(out_dtype).itemsize
    vmem_limit = int(vmem_limit_bytes) if vmem_limit_bytes is not None else _default_vmem_limit()
    weight_bytes = sum(int(a.size) * jnp.dtype(a.dtype).itemsize for a in arrays)

    if row_tile is None:
        To = _auto_row_tile(Ho, W, Cin, planes, Cout, stride, is_last, out_bytes,
                            weight_bytes, vmem_limit)
    else:
        To = row_tile
    assert Ho % To == 0, "row_tile must divide the output height"
    assert (To * Wo) % 8 == 0 or To == Ho, \
        "row_tile*Wo must be a multiple of 8 (sublane-dense flattened stores)"
    n_r = Ho // To

    x_bf = x_nhwc.astype(jnp.bfloat16)   # bf16 activations: half the HBM/VMEM traffic

    kernel = _make_kernel(stride=stride, row_tile=To, has_shortcut=has_shortcut,
                          is_last=is_last, W=W, Cin=Cin, P=planes, Cout=Cout)

    x_spec = pl.BlockSpec((1, stride * To, W, Cin), lambda n, r: (n, r, 0, 0))
    # single-row halo blocks; clamped at the image border and zero-masked in-kernel
    xt_spec = pl.BlockSpec((1, 1, W, Cin),
                           lambda n, r: (n, jnp.maximum(stride * To * r - 1, 0), 0, 0))
    # bottom halo is only used for stride==1 (stride-2 needs no bottom halo)
    xb_spec = pl.BlockSpec((1, 1, W, Cin),
                           lambda n, r: (n, jnp.minimum(To * (r + 1), H - 1), 0, 0))

    # lane/sublane-dense flattened output: block (1, To*Wo, Cout) -> unmasked stores
    out_spec = pl.BlockSpec((1, To * Wo, Cout), lambda n, r: (n, r, 0))
    out_sds = jax.ShapeDtypeStruct((N, Ho * Wo, Cout), out_dtype)
    if is_last:
        out_shape, out_specs = (out_sds, out_sds), (out_spec, out_spec)
    else:
        out_shape, out_specs = out_sds, out_spec

    inputs = [x_bf, x_bf] + ([x_bf] if stride == 1 else []) + list(arrays)
    scratch = ([pltpu.VMEM((To + 2, W + 2, planes), jnp.bfloat16)]
               if stride == 1 else [])

    def _call(sbw, limit):
        in_specs = [x_spec, xt_spec] + ([xb_spec] if stride == 1 else []) \
                   + [_weight_spec(a, sbw) for a in arrays]
        return pl.pallas_call(
            kernel,
            grid=(N, n_r),                          # N * n_r parallel steps (megacore)
            in_specs=in_specs,
            out_specs=out_specs,
            out_shape=out_shape,
            scratch_shapes=scratch,
            compiler_params=pltpu.CompilerParams(
                dimension_semantics=("parallel", "parallel"),
                vmem_limit_bytes=limit),
        )(*inputs)

    # Robustness ladder: prefer single-buffered weights + large VMEM limit, fall back
    # to defaults if this JAX build / backend rejects either (keeps the kernel running
    # everywhere while using the faster configuration when available).
    attempts = []
    if single_buffer_weights:
        attempts.append((True, vmem_limit))
    attempts.append((False, vmem_limit))
    if vmem_limit > 32 * 1024 * 1024:
        attempts.append((False, 32 * 1024 * 1024))
    res, last_err = None, None
    for sbw, limit in attempts:
        try:
            res = _call(sbw, limit)
            break
        except Exception as e:  # pragma: no cover - conservative fallback path
            last_err = e
    if res is None:
        raise last_err

    def _unflatten(a):        # contiguous reshape: free
        return a.reshape(N, Ho, Wo, Cout)

    if is_last:
        return _unflatten(res[0]), _unflatten(res[1])
    return _unflatten(res)


def bottleneck_forward(x_nchw, prep, *, is_last=False, row_tile=None, out_dtype=None):
    """PyTorch-interface (NCHW) wrapper. The hot path should call
    bottleneck_forward_nhwc directly and keep activations NHWC (and bf16) end-to-end."""
    x_nhwc = jnp.transpose(x_nchw, (0, 2, 3, 1))
    res = bottleneck_forward_nhwc(x_nhwc, prep, is_last=is_last, row_tile=row_tile,
                                  out_dtype=out_dtype)
    if is_last:
        out, pre = res
        return jnp.transpose(out, (0, 3, 1, 2)), jnp.transpose(pre, (0, 3, 1, 2))
    return jnp.transpose(res, (0, 3, 1, 2))


# --------------------------------------------------------------------------------
# Pure-JAX reference (mirrors the kernel's bf16 operand quantisation, f32 accum)
# --------------------------------------------------------------------------------
def _reference_forward(x_nchw, params, *, planes, stride):
    N, Cin, H, W = x_nchw.shape
    (w1, s1, b1, w2, s2, b2, w3, s3, b3, *sc_args), has_shortcut = \
        _prepare_arrays(params, Cin, planes, stride)
    f32, bf16 = jnp.float32, jnp.bfloat16
    x = jnp.transpose(x_nchw, (0, 2, 3, 1)).astype(bf16)
    dn = ("NHWC", "HWIO", "NHWC")

    h = jnp.einsum("nhwc,cp->nhwp", x, w1, preferred_element_type=f32)
    h = jnp.maximum(h * s1 + b1, 0.0).astype(bf16)
    h = lax.conv_general_dilated(h, w2.reshape(3, 3, planes, planes), (stride, stride),
                                 [(1, 1), (1, 1)], dimension_numbers=dn,
                                 preferred_element_type=f32)
    h = jnp.maximum(h * s2 + b2, 0.0).astype(bf16)
    h = jnp.einsum("nhwc,cp->nhwp", h, w3, preferred_element_type=f32) * s3 + b3
    if has_shortcut:
        wsc, ssc, bsc = sc_args
        xs = x[:, ::stride, ::stride, :]
        sc = jnp.einsum("nhwc,cp->nhwp", xs, wsc, preferred_element_type=f32) * ssc + bsc
    else:
        sc = x.astype(f32)
    pre = h + sc
    out = jnp.maximum(pre, 0.0)
    return (jnp.transpose(out, (0, 3, 1, 2)), jnp.transpose(pre, (0, 3, 1, 2)))


# --------------------------------------------------------------------------------
if __name__ == "__main__":
    key = jax.random.PRNGKey(0)
    in_planes, planes = 4, 4
    N, H, W = 2, 16, 16

    params = init_params(key, in_planes, planes)
    x = jax.random.normal(jax.random.fold_in(key, 99), (N, in_planes, H, W), jnp.float32)

    # --- stride 1, projection shortcut (in_planes != 4*planes), is_last=True --------
    prep1 = prepare_bottleneck_params(params, in_planes, planes, stride=1)
    out1, pre1 = bottleneck_forward(x, prep1, is_last=True, row_tile=4)
    jax.block_until_ready(out1)
    ref_out1, ref_pre1 = _reference_forward(x, params, planes=planes, stride=1)
    assert out1.shape == (N, EXPANSION * planes, H, W)
    assert float(jnp.max(jnp.abs(out1 - ref_out1))) < 1e-2, "stride-1 out mismatch"
    assert float(jnp.max(jnp.abs(pre1 - ref_pre1))) < 1e-2, "stride-1 preact mismatch"

    # --- stride 2 (downsampling) path -------------------------------------------------
    prep2 = prepare_bottleneck_params(params, in_planes, planes, stride=2)
    out2, pre2 = bottleneck_forward(x, prep2, is_last=True, row_tile=4)
    jax.block_until_ready(out2)
    ref_out2, ref_pre2 = _reference_forward(x, params, planes=planes, stride=2)
    assert out2.shape == (N, EXPANSION * planes, H // 2, W // 2)
    assert float(jnp.max(jnp.abs(out2 - ref_out2))) < 1e-2, "stride-2 out mismatch"
    assert float(jnp.max(jnp.abs(pre2 - ref_pre2))) < 1e-2, "stride-2 preact mismatch"

    # --- identity shortcut, auto row tile, is_last=False --------------------------------
    in_planes_id = EXPANSION * planes
    params_id = init_params(jax.random.fold_in(key, 7), in_planes_id, planes)
    x_id = jax.random.normal(jax.random.fold_in(key, 123),
                             (N, in_planes_id, H, W), jnp.float32)
    prep_id = prepare_bottleneck_params(params_id, in_planes_id, planes, stride=1)
    out_id = bottleneck_forward(x_id, prep_id, is_last=False)      # auto row_tile
    jax.block_until_ready(out_id)
    ref_out_id, _ = _reference_forward(x_id, params_id, planes=planes, stride=1)
    assert float(jnp.max(jnp.abs(out_id - ref_out_id))) < 1e-2, "identity-shortcut mismatch"

    # --- bf16-output NHWC hot path (lane-dense flattened stores) ------------------------
    x_nhwc = jnp.transpose(x, (0, 2, 3, 1))
    out_bf = bottleneck_forward_nhwc(x_nhwc, prep1, out_dtype=jnp.bfloat16, row_tile=8)
    jax.block_until_ready(out_bf)
    assert out_bf.dtype == jnp.bfloat16
    ref_nhwc = jnp.transpose(ref_out1, (0, 2, 3, 1))
    assert float(jnp.max(jnp.abs(out_bf.astype(jnp.float32) - ref_nhwc))) < 5e-2, \
        "bf16 hot-path mismatch"

    print("KERNEL_OK")
</pallas_src>

<mosaic_0001>
module attributes {stable_mosaic.version = 11 : i64} {
  func.func @kernel(%arg0: i32, %arg1: i32, %arg2: memref<1x4x16x4xbf16, #tpu.memory_space<vmem>>, %arg3: memref<1x1x16x4xbf16, #tpu.memory_space<vmem>>, %arg4: memref<1x1x16x4xbf16, #tpu.memory_space<vmem>>, %arg5: memref<4x4xbf16, #tpu.memory_space<vmem>>, %arg6: memref<1x4xf32, #tpu.memory_space<vmem>>, %arg7: memref<1x4xf32, #tpu.memory_space<vmem>>, %arg8: memref<36x4xbf16, #tpu.memory_space<vmem>>, %arg9: memref<1x4xf32, #tpu.memory_space<vmem>>, %arg10: memref<1x4xf32, #tpu.memory_space<vmem>>, %arg11: memref<4x16xbf16, #tpu.memory_space<vmem>>, %arg12: memref<1x16xf32, #tpu.memory_space<vmem>>, %arg13: memref<1x16xf32, #tpu.memory_space<vmem>>, %arg14: memref<4x16xbf16, #tpu.memory_space<vmem>>, %arg15: memref<1x16xf32, #tpu.memory_space<vmem>>, %arg16: memref<1x16xf32, #tpu.memory_space<vmem>>, %arg17: memref<1x64x16xf32, #tpu.memory_space<vmem>>, %arg18: memref<1x64x16xf32, #tpu.memory_space<vmem>>, %arg19: memref<6x18x4xbf16, #tpu.memory_space<vmem>>) attributes {dimension_semantics = [#tpu.dimension_semantics<parallel>, #tpu.dimension_semantics<parallel>], iteration_bounds = array<i64: 2, 4>, scalar_prefetch = 0 : i64, scratch_operands = 1 : i64, tpu.core_type = #tpu.core_type<tc>, window_params = [{transform_indices = @transform_0, window_bounds = array<i64: 1, 4, 16, 4>}, {transform_indices = @transform_1, window_bounds = array<i64: 1, 1, 16, 4>}, {transform_indices = @transform_2, window_bounds = array<i64: 1, 1, 16, 4>}, {pipeline_mode = #tpu.pipeline_mode<synchronous>, transform_indices = @transform_3, window_bounds = array<i64: 4, 4>}, {pipeline_mode = #tpu.pipeline_mode<synchronous>, transform_indices = @transform_4, window_bounds = array<i64: 1, 4>}, {pipeline_mode = #tpu.pipeline_mode<synchronous>, transform_indices = @transform_5, window_bounds = array<i64: 1, 4>}, {pipeline_mode = #tpu.pipeline_mode<synchronous>, transform_indices = @transform_6, window_bounds = array<i64: 36, 4>}, {pipeline_mode = #tpu.pipeline_mode<synchronous>, transform_indices = @transform_7, window_bounds = array<i64: 1, 4>}, {pipeline_mode = #tpu.pipeline_mode<synchronous>, transform_indices = @transform_8, window_bounds = array<i64: 1, 4>}, {pipeline_mode = #tpu.pipeline_mode<synchronous>, transform_indices = @transform_9, window_bounds = array<i64: 4, 16>}, {pipeline_mode = #tpu.pipeline_mode<synchronous>, transform_indices = @transform_10, window_bounds = array<i64: 1, 16>}, {pipeline_mode = #tpu.pipeline_mode<synchronous>, transform_indices = @transform_11, window_bounds = array<i64: 1, 16>}, {pipeline_mode = #tpu.pipeline_mode<synchronous>, transform_indices = @transform_12, window_bounds = array<i64: 4, 16>}, {pipeline_mode = #tpu.pipeline_mode<synchronous>, transform_indices = @transform_13, window_bounds = array<i64: 1, 16>}, {pipeline_mode = #tpu.pipeline_mode<synchronous>, transform_indices = @transform_14, window_bounds = array<i64: 1, 16>}, {transform_indices = @transform_15, window_bounds = array<i64: 1, 64, 16>}, {transform_indices = @transform_16, window_bounds = array<i64: 1, 64, 16>}]} {
    %c0 = arith.constant 0 : index
    %c0_0 = arith.constant 0 : index
    %c0_1 = arith.constant 0 : index
    %c0_2 = arith.constant 0 : index
    %0 = vector.load %arg2[%c0, %c0_0, %c0_1, %c0_2] : memref<1x4x16x4xbf16, #tpu.memory_space<vmem>>, vector<1x4x16x4xbf16>
    %1 = vector.shape_cast %0 : vector<1x4x16x4xbf16> to vector<4x16x4xbf16>
    %c0_3 = arith.constant 0 : index
    %c0_4 = arith.constant 0 : index
    %c0_5 = arith.constant 0 : index
    %c0_6 = arith.constant 0 : index
    %2 = vector.load %arg3[%c0_3, %c0_4, %c0_5, %c0_6] : memref<1x1x16x4xbf16, #tpu.memory_space<vmem>>, vector<1x1x16x4xbf16>
    %3 = vector.shape_cast %2 : vector<1x1x16x4xbf16> to vector<1x16x4xbf16>
    %c0_7 = arith.constant 0 : index
    %c0_8 = arith.constant 0 : index
    %c0_9 = arith.constant 0 : index
    %c0_10 = arith.constant 0 : index
    %4 = vector.load %arg4[%c0_7, %c0_8, %c0_9, %c0_10] : memref<1x1x16x4xbf16, #tpu.memory_space<vmem>>, vector<1x1x16x4xbf16>
    %5 = vector.shape_cast %4 : vector<1x1x16x4xbf16> to vector<1x16x4xbf16>
    %6 = tpu.concatenate %3, %1, %5 in 0 : vector<1x16x4xbf16>, vector<4x16x4xbf16>, vector<1x16x4xbf16> -> vector<6x16x4xbf16>
    %7 = vector.shape_cast %6 : vector<6x16x4xbf16> to vector<96x4xbf16>
    %c0_11 = arith.constant 0 : index
    %c0_12 = arith.constant 0 : index
    %8 = vector.load %arg5[%c0_11, %c0_12] : memref<4x4xbf16, #tpu.memory_space<vmem>>, vector<4x4xbf16>
    %cst = arith.constant dense<0.000000e+00> : vector<96x4xf32>
    %9 = tpu.matmul %7, %8, %cst {dimension_numbers = #tpu.dot_dimension_numbers<[1], [0], [0], [1], [0, 0, 1, 1], [], []>} : vector<96x4xbf16>, vector<4x4xbf16>, vector<96x4xf32> -> vector<96x4xf32>
    %c0_13 = arith.constant 0 : index
    %c0_14 = arith.constant 0 : index
    %10 = vector.load %arg6[%c0_13, %c0_14] : memref<1x4xf32, #tpu.memory_space<vmem>>, vector<1x4xf32>
    %11 = vector.broadcast %10 : vector<1x4xf32> to vector<96x4xf32>
    %12 = arith.mulf %9, %11 : vector<96x4xf32>
    %c0_15 = arith.constant 0 : index
    %c0_16 = arith.constant 0 : index
    %13 = vector.load %arg7[%c0_15, %c0_16] : memref<1x4xf32, #tpu.memory_space<vmem>>, vector<1x4xf32>
    %14 = vector.broadcast %13 : vector<1x4xf32> to vector<96x4xf32>
    %15 = arith.addf %12, %14 : vector<96x4xf32>
    %cst_17 = arith.constant 0.000000e+00 : f32
    %16 = vector.broadcast %cst_17 : f32 to vector<96x4xf32>
    %17 = arith.maximumf %15, %16 : vector<96x4xf32>
    %18 = arith.truncf %17 : vector<96x4xf32> to vector<96x4xbf16>
    %19 = vector.shape_cast %18 : vector<96x4xbf16> to vector<6x16x4xbf16>
    %c0_18 = arith.constant 0 : index
    %c1 = arith.constant 1 : index
    %c0_19 = arith.constant 0 : index
    %20 = vector.load %arg19[%c0_18, %c1, %c0_19] : memref<6x18x4xbf16, #tpu.memory_space<vmem>>, vector<6x16x4xbf16>
    tpu.vector_store %arg19[%c0_18, %c1, %c0_19], %19 {strides = array<i32>} : memref<6x18x4xbf16, #tpu.memory_space<vmem>>, vector<6x16x4xbf16>,
    %cst_20 = arith.constant 0.000000e+00 : bf16
    %21 = vector.broadcast %cst_20 : bf16 to vector<6x1x4xbf16>
    %c0_21 = arith.constant 0 : index
    %c0_22 = arith.constant 0 : index
    %c0_23 = arith.constant 0 : index
    %22 = vector.load %arg19[%c0_21, %c0_22, %c0_23] : memref<6x18x4xbf16, #tpu.memory_space<vmem>>, vector<6x1x4xbf16>
    tpu.vector_store %arg19[%c0_21, %c0_22, %c0_23], %21 {strides = array<i32>} : memref<6x18x4xbf16, #tpu.memory_space<vmem>>, vector<6x1x4xbf16>,
    %c0_24 = arith.constant 0 : index
    %c17 = arith.constant 17 : index
    %c0_25 = arith.constant 0 : index
    %23 = vector.load %arg19[%c0_24, %c17, %c0_25] : memref<6x18x4xbf16, #tpu.memory_space<vmem>>, vector<6x1x4xbf16>
    tpu.vector_store %arg19[%c0_24, %c17, %c0_25], %21 {strides = array<i32>} : memref<6x18x4xbf16, #tpu.memory_space<vmem>>, vector<6x1x4xbf16>,
    %c0_i32 = arith.constant 0 : i32
    %24 = arith.cmpi eq, %arg1, %c0_i32 : i32
    %25 = arith.extui %24 : i1 to i32
    %c0_i32_26 = arith.constant 0 : i32
    %26 = arith.cmpi ne, %25, %c0_i32_26 : i32
    scf.if %26 {
      %cst_83 = arith.constant 0.000000e+00 : bf16
      %76 = vector.broadcast %cst_83 : bf16 to vector<1x18x4xbf16>
      %c0_84 = arith.constant 0 : index
      %c0_85 = arith.constant 0 : index
      %c0_86 = arith.constant 0 : index
      %77 = vector.load %arg19[%c0_84, %c0_85, %c0_86] : memref<6x18x4xbf16, #tpu.memory_space<vmem>>, vector<1x18x4xbf16>
      tpu.vector_store %arg19[%c0_84, %c0_85, %c0_86], %76 {strides = array<i32>} : memref<6x18x4xbf16, #tpu.memory_space<vmem>>, vector<1x18x4xbf16>,
    } else {
    }
    %c3_i32 = arith.constant 3 : i32
    %27 = arith.cmpi eq, %arg1, %c3_i32 : i32
    %28 = arith.extui %27 : i1 to i32
    %c0_i32_27 = arith.constant 0 : i32
    %29 = arith.cmpi ne, %28, %c0_i32_27 : i32
    scf.if %29 {
      %cst_83 = arith.constant 0.000000e+00 : bf16
      %76 = vector.broadcast %cst_83 : bf16 to vector<1x18x4xbf16>
      %c5 = arith.constant 5 : index
      %c0_84 = arith.constant 0 : index
      %c0_85 = arith.constant 0 : index
      %77 = vector.load %arg19[%c5, %c0_84, %c0_85] : memref<6x18x4xbf16, #tpu.memory_space<vmem>>, vector<1x18x4xbf16>
      tpu.vector_store %arg19[%c5, %c0_84, %c0_85], %76 {strides = array<i32>} : memref<6x18x4xbf16, #tpu.memory_space<vmem>>, vector<1x18x4xbf16>,
    } else {
    }
    %c0_28 = arith.constant 0 : index
    %c0_29 = arith.constant 0 : index
    %c0_30 = arith.constant 0 : index
    %30 = vector.load %arg19[%c0_28, %c0_29, %c0_30] : memref<6x18x4xbf16, #tpu.memory_space<vmem>>, vector<4x16x4xbf16>
    %c0_31 = arith.constant 0 : index
    %c1_32 = arith.constant 1 : index
    %c0_33 = arith.constant 0 : index
    %31 = vector.load %arg19[%c0_31, %c1_32, %c0_33] : memref<6x18x4xbf16, #tpu.memory_space<vmem>>, vector<4x16x4xbf16>
    %c0_34 = arith.constant 0 : index
    %c2 = arith.constant 2 : index
    %c0_35 = arith.constant 0 : index
    %32 = vector.load %arg19[%c0_34, %c2, %c0_35] : memref<6x18x4xbf16, #tpu.memory_space<vmem>>, vector<4x16x4xbf16>
    %c1_36 = arith.constant 1 : index
    %c0_37 = arith.constant 0 : index
    %c0_38 = arith.constant 0 : index
    %33 = vector.load %arg19[%c1_36, %c0_37, %c0_38] : memref<6x18x4xbf16, #tpu.memory_space<vmem>>, vector<4x16x4xbf16>
    %c1_39 = arith.constant 1 : index
    %c1_40 = arith.constant 1 : index
    %c0_41 = arith.constant 0 : index
    %34 = vector.load %arg19[%c1_39, %c1_40, %c0_41] : memref<6x18x4xbf16, #tpu.memory_space<vmem>>, vector<4x16x4xbf16>
    %c1_42 = arith.constant 1 : index
    %c2_43 = arith.constant 2 : index
    %c0_44 = arith.constant 0 : index
    %35 = vector.load %arg19[%c1_42, %c2_43, %c0_44] : memref<6x18x4xbf16, #tpu.memory_space<vmem>>, vector<4x16x4xbf16>
    %c2_45 = arith.constant 2 : index
    %c0_46 = arith.constant 0 : index
    %c0_47 = arith.constant 0 : index
    %36 = vector.load %arg19[%c2_45, %c0_46, %c0_47] : memref<6x18x4xbf16, #tpu.memory_space<vmem>>, vector<4x16x4xbf16>
    %c2_48 = arith.constant 2 : index
    %c1_49 = arith.constant 1 : index
    %c0_50 = arith.constant 0 : index
    %37 = vector.load %arg19[%c2_48, %c1_49, %c0_50] : memref<6x18x4xbf16, #tpu.memory_space<vmem>>, vector<4x16x4xbf16>
    %c2_51 = arith.constant 2 : index
    %c2_52 = arith.constant 2 : index
    %c0_53 = arith.constant 0 : index
    %38 = vector.load %arg19[%c2_51, %c2_52, %c0_53] : memref<6x18x4xbf16, #tpu.memory_space<vmem>>, vector<4x16x4xbf16>
    %39 = tpu.concatenate %30, %31, %32, %33, %34, %35, %36, %37, %38 in 2 : vector<4x16x4xbf16>, vector<4x16x4xbf16>, vector<4x16x4xbf16>, vector<4x16x4xbf16>, vector<4x16x4xbf16>, vector<4x16x4xbf16>, vector<4x16x4xbf16>, vector<4x16x4xbf16>, vector<4x16x4xbf16> -> vector<4x16x36xbf16>
    %40 = vector.shape_cast %39 : vector<4x16x36xbf16> to vector<64x36xbf16>
    %c0_54 = arith.constant 0 : index
    %c0_55 = arith.constant 0 : index
    %41 = vector.load %arg8[%c0_54, %c0_55] : memref<36x4xbf16, #tpu.memory_space<vmem>>, vector<36x4xbf16>
    %cst_56 = arith.constant dense<0.000000e+00> : vector<64x4xf32>
    %42 = tpu.matmul %40, %41, %cst_56 {dimension_numbers = #tpu.dot_dimension_numbers<[1], [0], [0], [1], [0, 0, 1, 1], [], []>} : vector<64x36xbf16>, vector<36x4xbf16>, vector<64x4xf32> -> vector<64x4xf32>
    %c0_57 = arith.constant 0 : index
    %c0_58 = arith.constant 0 : index
    %43 = vector.load %arg9[%c0_57, %c0_58] : memref<1x4xf32, #tpu.memory_space<vmem>>, vector<1x4xf32>
    %44 = vector.broadcast %43 : vector<1x4xf32> to vector<64x4xf32>
    %45 = arith.mulf %42, %44 : vector<64x4xf32>
    %c0_59 = arith.constant 0 : index
    %c0_60 = arith.constant 0 : index
    %46 = vector.load %arg10[%c0_59, %c0_60] : memref<1x4xf32, #tpu.memory_space<vmem>>, vector<1x4xf32>
    %47 = vector.broadcast %46 : vector<1x4xf32> to vector<64x4xf32>
    %48 = arith.addf %45, %47 : vector<64x4xf32>
    %cst_61 = arith.constant 0.000000e+00 : f32
    %49 = vector.broadcast %cst_61 : f32 to vector<64x4xf32>
    %50 = arith.maximumf %48, %49 : vector<64x4xf32>
    %51 = arith.truncf %50 : vector<64x4xf32> to vector<64x4xbf16>
    %c0_62 = arith.constant 0 : index
    %c0_63 = arith.constant 0 : index
    %52 = vector.load %arg11[%c0_62, %c0_63] : memref<4x16xbf16, #tpu.memory_space<vmem>>, vector<4x16xbf16>
    %cst_64 = arith.constant dense<0.000000e+00> : vector<64x16xf32>
    %53 = tpu.matmul %51, %52, %cst_64 {dimension_numbers = #tpu.dot_dimension_numbers<[1], [0], [0], [1], [0, 0, 1, 1], [], []>} : vector<64x4xbf16>, vector<4x16xbf16>, vector<64x16xf32> -> vector<64x16xf32>
    %c0_65 = arith.constant 0 : index
    %c0_66 = arith.constant 0 : index
    %54 = vector.load %arg12[%c0_65, %c0_66] : memref<1x16xf32, #tpu.memory_space<vmem>>, vector<1x16xf32>
    %55 = vector.broadcast %54 : vector<1x16xf32> to vector<64x16xf32>
    %56 = arith.mulf %53, %55 : vector<64x16xf32>
    %c0_67 = arith.constant 0 : index
    %c0_68 = arith.constant 0 : index
    %57 = vector.load %arg13[%c0_67, %c0_68] : memref<1x16xf32, #tpu.memory_space<vmem>>, vector<1x16xf32>
    %58 = vector.broadcast %57 : vector<1x16xf32> to vector<64x16xf32>
    %59 = arith.addf %56, %58 : vector<64x16xf32>
    %60 = vector.shape_cast %1 : vector<4x16x4xbf16> to vector<64x4xbf16>
    %c0_69 = arith.constant 0 : index
    %c0_70 = arith.constant 0 : index
    %61 = vector.load %arg14[%c0_69, %c0_70] : memref<4x16xbf16, #tpu.memory_space<vmem>>, vector<4x16xbf16>
    %cst_71 = arith.constant dense<0.000000e+00> : vector<64x16xf32>
    %62 = tpu.matmul %60, %61, %cst_71 {dimension_numbers = #tpu.dot_dimension_numbers<[1], [0], [0], [1], [0, 0, 1, 1], [], []>} : vector<64x4xbf16>, vector<4x16xbf16>, vector<64x16xf32> -> vector<64x16xf32>
    %c0_72 = arith.constant 0 : index
    %c0_73 = arith.constant 0 : index
    %63 = vector.load %arg15[%c0_72, %c0_73] : memref<1x16xf32, #tpu.memory_space<vmem>>, vector<1x16xf32>
    %64 = vector.broadcast %63 : vector<1x16xf32> to vector<64x16xf32>
    %65 = arith.mulf %62, %64 : vector<64x16xf32>
    %c0_74 = arith.constant 0 : index
    %c0_75 = arith.constant 0 : index
    %66 = vector.load %arg16[%c0_74, %c0_75] : memref<1x16xf32, #tpu.memory_space<vmem>>, vector<1x16xf32>
    %67 = vector.broadcast %66 : vector<1x16xf32> to vector<64x16xf32>
    %68 = arith.addf %65, %67 : vector<64x16xf32>
    %69 = arith.addf %59, %68 : vector<64x16xf32>
    %cst_76 = arith.constant 0.000000e+00 : f32
    %70 = vector.broadcast %cst_76 : f32 to vector<64x16xf32>
    %71 = arith.maximumf %69, %70 : vector<64x16xf32>
    %72 = vector.shape_cast %71 : vector<64x16xf32> to vector<1x64x16xf32>
    %c0_77 = arith.constant 0 : index
    %c0_78 = arith.constant 0 : index
    %c0_79 = arith.constant 0 : index
    %73 = vector.load %arg17[%c0_77, %c0_78, %c0_79] : memref<1x64x16xf32, #tpu.memory_space<vmem>>, vector<1x64x16xf32>
    tpu.vector_store %arg17[%c0_77, %c0_78, %c0_79], %72 {strides = array<i32>} : memref<1x64x16xf32, #tpu.memory_space<vmem>>, vector<1x64x16xf32>,
    %74 = vector.shape_cast %69 : vector<64x16xf32> to vector<1x64x16xf32>
    %c0_80 = arith.constant 0 : index
    %c0_81 = arith.constant 0 : index
    %c0_82 = arith.constant 0 : index
    %75 = vector.load %arg18[%c0_80, %c0_81, %c0_82] : memref<1x64x16xf32, #tpu.memory_space<vmem>>, vector<1x64x16xf32>
    tpu.vector_store %arg18[%c0_80, %c0_81, %c0_82], %74 {strides = array<i32>} : memref<1x64x16xf32, #tpu.memory_space<vmem>>, vector<1x64x16xf32>,
    return
  }
  func.func @transform_0(%arg0: i32, %arg1: i32) -> (i32, i32, i32, i32) {
    %c0_i32 = arith.constant 0 : i32
    %c0_i32_0 = arith.constant 0 : i32
    %c0_i32_1 = arith.constant 0 : i32
    return %arg0, %arg1, %c0_i32, %c0_i32_0 : i32, i32, i32, i32
  }
  func.func @transform_1(%arg0: i32, %arg1: i32) -> (i32, i32, i32, i32) {
    %c4_i32 = arith.constant 4 : i32
    %0 = arith.muli %c4_i32, %arg1 : i32
    %c1_i32 = arith.constant 1 : i32
    %1 = arith.subi %0, %c1_i32 : i32
    %c0_i32 = arith.constant 0 : i32
    %2 = arith.maxsi %1, %c0_i32 : i32
    %c0_i32_0 = arith.constant 0 : i32
    %c0_i32_1 = arith.constant 0 : i32
    %c0_i32_2 = arith.constant 0 : i32
    return %arg0, %2, %c0_i32_0, %c0_i32_1 : i32, i32, i32, i32
  }
  func.func @transform_2(%arg0: i32, %arg1: i32) -> (i32, i32, i32, i32) {
    %c1_i32 = arith.constant 1 : i32
    %0 = arith.addi %arg1, %c1_i32 : i32
    %c4_i32 = arith.constant 4 : i32
    %1 = arith.muli %c4_i32, %0 : i32
    %c15_i32 = arith.constant 15 : i32
    %2 = arith.minsi %1, %c15_i32 : i32
    %c0_i32 = arith.constant 0 : i32
    %c0_i32_0 = arith.constant 0 : i32
    %c0_i32_1 = arith.constant 0 : i32
    return %arg0, %2, %c0_i32, %c0_i32_0 : i32, i32, i32, i32
  }
  func.func @transform_3(%arg0: i32, %arg1: i32) -> (i32, i32) {
    %c0_i32 = arith.constant 0 : i32
    %c0_i32_0 = arith.constant 0 : i32
    %c0_i32_1 = arith.constant 0 : i32
    return %c0_i32, %c0_i32_0 : i32, i32
  }
  func.func @transform_4(%arg0: i32, %arg1: i32) -> (i32, i32) {
    %c0_i32 = arith.constant 0 : i32
    %c0_i32_0 = arith.constant 0 : i32
    %c0_i32_1 = arith.constant 0 : i32
    return %c0_i32, %c0_i32_0 : i32, i32
  }
  func.func @transform_5(%arg0: i32, %arg1: i32) -> (i32, i32) {
    %c0_i32 = arith.constant 0 : i32
    %c0_i32_0 = arith.constant 0 : i32
    %c0_i32_1 = arith.constant 0 : i32
    return %c0_i32, %c0_i32_0 : i32, i32
  }
  func.func @transform_6(%arg0: i32, %arg1: i32) -> (i32, i32) {
    %c0_i32 = arith.constant 0 : i32
    %c0_i32_0 = arith.constant 0 : i32
    %c0_i32_1 = arith.constant 0 : i32
    return %c0_i32, %c0_i32_0 : i32, i32
  }
  func.func @transform_7(%arg0: i32, %arg1: i32) -> (i32, i32) {
    %c0_i32 = arith.constant 0 : i32
    %c0_i32_0 = arith.constant 0 : i32
    %c0_i32_1 = arith.constant 0 : i32
    return %c0_i32, %c0_i32_0 : i32, i32
  }
  func.func @transform_8(%arg0: i32, %arg1: i32) -> (i32, i32) {
    %c0_i32 = arith.constant 0 : i32
    %c0_i32_0 = arith.constant 0 : i32
    %c0_i32_1 = arith.constant 0 : i32
    return %c0_i32, %c0_i32_0 : i32, i32
  }
  func.func @transform_9(%arg0: i32, %arg1: i32) -> (i32, i32) {
    %c0_i32 = arith.constant 0 : i32
    %c0_i32_0 = arith.constant 0 : i32
    %c0_i32_1 = arith.constant 0 : i32
    return %c0_i32, %c0_i32_0 : i32, i32
  }
  func.func @transform_10(%arg0: i32, %arg1: i32) -> (i32, i32) {
    %c0_i32 = arith.constant 0 : i32
    %c0_i32_0 = arith.constant 0 : i32
    %c0_i32_1 = arith.constant 0 : i32
    return %c0_i32, %c0_i32_0 : i32, i32
  }
  func.func @transform_11(%arg0: i32, %arg1: i32) -> (i32, i32) {
    %c0_i32 = arith.constant 0 : i32
    %c0_i32_0 = arith.constant 0 : i32
    %c0_i32_1 = arith.constant 0 : i32
    return %c0_i32, %c0_i32_0 : i32, i32
  }
  func.func @transform_12(%arg0: i32, %arg1: i32) -> (i32, i32) {
    %c0_i32 = arith.constant 0 : i32
    %c0_i32_0 = arith.constant 0 : i32
    %c0_i32_1 = arith.constant 0 : i32
    return %c0_i32, %c0_i32_0 : i32, i32
  }
  func.func @transform_13(%arg0: i32, %arg1: i32) -> (i32, i32) {
    %c0_i32 = arith.constant 0 : i32
    %c0_i32_0 = arith.constant 0 : i32
    %c0_i32_1 = arith.constant 0 : i32
    return %c0_i32, %c0_i32_0 : i32, i32
  }
  func.func @transform_14(%arg0: i32, %arg1: i32) -> (i32, i32) {
    %c0_i32 = arith.constant 0 : i32
    %c0_i32_0 = arith.constant 0 : i32
    %c0_i32_1 = arith.constant 0 : i32
    return %c0_i32, %c0_i32_0 : i32, i32
  }
  func.func @transform_15(%arg0: i32, %arg1: i32) -> (i32, i32, i32) {
    %c0_i32 = arith.constant 0 : i32
    %c0_i32_0 = arith.constant 0 : i32
    return %arg0, %arg1, %c0_i32 : i32, i32, i32
  }
  func.func @transform_16(%arg0: i32, %arg1: i32) -> (i32, i32, i32) {
    %c0_i32 = arith.constant 0 : i32
    %c0_i32_0 = arith.constant 0 : i32
    return %arg0, %arg1, %c0_i32 : i32, i32, i32
  }
}

module attributes {stable_mosaic.version = 11 : i64} {
  func.func @kernel(%arg0: i32, %arg1: i32, %arg2: memref<1x4x16x4xbf16, #tpu.memory_space<vmem>>, %arg3: memref<1x1x16x4xbf16, #tpu.memory_space<vmem>>, %arg4: memref<1x1x16x4xbf16, #tpu.memory_space<vmem>>, %arg5: memref<4x4xbf16, #tpu.memory_space<vmem>>, %arg6: memref<1x4xf32, #tpu.memory_space<vmem>>, %arg7: memref<1x4xf32, #tpu.memory_space<vmem>>, %arg8: memref<36x4xbf16, #tpu.memory_space<vmem>>, %arg9: memref<1x4xf32, #tpu.memory_space<vmem>>, %arg10: memref<1x4xf32, #tpu.memory_space<vmem>>, %arg11: memref<4x16xbf16, #tpu.memory_space<vmem>>, %arg12: memref<1x16xf32, #tpu.memory_space<vmem>>, %arg13: memref<1x16xf32, #tpu.memory_space<vmem>>, %arg14: memref<4x16xbf16, #tpu.memory_space<vmem>>, %arg15: memref<1x16xf32, #tpu.memory_space<vmem>>, %arg16: memref<1x16xf32, #tpu.memory_space<vmem>>, %arg17: memref<1x64x16xf32, #tpu.memory_space<vmem>>, %arg18: memref<1x64x16xf32, #tpu.memory_space<vmem>>, %arg19: memref<6x18x4xbf16, #tpu.memory_space<vmem>>) attributes {dimension_semantics = [#tpu.dimension_semantics<parallel>, #tpu.dimension_semantics<parallel>], iteration_bounds = array<i64: 2, 4>, scalar_prefetch = 0 : i64, scratch_operands = 1 : i64, tpu.core_type = #tpu.core_type<tc>, window_params = [{transform_indices = @transform_0, window_bounds = array<i64: 1, 4, 16, 4>}, {transform_indices = @transform_1, window_bounds = array<i64: 1, 1, 16, 4>}, {transform_indices = @transform_2, window_bounds = array<i64: 1, 1, 16, 4>}, {pipeline_mode = #tpu.pipeline_mode<synchronous>, transform_indices = @transform_3, window_bounds = array<i64: 4, 4>}, {pipeline_mode = #tpu.pipeline_mode<synchronous>, transform_indices = @transform_4, window_bounds = array<i64: 1, 4>}, {pipeline_mode = #tpu.pipeline_mode<synchronous>, transform_indices = @transform_5, window_bounds = array<i64: 1, 4>}, {pipeline_mode = #tpu.pipeline_mode<synchronous>, transform_indices = @transform_6, window_bounds = array<i64: 36, 4>}, {pipeline_mode = #tpu.pipeline_mode<synchronous>, transform_indices = @transform_7, window_bounds = array<i64: 1, 4>}, {pipeline_mode = #tpu.pipeline_mode<synchronous>, transform_indices = @transform_8, window_bounds = array<i64: 1, 4>}, {pipeline_mode = #tpu.pipeline_mode<synchronous>, transform_indices = @transform_9, window_bounds = array<i64: 4, 16>}, {pipeline_mode = #tpu.pipeline_mode<synchronous>, transform_indices = @transform_10, window_bounds = array<i64: 1, 16>}, {pipeline_mode = #tpu.pipeline_mode<synchronous>, transform_indices = @transform_11, window_bounds = array<i64: 1, 16>}, {pipeline_mode = #tpu.pipeline_mode<synchronous>, transform_indices = @transform_12, window_bounds = array<i64: 4, 16>}, {pipeline_mode = #tpu.pipeline_mode<synchronous>, transform_indices = @transform_13, window_bounds = array<i64: 1, 16>}, {pipeline_mode = #tpu.pipeline_mode<synchronous>, transform_indices = @transform_14, window_bounds = array<i64: 1, 16>}, {transform_indices = @transform_15, window_bounds = array<i64: 1, 64, 16>}, {transform_indices = @transform_16, window_bounds = array<i64: 1, 64, 16>}]} {
    %c0 = arith.constant 0 : index
    %c0_0 = arith.constant 0 : index
    %c0_1 = arith.constant 0 : index
    %c0_2 = arith.constant 0 : index
    %0 = vector.load %arg2[%c0, %c0_0, %c0_1, %c0_2] : memref<1x4x16x4xbf16, #tpu.memory_space<vmem>>, vector<1x4x16x4xbf16>
    %1 = vector.shape_cast %0 : vector<1x4x16x4xbf16> to vector<4x16x4xbf16>
    %c0_3 = arith.constant 0 : index
    %c0_4 = arith.constant 0 : index
    %c0_5 = arith.constant 0 : index
    %c0_6 = arith.constant 0 : index
    %2 = vector.load %arg3[%c0_3, %c0_4, %c0_5, %c0_6] : memref<1x1x16x4xbf16, #tpu.memory_space<vmem>>, vector<1x1x16x4xbf16>
    %3 = vector.shape_cast %2 : vector<1x1x16x4xbf16> to vector<1x16x4xbf16>
    %c0_7 = arith.constant 0 : index
    %c0_8 = arith.constant 0 : index
    %c0_9 = arith.constant 0 : index
    %c0_10 = arith.constant 0 : index
    %4 = vector.load %arg4[%c0_7, %c0_8, %c0_9, %c0_10] : memref<1x1x16x4xbf16, #tpu.memory_space<vmem>>, vector<1x1x16x4xbf16>
    %5 = vector.shape_cast %4 : vector<1x1x16x4xbf16> to vector<1x16x4xbf16>
    %6 = tpu.concatenate %3, %1, %5 in 0 : vector<1x16x4xbf16>, vector<4x16x4xbf16>, vector<1x16x4xbf16> -> vector<6x16x4xbf16>
    %7 = vector.shape_cast %6 : vector<6x16x4xbf16> to vector<96x4xbf16>
    %c0_11 = arith.constant 0 : index
    %c0_12 = arith.constant 0 : index
    %8 = vector.load %arg5[%c0_11, %c0_12] : memref<4x4xbf16, #tpu.memory_space<vmem>>, vector<4x4xbf16>
    %cst = arith.constant dense<0.000000e+00> : vector<96x4xf32>
    %9 = tpu.matmul %7, %8, %cst {dimension_numbers = #tpu.dot_dimension_numbers<[1], [0], [0], [1], [0, 0, 1, 1], [], []>} : vector<96x4xbf16>, vector<4x4xbf16>, vector<96x4xf32> -> vector<96x4xf32>
    %c0_13 = arith.constant 0 : index
    %c0_14 = arith.constant 0 : index
    %10 = vector.load %arg6[%c0_13, %c0_14] : memref<1x4xf32, #tpu.memory_space<vmem>>, vector<1x4xf32>
    %11 = vector.broadcast %10 : vector<1x4xf32> to vector<96x4xf32>
    %12 = arith.mulf %9, %11 : vector<96x4xf32>
    %c0_15 = arith.constant 0 : index
    %c0_16 = arith.constant 0 : index
    %13 = vector.load %arg7[%c0_15, %c0_16] : memref<1x4xf32, #tpu.memory_space<vmem>>, vector<1x4xf32>
    %14 = vector.broadcast %13 : vector<1x4xf32> to vector<96x4xf32>
    %15 = arith.addf %12, %14 : vector<96x4xf32>
    %cst_17 = arith.constant 0.000000e+00 : f32
    %16 = vector.broadcast %cst_17 : f32 to vector<96x4xf32>
    %17 = arith.maximumf %15, %16 : vector<96x4xf32>
    %18 = arith.truncf %17 : vector<96x4xf32> to vector<96x4xbf16>
    %19 = vector.shape_cast %18 : vector<96x4xbf16> to vector<6x16x4xbf16>
    %c0_18 = arith.constant 0 : index
    %c1 = arith.constant 1 : index
    %c0_19 = arith.constant 0 : index
    %20 = vector.load %arg19[%c0_18, %c1, %c0_19] : memref<6x18x4xbf16, #tpu.memory_space<vmem>>, vector<6x16x4xbf16>
    tpu.vector_store %arg19[%c0_18, %c1, %c0_19], %19 {strides = array<i32>} : memref<6x18x4xbf16, #tpu.memory_space<vmem>>, vector<6x16x4xbf16>,
    %cst_20 = arith.constant 0.000000e+00 : bf16
    %21 = vector.broadcast %cst_20 : bf16 to vector<6x1x4xbf16>
    %c0_21 = arith.constant 0 : index
    %c0_22 = arith.constant 0 : index
    %c0_23 = arith.constant 0 : index
    %22 = vector.load %arg19[%c0_21, %c0_22, %c0_23] : memref<6x18x4xbf16, #tpu.memory_space<vmem>>, vector<6x1x4xbf16>
    tpu.vector_store %arg19[%c0_21, %c0_22, %c0_23], %21 {strides = array<i32>} : memref<6x18x4xbf16, #tpu.memory_space<vmem>>, vector<6x1x4xbf16>,
    %c0_24 = arith.constant 0 : index
    %c17 = arith.constant 17 : index
    %c0_25 = arith.constant 0 : index
    %23 = vector.load %arg19[%c0_24, %c17, %c0_25] : memref<6x18x4xbf16, #tpu.memory_space<vmem>>, vector<6x1x4xbf16>
    tpu.vector_store %arg19[%c0_24, %c17, %c0_25], %21 {strides = array<i32>} : memref<6x18x4xbf16, #tpu.memory_space<vmem>>, vector<6x1x4xbf16>,
    %c0_i32 = arith.constant 0 : i32
    %24 = arith.cmpi eq, %arg1, %c0_i32 : i32
    %25 = arith.extui %24 : i1 to i32
    %c0_i32_26 = arith.constant 0 : i32
    %26 = arith.cmpi ne, %25, %c0_i32_26 : i32
    scf.if %26 {
      %cst_83 = arith.constant 0.000000e+00 : bf16
      %76 = vector.broadcast %cst_83 : bf16 to vector<1x18x4xbf16>
      %c0_84 = arith.constant 0 : index
      %c0_85 = arith.constant 0 : index
      %c0_86 = arith.constant 0 : index
      %77 = vector.load %arg19[%c0_84, %c0_85, %c0_86] : memref<6x18x4xbf16, #tpu.memory_space<vmem>>, vector<1x18x4xbf16>
      tpu.vector_store %arg19[%c0_84, %c0_85, %c0_86], %76 {strides = array<i32>} : memref<6x18x4xbf16, #tpu.memory_space<vmem>>, vector<1x18x4xbf16>,
    } else {
    }
    %c3_i32 = arith.constant 3 : i32
    %27 = arith.cmpi eq, %arg1, %c3_i32 : i32
    %28 = arith.extui %27 : i1 to i32
    %c0_i32_27 = arith.constant 0 : i32
    %29 = arith.cmpi ne, %28, %c0_i32_27 : i32
    scf.if %29 {
      %cst_83 = arith.constant 0.000000e+00 : bf16
      %76 = vector.broadcast %cst_83 : bf16 to vector<1x18x4xbf16>
      %c5 = arith.constant 5 : index
      %c0_84 = arith.constant 0 : index
      %c0_85 = arith.constant 0 : index
      %77 = vector.load %arg19[%c5, %c0_84, %c0_85] : memref<6x18x4xbf16, #tpu.memory_space<vmem>>, vector<1x18x4xbf16>
      tpu.vector_store %arg19[%c5, %c0_84, %c0_85], %76 {strides = array<i32>} : memref<6x18x4xbf16, #tpu.memory_space<vmem>>, vector<1x18x4xbf16>,
    } else {
    }
    %c0_28 = arith.constant 0 : index
    %c0_29 = arith.constant 0 : index
    %c0_30 = arith.constant 0 : index
    %30 = vector.load %arg19[%c0_28, %c0_29, %c0_30] : memref<6x18x4xbf16, #tpu.memory_space<vmem>>, vector<4x16x4xbf16>
    %c0_31 = arith.constant 0 : index
    %c1_32 = arith.constant 1 : index
    %c0_33 = arith.constant 0 : index
    %31 = vector.load %arg19[%c0_31, %c1_32, %c0_33] : memref<6x18x4xbf16, #tpu.memory_space<vmem>>, vector<4x16x4xbf16>
    %c0_34 = arith.constant 0 : index
    %c2 = arith.constant 2 : index
    %c0_35 = arith.constant 0 : index
    %32 = vector.load %arg19[%c0_34, %c2, %c0_35] : memref<6x18x4xbf16, #tpu.memory_space<vmem>>, vector<4x16x4xbf16>
    %c1_36 = arith.constant 1 : index
    %c0_37 = arith.constant 0 : index
    %c0_38 = arith.constant 0 : index
    %33 = vector.load %arg19[%c1_36, %c0_37, %c0_38] : memref<6x18x4xbf16, #tpu.memory_space<vmem>>, vector<4x16x4xbf16>
    %c1_39 = arith.constant 1 : index
    %c1_40 = arith.constant 1 : index
    %c0_41 = arith.constant 0 : index
    %34 = vector.load %arg19[%c1_39, %c1_40, %c0_41] : memref<6x18x4xbf16, #tpu.memory_space<vmem>>, vector<4x16x4xbf16>
    %c1_42 = arith.constant 1 : index
    %c2_43 = arith.constant 2 : index
    %c0_44 = arith.constant 0 : index
    %35 = vector.load %arg19[%c1_42, %c2_43, %c0_44] : memref<6x18x4xbf16, #tpu.memory_space<vmem>>, vector<4x16x4xbf16>
    %c2_45 = arith.constant 2 : index
    %c0_46 = arith.constant 0 : index
    %c0_47 = arith.constant 0 : index
    %36 = vector.load %arg19[%c2_45, %c0_46, %c0_47] : memref<6x18x4xbf16, #tpu.memory_space<vmem>>, vector<4x16x4xbf16>
    %c2_48 = arith.constant 2 : index
    %c1_49 = arith.constant 1 : index
    %c0_50 = arith.constant 0 : index
    %37 = vector.load %arg19[%c2_48, %c1_49, %c0_50] : memref<6x18x4xbf16, #tpu.memory_space<vmem>>, vector<4x16x4xbf16>
    %c2_51 = arith.constant 2 : index
    %c2_52 = arith.constant 2 : index
    %c0_53 = arith.constant 0 : index
    %38 = vector.load %arg19[%c2_51, %c2_52, %c0_53] : memref<6x18x4xbf16, #tpu.memory_space<vmem>>, vector<4x16x4xbf16>
    %39 = tpu.concatenate %30, %31, %32, %33, %34, %35, %36, %37, %38 in 2 : vector<4x16x4xbf16>, vector<4x16x4xbf16>, vector<4x16x4xbf16>, vector<4x16x4xbf16>, vector<4x16x4xbf16>, vector<4x16x4xbf16>, vector<4x16x4xbf16>, vector<4x16x4xbf16>, vector<4x16x4xbf16> -> vector<4x16x36xbf16>
    %40 = vector.shape_cast %39 : vector<4x16x36xbf16> to vector<64x36xbf16>
    %c0_54 = arith.constant 0 : index
    %c0_55 = arith.constant 0 : index
    %41 = vector.load %arg8[%c0_54, %c0_55] : memref<36x4xbf16, #tpu.memory_space<vmem>>, vector<36x4xbf16>
    %cst_56 = arith.constant dense<0.000000e+00> : vector<64x4xf32>
    %42 = tpu.matmul %40, %41, %cst_56 {dimension_numbers = #tpu.dot_dimension_numbers<[1], [0], [0], [1], [0, 0, 1, 1], [], []>} : vector<64x36xbf16>, vector<36x4xbf16>, vector<64x4xf32> -> vector<64x4xf32>
    %c0_57 = arith.constant 0 : index
    %c0_58 = arith.constant 0 : index
    %43 = vector.load %arg9[%c0_57, %c0_58] : memref<1x4xf32, #tpu.memory_space<vmem>>, vector<1x4xf32>
    %44 = vector.broadcast %43 : vector<1x4xf32> to vector<64x4xf32>
    %45 = arith.mulf %42, %44 : vector<64x4xf32>
    %c0_59 = arith.constant 0 : index
    %c0_60 = arith.constant 0 : index
    %46 = vector.load %arg10[%c0_59, %c0_60] : memref<1x4xf32, #tpu.memory_space<vmem>>, vector<1x4xf32>
    %47 = vector.broadcast %46 : vector<1x4xf32> to vector<64x4xf32>
    %48 = arith.addf %45, %47 : vector<64x4xf32>
    %cst_61 = arith.constant 0.000000e+00 : f32
    %49 = vector.broadcast %cst_61 : f32 to vector<64x4xf32>
    %50 = arith.maximumf %48, %49 : vector<64x4xf32>
    %51 = arith.truncf %50 : vector<64x4xf32> to vector<64x4xbf16>
    %c0_62 = arith.constant 0 : index
    %c0_63 = arith.constant 0 : index
    %52 = vector.load %arg11[%c0_62, %c0_63] : memref<4x16xbf16, #tpu.memory_space<vmem>>, vector<4x16xbf16>
    %cst_64 = arith.constant dense<0.000000e+00> : vector<64x16xf32>
    %53 = tpu.matmul %51, %52, %cst_64 {dimension_numbers = #tpu.dot_dimension_numbers<[1], [0], [0], [1], [0, 0, 1, 1], [], []>} : vector<64x4xbf16>, vector<4x16xbf16>, vector<64x16xf32> -> vector<64x16xf32>
    %c0_65 = arith.constant 0 : index
    %c0_66 = arith.constant 0 : index
    %54 = vector.load %arg12[%c0_65, %c0_66] : memref<1x16xf32, #tpu.memory_space<vmem>>, vector<1x16xf32>
    %55 = vector.broadcast %54 : vector<1x16xf32> to vector<64x16xf32>
    %56 = arith.mulf %53, %55 : vector<64x16xf32>
    %c0_67 = arith.constant 0 : index
    %c0_68 = arith.constant 0 : index
    %57 = vector.load %arg13[%c0_67, %c0_68] : memref<1x16xf32, #tpu.memory_space<vmem>>, vector<1x16xf32>
    %58 = vector.broadcast %57 : vector<1x16xf32> to vector<64x16xf32>
    %59 = arith.addf %56, %58 : vector<64x16xf32>
    %60 = vector.shape_cast %1 : vector<4x16x4xbf16> to vector<64x4xbf16>
    %c0_69 = arith.constant 0 : index
    %c0_70 = arith.constant 0 : index
    %61 = vector.load %arg14[%c0_69, %c0_70] : memref<4x16xbf16, #tpu.memory_space<vmem>>, vector<4x16xbf16>
    %cst_71 = arith.constant dense<0.000000e+00> : vector<64x16xf32>
    %62 = tpu.matmul %60, %61, %cst_71 {dimension_numbers = #tpu.dot_dimension_numbers<[1], [0], [0], [1], [0, 0, 1, 1], [], []>} : vector<64x4xbf16>, vector<4x16xbf16>, vector<64x16xf32> -> vector<64x16xf32>
    %c0_72 = arith.constant 0 : index
    %c0_73 = arith.constant 0 : index
    %63 = vector.load %arg15[%c0_72, %c0_73] : memref<1x16xf32, #tpu.memory_space<vmem>>, vector<1x16xf32>
    %64 = vector.broadcast %63 : vector<1x16xf32> to vector<64x16xf32>
    %65 = arith.mulf %62, %64 : vector<64x16xf32>
    %c0_74 = arith.constant 0 : index
    %c0_75 = arith.constant 0 : index
    %66 = vector.load %arg16[%c0_74, %c0_75] : memref<1x16xf32, #tpu.memory_space<vmem>>, vector<1x16xf32>
    %67 = vector.broadcast %66 : vector<1x16xf32> to vector<64x16xf32>
    %68 = arith.addf %65, %67 : vector<64x16xf32>
    %69 = arith.addf %59, %68 : vector<64x16xf32>
    %cst_76 = arith.constant 0.000000e+00 : f32
    %70 = vector.broadcast %cst_76 : f32 to vector<64x16xf32>
    %71 = arith.maximumf %69, %70 : vector<64x16xf32>
    %72 = vector.shape_cast %71 : vector<64x16xf32> to vector<1x64x16xf32>
    %c0_77 = arith.constant 0 : index
    %c0_78 = arith.constant 0 : index
    %c0_79 = arith.constant 0 : index
    %73 = vector.load %arg17[%c0_77, %c0_78, %c0_79] : memref<1x64x16xf32, #tpu.memory_space<vmem>>, vector<1x64x16xf32>
    tpu.vector_store %arg17[%c0_77, %c0_78, %c0_79], %72 {strides = array<i32>} : memref<1x64x16xf32, #tpu.memory_space<vmem>>, vector<1x64x16xf32>,
    %74 = vector.shape_cast %69 : vector<64x16xf32> to vector<1x64x16xf32>
    %c0_80 = arith.constant 0 : index
    %c0_81 = arith.constant 0 : index
    %c0_82 = arith.constant 0 : index
    %75 = vector.load %arg18[%c0_80, %c0_81, %c0_82] : memref<1x64x16xf32, #tpu.memory_space<vmem>>, vector<1x64x16xf32>
    tpu.vector_store %arg18[%c0_80, %c0_81, %c0_82], %74 {strides = array<i32>} : memref<1x64x16xf32, #tpu.memory_space<vmem>>, vector<1x64x16xf32>,
    return
  }
  func.func @transform_0(%arg0: i32, %arg1: i32) -> (i32, i32, i32, i32) {
    %c0_i32 = arith.constant 0 : i32
    %c0_i32_0 = arith.constant 0 : i32
    %c0_i32_1 = arith.constant 0 : i32
    return %arg0, %arg1, %c0_i32, %c0_i32_0 : i32, i32, i32, i32
  }
  func.func @transform_1(%arg0: i32, %arg1: i32) -> (i32, i32, i32, i32) {
    %c4_i32 = arith.constant 4 : i32
    %0 = arith.muli %c4_i32, %arg1 : i32
    %c1_i32 = arith.constant 1 : i32
    %1 = arith.subi %0, %c1_i32 : i32
    %c0_i32 = arith.constant 0 : i32
    %2 = arith.maxsi %1, %c0_i32 : i32
    %c0_i32_0 = arith.constant 0 : i32
    %c0_i32_1 = arith.constant 0 : i32
    %c0_i32_2 = arith.constant 0 : i32
    return %arg0, %2, %c0_i32_0, %c0_i32_1 : i32, i32, i32, i32
  }
  func.func @transform_2(%arg0: i32, %arg1: i32) -> (i32, i32, i32, i32) {
    %c1_i32 = arith.constant 1 : i32
    %0 = arith.addi %arg1, %c1_i32 : i32
    %c4_i32 = arith.constant 4 : i32
    %1 = arith.muli %c4_i32, %0 : i32
    %c15_i32 = arith.constant 15 : i32
    %2 = arith.minsi %1, %c15_i32 : i32
    %c0_i32 = arith.constant 0 : i32
    %c0_i32_0 = arith.constant 0 : i32
    %c0_i32_1 = arith.constant 0 : i32
    return %arg0, %2, %c0_i32, %c0_i32_0 : i32, i32, i32, i32
  }
  func.func @transform_3(%arg0: i32, %arg1: i32) -> (i32, i32) {
    %c0_i32 = arith.constant 0 : i32
    %c0_i32_0 = arith.constant 0 : i32
    %c0_i32_1 = arith.constant 0 : i32
    return %c0_i32, %c0_i32_0 : i32, i32
  }
  func.func @transform_4(%arg0: i32, %arg1: i32) -> (i32, i32) {
    %c0_i32 = arith.constant 0 : i32
    %c0_i32_0 = arith.constant 0 : i32
    %c0_i32_1 = arith.constant 0 : i32
    return %c0_i32, %c0_i32_0 : i32, i32
  }
  func.func @transform_5(%arg0: i32, %arg1: i32) -> (i32, i32) {
    %c0_i32 = arith.constant 0 : i32
    %c0_i32_0 = arith.constant 0 : i32
    %c0_i32_1 = arith.constant 0 : i32
    return %c0_i32, %c0_i32_0 : i32, i32
  }
  func.func @transform_6(%arg0: i32, %arg1: i32) -> (i32, i32) {
    %c0_i32 = arith.constant 0 : i32
    %c0_i32_0 = arith.constant 0 : i32
    %c0_i32_1 = arith.constant 0 : i32
    return %c0_i32, %c0_i32_0 : i32, i32
  }
  func.func @transform_7(%arg0: i32, %arg1: i32) -> (i32, i32) {
    %c0_i32 = arith.constant 0 : i32
    %c0_i32_0 = arith.constant 0 : i32
    %c0_i32_1 = arith.constant 0 : i32
    return %c0_i32, %c0_i32_0 : i32, i32
  }
  func.func @transform_8(%arg0: i32, %arg1: i32) -> (i32, i32) {
    %c0_i32 = arith.constant 0 : i32
    %c0_i32_0 = arith.constant 0 : i32
    %c0_i32_1 = arith.constant 0 : i32
    return %c0_i32, %c0_i32_0 : i32, i32
  }
  func.func @transform_9(%arg0: i32, %arg1: i32) -> (i32, i32) {
    %c0_i32 = arith.constant 0 : i32
    %c0_i32_0 = arith.constant 0 : i32
    %c0_i32_1 = arith.constant 0 : i32
    return %c0_i32, %c0_i32_0 : i32, i32
  }
  func.func @transform_10(%arg0: i32, %arg1: i32) -> (i32, i32) {
    %c0_i32 = arith.constant 0 : i32
    %c0_i32_0 = arith.constant 0 : i32
    %c0_i32_1 = arith.constant 0 : i32
    return %c0_i32, %c0_i32_0 : i32, i32
  }
  func.func @transform_11(%arg0: i32, %arg1: i32) -> (i32, i32) {
    %c0_i32 = arith.constant 0 : i32
    %c0_i32_0 = arith.constant 0 : i32
    %c0_i32_1 = arith.constant 0 : i32
    return %c0_i32, %c0_i32_0 : i32, i32
  }
  func.func @transform_12(%arg0: i32, %arg1: i32) -> (i32, i32) {
    %c0_i32 = arith.constant 0 : i32
    %c0_i32_0 = arith.constant 0 : i32
    %c0_i32_1 = arith.constant 0 : i32
    return %c0_i32, %c0_i32_0 : i32, i32
  }
  func.func @transform_13(%arg0: i32, %arg1: i32) -> (i32, i32) {
    %c0_i32 = arith.constant 0 : i32
    %c0_i32_0 = arith.constant 0 : i32
    %c0_i32_1 = arith.constant 0 : i32
    return %c0_i32, %c0_i32_0 : i32, i32
  }
  func.func @transform_14(%arg0: i32, %arg1: i32) -> (i32, i32) {
    %c0_i32 = arith.constant 0 : i32
    %c0_i32_0 = arith.constant 0 : i32
    %c0_i32_1 = arith.constant 0 : i32
    return %c0_i32, %c0_i32_0 : i32, i32
  }
  func.func @transform_15(%arg0: i32, %arg1: i32) -> (i32, i32, i32) {
    %c0_i32 = arith.constant 0 : i32
    %c0_i32_0 = arith.constant 0 : i32
    return %arg0, %arg1, %c0_i32 : i32, i32, i32
  }
  func.func @transform_16(%arg0: i32, %arg1: i32) -> (i32, i32, i32) {
    %c0_i32 = arith.constant 0 : i32
    %c0_i32_0 = arith.constant 0 : i32
    return %arg0, %arg1, %c0_i32 : i32, i32, i32
  }
}

module attributes {stable_mosaic.version = 11 : i64} {
  func.func @kernel(%arg0: i32, %arg1: i32, %arg2: memref<1x4x16x4xbf16, #tpu.memory_space<vmem>>, %arg3: memref<1x1x16x4xbf16, #tpu.memory_space<vmem>>, %arg4: memref<1x1x16x4xbf16, #tpu.memory_space<vmem>>, %arg5: memref<4x4xbf16, #tpu.memory_space<vmem>>, %arg6: memref<1x4xf32, #tpu.memory_space<vmem>>, %arg7: memref<1x4xf32, #tpu.memory_space<vmem>>, %arg8: memref<36x4xbf16, #tpu.memory_space<vmem>>, %arg9: memref<1x4xf32, #tpu.memory_space<vmem>>, %arg10: memref<1x4xf32, #tpu.memory_space<vmem>>, %arg11: memref<4x16xbf16, #tpu.memory_space<vmem>>, %arg12: memref<1x16xf32, #tpu.memory_space<vmem>>, %arg13: memref<1x16xf32, #tpu.memory_space<vmem>>, %arg14: memref<4x16xbf16, #tpu.memory_space<vmem>>, %arg15: memref<1x16xf32, #tpu.memory_space<vmem>>, %arg16: memref<1x16xf32, #tpu.memory_space<vmem>>, %arg17: memref<1x64x16xf32, #tpu.memory_space<vmem>>, %arg18: memref<1x64x16xf32, #tpu.memory_space<vmem>>, %arg19: memref<6x18x4xbf16, #tpu.memory_space<vmem>>) attributes {dimension_semantics = [#tpu.dimension_semantics<parallel>, #tpu.dimension_semantics<parallel>], iteration_bounds = array<i64: 2, 4>, scalar_prefetch = 0 : i64, scratch_operands = 1 : i64, tpu.core_type = #tpu.core_type<tc>, window_params = [{transform_indices = @transform_0, window_bounds = array<i64: 1, 4, 16, 4>}, {transform_indices = @transform_1, window_bounds = array<i64: 1, 1, 16, 4>}, {transform_indices = @transform_2, window_bounds = array<i64: 1, 1, 16, 4>}, {pipeline_mode = #tpu.pipeline_mode<synchronous>, transform_indices = @transform_3, window_bounds = array<i64: 4, 4>}, {pipeline_mode = #tpu.pipeline_mode<synchronous>, transform_indices = @transform_4, window_bounds = array<i64: 1, 4>}, {pipeline_mode = #tpu.pipeline_mode<synchronous>, transform_indices = @transform_5, window_bounds = array<i64: 1, 4>}, {pipeline_mode = #tpu.pipeline_mode<synchronous>, transform_indices = @transform_6, window_bounds = array<i64: 36, 4>}, {pipeline_mode = #tpu.pipeline_mode<synchronous>, transform_indices = @transform_7, window_bounds = array<i64: 1, 4>}, {pipeline_mode = #tpu.pipeline_mode<synchronous>, transform_indices = @transform_8, window_bounds = array<i64: 1, 4>}, {pipeline_mode = #tpu.pipeline_mode<synchronous>, transform_indices = @transform_9, window_bounds = array<i64: 4, 16>}, {pipeline_mode = #tpu.pipeline_mode<synchronous>, transform_indices = @transform_10, window_bounds = array<i64: 1, 16>}, {pipeline_mode = #tpu.pipeline_mode<synchronous>, transform_indices = @transform_11, window_bounds = array<i64: 1, 16>}, {pipeline_mode = #tpu.pipeline_mode<synchronous>, transform_indices = @transform_12, window_bounds = array<i64: 4, 16>}, {pipeline_mode = #tpu.pipeline_mode<synchronous>, transform_indices = @transform_13, window_bounds = array<i64: 1, 16>}, {pipeline_mode = #tpu.pipeline_mode<synchronous>, transform_indices = @transform_14, window_bounds = array<i64: 1, 16>}, {transform_indices = @transform_15, window_bounds = array<i64: 1, 64, 16>}, {transform_indices = @transform_16, window_bounds = array<i64: 1, 64, 16>}]} {
    %c0 = arith.constant 0 : index
    %c0_0 = arith.constant 0 : index
    %c0_1 = arith.constant 0 : index
    %c0_2 = arith.constant 0 : index
    %0 = vector.load %arg2[%c0, %c0_0, %c0_1, %c0_2] : memref<1x4x16x4xbf16, #tpu.memory_space<vmem>>, vector<1x4x16x4xbf16>
    %1 = vector.shape_cast %0 : vector<1x4x16x4xbf16> to vector<4x16x4xbf16>
    %c0_3 = arith.constant 0 : index
    %c0_4 = arith.constant 0 : index
    %c0_5 = arith.constant 0 : index
    %c0_6 = arith.constant 0 : index
    %2 = vector.load %arg3[%c0_3, %c0_4, %c0_5, %c0_6] : memref<1x1x16x4xbf16, #tpu.memory_space<vmem>>, vector<1x1x16x4xbf16>
    %3 = vector.shape_cast %2 : vector<1x1x16x4xbf16> to vector<1x16x4xbf16>
    %c0_7 = arith.constant 0 : index
    %c0_8 = arith.constant 0 : index
    %c0_9 = arith.constant 0 : index
    %c0_10 = arith.constant 0 : index
    %4 = vector.load %arg4[%c0_7, %c0_8, %c0_9, %c0_10] : memref<1x1x16x4xbf16, #tpu.memory_space<vmem>>, vector<1x1x16x4xbf16>
    %5 = vector.shape_cast %4 : vector<1x1x16x4xbf16> to vector<1x16x4xbf16>
    %6 = tpu.concatenate %3, %1, %5 in 0 : vector<1x16x4xbf16>, vector<4x16x4xbf16>, vector<1x16x4xbf16> -> vector<6x16x4xbf16>
    %7 = vector.shape_cast %6 : vector<6x16x4xbf16> to vector<96x4xbf16>
    %c0_11 = arith.constant 0 : index
    %c0_12 = arith.constant 0 : index
    %8 = vector.load %arg5[%c0_11, %c0_12] : memref<4x4xbf16, #tpu.memory_space<vmem>>, vector<4x4xbf16>
    %cst = arith.constant dense<0.000000e+00> : vector<96x4xf32>
    %9 = tpu.matmul %7, %8, %cst {dimension_numbers = #tpu.dot_dimension_numbers<[1], [0], [0], [1], [0, 0, 1, 1], [], []>} : vector<96x4xbf16>, vector<4x4xbf16>, vector<96x4xf32> -> vector<96x4xf32>
    %c0_13 = arith.constant 0 : index
    %c0_14 = arith.constant 0 : index
    %10 = vector.load %arg6[%c0_13, %c0_14] : memref<1x4xf32, #tpu.memory_space<vmem>>, vector<1x4xf32>
    %11 = vector.broadcast %10 : vector<1x4xf32> to vector<96x4xf32>
    %12 = arith.mulf %9, %11 : vector<96x4xf32>
    %c0_15 = arith.constant 0 : index
    %c0_16 = arith.constant 0 : index
    %13 = vector.load %arg7[%c0_15, %c0_16] : memref<1x4xf32, #tpu.memory_space<vmem>>, vector<1x4xf32>
    %14 = vector.broadcast %13 : vector<1x4xf32> to vector<96x4xf32>
    %15 = arith.addf %12, %14 : vector<96x4xf32>
    %cst_17 = arith.constant 0.000000e+00 : f32
    %16 = vector.broadcast %cst_17 : f32 to vector<96x4xf32>
    %17 = arith.maximumf %15, %16 : vector<96x4xf32>
    %18 = arith.truncf %17 : vector<96x4xf32> to vector<96x4xbf16>
    %19 = vector.shape_cast %18 : vector<96x4xbf16> to vector<6x16x4xbf16>
    %c0_18 = arith.constant 0 : index
    %c1 = arith.constant 1 : index
    %c0_19 = arith.constant 0 : index
    %20 = vector.load %arg19[%c0_18, %c1, %c0_19] : memref<6x18x4xbf16, #tpu.memory_space<vmem>>, vector<6x16x4xbf16>
    tpu.vector_store %arg19[%c0_18, %c1, %c0_19], %19 {strides = array<i32>} : memref<6x18x4xbf16, #tpu.memory_space<vmem>>, vector<6x16x4xbf16>,
    %cst_20 = arith.constant 0.000000e+00 : bf16
    %21 = vector.broadcast %cst_20 : bf16 to vector<6x1x4xbf16>
    %c0_21 = arith.constant 0 : index
    %c0_22 = arith.constant 0 : index
    %c0_23 = arith.constant 0 : index
    %22 = vector.load %arg19[%c0_21, %c0_22, %c0_23] : memref<6x18x4xbf16, #tpu.memory_space<vmem>>, vector<6x1x4xbf16>
    tpu.vector_store %arg19[%c0_21, %c0_22, %c0_23], %21 {strides = array<i32>} : memref<6x18x4xbf16, #tpu.memory_space<vmem>>, vector<6x1x4xbf16>,
    %c0_24 = arith.constant 0 : index
    %c17 = arith.constant 17 : index
    %c0_25 = arith.constant 0 : index
    %23 = vector.load %arg19[%c0_24, %c17, %c0_25] : memref<6x18x4xbf16, #tpu.memory_space<vmem>>, vector<6x1x4xbf16>
    tpu.vector_store %arg19[%c0_24, %c17, %c0_25], %21 {strides = array<i32>} : memref<6x18x4xbf16, #tpu.memory_space<vmem>>, vector<6x1x4xbf16>,
    %c0_i32 = arith.constant 0 : i32
    %24 = arith.cmpi eq, %arg1, %c0_i32 : i32
    %25 = arith.extui %24 : i1 to i32
    %c0_i32_26 = arith.constant 0 : i32
    %26 = arith.cmpi ne, %25, %c0_i32_26 : i32
    scf.if %26 {
      %cst_83 = arith.constant 0.000000e+00 : bf16
      %76 = vector.broadcast %cst_83 : bf16 to vector<1x18x4xbf16>
      %c0_84 = arith.constant 0 : index
      %c0_85 = arith.constant 0 : index
      %c0_86 = arith.constant 0 : index
      %77 = vector.load %arg19[%c0_84, %c0_85, %c0_86] : memref<6x18x4xbf16, #tpu.memory_space<vmem>>, vector<1x18x4xbf16>
      tpu.vector_store %arg19[%c0_84, %c0_85, %c0_86], %76 {strides = array<i32>} : memref<6x18x4xbf16, #tpu.memory_space<vmem>>, vector<1x18x4xbf16>,
    } else {
    }
    %c3_i32 = arith.constant 3 : i32
    %27 = arith.cmpi eq, %arg1, %c3_i32 : i32
    %28 = arith.extui %27 : i1 to i32
    %c0_i32_27 = arith.constant 0 : i32
    %29 = arith.cmpi ne, %28, %c0_i32_27 : i32
    scf.if %29 {
      %cst_83 = arith.constant 0.000000e+00 : bf16
      %76 = vector.broadcast %cst_83 : bf16 to vector<1x18x4xbf16>
      %c5 = arith.constant 5 : index
      %c0_84 = arith.constant 0 : index
      %c0_85 = arith.constant 0 : index
      %77 = vector.load %arg19[%c5, %c0_84, %c0_85] : memref<6x18x4xbf16, #tpu.memory_space<vmem>>, vector<1x18x4xbf16>
      tpu.vector_store %arg19[%c5, %c0_84, %c0_85], %76 {strides = array<i32>} : memref<6x18x4xbf16, #tpu.memory_space<vmem>>, vector<1x18x4xbf16>,
    } else {
    }
    %c0_28 = arith.constant 0 : index
    %c0_29 = arith.constant 0 : index
    %c0_30 = arith.constant 0 : index
    %30 = vector.load %arg19[%c0_28, %c0_29, %c0_30] : memref<6x18x4xbf16, #tpu.memory_space<vmem>>, vector<4x16x4xbf16>
    %c0_31 = arith.constant 0 : index
    %c1_32 = arith.constant 1 : index
    %c0_33 = arith.constant 0 : index
    %31 = vector.load %arg19[%c0_31, %c1_32, %c0_33] : memref<6x18x4xbf16, #tpu.memory_space<vmem>>, vector<4x16x4xbf16>
    %c0_34 = arith.constant 0 : index
    %c2 = arith.constant 2 : index
    %c0_35 = arith.constant 0 : index
    %32 = vector.load %arg19[%c0_34, %c2, %c0_35] : memref<6x18x4xbf16, #tpu.memory_space<vmem>>, vector<4x16x4xbf16>
    %c1_36 = arith.constant 1 : index
    %c0_37 = arith.constant 0 : index
    %c0_38 = arith.constant 0 : index
    %33 = vector.load %arg19[%c1_36, %c0_37, %c0_38] : memref<6x18x4xbf16, #tpu.memory_space<vmem>>, vector<4x16x4xbf16>
    %c1_39 = arith.constant 1 : index
    %c1_40 = arith.constant 1 : index
    %c0_41 = arith.constant 0 : index
    %34 = vector.load %arg19[%c1_39, %c1_40, %c0_41] : memref<6x18x4xbf16, #tpu.memory_space<vmem>>, vector<4x16x4xbf16>
    %c1_42 = arith.constant 1 : index
    %c2_43 = arith.constant 2 : index
    %c0_44 = arith.constant 0 : index
    %35 = vector.load %arg19[%c1_42, %c2_43, %c0_44] : memref<6x18x4xbf16, #tpu.memory_space<vmem>>, vector<4x16x4xbf16>
    %c2_45 = arith.constant 2 : index
    %c0_46 = arith.constant 0 : index
    %c0_47 = arith.constant 0 : index
    %36 = vector.load %arg19[%c2_45, %c0_46, %c0_47] : memref<6x18x4xbf16, #tpu.memory_space<vmem>>, vector<4x16x4xbf16>
    %c2_48 = arith.constant 2 : index
    %c1_49 = arith.constant 1 : index
    %c0_50 = arith.constant 0 : index
    %37 = vector.load %arg19[%c2_48, %c1_49, %c0_50] : memref<6x18x4xbf16, #tpu.memory_space<vmem>>, vector<4x16x4xbf16>
    %c2_51 = arith.constant 2 : index
    %c2_52 = arith.constant 2 : index
    %c0_53 = arith.constant 0 : index
    %38 = vector.load %arg19[%c2_51, %c2_52, %c0_53] : memref<6x18x4xbf16, #tpu.memory_space<vmem>>, vector<4x16x4xbf16>
    %39 = tpu.concatenate %30, %31, %32, %33, %34, %35, %36, %37, %38 in 2 : vector<4x16x4xbf16>, vector<4x16x4xbf16>, vector<4x16x4xbf16>, vector<4x16x4xbf16>, vector<4x16x4xbf16>, vector<4x16x4xbf16>, vector<4x16x4xbf16>, vector<4x16x4xbf16>, vector<4x16x4xbf16> -> vector<4x16x36xbf16>
    %40 = vector.shape_cast %39 : vector<4x16x36xbf16> to vector<64x36xbf16>
    %c0_54 = arith.constant 0 : index
    %c0_55 = arith.constant 0 : index
    %41 = vector.load %arg8[%c0_54, %c0_55] : memref<36x4xbf16, #tpu.memory_space<vmem>>, vector<36x4xbf16>
    %cst_56 = arith.constant dense<0.000000e+00> : vector<64x4xf32>
    %42 = tpu.matmul %40, %41, %cst_56 {dimension_numbers = #tpu.dot_dimension_numbers<[1], [0], [0], [1], [0, 0, 1, 1], [], []>} : vector<64x36xbf16>, vector<36x4xbf16>, vector<64x4xf32> -> vector<64x4xf32>
    %c0_57 = arith.constant 0 : index
    %c0_58 = arith.constant 0 : index
    %43 = vector.load %arg9[%c0_57, %c0_58] : memref<1x4xf32, #tpu.memory_space<vmem>>, vector<1x4xf32>
    %44 = vector.broadcast %43 : vector<1x4xf32> to vector<64x4xf32>
    %45 = arith.mulf %42, %44 : vector<64x4xf32>
    %c0_59 = arith.constant 0 : index
    %c0_60 = arith.constant 0 : index
    %46 = vector.load %arg10[%c0_59, %c0_60] : memref<1x4xf32, #tpu.memory_space<vmem>>, vector<1x4xf32>
    %47 = vector.broadcast %46 : vector<1x4xf32> to vector<64x4xf32>
    %48 = arith.addf %45, %47 : vector<64x4xf32>
    %cst_61 = arith.constant 0.000000e+00 : f32
    %49 = vector.broadcast %cst_61 : f32 to vector<64x4xf32>
    %50 = arith.maximumf %48, %49 : vector<64x4xf32>
    %51 = arith.truncf %50 : vector<64x4xf32> to vector<64x4xbf16>
    %c0_62 = arith.constant 0 : index
    %c0_63 = arith.constant 0 : index
    %52 = vector.load %arg11[%c0_62, %c0_63] : memref<4x16xbf16, #tpu.memory_space<vmem>>, vector<4x16xbf16>
    %cst_64 = arith.constant dense<0.000000e+00> : vector<64x16xf32>
    %53 = tpu.matmul %51, %52, %cst_64 {dimension_numbers = #tpu.dot_dimension_numbers<[1], [0], [0], [1], [0, 0, 1, 1], [], []>} : vector<64x4xbf16>, vector<4x16xbf16>, vector<64x16xf32> -> vector<64x16xf32>
    %c0_65 = arith.constant 0 : index
    %c0_66 = arith.constant 0 : index
    %54 = vector.load %arg12[%c0_65, %c0_66] : memref<1x16xf32, #tpu.memory_space<vmem>>, vector<1x16xf32>
    %55 = vector.broadcast %54 : vector<1x16xf32> to vector<64x16xf32>
    %56 = arith.mulf %53, %55 : vector<64x16xf32>
    %c0_67 = arith.constant 0 : index
    %c0_68 = arith.constant 0 : index
    %57 = vector.load %arg13[%c0_67, %c0_68] : memref<1x16xf32, #tpu.memory_space<vmem>>, vector<1x16xf32>
    %58 = vector.broadcast %57 : vector<1x16xf32> to vector<64x16xf32>
    %59 = arith.addf %56, %58 : vector<64x16xf32>
    %60 = vector.shape_cast %1 : vector<4x16x4xbf16> to vector<64x4xbf16>
    %c0_69 = arith.constant 0 : index
    %c0_70 = arith.constant 0 : index
    %61 = vector.load %arg14[%c0_69, %c0_70] : memref<4x16xbf16, #tpu.memory_space<vmem>>, vector<4x16xbf16>
    %cst_71 = arith.constant dense<0.000000e+00> : vector<64x16xf32>
    %62 = tpu.matmul %60, %61, %cst_71 {dimension_numbers = #tpu.dot_dimension_numbers<[1], [0], [0], [1], [0, 0, 1, 1], [], []>} : vector<64x4xbf16>, vector<4x16xbf16>, vector<64x16xf32> -> vector<64x16xf32>
    %c0_72 = arith.constant 0 : index
    %c0_73 = arith.constant 0 : index
    %63 = vector.load %arg15[%c0_72, %c0_73] : memref<1x16xf32, #tpu.memory_space<vmem>>, vector<1x16xf32>
    %64 = vector.broadcast %63 : vector<1x16xf32> to vector<64x16xf32>
    %65 = arith.mulf %62, %64 : vector<64x16xf32>
    %c0_74 = arith.constant 0 : index
    %c0_75 = arith.constant 0 : index
    %66 = vector.load %arg16[%c0_74, %c0_75] : memref<1x16xf32, #tpu.memory_space<vmem>>, vector<1x16xf32>
    %67 = vector.broadcast %66 : vector<1x16xf32> to vector<64x16xf32>
    %68 = arith.addf %65, %67 : vector<64x16xf32>
    %69 = arith.addf %59, %68 : vector<64x16xf32>
    %cst_76 = arith.constant 0.000000e+00 : f32
    %70 = vector.broadcast %cst_76 : f32 to vector<64x16xf32>
    %71 = arith.maximumf %69, %70 : vector<64x16xf32>
    %72 = vector.shape_cast %71 : vector<64x16xf32> to vector<1x64x16xf32>
    %c0_77 = arith.constant 0 : index
    %c0_78 = arith.constant 0 : index
    %c0_79 = arith.constant 0 : index
    %73 = vector.load %arg17[%c0_77, %c0_78, %c0_79] : memref<1x64x16xf32, #tpu.memory_space<vmem>>, vector<1x64x16xf32>
    tpu.vector_store %arg17[%c0_77, %c0_78, %c0_79], %72 {strides = array<i32>} : memref<1x64x16xf32, #tpu.memory_space<vmem>>, vector<1x64x16xf32>,
    %74 = vector.shape_cast %69 : vector<64x16xf32> to vector<1x64x16xf32>
    %c0_80 = arith.constant 0 : index
    %c0_81 = arith.constant 0 : index
    %c0_82 = arith.constant 0 : index
    %75 = vector.load %arg18[%c0_80, %c0_81, %c0_82] : memref<1x64x16xf32, #tpu.memory_space<vmem>>, vector<1x64x16xf32>
    tpu.vector_store %arg18[%c0_80, %c0_81, %c0_82], %74 {strides = array<i32>} : memref<1x64x16xf32, #tpu.memory_space<vmem>>, vector<1x64x16xf32>,
    return
  }
  func.func @transform_0(%arg0: i32, %arg1: i32) -> (i32, i32, i32, i32) {
    %c0_i32 = arith.constant 0 : i32
    %c0_i32_0 = arith.constant 0 : i32
    %c0_i32_1 = arith.constant 0 : i32
    return %arg0, %arg1, %c0_i32, %c0_i32_0 : i32, i32, i32, i32
  }
  func.func @transform_1(%arg0: i32, %arg1: i32) -> (i32, i32, i32, i32) {
    %c4_i32 = arith.constant 4 : i32
    %0 = arith.muli %c4_i32, %arg1 : i32
    %c1_i32 = arith.constant 1 : i32
    %1 = arith.subi %0, %c1_i32 : i32
    %c0_i32 = arith.constant 0 : i32
    %2 = arith.maxsi %1, %c0_i32 : i32
    %c0_i32_0 = arith.constant 0 : i32
    %c0_i32_1 = arith.constant 0 : i32
    %c0_i32_2 = arith.constant 0 : i32
    return %arg0, %2, %c0_i32_0, %c0_i32_1 : i32, i32, i32, i32
  }
  func.func @transform_2(%arg0: i32, %arg1: i32) -> (i32, i32, i32, i32) {
    %c1_i32 = arith.constant 1 : i32
    %0 = arith.addi %arg1, %c1_i32 : i32
    %c4_i32 = arith.constant 4 : i32
    %1 = arith.muli %c4_i32, %0 : i32
    %c15_i32 = arith.constant 15 : i32
    %2 = arith.minsi %1, %c15_i32 : i32
    %c0_i32 = arith.constant 0 : i32
    %c0_i32_0 = arith.constant 0 : i32
    %c0_i32_1 = arith.constant 0 : i32
    return %arg0, %2, %c0_i32, %c0_i32_0 : i32, i32, i32, i32
  }
  func.func @transform_3(%arg0: i32, %arg1: i32) -> (i32, i32) {
    %c0_i32 = arith.constant 0 : i32
    %c0_i32_0 = arith.constant 0 : i32
    %c0_i32_1 = arith.constant 0 : i32
    return %c0_i32, %c0_i32_0 : i32, i32
  }
  func.func @transform_4(%arg0: i32, %arg1: i32) -> (i32, i32) {
    %c0_i32 = arith.constant 0 : i32
    %c0_i32_0 = arith.constant 0 : i32
    %c0_i32_1 = arith.constant 0 : i32
    return %c0_i32, %c0_i32_0 : i32, i32
  }
  func.func @transform_5(%arg0: i32, %arg1: i32) -> (i32, i32) {
    %c0_i32 = arith.constant 0 : i32
    %c0_i32_0 = arith.constant 0 : i32
    %c0_i32_1 = arith.constant 0 : i32
    return %c0_i32, %c0_i32_0 : i32, i32
  }
  func.func @transform_6(%arg0: i32, %arg1: i32) -> (i32, i32) {
    %c0_i32 = arith.constant 0 : i32
    %c0_i32_0 = arith.constant 0 : i32
    %c0_i32_1 = arith.constant 0 : i32
    return %c0_i32, %c0_i32_0 : i32, i32
  }
  func.func @transform_7(%arg0: i32, %arg1: i32) -> (i32, i32) {
    %c0_i32 = arith.constant 0 : i32
    %c0_i32_0 = arith.constant 0 : i32
    %c0_i32_1 = arith.constant 0 : i32
    return %c0_i32, %c0_i32_0 : i32, i32
  }
  func.func @transform_8(%arg0: i32, %arg1: i32) -> (i32, i32) {
    %c0_i32 = arith.constant 0 : i32
    %c0_i32_0 = arith.constant 0 : i32
    %c0_i32_1 = arith.constant 0 : i32
    return %c0_i32, %c0_i32_0 : i32, i32
  }
  func.func @transform_9(%arg0: i32, %arg1: i32) -> (i32, i32) {
    %c0_i32 = arith.constant 0 : i32
    %c0_i32_0 = arith.constant 0 : i32
    %c0_i32_1 = arith.constant 0 : i32
    return %c0_i32, %c0_i32_0 : i32, i32
  }
  func.func @transform_10(%arg0: i32, %arg1: i32) -> (i32, i32) {
    %c0_i32 = arith.constant 0 : i32
    %c0_i32_0 = arith.constant 0 : i32
    %c0_i32_1 = arith.constant 0 : i32
    return %c0_i32, %c0_i32_0 : i32, i32
  }
  func.func @transform_11(%arg0: i32, %arg1: i32) -> (i32, i32) {
    %c0_i32 = arith.constant 0 : i32
    %c0_i32_0 = arith.constant 0 : i32
    %c0_i32_1 = arith.constant 0 : i32
    return %c0_i32, %c0_i32_0 : i32, i32
  }
  func.func @transform_12(%arg0: i32, %arg1: i32) -> (i32, i32) {
    %c0_i32 = arith.constant 0 : i32
    %c0_i32_0 = arith.constant 0 : i32
    %c0_i32_1 = arith.constant 0 : i32
    return %c0_i32, %c0_i32_0 : i32, i32
  }
  func.func @transform_13(%arg0: i32, %arg1: i32) -> (i32, i32) {
    %c0_i32 = arith.constant 0 : i32
    %c0_i32_0 = arith.constant 0 : i32
    %c0_i32_1 = arith.constant 0 : i32
    return %c0_i32, %c0_i32_0 : i32, i32
  }
  func.func @transform_14(%arg0: i32, %arg1: i32) -> (i32, i32) {
    %c0_i32 = arith.constant 0 : i32
    %c0_i32_0 = arith.constant 0 : i32
    %c0_i32_1 = arith.constant 0 : i32
    return %c0_i32, %c0_i32_0 : i32, i32
  }
  func.func @transform_15(%arg0: i32, %arg1: i32) -> (i32, i32, i32) {
    %c0_i32 = arith.constant 0 : i32
    %c0_i32_0 = arith.constant 0 : i32
    return %arg0, %arg1, %c0_i32 : i32, i32, i32
  }
  func.func @transform_16(%arg0: i32, %arg1: i32) -> (i32, i32, i32) {
    %c0_i32 = arith.constant 0 : i32
    %c0_i32_0 = arith.constant 0 : i32
    return %arg0, %arg1, %c0_i32 : i32, i32, i32
  }
}

</mosaic_0001>

<llo_original>
// kernel: tpu_custom_call.1
$region0: #{tpu_custom_call.1}
  #allocation0 [shape = 'u32[]', space=smem, size = 0x4, offset = 0x4, fixed_abs, tag = 'smem constant byte address 0x4 - core index']
  #allocation1 [shape = 'u32[72,128]{1,0:T(1,128)}', space=vmem, size = 0x9000, scoped, tag = 'internal scratch']
  #allocation2 [shape = 'bf16[6,18,4]{2,1,0:T(8,128)(2,1)}', space=vmem, size = 0x9000, scoped, tag = 'scratch operand']
  %s0 = inlined_call_operand.vmem [shape: bf16[2,16,16,4], index: 0, kind: input, shape index: {}]
  %s1 = inlined_call_operand.vmem [shape: bf16[2,16,16,4], index: 1, kind: input, shape index: {}]
  %s2 = inlined_call_operand.vmem [shape: bf16[2,16,16,4], index: 2, kind: input, shape index: {}]
  %s3 = inlined_call_operand.vmem [shape: bf16[4,4], index: 3, kind: input, shape index: {}]
  %s4 = inlined_call_operand.vmem [shape: f32[1,4], index: 4, kind: input, shape index: {}]
  %s5 = inlined_call_operand.vmem [shape: f32[1,4], index: 5, kind: input, shape index: {}]
  %s6 = inlined_call_operand.vmem [shape: bf16[36,4], index: 6, kind: input, shape index: {}]
  %s7 = inlined_call_operand.vmem [shape: f32[1,4], index: 7, kind: input, shape index: {}]
  %s8 = inlined_call_operand.vmem [shape: f32[1,4], index: 8, kind: input, shape index: {}]
  %s9 = inlined_call_operand.vmem [shape: bf16[4,16], index: 9, kind: input, shape index: {}]
  %s10 = inlined_call_operand.vmem [shape: f32[1,16], index: 10, kind: input, shape index: {}]
  %s11 = inlined_call_operand.vmem [shape: f32[1,16], index: 11, kind: input, shape index: {}]
  %s12 = inlined_call_operand.vmem [shape: bf16[4,16], index: 12, kind: input, shape index: {}]
  %s13 = inlined_call_operand.vmem [shape: f32[1,16], index: 13, kind: input, shape index: {}]
  %s14 = inlined_call_operand.vmem [shape: f32[1,16], index: 14, kind: input, shape index: {}]
  %s15 = inlined_call_operand.vmem [shape: f32[2,256,16], index: 15, kind: output, shape index: {0}]
  %s16 = inlined_call_operand.vmem [shape: f32[2,256,16], index: 16, kind: output, shape index: {1}]
  %17 = xla_tuple %s15, %s16
  %s18 = sld [smem:[#allocation0]]
  $region109: #{tpu_custom_call.1} parent=0
    _
  %s20 = ssub.s32 1, %s18
  %s21 = scalar_select 0, %s20, %s18
  loop: start=0, step=1, limit=10
  $region2: #{tpu_custom_call.1} parent=0 // loop_pre_header
    _
  $region3: #{tpu_custom_call.1} parent=0 // loop_header
    %s23 = sphi 0, %s27
    %p24 = scmp.ge.s32.totalorder %s23, 10
    %s30 = sphi 0, %s42
    %s31 = sphi 0, %s38
    %s32 = sphi 0, %s30
    %s33 = sphi 0, %s31
    %s34 = sphi 0, %s32
    %s35 = sphi 0, %s33
    %s47 = sphi 0, %s49
    %s50 = sphi 0, %s47
    %s51 = sphi 0, %s50
    %s67 = sphi 0, %s51
    %s83 = sphi 0, %s85
    %s86 = sphi 0, %s83
    %s87 = sphi 0, %s86
    %s103 = sphi 0, %s87
    %s119 = sphi 0, %s121
    %s122 = sphi 0, %s119
    %s123 = sphi 0, %s122
    %s139 = sphi 0, %s123
    %s143 = sphi 0, %s143
    %s145 = sphi 0, %s143
    %s146 = sphi 0, %s145
    %s160 = sphi 0, %s146
    %s164 = sphi 0, %s164
    %s166 = sphi 0, %s164
    %s167 = sphi 0, %s166
    %s181 = sphi 0, %s167
    %s185 = sphi 0, %s185
    %s187 = sphi 0, %s185
    %s188 = sphi 0, %s187
    %s202 = sphi 0, %s188
    %s206 = sphi 0, %s206
    %s208 = sphi 0, %s206
    %s209 = sphi 0, %s208
    %s223 = sphi 0, %s209
    %s227 = sphi 0, %s227
    %s229 = sphi 0, %s227
    %s230 = sphi 0, %s229
    %s244 = sphi 0, %s230
    %s248 = sphi 0, %s248
    %s250 = sphi 0, %s248
    %s251 = sphi 0, %s250
    %s265 = sphi 0, %s251
    %s269 = sphi 0, %s269
    %s271 = sphi 0, %s269
    %s272 = sphi 0, %s271
    %s286 = sphi 0, %s272
    %s290 = sphi 0, %s290
    %s292 = sphi 0, %s290
    %s293 = sphi 0, %s292
    %s307 = sphi 0, %s293
    %s311 = sphi 0, %s311
    %s313 = sphi 0, %s311
    %s314 = sphi 0, %s313
    %s328 = sphi 0, %s314
    %s332 = sphi 0, %s332
    %s334 = sphi 0, %s332
    %s335 = sphi 0, %s334
    %s349 = sphi 0, %s335
    %s353 = sphi 0, %s353
    %s355 = sphi 0, %s353
    %s356 = sphi 0, %s355
    %s370 = sphi 0, %s356
    %s374 = sphi 0, %s374
    %s376 = sphi 0, %s374
    %s377 = sphi 0, %s376
    %s391 = sphi 0, %s377
    %s399 = sphi 0, %s401
    %s402 = sphi 0, %s399
    %s403 = sphi 0, %s402
    %s419 = sphi 0, %s403
    %s427 = sphi 0, %s429
    %s430 = sphi 0, %s427
    %s431 = sphi 0, %s430
    %s447 = sphi 0, %s431
  $region4: #{tpu_custom_call.1} parent=0 // loop_header_branch
    %26 = sbr.rel (%p24) target = $region8
  $region5: #{tpu_custom_call.1} parent=0 // loop_body
    %s28 = ssub.s32 %s23, 1
    %s29 = ssub.s32 %s23, 2
    %s36 = sadd.s32 1, %s31
    %p37 = scmp.ge.s32.totalorder %s36, 4
    %s38 = scalar_select %p37, 0, %s36
    %s39 = sadd.s32 1, %s30
    %s40 = scalar_select %p37, %s39, %s30
    %p41 = scmp.ge.s32.totalorder %s40, 2
    %s42 = scalar_select %p41, 0, %s40
    %s43 = ssub.s32 %s30, %s42
    %s44 = ssub.s32 %s31, %s38
    %s45 = sor.u32 %s43, %s44
    %p46 = scmp.eq.s32.totalorder %s45, 0
    %s48 = sadd.s32 %s47, 1
    %s49 = scalar_select %p46, %s47, %s48
    %p52 = pneg %p46
    %p53 = scmp.eq.s32.totalorder %s23, 7
    %p54 = por %p52, %p53
    %p55 = scmp.ne.s32.totalorder %s47, %s50
    %p56 = scmp.eq.s32.totalorder %s23, 0
    %p57 = por %p55, %p56
    %p58 = scmp.ne.s32.totalorder %s47, %s50
    %p59 = scmp.eq.s32.totalorder %s28, 7
    %p60 = por %p58, %p59
    %p61 = scmp.ne.s32.totalorder %s50, %s51
    %p62 = scmp.eq.s32.totalorder %s28, 0
    %p63 = por %p61, %p62
    %p64 = scmp.ne.s32.totalorder %s50, %s51
    %p65 = scmp.eq.s32.totalorder %s29, 7
    %p66 = por %p64, %p65
    %p68 = scmp.ne.s32.totalorder %s51, %s67
    %p69 = scmp.eq.s32.totalorder %s29, 0
    %p70 = por %p68, %p69
    %s71 = smul.u32 %s31, 4
    %s72 = ssub.s32 %s71, 1
    %p73 = scmp.gt.s32.totalorder %s72, 0
    %s74 = scalar_select %p73, %s72, 0
    %s75 = smul.u32 %s38, 4
    %s76 = ssub.s32 %s75, 1
    %p77 = scmp.gt.s32.totalorder %s76, 0
    %s78 = scalar_select %p77, %s76, 0
    %s79 = ssub.s32 %s30, %s42
    %s80 = ssub.s32 %s74, %s78
    %s81 = sor.u32 %s79, %s80
    %p82 = scmp.eq.s32.totalorder %s81, 0
    %s84 = sadd.s32 %s83, 1
    %s85 = scalar_select %p82, %s83, %s84
    %p88 = pneg %p82
    %p89 = scmp.eq.s32.totalorder %s23, 7
    %p90 = por %p88, %p89
    %p91 = scmp.ne.s32.totalorder %s83, %s86
    %p92 = scmp.eq.s32.totalorder %s23, 0
    %p93 = por %p91, %p92
    %p94 = scmp.ne.s32.totalorder %s83, %s86
    %p95 = scmp.eq.s32.totalorder %s28, 7
    %p96 = por %p94, %p95
    %p97 = scmp.ne.s32.totalorder %s86, %s87
    %p98 = scmp.eq.s32.totalorder %s28, 0
    %p99 = por %p97, %p98
    %p100 = scmp.ne.s32.totalorder %s86, %s87
    %p101 = scmp.eq.s32.totalorder %s29, 7
    %p102 = por %p100, %p101
    %p104 = scmp.ne.s32.totalorder %s87, %s103
    %p105 = scmp.eq.s32.totalorder %s29, 0
    %p106 = por %p104, %p105
    %s107 = sadd.s32 %s31, 1
    %s108 = smul.u32 %s107, 4
    %p109 = scmp.lt.s32.totalorder %s108, 15
    %s110 = scalar_select %p109, %s108, 15
    %s111 = sadd.s32 %s38, 1
    %s112 = smul.u32 %s111, 4
    %p113 = scmp.lt.s32.totalorder %s112, 15
    %s114 = scalar_select %p113, %s112, 15
    %s115 = ssub.s32 %s30, %s42
    %s116 = ssub.s32 %s110, %s114
    %s117 = sor.u32 %s115, %s116
    %p118 = scmp.eq.s32.totalorder %s117, 0
    %s120 = sadd.s32 %s119, 1
    %s121 = scalar_select %p118, %s119, %s120
    %p124 = pneg %p118
    %p125 = scmp.eq.s32.totalorder %s23, 7
    %p126 = por %p124, %p125
    %p127 = scmp.ne.s32.totalorder %s119, %s122
    %p128 = scmp.eq.s32.totalorder %s23, 0
    %p129 = por %p127, %p128
    %p130 = scmp.ne.s32.totalorder %s119, %s122
    %p131 = scmp.eq.s32.totalorder %s28, 7
    %p132 = por %p130, %p131
    %p133 = scmp.ne.s32.totalorder %s122, %s123
    %p134 = scmp.eq.s32.totalorder %s28, 0
    %p135 = por %p133, %p134
    %p136 = scmp.ne.s32.totalorder %s122, %s123
    %p137 = scmp.eq.s32.totalorder %s29, 7
    %p138 = por %p136, %p137
    %p140 = scmp.ne.s32.totalorder %s123, %s139
    %p141 = scmp.eq.s32.totalorder %s29, 0
    %p142 = por %p140, %p141
    %s144 = sadd.s32 %s143, 1
    %p147 = scmp.eq.s32.totalorder %s23, 7
    %p148 = scmp.ne.s32.totalorder %s143, %s145
    %p149 = scmp.eq.s32.totalorder %s23, 0
    %p150 = por %p148, %p149
    %p151 = scmp.ne.s32.totalorder %s143, %s145
    %p152 = scmp.eq.s32.totalorder %s28, 7
    %p153 = por %p151, %p152
    %p154 = scmp.ne.s32.totalorder %s145, %s146
    %p155 = scmp.eq.s32.totalorder %s28, 0
    %p156 = por %p154, %p155
    %p157 = scmp.ne.s32.totalorder %s145, %s146
    %p158 = scmp.eq.s32.totalorder %s29, 7
    %p159 = por %p157, %p158
    %p161 = scmp.ne.s32.totalorder %s146, %s160
    %p162 = scmp.eq.s32.totalorder %s29, 0
    %p163 = por %p161, %p162
    %s165 = sadd.s32 %s164, 1
    %p168 = scmp.eq.s32.totalorder %s23, 7
    %p169 = scmp.ne.s32.totalorder %s164, %s166
    %p170 = scmp.eq.s32.totalorder %s23, 0
    %p171 = por %p169, %p170
    %p172 = scmp.ne.s32.totalorder %s164, %s166
    %p173 = scmp.eq.s32.totalorder %s28, 7
    %p174 = por %p172, %p173
    %p175 = scmp.ne.s32.totalorder %s166, %s167
    %p176 = scmp.eq.s32.totalorder %s28, 0
    %p177 = por %p175, %p176
    %p178 = scmp.ne.s32.totalorder %s166, %s167
    %p179 = scmp.eq.s32.totalorder %s29, 7
    %p180 = por %p178, %p179
    %p182 = scmp.ne.s32.totalorder %s167, %s181
    %p183 = scmp.eq.s32.totalorder %s29, 0
    %p184 = por %p182, %p183
    %s186 = sadd.s32 %s185, 1
    %p189 = scmp.eq.s32.totalorder %s23, 7
    %p190 = scmp.ne.s32.totalorder %s185, %s187
    %p191 = scmp.eq.s32.totalorder %s23, 0
    %p192 = por %p190, %p191
    %p193 = scmp.ne.s32.totalorder %s185, %s187
    %p194 = scmp.eq.s32.totalorder %s28, 7
    %p195 = por %p193, %p194
    %p196 = scmp.ne.s32.totalorder %s187, %s188
    %p197 = scmp.eq.s32.totalorder %s28, 0
    %p198 = por %p196, %p197
    %p199 = scmp.ne.s32.totalorder %s187, %s188
    %p200 = scmp.eq.s32.totalorder %s29, 7
    %p201 = por %p199, %p200
    %p203 = scmp.ne.s32.totalorder %s188, %s202
    %p204 = scmp.eq.s32.totalorder %s29, 0
    %p205 = por %p203, %p204
    %s207 = sadd.s32 %s206, 1
    %p210 = scmp.eq.s32.totalorder %s23, 7
    %p211 = scmp.ne.s32.totalorder %s206, %s208
    %p212 = scmp.eq.s32.totalorder %s23, 0
    %p213 = por %p211, %p212
    %p214 = scmp.ne.s32.totalorder %s206, %s208
    %p215 = scmp.eq.s32.totalorder %s28, 7
    %p216 = por %p214, %p215
    %p217 = scmp.ne.s32.totalorder %s208, %s209
    %p218 = scmp.eq.s32.totalorder %s28, 0
    %p219 = por %p217, %p218
    %p220 = scmp.ne.s32.totalorder %s208, %s209
    %p221 = scmp.eq.s32.totalorder %s29, 7
    %p222 = por %p220, %p221
    %p224 = scmp.ne.s32.totalorder %s209, %s223
    %p225 = scmp.eq.s32.totalorder %s29, 0
    %p226 = por %p224, %p225
    %s228 = sadd.s32 %s227, 1
    %p231 = scmp.eq.s32.totalorder %s23, 7
    %p232 = scmp.ne.s32.totalorder %s227, %s229
    %p233 = scmp.eq.s32.totalorder %s23, 0
    %p234 = por %p232, %p233
    %p235 = scmp.ne.s32.totalorder %s227, %s229
    %p236 = scmp.eq.s32.totalorder %s28, 7
    %p237 = por %p235, %p236
    %p238 = scmp.ne.s32.totalorder %s229, %s230
    %p239 = scmp.eq.s32.totalorder %s28, 0
    %p240 = por %p238, %p239
    %p241 = scmp.ne.s32.totalorder %s229, %s230
    %p242 = scmp.eq.s32.totalorder %s29, 7
    %p243 = por %p241, %p242
    %p245 = scmp.ne.s32.totalorder %s230, %s244
    %p246 = scmp.eq.s32.totalorder %s29, 0
    %p247 = por %p245, %p246
    %s249 = sadd.s32 %s248, 1
    %p252 = scmp.eq.s32.totalorder %s23, 7
    %p253 = scmp.ne.s32.totalorder %s248, %s250
    %p254 = scmp.eq.s32.totalorder %s23, 0
    %p255 = por %p253, %p254
    %p256 = scmp.ne.s32.totalorder %s248, %s250
    %p257 = scmp.eq.s32.totalorder %s28, 7
    %p258 = por %p256, %p257
    %p259 = scmp.ne.s32.totalorder %s250, %s251
    %p260 = scmp.eq.s32.totalorder %s28, 0
    %p261 = por %p259, %p260
    %p262 = scmp.ne.s32.totalorder %s250, %s251
    %p263 = scmp.eq.s32.totalorder %s29, 7
    %p264 = por %p262, %p263
    %p266 = scmp.ne.s32.totalorder %s251, %s265
    %p267 = scmp.eq.s32.totalorder %s29, 0
    %p268 = por %p266, %p267
    %s270 = sadd.s32 %s269, 1
    %p273 = scmp.eq.s32.totalorder %s23, 7
    %p274 = scmp.ne.s32.totalorder %s269, %s271
    %p275 = scmp.eq.s32.totalorder %s23, 0
    %p276 = por %p274, %p275
    %p277 = scmp.ne.s32.totalorder %s269, %s271
    %p278 = scmp.eq.s32.totalorder %s28, 7
    %p279 = por %p277, %p278
    %p280 = scmp.ne.s32.totalorder %s271, %s272
    %p281 = scmp.eq.s32.totalorder %s28, 0
    %p282 = por %p280, %p281
    %p283 = scmp.ne.s32.totalorder %s271, %s272
    %p284 = scmp.eq.s32.totalorder %s29, 7
    %p285 = por %p283, %p284
    %p287 = scmp.ne.s32.totalorder %s272, %s286
    %p288 = scmp.eq.s32.totalorder %s29, 0
    %p289 = por %p287, %p288
    %s291 = sadd.s32 %s290, 1
    %p294 = scmp.eq.s32.totalorder %s23, 7
    %p295 = scmp.ne.s32.totalorder %s290, %s292
    %p296 = scmp.eq.s32.totalorder %s23, 0
    %p297 = por %p295, %p296
    %p298 = scmp.ne.s32.totalorder %s290, %s292
    %p299 = scmp.eq.s32.totalorder %s28, 7
    %p300 = por %p298, %p299
    %p301 = scmp.ne.s32.totalorder %s292, %s293
    %p302 = scmp.eq.s32.totalorder %s28, 0
    %p303 = por %p301, %p302
    %p304 = scmp.ne.s32.totalorder %s292, %s293
    %p305 = scmp.eq.s32.totalorder %s29, 7
    %p306 = por %p304, %p305
    %p308 = scmp.ne.s32.totalorder %s293, %s307
    %p309 = scmp.eq.s32.totalorder %s29, 0
    %p310 = por %p308, %p309
    %s312 = sadd.s32 %s311, 1
    %p315 = scmp.eq.s32.totalorder %s23, 7
    %p316 = scmp.ne.s32.totalorder %s311, %s313
    %p317 = scmp.eq.s32.totalorder %s23, 0
    %p318 = por %p316, %p317
    %p319 = scmp.ne.s32.totalorder %s311, %s313
    %p320 = scmp.eq.s32.totalorder %s28, 7
    %p321 = por %p319, %p320
    %p322 = scmp.ne.s32.totalorder %s313, %s314
    %p323 = scmp.eq.s32.totalorder %s28, 0
    %p324 = por %p322, %p323
    %p325 = scmp.ne.s32.totalorder %s313, %s314
    %p326 = scmp.eq.s32.totalorder %s29, 7
    %p327 = por %p325, %p326
    %p329 = scmp.ne.s32.totalorder %s314, %s328
    %p330 = scmp.eq.s32.totalorder %s29, 0
    %p331 = por %p329, %p330
    %s333 = sadd.s32 %s332, 1
    %p336 = scmp.eq.s32.totalorder %s23, 7
    %p337 = scmp.ne.s32.totalorder %s332, %s334
    %p338 = scmp.eq.s32.totalorder %s23, 0
    %p339 = por %p337, %p338
    %p340 = scmp.ne.s32.totalorder %s332, %s334
    %p341 = scmp.eq.s32.totalorder %s28, 7
    %p342 = por %p340, %p341
    %p343 = scmp.ne.s32.totalorder %s334, %s335
    %p344 = scmp.eq.s32.totalorder %s28, 0
    %p345 = por %p343, %p344
    %p346 = scmp.ne.s32.totalorder %s334, %s335
    %p347 = scmp.eq.s32.totalorder %s29, 7
    %p348 = por %p346, %p347
    %p350 = scmp.ne.s32.totalorder %s335, %s349
    %p351 = scmp.eq.s32.totalorder %s29, 0
    %p352 = por %p350, %p351
    %s354 = sadd.s32 %s353, 1
    %p357 = scmp.eq.s32.totalorder %s23, 7
    %p358 = scmp.ne.s32.totalorder %s353, %s355
    %p359 = scmp.eq.s32.totalorder %s23, 0
    %p360 = por %p358, %p359
    %p361 = scmp.ne.s32.totalorder %s353, %s355
    %p362 = scmp.eq.s32.totalorder %s28, 7
    %p363 = por %p361, %p362
    %p364 = scmp.ne.s32.totalorder %s355, %s356
    %p365 = scmp.eq.s32.totalorder %s28, 0
    %p366 = por %p364, %p365
    %p367 = scmp.ne.s32.totalorder %s355, %s356
    %p368 = scmp.eq.s32.totalorder %s29, 7
    %p369 = por %p367, %p368
    %p371 = scmp.ne.s32.totalorder %s356, %s370
    %p372 = scmp.eq.s32.totalorder %s29, 0
    %p373 = por %p371, %p372
    %s375 = sadd.s32 %s374, 1
    %p378 = scmp.eq.s32.totalorder %s23, 7
    %p379 = scmp.ne.s32.totalorder %s374, %s376
    %p380 = scmp.eq.s32.totalorder %s23, 0
    %p381 = por %p379, %p380
    %p382 = scmp.ne.s32.totalorder %s374, %s376
    %p383 = scmp.eq.s32.totalorder %s28, 7
    %p384 = por %p382, %p383
    %p385 = scmp.ne.s32.totalorder %s376, %s377
    %p386 = scmp.eq.s32.totalorder %s28, 0
    %p387 = por %p385, %p386
    %p388 = scmp.ne.s32.totalorder %s376, %s377
    %p389 = scmp.eq.s32.totalorder %s29, 7
    %p390 = por %p388, %p389
    %p392 = scmp.ne.s32.totalorder %s377, %s391
    %p393 = scmp.eq.s32.totalorder %s29, 0
    %p394 = por %p392, %p393
    %s395 = ssub.s32 %s30, %s42
    %s396 = ssub.s32 %s31, %s38
    %s397 = sor.u32 %s395, %s396
    %p398 = scmp.eq.s32.totalorder %s397, 0
    %s400 = sadd.s32 %s399, 1
    %s401 = scalar_select %p398, %s399, %s400
    %p404 = pneg %p398
    %p405 = scmp.eq.s32.totalorder %s23, 7
    %p406 = por %p404, %p405
    %p407 = scmp.ne.s32.totalorder %s399, %s402
    %p408 = scmp.eq.s32.totalorder %s23, 0
    %p409 = por %p407, %p408
    %p410 = scmp.ne.s32.totalorder %s399, %s402
    %p411 = scmp.eq.s32.totalorder %s28, 7
    %p412 = por %p410, %p411
    %p413 = scmp.ne.s32.totalorder %s402, %s403
    %p414 = scmp.eq.s32.totalorder %s28, 0
    %p415 = por %p413, %p414
    %p416 = scmp.ne.s32.totalorder %s402, %s403
    %p417 = scmp.eq.s32.totalorder %s29, 7
    %p418 = por %p416, %p417
    %p420 = scmp.ne.s32.totalorder %s403, %s419
    %p421 = scmp.eq.s32.totalorder %s29, 0
    %p422 = por %p420, %p421
    %s423 = ssub.s32 %s30, %s42
    %s424 = ssub.s32 %s31, %s38
    %s425 = sor.u32 %s423, %s424
    %p426 = scmp.eq.s32.totalorder %s425, 0
    %s428 = sadd.s32 %s427, 1
    %s429 = scalar_select %p426, %s427, %s428
    %p432 = pneg %p426
    %p433 = scmp.eq.s32.totalorder %s23, 7
    %p434 = por %p432, %p433
    %p435 = scmp.ne.s32.totalorder %s427, %s430
    %p436 = scmp.eq.s32.totalorder %s23, 0
    %p437 = por %p435, %p436
    %p438 = scmp.ne.s32.totalorder %s427, %s430
    %p439 = scmp.eq.s32.totalorder %s28, 7
    %p440 = por %p438, %p439
    %p441 = scmp.ne.s32.totalorder %s430, %s431
    %p442 = scmp.eq.s32.totalorder %s28, 0
    %p443 = por %p441, %p442
    %p444 = scmp.ne.s32.totalorder %s430, %s431
    %p445 = scmp.eq.s32.totalorder %s29, 7
    %p446 = por %p444, %p445
    %p448 = scmp.ne.s32.totalorder %s431, %s447
    %p449 = scmp.eq.s32.totalorder %s29, 0
    %p450 = por %p448, %p449
    %p451 = scmp.le.s32.totalorder 1, %s23
    %p452 = scmp.lt.s32.totalorder %s23, 9
    %p453 = pnand %p451, %p452
    %p454 = pneg %p453
    // Predicated region
    $region9: #{tpu_custom_call.1} parent=5 // pred_check
      _
    $region10: #{tpu_custom_call.1} parent=5 // pred_check_branch
      %456 = sbr.rel (%p453) target = $region12
    $region11: #{tpu_custom_call.1} parent=5 // pred_region
      %s457 = ssub.s32 %s23, 1
      // Predicated region
      $region13: #{tpu_custom_call.1} parent=11 // pred_check
        %p458 = pneg %p156
      $region14: #{tpu_custom_call.1} parent=11 // pred_check_branch
        %460 = sbr.rel (%p458) target = $region16
      $region15: #{tpu_custom_call.1} parent=11 // pred_region
        _
      $region16: #{tpu_custom_call.1} parent=11 // pred_fallthru
        _
      // Predicated region
      $region17: #{tpu_custom_call.1} parent=11 // pred_check
        %p461 = pneg %p177
      $region18: #{tpu_custom_call.1} parent=11 // pred_check_branch
        %463 = sbr.rel (%p461) target = $region20
      $region19: #{tpu_custom_call.1} parent=11 // pred_region
        _
      $region20: #{tpu_custom_call.1} parent=11 // pred_fallthru
        _
      // Predicated region
      $region21: #{tpu_custom_call.1} parent=11 // pred_check
        %p464 = pneg %p198
      $region22: #{tpu_custom_call.1} parent=11 // pred_check_branch
        %466 = sbr.rel (%p464) target = $region24
      $region23: #{tpu_custom_call.1} parent=11 // pred_region
        _
      $region24: #{tpu_custom_call.1} parent=11 // pred_fallthru
        _
      // Predicated region
      $region25: #{tpu_custom_call.1} parent=11 // pred_check
        %p467 = pneg %p219
      $region26: #{tpu_custom_call.1} parent=11 // pred_check_branch
        %469 = sbr.rel (%p467) target = $region28
      $region27: #{tpu_custom_call.1} parent=11 // pred_region
        _
      $region28: #{tpu_custom_call.1} parent=11 // pred_fallthru
        _
      // Predicated region
      $region29: #{tpu_custom_call.1} parent=11 // pred_check
        %p470 = pneg %p240
      $region30: #{tpu_custom_call.1} parent=11 // pred_check_branch
        %472 = sbr.rel (%p470) target = $region32
      $region31: #{tpu_custom_call.1} parent=11 // pred_region
        _
      $region32: #{tpu_custom_call.1} parent=11 // pred_fallthru
        _
      // Predicated region
      $region33: #{tpu_custom_call.1} parent=11 // pred_check
        %p473 = pneg %p261
      $region34: #{tpu_custom_call.1} parent=11 // pred_check_branch
        %475 = sbr.rel (%p473) target = $region36
      $region35: #{tpu_custom_call.1} parent=11 // pred_region
        _
      $region36: #{tpu_custom_call.1} parent=11 // pred_fallthru
        _
      // Predicated region
      $region37: #{tpu_custom_call.1} parent=11 // pred_check
        %p476 = pneg %p282
      $region38: #{tpu_custom_call.1} parent=11 // pred_check_branch
        %478 = sbr.rel (%p476) target = $region40
      $region39: #{tpu_custom_call.1} parent=11 // pred_region
        _
      $region40: #{tpu_custom_call.1} parent=11 // pred_fallthru
        _
      // Predicated region
      $region41: #{tpu_custom_call.1} parent=11 // pred_check
        %p479 = pneg %p303
      $region42: #{tpu_custom_call.1} parent=11 // pred_check_branch
        %481 = sbr.rel (%p479) target = $region44
      $region43: #{tpu_custom_call.1} parent=11 // pred_region
        _
      $region44: #{tpu_custom_call.1} parent=11 // pred_fallthru
        _
      // Predicated region
      $region45: #{tpu_custom_call.1} parent=11 // pred_check
        %p482 = pneg %p324
      $region46: #{tpu_custom_call.1} parent=11 // pred_check_branch
        %484 = sbr.rel (%p482) target = $region48
      $region47: #{tpu_custom_call.1} parent=11 // pred_region
        _
      $region48: #{tpu_custom_call.1} parent=11 // pred_fallthru
        _
      // Predicated region
      $region49: #{tpu_custom_call.1} parent=11 // pred_check
        %p485 = pneg %p345
      $region50: #{tpu_custom_call.1} parent=11 // pred_check_branch
        %487 = sbr.rel (%p485) target = $region52
      $region51: #{tpu_custom_call.1} parent=11 // pred_region
        _
      $region52: #{tpu_custom_call.1} parent=11 // pred_fallthru
        _
      // Predicated region
      $region53: #{tpu_custom_call.1} parent=11 // pred_check
        %p488 = pneg %p366
      $region54: #{tpu_custom_call.1} parent=11 // pred_check_branch
        %490 = sbr.rel (%p488) target = $region56
      $region55: #{tpu_custom_call.1} parent=11 // pred_region
        _
      $region56: #{tpu_custom_call.1} parent=11 // pred_fallthru
        _
      // Predicated region
      $region57: #{tpu_custom_call.1} parent=11 // pred_check
        %p491 = pneg %p387
      $region58: #{tpu_custom_call.1} parent=11 // pred_check_branch
        %493 = sbr.rel (%p491) target = $region60
      $region59: #{tpu_custom_call.1} parent=11 // pred_region
        _
      $region60: #{tpu_custom_call.1} parent=11 // pred_fallthru
        _
    $region12: #{tpu_custom_call.1} parent=5 // pred_fallthru
      _
    %p494 = scmp.lt.s32.totalorder %s23, 8
    // Predicated region
    $region61: #{tpu_custom_call.1} parent=5 // pred_check
      %p495 = pneg %p494
    $region62: #{tpu_custom_call.1} parent=5 // pred_check_branch
      %497 = sbr.rel (%p495) target = $region64
    $region63: #{tpu_custom_call.1} parent=5 // pred_region
      // Predicated region
      $region65: #{tpu_custom_call.1} parent=63 // pred_check
        %p498 = pneg %p57
      $region66: #{tpu_custom_call.1} parent=63 // pred_check_branch
        %500 = sbr.rel (%p498) target = $region68
      $region67: #{tpu_custom_call.1} parent=63 // pred_region
        %s501 = smul.u32 4, %s31
        %p502 = scmp.lt.s32.totalorder %s30, 1
        %s503 = scalar_select %p502, %s30, 1
        %p504 = scmp.lt.s32.totalorder %s501, 15
        %s505 = scalar_select %p504, %s501, 15
        %s506 = smul.addr %s505, 2
        %s507 = smul.addr %s503, 32
        %s508 = sadd.s32 %s506, %s507
        %s509 = smul.addr %s508, 4
        %s510 = scalar_lea.vmem %s0, %s509
        %s511 = smul.u32 4, %s31
      $region68: #{tpu_custom_call.1} parent=63 // pred_fallthru
        _
      // Predicated region
      $region69: #{tpu_custom_call.1} parent=63 // pred_check
        %p512 = pneg %p93
      $region70: #{tpu_custom_call.1} parent=63 // pred_check_branch
        %514 = sbr.rel (%p512) target = $region72
      $region71: #{tpu_custom_call.1} parent=63 // pred_region
        %s515 = smul.u32 %s31, 4
        %s516 = ssub.s32 %s515, 1
        %p517 = scmp.gt.s32.totalorder %s516, 0
        %s518 = scalar_select %p517, %s516, 0
        %p519 = scmp.lt.s32.totalorder %s30, 1
        %s520 = scalar_select %p519, %s30, 1
        %p521 = scmp.lt.s32.totalorder %s518, 15
        %s522 = scalar_select %p521, %s518, 15
        %s523 = smul.addr %s522, 2
        %s524 = smul.addr %s520, 32
        %s525 = sadd.s32 %s523, %s524
        %s526 = smul.addr %s525, 4
        %s527 = scalar_lea.vmem %s1, %s526
        %s528 = smul.u32 %s31, 4
        %s529 = ssub.s32 %s528, 1
        %p530 = scmp.gt.s32.totalorder %s529, 0
        %s531 = scalar_select %p530, %s529, 0
      $region72: #{tpu_custom_call.1} parent=63 // pred_fallthru
        _
      // Predicated region
      $region73: #{tpu_custom_call.1} parent=63 // pred_check
        %p532 = pneg %p129
      $region74: #{tpu_custom_call.1} parent=63 // pred_check_branch
        %534 = sbr.rel (%p532) target = $region76
      $region75: #{tpu_custom_call.1} parent=63 // pred_region
        %s535 = sadd.s32 %s31, 1
        %s536 = smul.u32 %s535, 4
        %p537 = scmp.lt.s32.totalorder %s536, 15
        %s538 = scalar_select %p537, %s536, 15
        %p539 = scmp.lt.s32.totalorder %s30, 1
        %s540 = scalar_select %p539, %s30, 1
        %p541 = scmp.lt.s32.totalorder %s538, 15
        %s542 = scalar_select %p541, %s538, 15
        %s543 = smul.addr %s542, 2
        %s544 = smul.addr %s540, 32
        %s545 = sadd.s32 %s543, %s544
        %s546 = smul.addr %s545, 4
        %s547 = scalar_lea.vmem %s2, %s546
        %s548 = sadd.s32 %s31, 1
        %s549 = smul.u32 %s548, 4
        %p550 = scmp.lt.s32.totalorder %s549, 15
        %s551 = scalar_select %p550, %s549, 15
      $region76: #{tpu_custom_call.1} parent=63 // pred_fallthru
        _
    $region64: #{tpu_custom_call.1} parent=5 // pred_fallthru
      _
    %p552 = scmp.le.s32.totalorder 1, %s23
    %p553 = scmp.lt.s32.totalorder %s23, 9
    %p554 = pnand %p552, %p553
    %p555 = pneg %p554
    // Predicated region
    $region77: #{tpu_custom_call.1} parent=5 // pred_check
      _
    $region78: #{tpu_custom_call.1} parent=5 // pred_check_branch
      %557 = sbr.rel (%p554) target = $region80
    $region79: #{tpu_custom_call.1} parent=5 // pred_region
      %s558 = ssub.s32 %s23, 1
      %s559 = smul.u32 4, %s33
      %p560 = scmp.lt.s32.totalorder %s32, 1
      %s561 = scalar_select %p560, %s32, 1
      %p562 = scmp.lt.s32.totalorder %s559, 15
      %s563 = scalar_select %p562, %s559, 15
      %s564 = smul.addr %s563, 2
      %s565 = smul.addr %s561, 32
      %s566 = sadd.s32 %s564, %s565
      %s567 = smul.addr %s566, 4
      %s568 = scalar_lea.vmem %s0, %s567
      %p569 = pneg %p63
      %p570 = pneg %p60
      %s571 = smul.u32 %s33, 4
      %s572 = ssub.s32 %s571, 1
      %p573 = scmp.gt.s32.totalorder %s572, 0
      %s574 = scalar_select %p573, %s572, 0
      %p575 = scmp.lt.s32.totalorder %s32, 1
      %s576 = scalar_select %p575, %s32, 1
      %p577 = scmp.lt.s32.totalorder %s574, 15
      %s578 = scalar_select %p577, %s574, 15
      %s579 = smul.addr %s578, 2
      %s580 = smul.addr %s576, 32
      %s581 = sadd.s32 %s579, %s580
      %s582 = smul.addr %s581, 4
      %s583 = scalar_lea.vmem %s1, %s582
      %p584 = pneg %p99
      %p585 = pneg %p96
      %s586 = sadd.s32 %s33, 1
      %s587 = smul.u32 %s586, 4
      %p588 = scmp.lt.s32.totalorder %s587, 15
      %s589 = scalar_select %p588, %s587, 15
      %p590 = scmp.lt.s32.totalorder %s32, 1
      %s591 = scalar_select %p590, %s32, 1
      %p592 = scmp.lt.s32.totalorder %s589, 15
      %s593 = scalar_select %p592, %s589, 15
      %s594 = smul.addr %s593, 2
      %s595 = smul.addr %s591, 32
      %s596 = sadd.s32 %s594, %s595
      %s597 = smul.addr %s596, 4
      %s598 = scalar_lea.vmem %s2, %s597
      %p599 = pneg %p135
      %p600 = pneg %p132
      %p601 = pneg %p156
      %p602 = pneg %p153
      %p603 = pneg %p177
      %p604 = pneg %p174
      %p605 = pneg %p198
      %p606 = pneg %p195
      %p607 = pneg %p219
      %p608 = pneg %p216
      %p609 = pneg %p240
      %p610 = pneg %p237
      %p611 = pneg %p261
      %p612 = pneg %p258
      %p613 = pneg %p282
      %p614 = pneg %p279
      %p615 = pneg %p303
      %p616 = pneg %p300
      %p617 = pneg %p324
      %p618 = pneg %p321
      %p619 = pneg %p345
      %p620 = pneg %p342
      %p621 = pneg %p366
      %p622 = pneg %p363
      %p623 = pneg %p387
      %p624 = pneg %p384
      %p625 = pneg %p415
      %p626 = pneg %p412
      %s627 = smul.u32 8, %s33
      %p628 = scmp.lt.s32.totalorder %s32, 1
      %s629 = scalar_select %p628, %s32, 1
      %p630 = scmp.lt.s32.totalorder %s627, 31
      %s631 = scalar_select %p630, %s627, 31
      %s632 = smul.addr %s629, 32
      %s633 = sadd.s32 %s631, %s632
      %s634 = smul.addr %s633, 8
      %s635 = scalar_lea.vmem %s15, %s634
      %p636 = pneg %p443
      %p637 = pneg %p440
      %s638 = smul.u32 8, %s33
      %p639 = scmp.lt.s32.totalorder %s32, 1
      %s640 = scalar_select %p639, %s32, 1
      %p641 = scmp.lt.s32.totalorder %s638, 31
      %s642 = scalar_select %p641, %s638, 31
      %s643 = smul.addr %s640, 32
      %s644 = sadd.s32 %s642, %s643
      %s645 = smul.addr %s644, 8
      %s646 = scalar_lea.vmem %s16, %s645
      %s647 = smul.u32 4, %s33
      %p648 = scmp.lt.s32.totalorder %s32, 1
      %s649 = scalar_select %p648, %s32, 1
      %p650 = scmp.lt.s32.totalorder %s647, 15
      %s651 = scalar_select %p650, %s647, 15
      %s652 = smul.addr %s651, 2
      %s653 = smul.addr %s649, 32
      %s654 = sadd.s32 %s652, %s653
      %s655 = smul.addr %s654, 4
      %s656 = scalar_lea.vmem %s0, %s655
      %s657 = smul.u32 4, %s33
      %s658 = smul.u32 %s33, 4
      %s659 = ssub.s32 %s658, 1
      %p660 = scmp.gt.s32.totalorder %s659, 0
      %s661 = scalar_select %p660, %s659, 0
      %p662 = scmp.lt.s32.totalorder %s32, 1
      %s663 = scalar_select %p662, %s32, 1
      %p664 = scmp.lt.s32.totalorder %s661, 15
      %s665 = scalar_select %p664, %s661, 15
      %s666 = smul.addr %s665, 2
      %s667 = smul.addr %s663, 32
      %s668 = sadd.s32 %s666, %s667
      %s669 = smul.addr %s668, 4
      %s670 = scalar_lea.vmem %s1, %s669
      %s671 = smul.u32 %s33, 4
      %s672 = ssub.s32 %s671, 1
      %p673 = scmp.gt.s32.totalorder %s672, 0
      %s674 = scalar_select %p673, %s672, 0
      %s675 = sadd.s32 %s33, 1
      %s676 = smul.u32 %s675, 4
      %p677 = scmp.lt.s32.totalorder %s676, 15
      %s678 = scalar_select %p677, %s676, 15
      %p679 = scmp.lt.s32.totalorder %s32, 1
      %s680 = scalar_select %p679, %s32, 1
      %p681 = scmp.lt.s32.totalorder %s678, 15
      %s682 = scalar_select %p681, %s678, 15
      %s683 = smul.addr %s682, 2
      %s684 = smul.addr %s680, 32
      %s685 = sadd.s32 %s683, %s684
      %s686 = smul.addr %s685, 4
      %s687 = scalar_lea.vmem %s2, %s686
      %s688 = sadd.s32 %s33, 1
      %s689 = smul.u32 %s688, 4
      %p690 = scmp.lt.s32.totalorder %s689, 15
      %s691 = scalar_select %p690, %s689, 15
      %s692 = smul.u32 8, %s33
      %p693 = scmp.lt.s32.totalorder %s32, 1
      %s694 = scalar_select %p693, %s32, 1
      %p695 = scmp.lt.s32.totalorder %s692, 31
      %s696 = scalar_select %p695, %s692, 31
      %s697 = smul.addr %s694, 32
      %s698 = sadd.s32 %s696, %s697
      %s699 = smul.addr %s698, 8
      %s700 = scalar_lea.vmem %s15, %s699
      %s701 = smul.u32 8, %s33
      %s702 = smul.u32 8, %s33
      %p703 = scmp.lt.s32.totalorder %s32, 1
      %s704 = scalar_select %p703, %s32, 1
      %p705 = scmp.lt.s32.totalorder %s702, 31
      %s706 = scalar_select %p705, %s702, 31
      %s707 = smul.addr %s704, 32
      %s708 = sadd.s32 %s706, %s707
      %s709 = smul.addr %s708, 8
      %s710 = scalar_lea.vmem %s16, %s709
      %s711 = smul.u32 8, %s33
      %v713 = vld [vmem:[%s656] sm:$0xf]
      %v714 = vld [vmem:[%s656 + $0x4] sm:$0xf]
      %v715 = vld [vmem:[%s656 + $0x8] sm:$0xf]
      %v716 = vld [vmem:[%s656 + $0xc] sm:$0xf]
      %v717 = vld [vmem:[%s656 + $0x10] sm:$0xf]
      %v718 = vld [vmem:[%s656 + $0x14] sm:$0xf]
      %v719 = vld [vmem:[%s656 + $0x18] sm:$0xf]
      %v720 = vld [vmem:[%s656 + $0x1c] sm:$0xf]
      %v721 = vld [vmem:[%s670] sm:$0xf]
      %v722 = vld [vmem:[%s670 + $0x4] sm:$0xf]
      %v723 = vld [vmem:[%s687] sm:$0xf]
      %v724 = vld [vmem:[%s687 + $0x4] sm:$0xf]
      %v725 = vld [vmem:[%s3] sm:$0x3]
      %v738 = vunpack.c.l.b16 %v721
      %v739 = vunpack.c.l.b16 %v722
      %v740 = vunpack.c.l.b16 %v713
      %v741 = vunpack.c.l.b16 %v714
      %v742 = vunpack.c.l.b16 %v715
      %v743 = vunpack.c.l.b16 %v716
      %v744 = vunpack.c.l.b16 %v717
      %v745 = vunpack.c.l.b16 %v718
      %v746 = vunpack.c.l.b16 %v719
      %v747 = vunpack.c.l.b16 %v720
      %v748 = vunpack.c.l.b16 %v723
      %v749 = vunpack.c.l.b16 %v724
      %v750 = vpack.c.b16 %v739, %v738
      %v751 = vpack.c.b16 %v741, %v740
      %v752 = vpack.c.b16 %v743, %v742
      %v753 = vpack.c.b16 %v745, %v744
      %v754 = vpack.c.b16 %v747, %v746
      %v755 = vpack.c.b16 %v749, %v748
      %vm756 = vcmask 31744
      %v758 = vsel %vm756, %v750, 0
      %v761 = vsel %vm756, %v751, 0
      %v764 = vsel %vm756, %v752, 0
      %v767 = vsel %vm756, %v753, 0
      %v770 = vsel %vm756, %v754, 0
      %v773 = vsel %vm756, %v755, 0
      %vm775 = vcmask 1041408
      %v777 = vsel %vm775, %v725, 0
      %779 = vmatpush.bf16.msra.mxu0 0
      %780 = vmatpush.bf16.msra.mxu0 0
      %781 = vmatpush.bf16.msra.mxu0 0
      %782 = vmatpush.bf16.msra.mxu0 0
      %783 = vmatpush.bf16.msra.mxu0 0
      %784 = vmatpush.bf16.msra.mxu0 0
      %785 = vmatpush.bf16.msra.mxu0 0
      %786 = vmatpush.bf16.msra.mxu0 %v777
      %787 = vmatmul.bf16.gmra.mxu0 %v758
      %v788 = vpop.f32.mrf.mxu0
      %v789 = vadd.f32 0.0, %v788
      %v790 = vpop.f32.mrf.mxu0
      %v791 = vadd.f32 0.0, %v790
      %792 = vmatmul.bf16.gmra.mxu0 %v761
      %v793 = vpop.f32.mrf.mxu0
      %v794 = vadd.f32 0.0, %v793
      %v795 = vpop.f32.mrf.mxu0
      %v796 = vadd.f32 0.0, %v795
      %797 = vmatmul.bf16.gmra.mxu0 %v764
      %v798 = vpop.f32.mrf.mxu0
      %v799 = vadd.f32 0.0, %v798
      %v800 = vpop.f32.mrf.mxu0
      %v801 = vadd.f32 0.0, %v800
      %802 = vmatmul.bf16.gmra.mxu0 %v767
      %v803 = vpop.f32.mrf.mxu0
      %v804 = vadd.f32 0.0, %v803
      %v805 = vpop.f32.mrf.mxu0
      %v806 = vadd.f32 0.0, %v805
      %807 = vmatmul.bf16.gmra.mxu0 %v770
      %v808 = vpop.f32.mrf.mxu0
      %v809 = vadd.f32 0.0, %v808
      %v810 = vpop.f32.mrf.mxu0
      %v811 = vadd.f32 0.0, %v810
      %812 = vmatmul.bf16.gmra.mxu0 %v773
      %v813 = vpop.f32.mrf.mxu0
      %v814 = vadd.f32 0.0, %v813
      %v815 = vpop.f32.mrf.mxu0
      %v816 = vadd.f32 0.0, %v815
      %817 = vdwg.mxu0
      %v818 = vld [vmem:[%s4] sm:$0x1]
      %v820 = vperm.slane %v818, 0
      %v822 = vmul.f32 %v789, %v820
      %v823 = vmul.f32 %v791, %v820
      %v824 = vmul.f32 %v794, %v820
      %v825 = vmul.f32 %v796, %v820
      %v826 = vmul.f32 %v799, %v820
      %v827 = vmul.f32 %v801, %v820
      %v828 = vmul.f32 %v804, %v820
      %v829 = vmul.f32 %v806, %v820
      %v830 = vmul.f32 %v809, %v820
      %v831 = vmul.f32 %v811, %v820
      %v832 = vmul.f32 %v814, %v820
      %v833 = vmul.f32 %v816, %v820
      %v834 = vld [vmem:[%s5] sm:$0x1]
      %v836 = vperm.slane %v834, 0
      %v838 = vadd.f32 %v822, %v836
      %v839 = vadd.f32 %v823, %v836
      %v840 = vadd.f32 %v824, %v836
      %v841 = vadd.f32 %v825, %v836
      %v842 = vadd.f32 %v826, %v836
      %v843 = vadd.f32 %v827, %v836
      %v844 = vadd.f32 %v828, %v836
      %v845 = vadd.f32 %v829, %v836
      %v846 = vadd.f32 %v830, %v836
      %v847 = vadd.f32 %v831, %v836
      %v848 = vadd.f32 %v832, %v836
      %v849 = vadd.f32 %v833, %v836
      %v850 = vmax.f32 %v838, 0.0
      %v851 = vmax.f32 %v839, 0.0
      %v852 = vmax.f32 %v840, 0.0
      %v853 = vmax.f32 %v841, 0.0
      %v854 = vmax.f32 %v842, 0.0
      %v855 = vmax.f32 %v843, 0.0
      %v856 = vmax.f32 %v844, 0.0
      %v857 = vmax.f32 %v845, 0.0
      %v858 = vmax.f32 %v846, 0.0
      %v859 = vmax.f32 %v847, 0.0
      %v860 = vmax.f32 %v848, 0.0
      %v861 = vmax.f32 %v849, 0.0
      %v862 = vpack.c.bf16 %v850, %v850
      %v863 = vpack.c.bf16 %v851, %v851
      %v864 = vpack.c.bf16 %v852, %v852
      %v865 = vpack.c.bf16 %v853, %v853
      %v866 = vpack.c.bf16 %v854, %v854
      %v867 = vpack.c.bf16 %v855, %v855
      %v868 = vpack.c.bf16 %v856, %v856
      %v869 = vpack.c.bf16 %v857, %v857
      %v870 = vpack.c.bf16 %v858, %v858
      %v871 = vpack.c.bf16 %v859, %v859
      %v872 = vpack.c.bf16 %v860, %v860
      %v873 = vpack.c.bf16 %v861, %v861
      %vm874 = vsmask.f32 256
      %vm875 = vsmask.f32 4368
      %vm876 = vmor %vm874, %vm875
      %v878 = vshrl.u32 %v862, 16
      %v880 = vrot.slane %v878, 7
      %v881 = vshll.u32 %v862, 16
      %v883 = vor.u32 %v880, %v881
      %v884 = vrot.slane %v880, 4
      %v886 = vshrl.u32 %v863, 16
      %v888 = vrot.slane %v886, 7
      %v889 = vshll.u32 %v863, 16
      %v891 = vor.u32 %v888, %v889
      %v892 = vsel %vm876, %v884, %v891
      %v893 = vrot.slane %v888, 4
      %v895 = vshrl.u32 %v864, 16
      %v897 = vrot.slane %v895, 7
      %v898 = vshll.u32 %v864, 16
      %v900 = vor.u32 %v897, %v898
      %v901 = vrot.slane %v897, 4
      %v903 = vshrl.u32 %v865, 16
      %v905 = vrot.slane %v903, 7
      %v906 = vshll.u32 %v865, 16
      %v908 = vor.u32 %v905, %v906
      %v909 = vsel %vm876, %v901, %v908
      %v910 = vrot.slane %v905, 4
      %v912 = vshrl.u32 %v866, 16
      %v914 = vrot.slane %v912, 7
      %v915 = vshll.u32 %v866, 16
      %v917 = vor.u32 %v914, %v915
      %v918 = vrot.slane %v914, 4
      %v920 = vshrl.u32 %v867, 16
      %v922 = vrot.slane %v920, 7
      %v923 = vshll.u32 %v867, 16
      %v925 = vor.u32 %v922, %v923
      %v926 = vsel %vm876, %v918, %v925
      %v927 = vrot.slane %v922, 4
      %v929 = vshrl.u32 %v868, 16
      %v931 = vrot.slane %v929, 7
      %v932 = vshll.u32 %v868, 16
      %v934 = vor.u32 %v931, %v932
      %v935 = vrot.slane %v931, 4
      %v937 = vshrl.u32 %v869, 16
      %v939 = vrot.slane %v937, 7
      %v940 = vshll.u32 %v869, 16
      %v942 = vor.u32 %v939, %v940
      %v943 = vsel %vm876, %v935, %v942
      %v944 = vrot.slane %v939, 4
      %v946 = vshrl.u32 %v870, 16
      %v948 = vrot.slane %v946, 7
      %v949 = vshll.u32 %v870, 16
      %v951 = vor.u32 %v948, %v949
      %v952 = vrot.slane %v948, 4
      %v954 = vshrl.u32 %v871, 16
      %v956 = vrot.slane %v954, 7
      %v957 = vshll.u32 %v871, 16
      %v959 = vor.u32 %v956, %v957
      %v960 = vsel %vm876, %v952, %v959
      %v961 = vrot.slane %v956, 4
      %v963 = vshrl.u32 %v872, 16
      %v965 = vrot.slane %v963, 7
      %v966 = vshll.u32 %v872, 16
      %v968 = vor.u32 %v965, %v966
      %v969 = vrot.slane %v965, 4
      %v971 = vshrl.u32 %v873, 16
      %v973 = vrot.slane %v971, 7
      %v974 = vshll.u32 %v873, 16
      %v976 = vor.u32 %v973, %v974
      %v977 = vsel %vm876, %v969, %v976
      %v978 = vrot.slane %v973, 4
      %vm997 = vcmask 27648
      %vm998 = vsmask.f32 7938
      %vm999 = vmand %vm997, %vm998
      %v1000 = vld [vmem:[#allocation2] sm:$0xf]
      %v1001 = vsel %vm999, %v883, %v1000
      %1002 = vst [vmem:[#allocation2] sm:$0xf] %v1001
      %vm1003 = vcmask 27648
      %1004 = vst.msk [vmem:[#allocation2 + $0x4] sm:$0xf] %vm1003, %v892
      %vm1005 = vcmask 24576
      %vm1006 = vmand %vm1005, %vm874
      %v1007 = vld [vmem:[#allocation2 + $0x8] sm:$0x1]
      %v1008 = vsel %vm1006, %v893, %v1007
      %1009 = vst [vmem:[#allocation2 + $0x8] sm:$0x1] %v1008
      %v1010 = vld [vmem:[#allocation2 + $0xc] sm:$0xf]
      %v1011 = vsel %vm999, %v900, %v1010
      %1012 = vst [vmem:[#allocation2 + $0xc] sm:$0xf] %v1011
      %1013 = vst.msk [vmem:[#allocation2 + $0x10] sm:$0xf] %vm1003, %v909
      %v1014 = vld [vmem:[#allocation2 + $0x14] sm:$0x1]
      %v1015 = vsel %vm1006, %v910, %v1014
      %1016 = vst [vmem:[#allocation2 + $0x14] sm:$0x1] %v1015
      %v1017 = vld [vmem:[#allocation2 + $0x18] sm:$0xf]
      %v1018 = vsel %vm999, %v917, %v1017
      %1019 = vst [vmem:[#allocation2 + $0x18] sm:$0xf] %v1018
      %1020 = vst.msk [vmem:[#allocation2 + $0x1c] sm:$0xf] %vm1003, %v926
      %v1021 = vld [vmem:[#allocation2 + $0x20] sm:$0x1]
      %v1022 = vsel %vm1006, %v927, %v1021
      %1023 = vst [vmem:[#allocation2 + $0x20] sm:$0x1] %v1022
      %v1024 = vld [vmem:[#allocation2 + $0x24] sm:$0xf]
      %v1025 = vsel %vm999, %v934, %v1024
      %1026 = vst [vmem:[#allocation2 + $0x24] sm:$0xf] %v1025
      %1027 = vst.msk [vmem:[#allocation2 + $0x28] sm:$0xf] %vm1003, %v943
      %v1028 = vld [vmem:[#allocation2 + $0x2c] sm:$0x1]
      %v1029 = vsel %vm1006, %v944, %v1028
      %1030 = vst [vmem:[#allocation2 + $0x2c] sm:$0x1] %v1029
      %v1031 = vld [vmem:[#allocation2 + $0x30] sm:$0xf]
      %v1032 = vsel %vm999, %v951, %v1031
      %1033 = vst [vmem:[#allocation2 + $0x30] sm:$0xf] %v1032
      %1034 = vst.msk [vmem:[#allocation2 + $0x34] sm:$0xf] %vm1003, %v960
      %v1035 = vld [vmem:[#allocation2 + $0x38] sm:$0x1]
      %v1036 = vsel %vm1006, %v961, %v1035
      %1037 = vst [vmem:[#allocation2 + $0x38] sm:$0x1] %v1036
      %v1038 = vld [vmem:[#allocation2 + $0x3c] sm:$0xf]
      %v1039 = vsel %vm999, %v968, %v1038
      %1040 = vst [vmem:[#allocation2 + $0x3c] sm:$0xf] %v1039
      %1041 = vst.msk [vmem:[#allocation2 + $0x40] sm:$0xf] %vm1003, %v977
      %v1042 = vld [vmem:[#allocation2 + $0x44] sm:$0x1]
      %v1043 = vsel %vm1006, %v978, %v1042
      %1044 = vst [vmem:[#allocation2 + $0x44] sm:$0x1] %v1043
      %v1045 = vld [vmem:[#allocation2] sm:$0x1]
      %v1046 = vsel %vm1006, 0, %v1045
      %1047 = vst [vmem:[#allocation2] sm:$0x1] %v1046
      %v1048 = vld [vmem:[#allocation2 + $0xc] sm:$0x1]
      %v1049 = vsel %vm1006, 0, %v1048
      %1050 = vst [vmem:[#allocation2 + $0xc] sm:$0x1] %v1049
      %v1051 = vld [vmem:[#allocation2 + $0x18] sm:$0x1]
      %v1052 = vsel %vm1006, 0, %v1051
      %1053 = vst [vmem:[#allocation2 + $0x18] sm:$0x1] %v1052
      %v1054 = vld [vmem:[#allocation2 + $0x24] sm:$0x1]
      %v1055 = vsel %vm1006, 0, %v1054
      %1056 = vst [vmem:[#allocation2 + $0x24] sm:$0x1] %v1055
      %v1057 = vld [vmem:[#allocation2 + $0x30] sm:$0x1]
      %v1058 = vsel %vm1006, 0, %v1057
      %1059 = vst [vmem:[#allocation2 + $0x30] sm:$0x1] %v1058
      %v1060 = vld [vmem:[#allocation2 + $0x3c] sm:$0x1]
      %v1061 = vsel %vm1006, 0, %v1060
      %1062 = vst [vmem:[#allocation2 + $0x3c] sm:$0x1] %v1061
      %vm1063 = vmand %vm1005, %vm998
      %v1064 = vld [vmem:[#allocation2 + $0x8] sm:$0x1]
      %v1065 = vsel %vm1063, 0, %v1064
      %1066 = vst [vmem:[#allocation2 + $0x8] sm:$0x1] %v1065
      %v1067 = vld [vmem:[#allocation2 + $0x14] sm:$0x1]
      %v1068 = vsel %vm1063, 0, %v1067
      %1069 = vst [vmem:[#allocation2 + $0x14] sm:$0x1] %v1068
      %v1070 = vld [vmem:[#allocation2 + $0x20] sm:$0x1]
      %v1071 = vsel %vm1063, 0, %v1070
      %1072 = vst [vmem:[#allocation2 + $0x20] sm:$0x1] %v1071
      %v1073 = vld [vmem:[#allocation2 + $0x2c] sm:$0x1]
      %v1074 = vsel %vm1063, 0, %v1073
      %1075 = vst [vmem:[#allocation2 + $0x2c] sm:$0x1] %v1074
      %v1076 = vld [vmem:[#allocation2 + $0x38] sm:$0x1]
      %v1077 = vsel %vm1063, 0, %v1076
      %1078 = vst [vmem:[#allocation2 + $0x38] sm:$0x1] %v1077
      %v1079 = vld [vmem:[#allocation2 + $0x44] sm:$0x1]
      %v1080 = vsel %vm1063, 0, %v1079
      %1081 = vst [vmem:[#allocation2 + $0x44] sm:$0x1] %v1080
      %p1082 = scmp.eq.s32.totalorder %s33, 0
      // Predicated region
      $region81: #{tpu_custom_call.1} parent=79 // pred_check
        %p1083 = pneg %p1082
      $region82: #{tpu_custom_call.1} parent=79 // pred_check_branch
        %1085 = sbr.rel (%p1083) target = $region84
      $region83: #{tpu_custom_call.1} parent=79 // pred_region
        %1086 = vst.msk [vmem:[#allocation2] sm:$0xf] %vm1003, 0
        %1087 = vst.msk [vmem:[#allocation2 + $0x4] sm:$0xf] %vm1003, 0
        %vm1088 = vcmask 24576
        %1089 = vst.msk [vmem:[#allocation2 + $0x8] sm:$0x1] %vm1088, 0
      $region84: #{tpu_custom_call.1} parent=79 // pred_fallthru
        _
      %p1090 = scmp.eq.s32.totalorder %s33, 3
      // Predicated region
      $region85: #{tpu_custom_call.1} parent=79 // pred_check
        %p1091 = pneg %p1090
      $region86: #{tpu_custom_call.1} parent=79 // pred_check_branch
        %1093 = sbr.rel (%p1091) target = $region88
      $region87: #{tpu_custom_call.1} parent=79 // pred_region
        %s1094 = scalar_lea.vmem [#allocation2], 60
        %1095 = vst.msk [vmem:[%s1094] sm:$0xf] %vm1003, 0
        %1096 = vst.msk [vmem:[%s1094 + $0x4] sm:$0xf] %vm1003, 0
        %vm1097 = vcmask 24576
        %1098 = vst.msk [vmem:[%s1094 + $0x8] sm:$0x1] %vm1097, 0
      $region88: #{tpu_custom_call.1} parent=79 // pred_fallthru
        _
      %v1099 = vld [vmem:[#allocation2] sm:$0xf]
      %v1100 = vld [vmem:[#allocation2 + $0x4] sm:$0xf]
      %v1101 = vld [vmem:[#allocation2 + $0xc] sm:$0xf]
      %v1102 = vld [vmem:[#allocation2 + $0x10] sm:$0xf]
      %v1103 = vld [vmem:[#allocation2 + $0x18] sm:$0xf]
      %v1104 = vld [vmem:[#allocation2 + $0x1c] sm:$0xf]
      %v1105 = vld [vmem:[#allocation2 + $0x24] sm:$0xf]
      %v1106 = vld [vmem:[#allocation2 + $0x28] sm:$0xf]
      %v1107 = vld [vmem:[#allocation2 + $0x8] sm:$0x1]
      %v1108 = vld [vmem:[#allocation2 + $0x14] sm:$0x1]
      %v1109 = vld [vmem:[#allocation2 + $0x20] sm:$0x1]
      %v1110 = vld [vmem:[#allocation2 + $0x2c] sm:$0x1]
      %v1111 = vld [vmem:[#allocation2] sm:$0xe]
      %v1112 = vld [vmem:[#allocation2 + $0xc] sm:$0xe]
      %v1113 = vld [vmem:[#allocation2 + $0x18] sm:$0xe]
      %v1114 = vld [vmem:[#allocation2 + $0x24] sm:$0xe]
      %s1115 = scalar_lea.vmem [#allocation2], 12
      %v1116 = vld [vmem:[%s1115] sm:$0xf]
      %v1117 = vld [vmem:[%s1115 + $0x4] sm:$0xf]
      %v1118 = vld [vmem:[%s1115 + $0xc] sm:$0xf]
      %v1119 = vld [vmem:[%s1115 + $0x10] sm:$0xf]
      %v1120 = vld [vmem:[%s1115 + $0x18] sm:$0xf]
      %v1121 = vld [vmem:[%s1115 + $0x1c] sm:$0xf]
      %v1122 = vld [vmem:[%s1115 + $0x24] sm:$0xf]
      %v1123 = vld [vmem:[%s1115 + $0x28] sm:$0xf]
      %v1124 = vld [vmem:[%s1115 + $0x8] sm:$0x1]
      %v1125 = vld [vmem:[%s1115 + $0x14] sm:$0x1]
      %v1126 = vld [vmem:[%s1115 + $0x20] sm:$0x1]
      %v1127 = vld [vmem:[%s1115 + $0x2c] sm:$0x1]
      %v1128 = vld [vmem:[%s1115] sm:$0xe]
      %v1129 = vld [vmem:[%s1115 + $0xc] sm:$0xe]
      %v1130 = vld [vmem:[%s1115 + $0x18] sm:$0xe]
      %v1131 = vld [vmem:[%s1115 + $0x24] sm:$0xe]
      %s1132 = scalar_lea.vmem [#allocation2], 24
      %v1133 = vld [vmem:[%s1132] sm:$0xf]
      %v1134 = vld [vmem:[%s1132 + $0x4] sm:$0xf]
      %v1135 = vld [vmem:[%s1132 + $0xc] sm:$0xf]
      %v1136 = vld [vmem:[%s1132 + $0x10] sm:$0xf]
      %v1137 = vld [vmem:[%s1132 + $0x18] sm:$0xf]
      %v1138 = vld [vmem:[%s1132 + $0x1c] sm:$0xf]
      %v1139 = vld [vmem:[%s1132 + $0x24] sm:$0xf]
      %v1140 = vld [vmem:[%s1132 + $0x28] sm:$0xf]
      %v1141 = vld [vmem:[%s1132 + $0x8] sm:$0x1]
      %v1142 = vld [vmem:[%s1132 + $0x14] sm:$0x1]
      %v1143 = vld [vmem:[%s1132 + $0x20] sm:$0x1]
      %v1144 = vld [vmem:[%s1132 + $0x2c] sm:$0x1]
      %v1145 = vld [vmem:[%s1132] sm:$0xe]
      %v1146 = vld [vmem:[%s1132 + $0xc] sm:$0xe]
      %v1147 = vld [vmem:[%s1132 + $0x18] sm:$0xe]
      %v1148 = vld [vmem:[%s1132 + $0x24] sm:$0xe]
      %v1157 = vunpack.c.l.b16 %v1099
      %v1158 = vunpack.c.l.b16 %v1100
      %v1159 = vunpack.c.l.b16 %v1101
      %v1160 = vunpack.c.l.b16 %v1102
      %v1161 = vunpack.c.l.b16 %v1103
      %v1162 = vunpack.c.l.b16 %v1104
      %v1163 = vunpack.c.l.b16 %v1105
      %v1164 = vunpack.c.l.b16 %v1106
      %v1165 = vpack.c.b16 %v1158, %v1157
      %v1166 = vpack.c.b16 %v1160, %v1159
      %v1167 = vpack.c.b16 %v1162, %v1161
      %v1168 = vpack.c.b16 %v1164, %v1163
      %v1173 = vunpack.c.l.b16 %v1107
      %v1174 = vunpack.c.l.b16 %v1108
      %v1175 = vunpack.c.l.b16 %v1109
      %v1176 = vunpack.c.l.b16 %v1110
      %v1177 = vpack.c.b16 %v1173, %v1173
      %v1178 = vpack.c.b16 %v1174, %v1174
      %v1179 = vpack.c.b16 %v1175, %v1175
      %v1180 = vpack.c.b16 %v1176, %v1176
      %vm1181 = vsmask.f32 7424
      %v1183 = vshrl.u32 %v1165, 16
      %v1185 = vshll.u32 %v1165, 16
      %v1187 = vrot.slane %v1185, 1
      %v1188 = vor.u32 %v1183, %v1187
      %v1190 = vshll.u32 %v1177, 16
      %v1192 = vrot.slane %v1190, 1
      %v1193 = vsel %vm1181, %v1188, %v1192
      %v1195 = vshrl.u32 %v1166, 16
      %v1197 = vshll.u32 %v1166, 16
      %v1199 = vrot.slane %v1197, 1
      %v1200 = vor.u32 %v1195, %v1199
      %v1202 = vshll.u32 %v1178, 16
      %v1204 = vrot.slane %v1202, 1
      %v1205 = vsel %vm1181, %v1200, %v1204
      %v1207 = vshrl.u32 %v1167, 16
      %v1209 = vshll.u32 %v1167, 16
      %v1211 = vrot.slane %v1209, 1
      %v1212 = vor.u32 %v1207, %v1211
      %v1214 = vshll.u32 %v1179, 16
      %v1216 = vrot.slane %v1214, 1
      %v1217 = vsel %vm1181, %v1212, %v1216
      %v1219 = vshrl.u32 %v1168, 16
      %v1221 = vshll.u32 %v1168, 16
      %v1223 = vrot.slane %v1221, 1
      %v1224 = vor.u32 %v1219, %v1223
      %v1226 = vshll.u32 %v1180, 16
      %v1228 = vrot.slane %v1226, 1
      %v1229 = vsel %vm1181, %v1224, %v1228
      %1230 = vrot.lane.b32.xlu0 %v1193, 4
      %v1231 = vpop.permute.xlu0 %1230
      %1232 = vrot.lane.b32.xlu0 %v1205, 4
      %v1233 = vpop.permute.xlu0 %1232
      %1234 = vrot.lane.b32.xlu0 %v1217, 4
      %v1235 = vpop.permute.xlu0 %1234
      %1236 = vrot.lane.b32.xlu0 %v1229, 4
      %v1237 = vpop.permute.xlu0 %1236
      %v1242 = vunpack.c.l.b16 %v1111
      %v1243 = vunpack.c.l.b16 %v1112
      %v1244 = vunpack.c.l.b16 %v1113
      %v1245 = vunpack.c.l.b16 %v1114
      %v1246 = vpack.c.b16 %v1158, %v1242
      %v1247 = vpack.c.b16 %v1160, %v1243
      %v1248 = vpack.c.b16 %v1162, %v1244
      %v1249 = vpack.c.b16 %v1164, %v1245
      %vm1250 = vcmask 1046528
      %v1251 = vrot.slane %v1246, 1
      %v1252 = vrot.slane %v1177, 1
      %v1253 = vsel %vm1250, %v1251, %v1252
      %v1254 = vrot.slane %v1247, 1
      %v1255 = vrot.slane %v1178, 1
      %v1256 = vsel %vm1250, %v1254, %v1255
      %v1257 = vrot.slane %v1248, 1
      %v1258 = vrot.slane %v1179, 1
      %v1259 = vsel %vm1250, %v1257, %v1258
      %v1260 = vrot.slane %v1249, 1
      %v1261 = vrot.slane %v1180, 1
      %v1262 = vsel %vm1250, %v1260, %v1261
      %1263 = vrot.lane.b32.xlu0 %v1253, 8
      %v1264 = vpop.permute.xlu0 %1263
      %1265 = vrot.lane.b32.xlu0 %v1256, 8
      %v1266 = vpop.permute.xlu0 %1265
      %1267 = vrot.lane.b32.xlu0 %v1259, 8
      %v1268 = vpop.permute.xlu0 %1267
      %1269 = vrot.lane.b32.xlu0 %v1262, 8
      %v1270 = vpop.permute.xlu0 %1269
      %v1279 = vunpack.c.l.b16 %v1116
      %v1280 = vunpack.c.l.b16 %v1117
      %v1281 = vunpack.c.l.b16 %v1118
      %v1282 = vunpack.c.l.b16 %v1119
      %v1283 = vunpack.c.l.b16 %v1120
      %v1284 = vunpack.c.l.b16 %v1121
      %v1285 = vunpack.c.l.b16 %v1122
      %v1286 = vunpack.c.l.b16 %v1123
      %v1287 = vpack.c.b16 %v1280, %v1279
      %v1288 = vpack.c.b16 %v1282, %v1281
      %v1289 = vpack.c.b16 %v1284, %v1283
      %v1290 = vpack.c.b16 %v1286, %v1285
      %1291 = vrot.lane.b32.xlu0 %v1287, 12
      %v1292 = vpop.permute.xlu0 %1291
      %1293 = vrot.lane.b32.xlu0 %v1288, 12
      %v1294 = vpop.permute.xlu0 %1293
      %1295 = vrot.lane.b32.xlu0 %v1289, 12
      %v1296 = vpop.permute.xlu0 %1295
      %1297 = vrot.lane.b32.xlu0 %v1290, 12
      %v1298 = vpop.permute.xlu0 %1297
      %v1303 = vunpack.c.l.b16 %v1124
      %v1304 = vunpack.c.l.b16 %v1125
      %v1305 = vunpack.c.l.b16 %v1126
      %v1306 = vunpack.c.l.b16 %v1127
      %v1307 = vpack.c.b16 %v1303, %v1303
      %v1308 = vpack.c.b16 %v1304, %v1304
      %v1309 = vpack.c.b16 %v1305, %v1305
      %v1310 = vpack.c.b16 %v1306, %v1306
      %v1312 = vshrl.u32 %v1287, 16
      %v1314 = vshll.u32 %v1287, 16
      %v1316 = vrot.slane %v1314, 1
      %v1317 = vor.u32 %v1312, %v1316
      %v1319 = vshll.u32 %v1307, 16
      %v1321 = vrot.slane %v1319, 1
      %v1322 = vsel %vm1181, %v1317, %v1321
      %v1324 = vshrl.u32 %v1288, 16
      %v1326 = vshll.u32 %v1288, 16
      %v1328 = vrot.slane %v1326, 1
      %v1329 = vor.u32 %v1324, %v1328
      %v1331 = vshll.u32 %v1308, 16
      %v1333 = vrot.slane %v1331, 1
      %v1334 = vsel %vm1181, %v1329, %v1333
      %v1336 = vshrl.u32 %v1289, 16
      %v1338 = vshll.u32 %v1289, 16
      %v1340 = vrot.slane %v1338, 1
      %v1341 = vor.u32 %v1336, %v1340
      %v1343 = vshll.u32 %v1309, 16
      %v1345 = vrot.slane %v1343, 1
      %v1346 = vsel %vm1181, %v1341, %v1345
      %v1348 = vshrl.u32 %v1290, 16
      %v1350 = vshll.u32 %v1290, 16
      %v1352 = vrot.slane %v1350, 1
      %v1353 = vor.u32 %v1348, %v1352
      %v1355 = vshll.u32 %v1310, 16
      %v1357 = vrot.slane %v1355, 1
      %v1358 = vsel %vm1181, %v1353, %v1357
      %1359 = vrot.lane.b32.xlu0 %v1322, 16
      %v1360 = vpop.permute.xlu0 %1359
      %1361 = vrot.lane.b32.xlu0 %v1334, 16
      %v1362 = vpop.permute.xlu0 %1361
      %1363 = vrot.lane.b32.xlu0 %v1346, 16
      %v1364 = vpop.permute.xlu0 %1363
      %1365 = vrot.lane.b32.xlu0 %v1358, 16
      %v1366 = vpop.permute.xlu0 %1365
      %v1371 = vunpack.c.l.b16 %v1128
      %v1372 = vunpack.c.l.b16 %v1129
      %v1373 = vunpack.c.l.b16 %v1130
      %v1374 = vunpack.c.l.b16 %v1131
      %v1375 = vpack.c.b16 %v1280, %v1371
      %v1376 = vpack.c.b16 %v1282, %v1372
      %v1377 = vpack.c.b16 %v1284, %v1373
      %v1378 = vpack.c.b16 %v1286, %v1374
      %v1379 = vrot.slane %v1375, 1
      %v1380 = vrot.slane %v1307, 1
      %v1381 = vsel %vm1250, %v1379, %v1380
      %v1382 = vrot.slane %v1376, 1
      %v1383 = vrot.slane %v1308, 1
      %v1384 = vsel %vm1250, %v1382, %v1383
      %v1385 = vrot.slane %v1377, 1
      %v1386 = vrot.slane %v1309, 1
      %v1387 = vsel %vm1250, %v1385, %v1386
      %v1388 = vrot.slane %v1378, 1
      %v1389 = vrot.slane %v1310, 1
      %v1390 = vsel %vm1250, %v1388, %v1389
      %1391 = vrot.lane.b32.xlu0 %v1381, 20
      %v1392 = vpop.permute.xlu0 %1391
      %1393 = vrot.lane.b32.xlu0 %v1384, 20
      %v1394 = vpop.permute.xlu0 %1393
      %1395 = vrot.lane.b32.xlu0 %v1387, 20
      %v1396 = vpop.permute.xlu0 %1395
      %1397 = vrot.lane.b32.xlu0 %v1390, 20
      %v1398 = vpop.permute.xlu0 %1397
      %v1407 = vunpack.c.l.b16 %v1133
      %v1408 = vunpack.c.l.b16 %v1134
      %v1409 = vunpack.c.l.b16 %v1135
      %v1410 = vunpack.c.l.b16 %v1136
      %v1411 = vunpack.c.l.b16 %v1137
      %v1412 = vunpack.c.l.b16 %v1138
      %v1413 = vunpack.c.l.b16 %v1139
      %v1414 = vunpack.c.l.b16 %v1140
      %v1415 = vpack.c.b16 %v1408, %v1407
      %v1416 = vpack.c.b16 %v1410, %v1409
      %v1417 = vpack.c.b16 %v1412, %v1411
      %v1418 = vpack.c.b16 %v1414, %v1413
      %1419 = vrot.lane.b32.xlu0 %v1415, 24
      %v1420 = vpop.permute.xlu0 %1419
      %1421 = vrot.lane.b32.xlu0 %v1416, 24
      %v1422 = vpop.permute.xlu0 %1421
      %1423 = vrot.lane.b32.xlu0 %v1417, 24
      %v1424 = vpop.permute.xlu0 %1423
      %1425 = vrot.lane.b32.xlu0 %v1418, 24
      %v1426 = vpop.permute.xlu0 %1425
      %v1431 = vunpack.c.l.b16 %v1141
      %v1432 = vunpack.c.l.b16 %v1142
      %v1433 = vunpack.c.l.b16 %v1143
      %v1434 = vunpack.c.l.b16 %v1144
      %v1435 = vpack.c.b16 %v1431, %v1431
      %v1436 = vpack.c.b16 %v1432, %v1432
      %v1437 = vpack.c.b16 %v1433, %v1433
      %v1438 = vpack.c.b16 %v1434, %v1434
      %v1440 = vshrl.u32 %v1415, 16
      %v1442 = vshll.u32 %v1415, 16
      %v1444 = vrot.slane %v1442, 1
      %v1445 = vor.u32 %v1440, %v1444
      %v1447 = vshll.u32 %v1435, 16
      %v1449 = vrot.slane %v1447, 1
      %v1450 = vsel %vm1181, %v1445, %v1449
      %v1452 = vshrl.u32 %v1416, 16
      %v1454 = vshll.u32 %v1416, 16
      %v1456 = vrot.slane %v1454, 1
      %v1457 = vor.u32 %v1452, %v1456
      %v1459 = vshll.u32 %v1436, 16
      %v1461 = vrot.slane %v1459, 1
      %v1462 = vsel %vm1181, %v1457, %v1461
      %v1464 = vshrl.u32 %v1417, 16
      %v1466 = vshll.u32 %v1417, 16
      %v1468 = vrot.slane %v1466, 1
      %v1469 = vor.u32 %v1464, %v1468
      %v1471 = vshll.u32 %v1437, 16
      %v1473 = vrot.slane %v1471, 1
      %v1474 = vsel %vm1181, %v1469, %v1473
      %v1476 = vshrl.u32 %v1418, 16
      %v1478 = vshll.u32 %v1418, 16
      %v1480 = vrot.slane %v1478, 1
      %v1481 = vor.u32 %v1476, %v1480
      %v1483 = vshll.u32 %v1438, 16
      %v1485 = vrot.slane %v1483, 1
      %v1486 = vsel %vm1181, %v1481, %v1485
      %1487 = vrot.lane.b32.xlu0 %v1450, 28
      %v1488 = vpop.permute.xlu0 %1487
      %1489 = vrot.lane.b32.xlu0 %v1462, 28
      %v1490 = vpop.permute.xlu0 %1489
      %1491 = vrot.lane.b32.xlu0 %v1474, 28
      %v1492 = vpop.permute.xlu0 %1491
      %1493 = vrot.lane.b32.xlu0 %v1486, 28
      %v1494 = vpop.permute.xlu0 %1493
      %v1499 = vunpack.c.l.b16 %v1145
      %v1500 = vunpack.c.l.b16 %v1146
      %v1501 = vunpack.c.l.b16 %v1147
      %v1502 = vunpack.c.l.b16 %v1148
      %v1503 = vpack.c.b16 %v1408, %v1499
      %v1504 = vpack.c.b16 %v1410, %v1500
      %v1505 = vpack.c.b16 %v1412, %v1501
      %v1506 = vpack.c.b16 %v1414, %v1502
      %v1507 = vrot.slane %v1503, 1
      %v1508 = vrot.slane %v1435, 1
      %v1509 = vsel %vm1250, %v1507, %v1508
      %v1510 = vrot.slane %v1504, 1
      %v1511 = vrot.slane %v1436, 1
      %v1512 = vsel %vm1250, %v1510, %v1511
      %v1513 = vrot.slane %v1505, 1
      %v1514 = vrot.slane %v1437, 1
      %v1515 = vsel %vm1250, %v1513, %v1514
      %v1516 = vrot.slane %v1506, 1
      %v1517 = vrot.slane %v1438, 1
      %v1518 = vsel %vm1250, %v1516, %v1517
      %1519 = vrot.lane.b32.xlu0 %v1509, 32
      %v1520 = vpop.permute.xlu0 %1519
      %1521 = vrot.lane.b32.xlu0 %v1512, 32
      %v1522 = vpop.permute.xlu0 %1521
      %1523 = vrot.lane.b32.xlu0 %v1515, 32
      %v1524 = vpop.permute.xlu0 %1523
      %1525 = vrot.lane.b32.xlu0 %v1518, 32
      %v1526 = vpop.permute.xlu0 %1525
      %v1528 = vsel %vm756, %v1165, %v1231
      %v1530 = vsel %vm756, %v1166, %v1233
      %v1532 = vsel %vm756, %v1167, %v1235
      %v1534 = vsel %vm756, %v1168, %v1237
      %vm1535 = vcmask 64512
      %v1537 = vsel %vm1535, %v1528, %v1264
      %v1539 = vsel %vm1535, %v1530, %v1266
      %v1541 = vsel %vm1535, %v1532, %v1268
      %v1543 = vsel %vm1535, %v1534, %v1270
      %vm1544 = vcmask 97280
      %v1546 = vsel %vm1544, %v1537, %v1292
      %v1548 = vsel %vm1544, %v1539, %v1294
      %v1550 = vsel %vm1544, %v1541, %v1296
      %v1552 = vsel %vm1544, %v1543, %v1298
      %vm1553 = vcmask 130048
      %v1555 = vsel %vm1553, %v1546, %v1360
      %v1557 = vsel %vm1553, %v1548, %v1362
      %v1559 = vsel %vm1553, %v1550, %v1364
      %v1561 = vsel %vm1553, %v1552, %v1366
      %vm1562 = vcmask 162816
      %v1564 = vsel %vm1562, %v1555, %v1392
      %v1566 = vsel %vm1562, %v1557, %v1394
      %v1568 = vsel %vm1562, %v1559, %v1396
      %v1570 = vsel %vm1562, %v1561, %v1398
      %vm1571 = vcmask 195584
      %v1573 = vsel %vm1571, %v1564, %v1420
      %v1575 = vsel %vm1571, %v1566, %v1422
      %v1577 = vsel %vm1571, %v1568, %v1424
      %v1579 = vsel %vm1571, %v1570, %v1426
      %vm1580 = vcmask 228352
      %v1582 = vsel %vm1580, %v1573, %v1488
      %v1584 = vsel %vm1580, %v1575, %v1490
      %v1586 = vsel %vm1580, %v1577, %v1492
      %v1588 = vsel %vm1580, %v1579, %v1494
      %vm1589 = vcmask 261120
      %v1591 = vsel %vm1589, %v1582, %v1520
      %v1593 = vsel %vm1589, %v1584, %v1522
      %v1595 = vsel %vm1589, %v1586, %v1524
      %v1597 = vsel %vm1589, %v1588, %v1526
      %v1598 = vld [vmem:[%s6] sm:$0xf]
      %v1599 = vld [vmem:[%s6 + $0x4] sm:$0xf]
      %v1600 = vld [vmem:[%s6 + $0x8] sm:$0xf]
      %v1601 = vld [vmem:[%s6 + $0xc] sm:$0xf]
      %v1602 = vld [vmem:[%s6 + $0x10] sm:$0x3]
      %v1608 = vunpack.c.l.b16 %v1598
      %v1609 = vunpack.c.l.b16 %v1599
      %v1610 = vunpack.c.l.b16 %v1600
      %v1611 = vunpack.c.l.b16 %v1601
      %v1612 = vunpack.c.l.b16 %v1602
      %v1613 = vpack.c.b16 %v1609, %v1608
      %v1614 = vpack.c.b16 %v1611, %v1610
      %v1615 = vpack.c.b16 %v1612, %v1612
      %vm1618 = vcmask 293888
      %v1619 = vsel %vm1618, %v1591, 0
      %v1621 = vsel %vm1618, %v1593, 0
      %v1623 = vsel %vm1618, %v1595, 0
      %v1625 = vsel %vm1618, %v1597, 0
      %v1628 = vsel %vm775, %v1615, 0
      %1630 = vmatpush.bf16.msra.mxu0 0
      %1631 = vmatpush.bf16.msra.mxu0 0
      %1632 = vmatpush.bf16.msra.mxu0 0
      %1633 = vmatpush.bf16.msra.mxu0 0
      %1634 = vmatpush.bf16.msra.mxu0 0
      %1635 = vmatpush.bf16.msra.mxu0 %v1628
      %1636 = vmatpush.bf16.msra.mxu0 %v1614
      %1637 = vmatpush.bf16.msra.mxu0 %v1613
      %1638 = vmatmul.bf16.gmra.mxu0 %v1619
      %v1639 = vpop.f32.mrf.mxu0
      %v1640 = vadd.f32 0.0, %v1639
      %v1641 = vpop.f32.mrf.mxu0
      %v1642 = vadd.f32 0.0, %v1641
      %1643 = vmatmul.bf16.gmra.mxu0 %v1621
      %v1644 = vpop.f32.mrf.mxu0
      %v1645 = vadd.f32 0.0, %v1644
      %v1646 = vpop.f32.mrf.mxu0
      %v1647 = vadd.f32 0.0, %v1646
      %1648 = vmatmul.bf16.gmra.mxu0 %v1623
      %v1649 = vpop.f32.mrf.mxu0
      %v1650 = vadd.f32 0.0, %v1649
      %v1651 = vpop.f32.mrf.mxu0
      %v1652 = vadd.f32 0.0, %v1651
      %1653 = vmatmul.bf16.gmra.mxu0 %v1625
      %v1654 = vpop.f32.mrf.mxu0
      %v1655 = vadd.f32 0.0, %v1654
      %v1656 = vpop.f32.mrf.mxu0
      %v1657 = vadd.f32 0.0, %v1656
      %1658 = vdwg.mxu0
      %v1659 = vld [vmem:[%s7] sm:$0x1]
      %v1661 = vperm.slane %v1659, 0
      %v1663 = vmul.f32 %v1640, %v1661
      %v1664 = vmul.f32 %v1642, %v1661
      %v1665 = vmul.f32 %v1645, %v1661
      %v1666 = vmul.f32 %v1647, %v1661
      %v1667 = vmul.f32 %v1650, %v1661
      %v1668 = vmul.f32 %v1652, %v1661
      %v1669 = vmul.f32 %v1655, %v1661
      %v1670 = vmul.f32 %v1657, %v1661
      %v1671 = vld [vmem:[%s8] sm:$0x1]
      %v1673 = vperm.slane %v1671, 0
      %v1675 = vadd.f32 %v1663, %v1673
      %v1676 = vadd.f32 %v1664, %v1673
      %v1677 = vadd.f32 %v1665, %v1673
      %v1678 = vadd.f32 %v1666, %v1673
      %v1679 = vadd.f32 %v1667, %v1673
      %v1680 = vadd.f32 %v1668, %v1673
      %v1681 = vadd.f32 %v1669, %v1673
      %v1682 = vadd.f32 %v1670, %v1673
      %v1683 = vmax.f32 %v1675, 0.0
      %v1684 = vmax.f32 %v1676, 0.0
      %v1685 = vmax.f32 %v1677, 0.0
      %v1686 = vmax.f32 %v1678, 0.0
      %v1687 = vmax.f32 %v1679, 0.0
      %v1688 = vmax.f32 %v1680, 0.0
      %v1689 = vmax.f32 %v1681, 0.0
      %v1690 = vmax.f32 %v1682, 0.0
      %v1691 = vpack.c.bf16 %v1684, %v1683
      %v1692 = vpack.c.bf16 %v1686, %v1685
      %v1693 = vpack.c.bf16 %v1688, %v1687
      %v1694 = vpack.c.bf16 %v1690, %v1689
      %v1695 = vld [vmem:[%s9] sm:$0x3]
      %v1697 = vsel %vm756, %v1691, 0
      %v1700 = vsel %vm756, %v1692, 0
      %v1703 = vsel %vm756, %v1693, 0
      %v1706 = vsel %vm756, %v1694, 0
      %v1709 = vsel %vm775, %v1695, 0
      %1711 = vmatpush.bf16.msra.mxu0 0
      %1712 = vmatpush.bf16.msra.mxu0 0
      %1713 = vmatpush.bf16.msra.mxu0 0
      %1714 = vmatpush.bf16.msra.mxu0 0
      %1715 = vmatpush.bf16.msra.mxu0 0
      %1716 = vmatpush.bf16.msra.mxu0 0
      %1717 = vmatpush.bf16.msra.mxu0 0
      %1718 = vmatpush.bf16.msra.mxu0 %v1709
      %1719 = vmatmul.bf16.gmra.mxu0 %v1697
      %v1720 = vpop.f32.mrf.mxu0
      %v1721 = vadd.f32 0.0, %v1720
      %v1722 = vpop.f32.mrf.mxu0
      %v1723 = vadd.f32 0.0, %v1722
      %1724 = vmatmul.bf16.gmra.mxu0 %v1700
      %v1725 = vpop.f32.mrf.mxu0
      %v1726 = vadd.f32 0.0, %v1725
      %v1727 = vpop.f32.mrf.mxu0
      %v1728 = vadd.f32 0.0, %v1727
      %1729 = vmatmul.bf16.gmra.mxu0 %v1703
      %v1730 = vpop.f32.mrf.mxu0
      %v1731 = vadd.f32 0.0, %v1730
      %v1732 = vpop.f32.mrf.mxu0
      %v1733 = vadd.f32 0.0, %v1732
      %1734 = vmatmul.bf16.gmra.mxu0 %v1706
      %v1735 = vpop.f32.mrf.mxu0
      %v1736 = vadd.f32 0.0, %v1735
      %v1737 = vpop.f32.mrf.mxu0
      %v1738 = vadd.f32 0.0, %v1737
      %1739 = vdwg.mxu0
      %v1740 = vld [vmem:[%s10] sm:$0x1]
      %v1742 = vperm.slane %v1740, 0
      %v1744 = vmul.f32 %v1721, %v1742
      %v1745 = vmul.f32 %v1723, %v1742
      %v1746 = vmul.f32 %v1726, %v1742
      %v1747 = vmul.f32 %v1728, %v1742
      %v1748 = vmul.f32 %v1731, %v1742
      %v1749 = vmul.f32 %v1733, %v1742
      %v1750 = vmul.f32 %v1736, %v1742
      %v1751 = vmul.f32 %v1738, %v1742
      %v1752 = vld [vmem:[%s11] sm:$0x1]
      %v1754 = vperm.slane %v1752, 0
      %v1756 = vadd.f32 %v1744, %v1754
      %v1757 = vadd.f32 %v1745, %v1754
      %v1758 = vadd.f32 %v1746, %v1754
      %v1759 = vadd.f32 %v1747, %v1754
      %v1760 = vadd.f32 %v1748, %v1754
      %v1761 = vadd.f32 %v1749, %v1754
      %v1762 = vadd.f32 %v1750, %v1754
      %v1763 = vadd.f32 %v1751, %v1754
      %v1764 = vld [vmem:[%s12] sm:$0x3]
      %v1766 = vsel %vm775, %v1764, 0
      %1768 = vmatpush.bf16.msra.mxu0 0
      %1769 = vmatpush.bf16.msra.mxu0 0
      %1770 = vmatpush.bf16.msra.mxu0 0
      %1771 = vmatpush.bf16.msra.mxu0 0
      %1772 = vmatpush.bf16.msra.mxu0 0
      %1773 = vmatpush.bf16.msra.mxu0 0
      %1774 = vmatpush.bf16.msra.mxu0 0
      %1775 = vmatpush.bf16.msra.mxu0 %v1766
      %1776 = vmatmul.bf16.gmra.mxu0 %v761
      %v1777 = vpop.f32.mrf.mxu0
      %v1778 = vadd.f32 0.0, %v1777
      %v1779 = vpop.f32.mrf.mxu0
      %v1780 = vadd.f32 0.0, %v1779
      %1781 = vmatmul.bf16.gmra.mxu0 %v764
      %v1782 = vpop.f32.mrf.mxu0
      %v1783 = vadd.f32 0.0, %v1782
      %v1784 = vpop.f32.mrf.mxu0
      %v1785 = vadd.f32 0.0, %v1784
      %1786 = vmatmul.bf16.gmra.mxu0 %v767
      %v1787 = vpop.f32.mrf.mxu0
      %v1788 = vadd.f32 0.0, %v1787
      %v1789 = vpop.f32.mrf.mxu0
      %v1790 = vadd.f32 0.0, %v1789
      %1791 = vmatmul.bf16.gmra.mxu0 %v770
      %v1792 = vpop.f32.mrf.mxu0
      %v1793 = vadd.f32 0.0, %v1792
      %v1794 = vpop.f32.mrf.mxu0
      %v1795 = vadd.f32 0.0, %v1794
      %1796 = vdwg.mxu0
      %v1797 = vld [vmem:[%s13] sm:$0x1]
      %v1799 = vperm.slane %v1797, 0
      %v1801 = vmul.f32 %v1778, %v1799
      %v1802 = vmul.f32 %v1780, %v1799
      %v1803 = vmul.f32 %v1783, %v1799
      %v1804 = vmul.f32 %v1785, %v1799
      %v1805 = vmul.f32 %v1788, %v1799
      %v1806 = vmul.f32 %v1790, %v1799
      %v1807 = vmul.f32 %v1793, %v1799
      %v1808 = vmul.f32 %v1795, %v1799
      %v1809 = vld [vmem:[%s14] sm:$0x1]
      %v1811 = vperm.slane %v1809, 0
      %v1813 = vadd.f32 %v1801, %v1811
      %v1814 = vadd.f32 %v1802, %v1811
      %v1815 = vadd.f32 %v1803, %v1811
      %v1816 = vadd.f32 %v1804, %v1811
      %v1817 = vadd.f32 %v1805, %v1811
      %v1818 = vadd.f32 %v1806, %v1811
      %v1819 = vadd.f32 %v1807, %v1811
      %v1820 = vadd.f32 %v1808, %v1811
      %v1821 = vadd.f32 %v1756, %v1813
      %v1822 = vadd.f32 %v1757, %v1814
      %v1823 = vadd.f32 %v1758, %v1815
      %v1824 = vadd.f32 %v1759, %v1816
      %v1825 = vadd.f32 %v1760, %v1817
      %v1826 = vadd.f32 %v1761, %v1818
      %v1827 = vadd.f32 %v1762, %v1819
      %v1828 = vadd.f32 %v1763, %v1820
      %v1829 = vmax.f32 %v1821, 0.0
      %v1830 = vmax.f32 %v1822, 0.0
      %v1831 = vmax.f32 %v1823, 0.0
      %v1832 = vmax.f32 %v1824, 0.0
      %v1833 = vmax.f32 %v1825, 0.0
      %v1834 = vmax.f32 %v1826, 0.0
      %v1835 = vmax.f32 %v1827, 0.0
      %v1836 = vmax.f32 %v1828, 0.0
      %1837 = vst.msk [vmem:[%s700] sm:$0xff] %vm1553, %v1829
      %1838 = vst.msk [vmem:[%s700 + $0x8] sm:$0xff] %vm1553, %v1830
      %1839 = vst.msk [vmem:[%s700 + $0x10] sm:$0xff] %vm1553, %v1831
      %1840 = vst.msk [vmem:[%s700 + $0x18] sm:$0xff] %vm1553, %v1832
      %1841 = vst.msk [vmem:[%s700 + $0x20] sm:$0xff] %vm1553, %v1833
      %1842 = vst.msk [vmem:[%s700 + $0x28] sm:$0xff] %vm1553, %v1834
      %1843 = vst.msk [vmem:[%s700 + $0x30] sm:$0xff] %vm1553, %v1835
      %1844 = vst.msk [vmem:[%s700 + $0x38] sm:$0xff] %vm1553, %v1836
      %1845 = vst.msk [vmem:[%s710] sm:$0xff] %vm1553, %v1821
      %1846 = vst.msk [vmem:[%s710 + $0x8] sm:$0xff] %vm1553, %v1822
      %1847 = vst.msk [vmem:[%s710 + $0x10] sm:$0xff] %vm1553, %v1823
      %1848 = vst.msk [vmem:[%s710 + $0x18] sm:$0xff] %vm1553, %v1824
      %1849 = vst.msk [vmem:[%s710 + $0x20] sm:$0xff] %vm1553, %v1825
      %1850 = vst.msk [vmem:[%s710 + $0x28] sm:$0xff] %vm1553, %v1826
      %1851 = vst.msk [vmem:[%s710 + $0x30] sm:$0xff] %vm1553, %v1827
      %1852 = vst.msk [vmem:[%s710 + $0x38] sm:$0xff] %vm1553, %v1828
      %s1853 = smul.u32 8, %s33
      %p1854 = scmp.lt.s32.totalorder %s32, 1
      %s1855 = scalar_select %p1854, %s32, 1
      %p1856 = scmp.lt.s32.totalorder %s1853, 31
      %s1857 = scalar_select %p1856, %s1853, 31
      %s1858 = smul.addr %s1855, 32
      %s1859 = sadd.s32 %s1857, %s1858
      %s1860 = smul.addr %s1859, 8
      %s1861 = scalar_lea.vmem %s15, %s1860
      %s1862 = smul.u32 8, %s33
      %p1863 = scmp.lt.s32.totalorder %s32, 1
      %s1864 = scalar_select %p1863, %s32, 1
      %p1865 = scmp.lt.s32.totalorder %s1862, 31
      %s1866 = scalar_select %p1865, %s1862, 31
      %s1867 = smul.addr %s1864, 32
      %s1868 = sadd.s32 %s1866, %s1867
      %s1869 = smul.addr %s1868, 8
      %s1870 = scalar_lea.vmem %s16, %s1869
      // Predicated region
      $region89: #{tpu_custom_call.1} parent=79 // pred_check
        %p1871 = pneg %p412
      $region90: #{tpu_custom_call.1} parent=79 // pred_check_branch
        %1873 = sbr.rel (%p1871) target = $region92
      $region91: #{tpu_custom_call.1} parent=79 // pred_region
        %s1874 = smul.u32 8, %s33
      $region92: #{tpu_custom_call.1} parent=79 // pred_fallthru
        _
      // Predicated region
      $region93: #{tpu_custom_call.1} parent=79 // pred_check
        %p1875 = pneg %p440
      $region94: #{tpu_custom_call.1} parent=79 // pred_check_branch
        %1877 = sbr.rel (%p1875) target = $region96
      $region95: #{tpu_custom_call.1} parent=79 // pred_region
        %s1878 = smul.u32 8, %s33
      $region96: #{tpu_custom_call.1} parent=79 // pred_fallthru
        _
    $region80: #{tpu_custom_call.1} parent=5 // pred_fallthru
      _
    %p1879 = scmp.le.s32.totalorder 2, %s23
    // Predicated region
    $region97: #{tpu_custom_call.1} parent=5 // pred_check
      %p1880 = pneg %p1879
    $region98: #{tpu_custom_call.1} parent=5 // pred_check_branch
      %1882 = sbr.rel (%p1880) target = $region100
    $region99: #{tpu_custom_call.1} parent=5 // pred_region
      %s1883 = ssub.s32 %s23, 2
      // Predicated region
      $region101: #{tpu_custom_call.1} parent=99 // pred_check
        %p1884 = pneg %p418
      $region102: #{tpu_custom_call.1} parent=99 // pred_check_branch
        %1886 = sbr.rel (%p1884) target = $region104
      $region103: #{tpu_custom_call.1} parent=99 // pred_region
        %s1887 = smul.u32 8, %s35
        %p1888 = scmp.lt.s32.totalorder %s34, 1
        %s1889 = scalar_select %p1888, %s34, 1
        %p1890 = scmp.lt.s32.totalorder %s1887, 31
        %s1891 = scalar_select %p1890, %s1887, 31
        %s1892 = smul.addr %s1889, 32
        %s1893 = sadd.s32 %s1891, %s1892
        %s1894 = smul.addr %s1893, 8
        %s1895 = scalar_lea.vmem %s15, %s1894
      $region104: #{tpu_custom_call.1} parent=99 // pred_fallthru
        _
      // Predicated region
      $region105: #{tpu_custom_call.1} parent=99 // pred_check
        %p1896 = pneg %p446
      $region106: #{tpu_custom_call.1} parent=99 // pred_check_branch
        %1898 = sbr.rel (%p1896) target = $region108
      $region107: #{tpu_custom_call.1} parent=99 // pred_region
        %s1899 = smul.u32 8, %s35
        %p1900 = scmp.lt.s32.totalorder %s34, 1
        %s1901 = scalar_select %p1900, %s34, 1
        %p1902 = scmp.lt.s32.totalorder %s1899, 31
        %s1903 = scalar_select %p1902, %s1899, 31
        %s1904 = smul.addr %s1901, 32
        %s1905 = sadd.s32 %s1903, %s1904
        %s1906 = smul.addr %s1905, 8
        %s1907 = scalar_lea.vmem %s16, %s1906
      $region108: #{tpu_custom_call.1} parent=99 // pred_fallthru
        _
    $region100: #{tpu_custom_call.1} parent=5 // pred_fallthru
      _
  $region6: #{tpu_custom_call.1} parent=0 // loop_footer
    %s27 = sadd.s32 1, %s23
  $region7: #{tpu_custom_call.1} parent=0 // loop_footer_branch
    %22 = sbr.rel target = $region3
  $region8: #{tpu_custom_call.1} parent=0 // loop_exit
    _

// kernel: tpu_custom_call.1
$region0: #{tpu_custom_call.1}
  #allocation0 [shape = 'u32[]', space=smem, size = 0x4, offset = 0x4, fixed_abs, tag = 'smem constant byte address 0x4 - core index']
  #allocation1 [shape = 'u32[72,128]{1,0:T(1,128)}', space=vmem, size = 0x9000, scoped, tag = 'internal scratch']
  #allocation2 [shape = 'bf16[6,18,4]{2,1,0:T(8,128)(2,1)}', space=vmem, size = 0x9000, scoped, tag = 'scratch operand']
  %s0 = inlined_call_operand.vmem [shape: bf16[2,16,16,4], index: 0, kind: input, shape index: {}]
  %s1 = inlined_call_operand.vmem [shape: bf16[2,16,16,4], index: 1, kind: input, shape index: {}]
  %s2 = inlined_call_operand.vmem [shape: bf16[2,16,16,4], index: 2, kind: input, shape index: {}]
  %s3 = inlined_call_operand.vmem [shape: bf16[4,4], index: 3, kind: input, shape index: {}]
  %s4 = inlined_call_operand.vmem [shape: f32[1,4], index: 4, kind: input, shape index: {}]
  %s5 = inlined_call_operand.vmem [shape: f32[1,4], index: 5, kind: input, shape index: {}]
  %s6 = inlined_call_operand.vmem [shape: bf16[36,4], index: 6, kind: input, shape index: {}]
  %s7 = inlined_call_operand.vmem [shape: f32[1,4], index: 7, kind: input, shape index: {}]
  %s8 = inlined_call_operand.vmem [shape: f32[1,4], index: 8, kind: input, shape index: {}]
  %s9 = inlined_call_operand.vmem [shape: bf16[4,16], index: 9, kind: input, shape index: {}]
  %s10 = inlined_call_operand.vmem [shape: f32[1,16], index: 10, kind: input, shape index: {}]
  %s11 = inlined_call_operand.vmem [shape: f32[1,16], index: 11, kind: input, shape index: {}]
  %s12 = inlined_call_operand.vmem [shape: bf16[4,16], index: 12, kind: input, shape index: {}]
  %s13 = inlined_call_operand.vmem [shape: f32[1,16], index: 13, kind: input, shape index: {}]
  %s14 = inlined_call_operand.vmem [shape: f32[1,16], index: 14, kind: input, shape index: {}]
  %s15 = inlined_call_operand.vmem [shape: f32[2,256,16], index: 15, kind: output, shape index: {0}]
  %s16 = inlined_call_operand.vmem [shape: f32[2,256,16], index: 16, kind: output, shape index: {1}]
  %17 = xla_tuple %s15, %s16
  %s18 = sld [smem:[#allocation0]]
  $region109: #{tpu_custom_call.1} parent=0
    _
  %s20 = ssub.s32 1, %s18
  %s21 = scalar_select 0, %s20, %s18
  loop: start=0, step=1, limit=10
  $region2: #{tpu_custom_call.1} parent=0 // loop_pre_header
    _
  $region3: #{tpu_custom_call.1} parent=0 // loop_header
    %s23 = sphi 0, %s27
    %p24 = scmp.ge.s32.totalorder %s23, 10
    %s30 = sphi 0, %s42
    %s31 = sphi 0, %s38
    %s32 = sphi 0, %s30
    %s33 = sphi 0, %s31
    %s34 = sphi 0, %s32
    %s35 = sphi 0, %s33
    %s47 = sphi 0, %s49
    %s50 = sphi 0, %s47
    %s51 = sphi 0, %s50
    %s67 = sphi 0, %s51
    %s83 = sphi 0, %s85
    %s86 = sphi 0, %s83
    %s87 = sphi 0, %s86
    %s103 = sphi 0, %s87
    %s119 = sphi 0, %s121
    %s122 = sphi 0, %s119
    %s123 = sphi 0, %s122
    %s139 = sphi 0, %s123
    %s143 = sphi 0, %s143
    %s145 = sphi 0, %s143
    %s146 = sphi 0, %s145
    %s160 = sphi 0, %s146
    %s164 = sphi 0, %s164
    %s166 = sphi 0, %s164
    %s167 = sphi 0, %s166
    %s181 = sphi 0, %s167
    %s185 = sphi 0, %s185
    %s187 = sphi 0, %s185
    %s188 = sphi 0, %s187
    %s202 = sphi 0, %s188
    %s206 = sphi 0, %s206
    %s208 = sphi 0, %s206
    %s209 = sphi 0, %s208
    %s223 = sphi 0, %s209
    %s227 = sphi 0, %s227
    %s229 = sphi 0, %s227
    %s230 = sphi 0, %s229
    %s244 = sphi 0, %s230
    %s248 = sphi 0, %s248
    %s250 = sphi 0, %s248
    %s251 = sphi 0, %s250
    %s265 = sphi 0, %s251
    %s269 = sphi 0, %s269
    %s271 = sphi 0, %s269
    %s272 = sphi 0, %s271
    %s286 = sphi 0, %s272
    %s290 = sphi 0, %s290
    %s292 = sphi 0, %s290
    %s293 = sphi 0, %s292
    %s307 = sphi 0, %s293
    %s311 = sphi 0, %s311
    %s313 = sphi 0, %s311
    %s314 = sphi 0, %s313
    %s328 = sphi 0, %s314
    %s332 = sphi 0, %s332
    %s334 = sphi 0, %s332
    %s335 = sphi 0, %s334
    %s349 = sphi 0, %s335
    %s353 = sphi 0, %s353
    %s355 = sphi 0, %s353
    %s356 = sphi 0, %s355
    %s370 = sphi 0, %s356
    %s374 = sphi 0, %s374
    %s376 = sphi 0, %s374
    %s377 = sphi 0, %s376
    %s391 = sphi 0, %s377
    %s399 = sphi 0, %s401
    %s402 = sphi 0, %s399
    %s403 = sphi 0, %s402
    %s419 = sphi 0, %s403
    %s427 = sphi 0, %s429
    %s430 = sphi 0, %s427
    %s431 = sphi 0, %s430
    %s447 = sphi 0, %s431
  $region4: #{tpu_custom_call.1} parent=0 // loop_header_branch
    %26 = sbr.rel (%p24) target = $region8
  $region5: #{tpu_custom_call.1} parent=0 // loop_body
    %s28 = ssub.s32 %s23, 1
    %s29 = ssub.s32 %s23, 2
    %s36 = sadd.s32 1, %s31
    %p37 = scmp.ge.s32.totalorder %s36, 4
    %s38 = scalar_select %p37, 0, %s36
    %s39 = sadd.s32 1, %s30
    %s40 = scalar_select %p37, %s39, %s30
    %p41 = scmp.ge.s32.totalorder %s40, 2
    %s42 = scalar_select %p41, 0, %s40
    %s43 = ssub.s32 %s30, %s42
    %s44 = ssub.s32 %s31, %s38
    %s45 = sor.u32 %s43, %s44
    %p46 = scmp.eq.s32.totalorder %s45, 0
    %s48 = sadd.s32 %s47, 1
    %s49 = scalar_select %p46, %s47, %s48
    %p52 = pneg %p46
    %p53 = scmp.eq.s32.totalorder %s23, 7
    %p54 = por %p52, %p53
    %p55 = scmp.ne.s32.totalorder %s47, %s50
    %p56 = scmp.eq.s32.totalorder %s23, 0
    %p57 = por %p55, %p56
    %p58 = scmp.ne.s32.totalorder %s47, %s50
    %p59 = scmp.eq.s32.totalorder %s28, 7
    %p60 = por %p58, %p59
    %p61 = scmp.ne.s32.totalorder %s50, %s51
    %p62 = scmp.eq.s32.totalorder %s28, 0
    %p63 = por %p61, %p62
    %p64 = scmp.ne.s32.totalorder %s50, %s51
    %p65 = scmp.eq.s32.totalorder %s29, 7
    %p66 = por %p64, %p65
    %p68 = scmp.ne.s32.totalorder %s51, %s67
    %p69 = scmp.eq.s32.totalorder %s29, 0
    %p70 = por %p68, %p69
    %s71 = smul.u32 %s31, 4
    %s72 = ssub.s32 %s71, 1
    %p73 = scmp.gt.s32.totalorder %s72, 0
    %s74 = scalar_select %p73, %s72, 0
    %s75 = smul.u32 %s38, 4
    %s76 = ssub.s32 %s75, 1
    %p77 = scmp.gt.s32.totalorder %s76, 0
    %s78 = scalar_select %p77, %s76, 0
    %s79 = ssub.s32 %s30, %s42
    %s80 = ssub.s32 %s74, %s78
    %s81 = sor.u32 %s79, %s80
    %p82 = scmp.eq.s32.totalorder %s81, 0
    %s84 = sadd.s32 %s83, 1
    %s85 = scalar_select %p82, %s83, %s84
    %p88 = pneg %p82
    %p89 = scmp.eq.s32.totalorder %s23, 7
    %p90 = por %p88, %p89
    %p91 = scmp.ne.s32.totalorder %s83, %s86
    %p92 = scmp.eq.s32.totalorder %s23, 0
    %p93 = por %p91, %p92
    %p94 = scmp.ne.s32.totalorder %s83, %s86
    %p95 = scmp.eq.s32.totalorder %s28, 7
    %p96 = por %p94, %p95
    %p97 = scmp.ne.s32.totalorder %s86, %s87
    %p98 = scmp.eq.s32.totalorder %s28, 0
    %p99 = por %p97, %p98
    %p100 = scmp.ne.s32.totalorder %s86, %s87
    %p101 = scmp.eq.s32.totalorder %s29, 7
    %p102 = por %p100, %p101
    %p104 = scmp.ne.s32.totalorder %s87, %s103
    %p105 = scmp.eq.s32.totalorder %s29, 0
    %p106 = por %p104, %p105
    %s107 = sadd.s32 %s31, 1
    %s108 = smul.u32 %s107, 4
    %p109 = scmp.lt.s32.totalorder %s108, 15
    %s110 = scalar_select %p109, %s108, 15
    %s111 = sadd.s32 %s38, 1
    %s112 = smul.u32 %s111, 4
    %p113 = scmp.lt.s32.totalorder %s112, 15
    %s114 = scalar_select %p113, %s112, 15
    %s115 = ssub.s32 %s30, %s42
    %s116 = ssub.s32 %s110, %s114
    %s117 = sor.u32 %s115, %s116
    %p118 = scmp.eq.s32.totalorder %s117, 0
    %s120 = sadd.s32 %s119, 1
    %s121 = scalar_select %p118, %s119, %s120
    %p124 = pneg %p118
    %p125 = scmp.eq.s32.totalorder %s23, 7
    %p126 = por %p124, %p125
    %p127 = scmp.ne.s32.totalorder %s119, %s122
    %p128 = scmp.eq.s32.totalorder %s23, 0
    %p129 = por %p127, %p128
    %p130 = scmp.ne.s32.totalorder %s119, %s122
    %p131 = scmp.eq.s32.totalorder %s28, 7
    %p132 = por %p130, %p131
    %p133 = scmp.ne.s32.totalorder %s122, %s123
    %p134 = scmp.eq.s32.totalorder %s28, 0
    %p135 = por %p133, %p134
    %p136 = scmp.ne.s32.totalorder %s122, %s123
    %p137 = scmp.eq.s32.totalorder %s29, 7
    %p138 = por %p136, %p137
    %p140 = scmp.ne.s32.totalorder %s123, %s139
    %p141 = scmp.eq.s32.totalorder %s29, 0
    %p142 = por %p140, %p141
    %s144 = sadd.s32 %s143, 1
    %p147 = scmp.eq.s32.totalorder %s23, 7
    %p148 = scmp.ne.s32.totalorder %s143, %s145
    %p149 = scmp.eq.s32.totalorder %s23, 0
    %p150 = por %p148, %p149
    %p151 = scmp.ne.s32.totalorder %s143, %s145
    %p152 = scmp.eq.s32.totalorder %s28, 7
    %p153 = por %p151, %p152
    %p154 = scmp.ne.s32.totalorder %s145, %s146
    %p155 = scmp.eq.s32.totalorder %s28, 0
    %p156 = por %p154, %p155
    %p157 = scmp.ne.s32.totalorder %s145, %s146
    %p158 = scmp.eq.s32.totalorder %s29, 7
    %p159 = por %p157, %p158
    %p161 = scmp.ne.s32.totalorder %s146, %s160
    %p162 = scmp.eq.s32.totalorder %s29, 0
    %p163 = por %p161, %p162
    %s165 = sadd.s32 %s164, 1
    %p168 = scmp.eq.s32.totalorder %s23, 7
    %p169 = scmp.ne.s32.totalorder %s164, %s166
    %p170 = scmp.eq.s32.totalorder %s23, 0
    %p171 = por %p169, %p170
    %p172 = scmp.ne.s32.totalorder %s164, %s166
    %p173 = scmp.eq.s32.totalorder %s28, 7
    %p174 = por %p172, %p173
    %p175 = scmp.ne.s32.totalorder %s166, %s167
    %p176 = scmp.eq.s32.totalorder %s28, 0
    %p177 = por %p175, %p176
    %p178 = scmp.ne.s32.totalorder %s166, %s167
    %p179 = scmp.eq.s32.totalorder %s29, 7
    %p180 = por %p178, %p179
    %p182 = scmp.ne.s32.totalorder %s167, %s181
    %p183 = scmp.eq.s32.totalorder %s29, 0
    %p184 = por %p182, %p183
    %s186 = sadd.s32 %s185, 1
    %p189 = scmp.eq.s32.totalorder %s23, 7
    %p190 = scmp.ne.s32.totalorder %s185, %s187
    %p191 = scmp.eq.s32.totalorder %s23, 0
    %p192 = por %p190, %p191
    %p193 = scmp.ne.s32.totalorder %s185, %s187
    %p194 = scmp.eq.s32.totalorder %s28, 7
    %p195 = por %p193, %p194
    %p196 = scmp.ne.s32.totalorder %s187, %s188
    %p197 = scmp.eq.s32.totalorder %s28, 0
    %p198 = por %p196, %p197
    %p199 = scmp.ne.s32.totalorder %s187, %s188
    %p200 = scmp.eq.s32.totalorder %s29, 7
    %p201 = por %p199, %p200
    %p203 = scmp.ne.s32.totalorder %s188, %s202
    %p204 = scmp.eq.s32.totalorder %s29, 0
    %p205 = por %p203, %p204
    %s207 = sadd.s32 %s206, 1
    %p210 = scmp.eq.s32.totalorder %s23, 7
    %p211 = scmp.ne.s32.totalorder %s206, %s208
    %p212 = scmp.eq.s32.totalorder %s23, 0
    %p213 = por %p211, %p212
    %p214 = scmp.ne.s32.totalorder %s206, %s208
    %p215 = scmp.eq.s32.totalorder %s28, 7
    %p216 = por %p214, %p215
    %p217 = scmp.ne.s32.totalorder %s208, %s209
    %p218 = scmp.eq.s32.totalorder %s28, 0
    %p219 = por %p217, %p218
    %p220 = scmp.ne.s32.totalorder %s208, %s209
    %p221 = scmp.eq.s32.totalorder %s29, 7
    %p222 = por %p220, %p221
    %p224 = scmp.ne.s32.totalorder %s209, %s223
    %p225 = scmp.eq.s32.totalorder %s29, 0
    %p226 = por %p224, %p225
    %s228 = sadd.s32 %s227, 1
    %p231 = scmp.eq.s32.totalorder %s23, 7
    %p232 = scmp.ne.s32.totalorder %s227, %s229
    %p233 = scmp.eq.s32.totalorder %s23, 0
    %p234 = por %p232, %p233
    %p235 = scmp.ne.s32.totalorder %s227, %s229
    %p236 = scmp.eq.s32.totalorder %s28, 7
    %p237 = por %p235, %p236
    %p238 = scmp.ne.s32.totalorder %s229, %s230
    %p239 = scmp.eq.s32.totalorder %s28, 0
    %p240 = por %p238, %p239
    %p241 = scmp.ne.s32.totalorder %s229, %s230
    %p242 = scmp.eq.s32.totalorder %s29, 7
    %p243 = por %p241, %p242
    %p245 = scmp.ne.s32.totalorder %s230, %s244
    %p246 = scmp.eq.s32.totalorder %s29, 0
    %p247 = por %p245, %p246
    %s249 = sadd.s32 %s248, 1
    %p252 = scmp.eq.s32.totalorder %s23, 7
    %p253 = scmp.ne.s32.totalorder %s248, %s250
    %p254 = scmp.eq.s32.totalorder %s23, 0
    %p255 = por %p253, %p254
    %p256 = scmp.ne.s32.totalorder %s248, %s250
    %p257 = scmp.eq.s32.totalorder %s28, 7
    %p258 = por %p256, %p257
    %p259 = scmp.ne.s32.totalorder %s250, %s251
    %p260 = scmp.eq.s32.totalorder %s28, 0
    %p261 = por %p259, %p260
    %p262 = scmp.ne.s32.totalorder %s250, %s251
    %p263 = scmp.eq.s32.totalorder %s29, 7
    %p264 = por %p262, %p263
    %p266 = scmp.ne.s32.totalorder %s251, %s265
    %p267 = scmp.eq.s32.totalorder %s29, 0
    %p268 = por %p266, %p267
    %s270 = sadd.s32 %s269, 1
    %p273 = scmp.eq.s32.totalorder %s23, 7
    %p274 = scmp.ne.s32.totalorder %s269, %s271
    %p275 = scmp.eq.s32.totalorder %s23, 0
    %p276 = por %p274, %p275
    %p277 = scmp.ne.s32.totalorder %s269, %s271
    %p278 = scmp.eq.s32.totalorder %s28, 7
    %p279 = por %p277, %p278
    %p280 = scmp.ne.s32.totalorder %s271, %s272
    %p281 = scmp.eq.s32.totalorder %s28, 0
    %p282 = por %p280, %p281
    %p283 = scmp.ne.s32.totalorder %s271, %s272
    %p284 = scmp.eq.s32.totalorder %s29, 7
    %p285 = por %p283, %p284
    %p287 = scmp.ne.s32.totalorder %s272, %s286
    %p288 = scmp.eq.s32.totalorder %s29, 0
    %p289 = por %p287, %p288
    %s291 = sadd.s32 %s290, 1
    %p294 = scmp.eq.s32.totalorder %s23, 7
    %p295 = scmp.ne.s32.totalorder %s290, %s292
    %p296 = scmp.eq.s32.totalorder %s23, 0
    %p297 = por %p295, %p296
    %p298 = scmp.ne.s32.totalorder %s290, %s292
    %p299 = scmp.eq.s32.totalorder %s28, 7
    %p300 = por %p298, %p299
    %p301 = scmp.ne.s32.totalorder %s292, %s293
    %p302 = scmp.eq.s32.totalorder %s28, 0
    %p303 = por %p301, %p302
    %p304 = scmp.ne.s32.totalorder %s292, %s293
    %p305 = scmp.eq.s32.totalorder %s29, 7
    %p306 = por %p304, %p305
    %p308 = scmp.ne.s32.totalorder %s293, %s307
    %p309 = scmp.eq.s32.totalorder %s29, 0
    %p310 = por %p308, %p309
    %s312 = sadd.s32 %s311, 1
    %p315 = scmp.eq.s32.totalorder %s23, 7
    %p316 = scmp.ne.s32.totalorder %s311, %s313
    %p317 = scmp.eq.s32.totalorder %s23, 0
    %p318 = por %p316, %p317
    %p319 = scmp.ne.s32.totalorder %s311, %s313
    %p320 = scmp.eq.s32.totalorder %s28, 7
    %p321 = por %p319, %p320
    %p322 = scmp.ne.s32.totalorder %s313, %s314
    %p323 = scmp.eq.s32.totalorder %s28, 0
    %p324 = por %p322, %p323
    %p325 = scmp.ne.s32.totalorder %s313, %s314
    %p326 = scmp.eq.s32.totalorder %s29, 7
    %p327 = por %p325, %p326
    %p329 = scmp.ne.s32.totalorder %s314, %s328
    %p330 = scmp.eq.s32.totalorder %s29, 0
    %p331 = por %p329, %p330
    %s333 = sadd.s32 %s332, 1
    %p336 = scmp.eq.s32.totalorder %s23, 7
    %p337 = scmp.ne.s32.totalorder %s332, %s334
    %p338 = scmp.eq.s32.totalorder %s23, 0
    %p339 = por %p337, %p338
    %p340 = scmp.ne.s32.totalorder %s332, %s334
    %p341 = scmp.eq.s32.totalorder %s28, 7
    %p342 = por %p340, %p341
    %p343 = scmp.ne.s32.totalorder %s334, %s335
    %p344 = scmp.eq.s32.totalorder %s28, 0
    %p345 = por %p343, %p344
    %p346 = scmp.ne.s32.totalorder %s334, %s335
    %p347 = scmp.eq.s32.totalorder %s29, 7
    %p348 = por %p346, %p347
    %p350 = scmp.ne.s32.totalorder %s335, %s349
    %p351 = scmp.eq.s32.totalorder %s29, 0
    %p352 = por %p350, %p351
    %s354 = sadd.s32 %s353, 1
    %p357 = scmp.eq.s32.totalorder %s23, 7
    %p358 = scmp.ne.s32.totalorder %s353, %s355
    %p359 = scmp.eq.s32.totalorder %s23, 0
    %p360 = por %p358, %p359
    %p361 = scmp.ne.s32.totalorder %s353, %s355
    %p362 = scmp.eq.s32.totalorder %s28, 7
    %p363 = por %p361, %p362
    %p364 = scmp.ne.s32.totalorder %s355, %s356
    %p365 = scmp.eq.s32.totalorder %s28, 0
    %p366 = por %p364, %p365
    %p367 = scmp.ne.s32.totalorder %s355, %s356
    %p368 = scmp.eq.s32.totalorder %s29, 7
    %p369 = por %p367, %p368
    %p371 = scmp.ne.s32.totalorder %s356, %s370
    %p372 = scmp.eq.s32.totalorder %s29, 0
    %p373 = por %p371, %p372
    %s375 = sadd.s32 %s374, 1
    %p378 = scmp.eq.s32.totalorder %s23, 7
    %p379 = scmp.ne.s32.totalorder %s374, %s376
    %p380 = scmp.eq.s32.totalorder %s23, 0
    %p381 = por %p379, %p380
    %p382 = scmp.ne.s32.totalorder %s374, %s376
    %p383 = scmp.eq.s32.totalorder %s28, 7
    %p384 = por %p382, %p383
    %p385 = scmp.ne.s32.totalorder %s376, %s377
    %p386 = scmp.eq.s32.totalorder %s28, 0
    %p387 = por %p385, %p386
    %p388 = scmp.ne.s32.totalorder %s376, %s377
    %p389 = scmp.eq.s32.totalorder %s29, 7
    %p390 = por %p388, %p389
    %p392 = scmp.ne.s32.totalorder %s377, %s391
    %p393 = scmp.eq.s32.totalorder %s29, 0
    %p394 = por %p392, %p393
    %s395 = ssub.s32 %s30, %s42
    %s396 = ssub.s32 %s31, %s38
    %s397 = sor.u32 %s395, %s396
    %p398 = scmp.eq.s32.totalorder %s397, 0
    %s400 = sadd.s32 %s399, 1
    %s401 = scalar_select %p398, %s399, %s400
    %p404 = pneg %p398
    %p405 = scmp.eq.s32.totalorder %s23, 7
    %p406 = por %p404, %p405
    %p407 = scmp.ne.s32.totalorder %s399, %s402
    %p408 = scmp.eq.s32.totalorder %s23, 0
    %p409 = por %p407, %p408
    %p410 = scmp.ne.s32.totalorder %s399, %s402
    %p411 = scmp.eq.s32.totalorder %s28, 7
    %p412 = por %p410, %p411
    %p413 = scmp.ne.s32.totalorder %s402, %s403
    %p414 = scmp.eq.s32.totalorder %s28, 0
    %p415 = por %p413, %p414
    %p416 = scmp.ne.s32.totalorder %s402, %s403
    %p417 = scmp.eq.s32.totalorder %s29, 7
    %p418 = por %p416, %p417
    %p420 = scmp.ne.s32.totalorder %s403, %s419
    %p421 = scmp.eq.s32.totalorder %s29, 0
    %p422 = por %p420, %p421
    %s423 = ssub.s32 %s30, %s42
    %s424 = ssub.s32 %s31, %s38
    %s425 = sor.u32 %s423, %s424
    %p426 = scmp.eq.s32.totalorder %s425, 0
    %s428 = sadd.s32 %s427, 1
    %s429 = scalar_select %p426, %s427, %s428
    %p432 = pneg %p426
    %p433 = scmp.eq.s32.totalorder %s23, 7
    %p434 = por %p432, %p433
    %p435 = scmp.ne.s32.totalorder %s427, %s430
    %p436 = scmp.eq.s32.totalorder %s23, 0
    %p437 = por %p435, %p436
    %p438 = scmp.ne.s32.totalorder %s427, %s430
    %p439 = scmp.eq.s32.totalorder %s28, 7
    %p440 = por %p438, %p439
    %p441 = scmp.ne.s32.totalorder %s430, %s431
    %p442 = scmp.eq.s32.totalorder %s28, 0
    %p443 = por %p441, %p442
    %p444 = scmp.ne.s32.totalorder %s430, %s431
    %p445 = scmp.eq.s32.totalorder %s29, 7
    %p446 = por %p444, %p445
    %p448 = scmp.ne.s32.totalorder %s431, %s447
    %p449 = scmp.eq.s32.totalorder %s29, 0
    %p450 = por %p448, %p449
    %p451 = scmp.le.s32.totalorder 1, %s23
    %p452 = scmp.lt.s32.totalorder %s23, 9
    %p453 = pnand %p451, %p452
    %p454 = pneg %p453
    // Predicated region
    $region9: #{tpu_custom_call.1} parent=5 // pred_check
      _
    $region10: #{tpu_custom_call.1} parent=5 // pred_check_branch
      %456 = sbr.rel (%p453) target = $region12
    $region11: #{tpu_custom_call.1} parent=5 // pred_region
      %s457 = ssub.s32 %s23, 1
      // Predicated region
      $region13: #{tpu_custom_call.1} parent=11 // pred_check
        %p458 = pneg %p156
      $region14: #{tpu_custom_call.1} parent=11 // pred_check_branch
        %460 = sbr.rel (%p458) target = $region16
      $region15: #{tpu_custom_call.1} parent=11 // pred_region
        _
      $region16: #{tpu_custom_call.1} parent=11 // pred_fallthru
        _
      // Predicated region
      $region17: #{tpu_custom_call.1} parent=11 // pred_check
        %p461 = pneg %p177
      $region18: #{tpu_custom_call.1} parent=11 // pred_check_branch
        %463 = sbr.rel (%p461) target = $region20
      $region19: #{tpu_custom_call.1} parent=11 // pred_region
        _
      $region20: #{tpu_custom_call.1} parent=11 // pred_fallthru
        _
      // Predicated region
      $region21: #{tpu_custom_call.1} parent=11 // pred_check
        %p464 = pneg %p198
      $region22: #{tpu_custom_call.1} parent=11 // pred_check_branch
        %466 = sbr.rel (%p464) target = $region24
      $region23: #{tpu_custom_call.1} parent=11 // pred_region
        _
      $region24: #{tpu_custom_call.1} parent=11 // pred_fallthru
        _
      // Predicated region
      $region25: #{tpu_custom_call.1} parent=11 // pred_check
        %p467 = pneg %p219
      $region26: #{tpu_custom_call.1} parent=11 // pred_check_branch
        %469 = sbr.rel (%p467) target = $region28
      $region27: #{tpu_custom_call.1} parent=11 // pred_region
        _
      $region28: #{tpu_custom_call.1} parent=11 // pred_fallthru
        _
      // Predicated region
      $region29: #{tpu_custom_call.1} parent=11 // pred_check
        %p470 = pneg %p240
      $region30: #{tpu_custom_call.1} parent=11 // pred_check_branch
        %472 = sbr.rel (%p470) target = $region32
      $region31: #{tpu_custom_call.1} parent=11 // pred_region
        _
      $region32: #{tpu_custom_call.1} parent=11 // pred_fallthru
        _
      // Predicated region
      $region33: #{tpu_custom_call.1} parent=11 // pred_check
        %p473 = pneg %p261
      $region34: #{tpu_custom_call.1} parent=11 // pred_check_branch
        %475 = sbr.rel (%p473) target = $region36
      $region35: #{tpu_custom_call.1} parent=11 // pred_region
        _
      $region36: #{tpu_custom_call.1} parent=11 // pred_fallthru
        _
      // Predicated region
      $region37: #{tpu_custom_call.1} parent=11 // pred_check
        %p476 = pneg %p282
      $region38: #{tpu_custom_call.1} parent=11 // pred_check_branch
        %478 = sbr.rel (%p476) target = $region40
      $region39: #{tpu_custom_call.1} parent=11 // pred_region
        _
      $region40: #{tpu_custom_call.1} parent=11 // pred_fallthru
        _
      // Predicated region
      $region41: #{tpu_custom_call.1} parent=11 // pred_check
        %p479 = pneg %p303
      $region42: #{tpu_custom_call.1} parent=11 // pred_check_branch
        %481 = sbr.rel (%p479) target = $region44
      $region43: #{tpu_custom_call.1} parent=11 // pred_region
        _
      $region44: #{tpu_custom_call.1} parent=11 // pred_fallthru
        _
      // Predicated region
      $region45: #{tpu_custom_call.1} parent=11 // pred_check
        %p482 = pneg %p324
      $region46: #{tpu_custom_call.1} parent=11 // pred_check_branch
        %484 = sbr.rel (%p482) target = $region48
      $region47: #{tpu_custom_call.1} parent=11 // pred_region
        _
      $region48: #{tpu_custom_call.1} parent=11 // pred_fallthru
        _
      // Predicated region
      $region49: #{tpu_custom_call.1} parent=11 // pred_check
        %p485 = pneg %p345
      $region50: #{tpu_custom_call.1} parent=11 // pred_check_branch
        %487 = sbr.rel (%p485) target = $region52
      $region51: #{tpu_custom_call.1} parent=11 // pred_region
        _
      $region52: #{tpu_custom_call.1} parent=11 // pred_fallthru
        _
      // Predicated region
      $region53: #{tpu_custom_call.1} parent=11 // pred_check
        %p488 = pneg %p366
      $region54: #{tpu_custom_call.1} parent=11 // pred_check_branch
        %490 = sbr.rel (%p488) target = $region56
      $region55: #{tpu_custom_call.1} parent=11 // pred_region
        _
      $region56: #{tpu_custom_call.1} parent=11 // pred_fallthru
        _
      // Predicated region
      $region57: #{tpu_custom_call.1} parent=11 // pred_check
        %p491 = pneg %p387
      $region58: #{tpu_custom_call.1} parent=11 // pred_check_branch
        %493 = sbr.rel (%p491) target = $region60
      $region59: #{tpu_custom_call.1} parent=11 // pred_region
        _
      $region60: #{tpu_custom_call.1} parent=11 // pred_fallthru
        _
    $region12: #{tpu_custom_call.1} parent=5 // pred_fallthru
      _
    %p494 = scmp.lt.s32.totalorder %s23, 8
    // Predicated region
    $region61: #{tpu_custom_call.1} parent=5 // pred_check
      %p495 = pneg %p494
    $region62: #{tpu_custom_call.1} parent=5 // pred_check_branch
      %497 = sbr.rel (%p495) target = $region64
    $region63: #{tpu_custom_call.1} parent=5 // pred_region
      // Predicated region
      $region65: #{tpu_custom_call.1} parent=63 // pred_check
        %p498 = pneg %p57
      $region66: #{tpu_custom_call.1} parent=63 // pred_check_branch
        %500 = sbr.rel (%p498) target = $region68
      $region67: #{tpu_custom_call.1} parent=63 // pred_region
        %s501 = smul.u32 4, %s31
        %p502 = scmp.lt.s32.totalorder %s30, 1
        %s503 = scalar_select %p502, %s30, 1
        %p504 = scmp.lt.s32.totalorder %s501, 15
        %s505 = scalar_select %p504, %s501, 15
        %s506 = smul.addr %s505, 2
        %s507 = smul.addr %s503, 32
        %s508 = sadd.s32 %s506, %s507
        %s509 = smul.addr %s508, 4
        %s510 = scalar_lea.vmem %s0, %s509
        %s511 = smul.u32 4, %s31
      $region68: #{tpu_custom_call.1} parent=63 // pred_fallthru
        _
      // Predicated region
      $region69: #{tpu_custom_call.1} parent=63 // pred_check
        %p512 = pneg %p93
      $region70: #{tpu_custom_call.1} parent=63 // pred_check_branch
        %514 = sbr.rel (%p512) target = $region72
      $region71: #{tpu_custom_call.1} parent=63 // pred_region
        %s515 = smul.u32 %s31, 4
        %s516 = ssub.s32 %s515, 1
        %p517 = scmp.gt.s32.totalorder %s516, 0
        %s518 = scalar_select %p517, %s516, 0
        %p519 = scmp.lt.s32.totalorder %s30, 1
        %s520 = scalar_select %p519, %s30, 1
        %p521 = scmp.lt.s32.totalorder %s518, 15
        %s522 = scalar_select %p521, %s518, 15
        %s523 = smul.addr %s522, 2
        %s524 = smul.addr %s520, 32
        %s525 = sadd.s32 %s523, %s524
        %s526 = smul.addr %s525, 4
        %s527 = scalar_lea.vmem %s1, %s526
        %s528 = smul.u32 %s31, 4
        %s529 = ssub.s32 %s528, 1
        %p530 = scmp.gt.s32.totalorder %s529, 0
        %s531 = scalar_select %p530, %s529, 0
      $region72: #{tpu_custom_call.1} parent=63 // pred_fallthru
        _
      // Predicated region
      $region73: #{tpu_custom_call.1} parent=63 // pred_check
        %p532 = pneg %p129
      $region74: #{tpu_custom_call.1} parent=63 // pred_check_branch
        %534 = sbr.rel (%p532) target = $region76
      $region75: #{tpu_custom_call.1} parent=63 // pred_region
        %s535 = sadd.s32 %s31, 1
        %s536 = smul.u32 %s535, 4
        %p537 = scmp.lt.s32.totalorder %s536, 15
        %s538 = scalar_select %p537, %s536, 15
        %p539 = scmp.lt.s32.totalorder %s30, 1
        %s540 = scalar_select %p539, %s30, 1
        %p541 = scmp.lt.s32.totalorder %s538, 15
        %s542 = scalar_select %p541, %s538, 15
        %s543 = smul.addr %s542, 2
        %s544 = smul.addr %s540, 32
        %s545 = sadd.s32 %s543, %s544
        %s546 = smul.addr %s545, 4
        %s547 = scalar_lea.vmem %s2, %s546
        %s548 = sadd.s32 %s31, 1
        %s549 = smul.u32 %s548, 4
        %p550 = scmp.lt.s32.totalorder %s549, 15
        %s551 = scalar_select %p550, %s549, 15
      $region76: #{tpu_custom_call.1} parent=63 // pred_fallthru
        _
    $region64: #{tpu_custom_call.1} parent=5 // pred_fallthru
      _
    %p552 = scmp.le.s32.totalorder 1, %s23
    %p553 = scmp.lt.s32.totalorder %s23, 9
    %p554 = pnand %p552, %p553
    %p555 = pneg %p554
    // Predicated region
    $region77: #{tpu_custom_call.1} parent=5 // pred_check
      _
    $region78: #{tpu_custom_call.1} parent=5 // pred_check_branch
      %557 = sbr.rel (%p554) target = $region80
    $region79: #{tpu_custom_call.1} parent=5 // pred_region
      %s558 = ssub.s32 %s23, 1
      %s559 = smul.u32 4, %s33
      %p560 = scmp.lt.s32.totalorder %s32, 1
      %s561 = scalar_select %p560, %s32, 1
      %p562 = scmp.lt.s32.totalorder %s559, 15
      %s563 = scalar_select %p562, %s559, 15
      %s564 = smul.addr %s563, 2
      %s565 = smul.addr %s561, 32
      %s566 = sadd.s32 %s564, %s565
      %s567 = smul.addr %s566, 4
      %s568 = scalar_lea.vmem %s0, %s567
      %p569 = pneg %p63
      %p570 = pneg %p60
      %s571 = smul.u32 %s33, 4
      %s572 = ssub.s32 %s571, 1
      %p573 = scmp.gt.s32.totalorder %s572, 0
      %s574 = scalar_select %p573, %s572, 0
      %p575 = scmp.lt.s32.totalorder %s32, 1
      %s576 = scalar_select %p575, %s32, 1
      %p577 = scmp.lt.s32.totalorder %s574, 15
      %s578 = scalar_select %p577, %s574, 15
      %s579 = smul.addr %s578, 2
      %s580 = smul.addr %s576, 32
      %s581 = sadd.s32 %s579, %s580
      %s582 = smul.addr %s581, 4
      %s583 = scalar_lea.vmem %s1, %s582
      %p584 = pneg %p99
      %p585 = pneg %p96
      %s586 = sadd.s32 %s33, 1
      %s587 = smul.u32 %s586, 4
      %p588 = scmp.lt.s32.totalorder %s587, 15
      %s589 = scalar_select %p588, %s587, 15
      %p590 = scmp.lt.s32.totalorder %s32, 1
      %s591 = scalar_select %p590, %s32, 1
      %p592 = scmp.lt.s32.totalorder %s589, 15
      %s593 = scalar_select %p592, %s589, 15
      %s594 = smul.addr %s593, 2
      %s595 = smul.addr %s591, 32
      %s596 = sadd.s32 %s594, %s595
      %s597 = smul.addr %s596, 4
      %s598 = scalar_lea.vmem %s2, %s597
      %p599 = pneg %p135
      %p600 = pneg %p132
      %p601 = pneg %p156
      %p602 = pneg %p153
      %p603 = pneg %p177
      %p604 = pneg %p174
      %p605 = pneg %p198
      %p606 = pneg %p195
      %p607 = pneg %p219
      %p608 = pneg %p216
      %p609 = pneg %p240
      %p610 = pneg %p237
      %p611 = pneg %p261
      %p612 = pneg %p258
      %p613 = pneg %p282
      %p614 = pneg %p279
      %p615 = pneg %p303
      %p616 = pneg %p300
      %p617 = pneg %p324
      %p618 = pneg %p321
      %p619 = pneg %p345
      %p620 = pneg %p342
      %p621 = pneg %p366
      %p622 = pneg %p363
      %p623 = pneg %p387
      %p624 = pneg %p384
      %p625 = pneg %p415
      %p626 = pneg %p412
      %s627 = smul.u32 8, %s33
      %p628 = scmp.lt.s32.totalorder %s32, 1
      %s629 = scalar_select %p628, %s32, 1
      %p630 = scmp.lt.s32.totalorder %s627, 31
      %s631 = scalar_select %p630, %s627, 31
      %s632 = smul.addr %s629, 32
      %s633 = sadd.s32 %s631, %s632
      %s634 = smul.addr %s633, 8
      %s635 = scalar_lea.vmem %s15, %s634
      %p636 = pneg %p443
      %p637 = pneg %p440
      %s638 = smul.u32 8, %s33
      %p639 = scmp.lt.s32.totalorder %s32, 1
      %s640 = scalar_select %p639, %s32, 1
      %p641 = scmp.lt.s32.totalorder %s638, 31
      %s642 = scalar_select %p641, %s638, 31
      %s643 = smul.addr %s640, 32
      %s644 = sadd.s32 %s642, %s643
      %s645 = smul.addr %s644, 8
      %s646 = scalar_lea.vmem %s16, %s645
      %s647 = smul.u32 4, %s33
      %p648 = scmp.lt.s32.totalorder %s32, 1
      %s649 = scalar_select %p648, %s32, 1
      %p650 = scmp.lt.s32.totalorder %s647, 15
      %s651 = scalar_select %p650, %s647, 15
      %s652 = smul.addr %s651, 2
      %s653 = smul.addr %s649, 32
      %s654 = sadd.s32 %s652, %s653
      %s655 = smul.addr %s654, 4
      %s656 = scalar_lea.vmem %s0, %s655
      %s657 = smul.u32 4, %s33
      %s658 = smul.u32 %s33, 4
      %s659 = ssub.s32 %s658, 1
      %p660 = scmp.gt.s32.totalorder %s659, 0
      %s661 = scalar_select %p660, %s659, 0
      %p662 = scmp.lt.s32.totalorder %s32, 1
      %s663 = scalar_select %p662, %s32, 1
      %p664 = scmp.lt.s32.totalorder %s661, 15
      %s665 = scalar_select %p664, %s661, 15
      %s666 = smul.addr %s665, 2
      %s667 = smul.addr %s663, 32
      %s668 = sadd.s32 %s666, %s667
      %s669 = smul.addr %s668, 4
      %s670 = scalar_lea.vmem %s1, %s669
      %s671 = smul.u32 %s33, 4
      %s672 = ssub.s32 %s671, 1
      %p673 = scmp.gt.s32.totalorder %s672, 0
      %s674 = scalar_select %p673, %s672, 0
      %s675 = sadd.s32 %s33, 1
      %s676 = smul.u32 %s675, 4
      %p677 = scmp.lt.s32.totalorder %s676, 15
      %s678 = scalar_select %p677, %s676, 15
      %p679 = scmp.lt.s32.totalorder %s32, 1
      %s680 = scalar_select %p679, %s32, 1
      %p681 = scmp.lt.s32.totalorder %s678, 15
      %s682 = scalar_select %p681, %s678, 15
      %s683 = smul.addr %s682, 2
      %s684 = smul.addr %s680, 32
      %s685 = sadd.s32 %s683, %s684
      %s686 = smul.addr %s685, 4
      %s687 = scalar_lea.vmem %s2, %s686
      %s688 = sadd.s32 %s33, 1
      %s689 = smul.u32 %s688, 4
      %p690 = scmp.lt.s32.totalorder %s689, 15
      %s691 = scalar_select %p690, %s689, 15
      %s692 = smul.u32 8, %s33
      %p693 = scmp.lt.s32.totalorder %s32, 1
      %s694 = scalar_select %p693, %s32, 1
      %p695 = scmp.lt.s32.totalorder %s692, 31
      %s696 = scalar_select %p695, %s692, 31
      %s697 = smul.addr %s694, 32
      %s698 = sadd.s32 %s696, %s697
      %s699 = smul.addr %s698, 8
      %s700 = scalar_lea.vmem %s15, %s699
      %s701 = smul.u32 8, %s33
      %s702 = smul.u32 8, %s33
      %p703 = scmp.lt.s32.totalorder %s32, 1
      %s704 = scalar_select %p703, %s32, 1
      %p705 = scmp.lt.s32.totalorder %s702, 31
      %s706 = scalar_select %p705, %s702, 31
      %s707 = smul.addr %s704, 32
      %s708 = sadd.s32 %s706, %s707
      %s709 = smul.addr %s708, 8
      %s710 = scalar_lea.vmem %s16, %s709
      %s711 = smul.u32 8, %s33
      %v713 = vld [vmem:[%s656] sm:$0xf]
      %v714 = vld [vmem:[%s656 + $0x4] sm:$0xf]
      %v715 = vld [vmem:[%s656 + $0x8] sm:$0xf]
      %v716 = vld [vmem:[%s656 + $0xc] sm:$0xf]
      %v717 = vld [vmem:[%s656 + $0x10] sm:$0xf]
      %v718 = vld [vmem:[%s656 + $0x14] sm:$0xf]
      %v719 = vld [vmem:[%s656 + $0x18] sm:$0xf]
      %v720 = vld [vmem:[%s656 + $0x1c] sm:$0xf]
      %v721 = vld [vmem:[%s670] sm:$0xf]
      %v722 = vld [vmem:[%s670 + $0x4] sm:$0xf]
      %v723 = vld [vmem:[%s687] sm:$0xf]
      %v724 = vld [vmem:[%s687 + $0x4] sm:$0xf]
      %v725 = vld [vmem:[%s3] sm:$0x3]
      %v738 = vunpack.c.l.b16 %v721
      %v739 = vunpack.c.l.b16 %v722
      %v740 = vunpack.c.l.b16 %v713
      %v741 = vunpack.c.l.b16 %v714
      %v742 = vunpack.c.l.b16 %v715
      %v743 = vunpack.c.l.b16 %v716
      %v744 = vunpack.c.l.b16 %v717
      %v745 = vunpack.c.l.b16 %v718
      %v746 = vunpack.c.l.b16 %v719
      %v747 = vunpack.c.l.b16 %v720
      %v748 = vunpack.c.l.b16 %v723
      %v749 = vunpack.c.l.b16 %v724
      %v750 = vpack.c.b16 %v739, %v738
      %v751 = vpack.c.b16 %v741, %v740
      %v752 = vpack.c.b16 %v743, %v742
      %v753 = vpack.c.b16 %v745, %v744
      %v754 = vpack.c.b16 %v747, %v746
      %v755 = vpack.c.b16 %v749, %v748
      %vm756 = vcmask 31744
      %v758 = vsel %vm756, %v750, 0
      %v761 = vsel %vm756, %v751, 0
      %v764 = vsel %vm756, %v752, 0
      %v767 = vsel %vm756, %v753, 0
      %v770 = vsel %vm756, %v754, 0
      %v773 = vsel %vm756, %v755, 0
      %vm775 = vcmask 1041408
      %v777 = vsel %vm775, %v725, 0
      %779 = vmatpush.bf16.msra.mxu0 0
      %780 = vmatpush.bf16.msra.mxu0 0
      %781 = vmatpush.bf16.msra.mxu0 0
      %782 = vmatpush.bf16.msra.mxu0 0
      %783 = vmatpush.bf16.msra.mxu0 0
      %784 = vmatpush.bf16.msra.mxu0 0
      %785 = vmatpush.bf16.msra.mxu0 0
      %786 = vmatpush.bf16.msra.mxu0 %v777
      %787 = vmatmul.bf16.gmra.mxu0 %v758
      %v788 = vpop.f32.mrf.mxu0
      %v789 = vadd.f32 0.0, %v788
      %v790 = vpop.f32.mrf.mxu0
      %v791 = vadd.f32 0.0, %v790
      %792 = vmatmul.bf16.gmra.mxu0 %v761
      %v793 = vpop.f32.mrf.mxu0
      %v794 = vadd.f32 0.0, %v793
      %v795 = vpop.f32.mrf.mxu0
      %v796 = vadd.f32 0.0, %v795
      %797 = vmatmul.bf16.gmra.mxu0 %v764
      %v798 = vpop.f32.mrf.mxu0
      %v799 = vadd.f32 0.0, %v798
      %v800 = vpop.f32.mrf.mxu0
      %v801 = vadd.f32 0.0, %v800
      %802 = vmatmul.bf16.gmra.mxu0 %v767
      %v803 = vpop.f32.mrf.mxu0
      %v804 = vadd.f32 0.0, %v803
      %v805 = vpop.f32.mrf.mxu0
      %v806 = vadd.f32 0.0, %v805
      %807 = vmatmul.bf16.gmra.mxu0 %v770
      %v808 = vpop.f32.mrf.mxu0
      %v809 = vadd.f32 0.0, %v808
      %v810 = vpop.f32.mrf.mxu0
      %v811 = vadd.f32 0.0, %v810
      %812 = vmatmul.bf16.gmra.mxu0 %v773
      %v813 = vpop.f32.mrf.mxu0
      %v814 = vadd.f32 0.0, %v813
      %v815 = vpop.f32.mrf.mxu0
      %v816 = vadd.f32 0.0, %v815
      %817 = vdwg.mxu0
      %v818 = vld [vmem:[%s4] sm:$0x1]
      %v820 = vperm.slane %v818, 0
      %v822 = vmul.f32 %v789, %v820
      %v823 = vmul.f32 %v791, %v820
      %v824 = vmul.f32 %v794, %v820
      %v825 = vmul.f32 %v796, %v820
      %v826 = vmul.f32 %v799, %v820
      %v827 = vmul.f32 %v801, %v820
      %v828 = vmul.f32 %v804, %v820
      %v829 = vmul.f32 %v806, %v820
      %v830 = vmul.f32 %v809, %v820
      %v831 = vmul.f32 %v811, %v820
      %v832 = vmul.f32 %v814, %v820
      %v833 = vmul.f32 %v816, %v820
      %v834 = vld [vmem:[%s5] sm:$0x1]
      %v836 = vperm.slane %v834, 0
      %v838 = vadd.f32 %v822, %v836
      %v839 = vadd.f32 %v823, %v836
      %v840 = vadd.f32 %v824, %v836
      %v841 = vadd.f32 %v825, %v836
      %v842 = vadd.f32 %v826, %v836
      %v843 = vadd.f32 %v827, %v836
      %v844 = vadd.f32 %v828, %v836
      %v845 = vadd.f32 %v829, %v836
      %v846 = vadd.f32 %v830, %v836
      %v847 = vadd.f32 %v831, %v836
      %v848 = vadd.f32 %v832, %v836
      %v849 = vadd.f32 %v833, %v836
      %v850 = vmax.f32 %v838, 0.0
      %v851 = vmax.f32 %v839, 0.0
      %v852 = vmax.f32 %v840, 0.0
      %v853 = vmax.f32 %v841, 0.0
      %v854 = vmax.f32 %v842, 0.0
      %v855 = vmax.f32 %v843, 0.0
      %v856 = vmax.f32 %v844, 0.0
      %v857 = vmax.f32 %v845, 0.0
      %v858 = vmax.f32 %v846, 0.0
      %v859 = vmax.f32 %v847, 0.0
      %v860 = vmax.f32 %v848, 0.0
      %v861 = vmax.f32 %v849, 0.0
      %v862 = vpack.c.bf16 %v850, %v850
      %v863 = vpack.c.bf16 %v851, %v851
      %v864 = vpack.c.bf16 %v852, %v852
      %v865 = vpack.c.bf16 %v853, %v853
      %v866 = vpack.c.bf16 %v854, %v854
      %v867 = vpack.c.bf16 %v855, %v855
      %v868 = vpack.c.bf16 %v856, %v856
      %v869 = vpack.c.bf16 %v857, %v857
      %v870 = vpack.c.bf16 %v858, %v858
      %v871 = vpack.c.bf16 %v859, %v859
      %v872 = vpack.c.bf16 %v860, %v860
      %v873 = vpack.c.bf16 %v861, %v861
      %vm874 = vsmask.f32 256
      %vm875 = vsmask.f32 4368
      %vm876 = vmor %vm874, %vm875
      %v878 = vshrl.u32 %v862, 16
      %v880 = vrot.slane %v878, 7
      %v881 = vshll.u32 %v862, 16
      %v883 = vor.u32 %v880, %v881
      %v884 = vrot.slane %v880, 4
      %v886 = vshrl.u32 %v863, 16
      %v888 = vrot.slane %v886, 7
      %v889 = vshll.u32 %v863, 16
      %v891 = vor.u32 %v888, %v889
      %v892 = vsel %vm876, %v884, %v891
      %v893 = vrot.slane %v888, 4
      %v895 = vshrl.u32 %v864, 16
      %v897 = vrot.slane %v895, 7
      %v898 = vshll.u32 %v864, 16
      %v900 = vor.u32 %v897, %v898
      %v901 = vrot.slane %v897, 4
      %v903 = vshrl.u32 %v865, 16
      %v905 = vrot.slane %v903, 7
      %v906 = vshll.u32 %v865, 16
      %v908 = vor.u32 %v905, %v906
      %v909 = vsel %vm876, %v901, %v908
      %v910 = vrot.slane %v905, 4
      %v912 = vshrl.u32 %v866, 16
      %v914 = vrot.slane %v912, 7
      %v915 = vshll.u32 %v866, 16
      %v917 = vor.u32 %v914, %v915
      %v918 = vrot.slane %v914, 4
      %v920 = vshrl.u32 %v867, 16
      %v922 = vrot.slane %v920, 7
      %v923 = vshll.u32 %v867, 16
      %v925 = vor.u32 %v922, %v923
      %v926 = vsel %vm876, %v918, %v925
      %v927 = vrot.slane %v922, 4
      %v929 = vshrl.u32 %v868, 16
      %v931 = vrot.slane %v929, 7
      %v932 = vshll.u32 %v868, 16
      %v934 = vor.u32 %v931, %v932
      %v935 = vrot.slane %v931, 4
      %v937 = vshrl.u32 %v869, 16
      %v939 = vrot.slane %v937, 7
      %v940 = vshll.u32 %v869, 16
      %v942 = vor.u32 %v939, %v940
      %v943 = vsel %vm876, %v935, %v942
      %v944 = vrot.slane %v939, 4
      %v946 = vshrl.u32 %v870, 16
      %v948 = vrot.slane %v946, 7
      %v949 = vshll.u32 %v870, 16
      %v951 = vor.u32 %v948, %v949
      %v952 = vrot.slane %v948, 4
      %v954 = vshrl.u32 %v871, 16
      %v956 = vrot.slane %v954, 7
      %v957 = vshll.u32 %v871, 16
      %v959 = vor.u32 %v956, %v957
      %v960 = vsel %vm876, %v952, %v959
      %v961 = vrot.slane %v956, 4
      %v963 = vshrl.u32 %v872, 16
      %v965 = vrot.slane %v963, 7
      %v966 = vshll.u32 %v872, 16
      %v968 = vor.u32 %v965, %v966
      %v969 = vrot.slane %v965, 4
      %v971 = vshrl.u32 %v873, 16
      %v973 = vrot.slane %v971, 7
      %v974 = vshll.u32 %v873, 16
      %v976 = vor.u32 %v973, %v974
      %v977 = vsel %vm876, %v969, %v976
      %v978 = vrot.slane %v973, 4
      %vm997 = vcmask 27648
      %vm998 = vsmask.f32 7938
      %vm999 = vmand %vm997, %vm998
      %v1000 = vld [vmem:[#allocation2] sm:$0xf]
      %v1001 = vsel %vm999, %v883, %v1000
      %1002 = vst [vmem:[#allocation2] sm:$0xf] %v1001
      %vm1003 = vcmask 27648
      %1004 = vst.msk [vmem:[#allocation2 + $0x4] sm:$0xf] %vm1003, %v892
      %vm1005 = vcmask 24576
      %vm1006 = vmand %vm1005, %vm874
      %v1007 = vld [vmem:[#allocation2 + $0x8] sm:$0x1]
      %v1008 = vsel %vm1006, %v893, %v1007
      %1009 = vst [vmem:[#allocation2 + $0x8] sm:$0x1] %v1008
      %v1010 = vld [vmem:[#allocation2 + $0xc] sm:$0xf]
      %v1011 = vsel %vm999, %v900, %v1010
      %1012 = vst [vmem:[#allocation2 + $0xc] sm:$0xf] %v1011
      %1013 = vst.msk [vmem:[#allocation2 + $0x10] sm:$0xf] %vm1003, %v909
      %v1014 = vld [vmem:[#allocation2 + $0x14] sm:$0x1]
      %v1015 = vsel %vm1006, %v910, %v1014
      %1016 = vst [vmem:[#allocation2 + $0x14] sm:$0x1] %v1015
      %v1017 = vld [vmem:[#allocation2 + $0x18] sm:$0xf]
      %v1018 = vsel %vm999, %v917, %v1017
      %1019 = vst [vmem:[#allocation2 + $0x18] sm:$0xf] %v1018
      %1020 = vst.msk [vmem:[#allocation2 + $0x1c] sm:$0xf] %vm1003, %v926
      %v1021 = vld [vmem:[#allocation2 + $0x20] sm:$0x1]
      %v1022 = vsel %vm1006, %v927, %v1021
      %1023 = vst [vmem:[#allocation2 + $0x20] sm:$0x1] %v1022
      %v1024 = vld [vmem:[#allocation2 + $0x24] sm:$0xf]
      %v1025 = vsel %vm999, %v934, %v1024
      %1026 = vst [vmem:[#allocation2 + $0x24] sm:$0xf] %v1025
      %1027 = vst.msk [vmem:[#allocation2 + $0x28] sm:$0xf] %vm1003, %v943
      %v1028 = vld [vmem:[#allocation2 + $0x2c] sm:$0x1]
      %v1029 = vsel %vm1006, %v944, %v1028
      %1030 = vst [vmem:[#allocation2 + $0x2c] sm:$0x1] %v1029
      %v1031 = vld [vmem:[#allocation2 + $0x30] sm:$0xf]
      %v1032 = vsel %vm999, %v951, %v1031
      %1033 = vst [vmem:[#allocation2 + $0x30] sm:$0xf] %v1032
      %1034 = vst.msk [vmem:[#allocation2 + $0x34] sm:$0xf] %vm1003, %v960
      %v1035 = vld [vmem:[#allocation2 + $0x38] sm:$0x1]
      %v1036 = vsel %vm1006, %v961, %v1035
      %1037 = vst [vmem:[#allocation2 + $0x38] sm:$0x1] %v1036
      %v1038 = vld [vmem:[#allocation2 + $0x3c] sm:$0xf]
      %v1039 = vsel %vm999, %v968, %v1038
      %1040 = vst [vmem:[#allocation2 + $0x3c] sm:$0xf] %v1039
      %1041 = vst.msk [vmem:[#allocation2 + $0x40] sm:$0xf] %vm1003, %v977
      %v1042 = vld [vmem:[#allocation2 + $0x44] sm:$0x1]
      %v1043 = vsel %vm1006, %v978, %v1042
      %1044 = vst [vmem:[#allocation2 + $0x44] sm:$0x1] %v1043
      %v1045 = vld [vmem:[#allocation2] sm:$0x1]
      %v1046 = vsel %vm1006, 0, %v1045
      %1047 = vst [vmem:[#allocation2] sm:$0x1] %v1046
      %v1048 = vld [vmem:[#allocation2 + $0xc] sm:$0x1]
      %v1049 = vsel %vm1006, 0, %v1048
      %1050 = vst [vmem:[#allocation2 + $0xc] sm:$0x1] %v1049
      %v1051 = vld [vmem:[#allocation2 + $0x18] sm:$0x1]
      %v1052 = vsel %vm1006, 0, %v1051
      %1053 = vst [vmem:[#allocation2 + $0x18] sm:$0x1] %v1052
      %v1054 = vld [vmem:[#allocation2 + $0x24] sm:$0x1]
      %v1055 = vsel %vm1006, 0, %v1054
      %1056 = vst [vmem:[#allocation2 + $0x24] sm:$0x1] %v1055
      %v1057 = vld [vmem:[#allocation2 + $0x30] sm:$0x1]
      %v1058 = vsel %vm1006, 0, %v1057
      %1059 = vst [vmem:[#allocation2 + $0x30] sm:$0x1] %v1058
      %v1060 = vld [vmem:[#allocation2 + $0x3c] sm:$0x1]
      %v1061 = vsel %vm1006, 0, %v1060
      %1062 = vst [vmem:[#allocation2 + $0x3c] sm:$0x1] %v1061
      %vm1063 = vmand %vm1005, %vm998
      %v1064 = vld [vmem:[#allocation2 + $0x8] sm:$0x1]
      %v1065 = vsel %vm1063, 0, %v1064
      %1066 = vst [vmem:[#allocation2 + $0x8] sm:$0x1] %v1065
      %v1067 = vld [vmem:[#allocation2 + $0x14] sm:$0x1]
      %v1068 = vsel %vm1063, 0, %v1067
      %1069 = vst [vmem:[#allocation2 + $0x14] sm:$0x1] %v1068
      %v1070 = vld [vmem:[#allocation2 + $0x20] sm:$0x1]
      %v1071 = vsel %vm1063, 0, %v1070
      %1072 = vst [vmem:[#allocation2 + $0x20] sm:$0x1] %v1071
      %v1073 = vld [vmem:[#allocation2 + $0x2c] sm:$0x1]
      %v1074 = vsel %vm1063, 0, %v1073
      %1075 = vst [vmem:[#allocation2 + $0x2c] sm:$0x1] %v1074
      %v1076 = vld [vmem:[#allocation2 + $0x38] sm:$0x1]
      %v1077 = vsel %vm1063, 0, %v1076
      %1078 = vst [vmem:[#allocation2 + $0x38] sm:$0x1] %v1077
      %v1079 = vld [vmem:[#allocation2 + $0x44] sm:$0x1]
      %v1080 = vsel %vm1063, 0, %v1079
      %1081 = vst [vmem:[#allocation2 + $0x44] sm:$0x1] %v1080
      %p1082 = scmp.eq.s32.totalorder %s33, 0
      // Predicated region
      $region81: #{tpu_custom_call.1} parent=79 // pred_check
        %p1083 = pneg %p1082
      $region82: #{tpu_custom_call.1} parent=79 // pred_check_branch
        %1085 = sbr.rel (%p1083) target = $region84
      $region83: #{tpu_custom_call.1} parent=79 // pred_region
        %1086 = vst.msk [vmem:[#allocation2] sm:$0xf] %vm1003, 0
        %1087 = vst.msk [vmem:[#allocation2 + $0x4] sm:$0xf] %vm1003, 0
        %vm1088 = vcmask 24576
        %1089 = vst.msk [vmem:[#allocation2 + $0x8] sm:$0x1] %vm1088, 0
      $region84: #{tpu_custom_call.1} parent=79 // pred_fallthru
        _
      %p1090 = scmp.eq.s32.totalorder %s33, 3
      // Predicated region
      $region85: #{tpu_custom_call.1} parent=79 // pred_check
        %p1091 = pneg %p1090
      $region86: #{tpu_custom_call.1} parent=79 // pred_check_branch
        %1093 = sbr.rel (%p1091) target = $region88
      $region87: #{tpu_custom_call.1} parent=79 // pred_region
        %s1094 = scalar_lea.vmem [#allocation2], 60
        %1095 = vst.msk [vmem:[%s1094] sm:$0xf] %vm1003, 0
        %1096 = vst.msk [vmem:[%s1094 + $0x4] sm:$0xf] %vm1003, 0
        %vm1097 = vcmask 24576
        %1098 = vst.msk [vmem:[%s1094 + $0x8] sm:$0x1] %vm1097, 0
      $region88: #{tpu_custom_call.1} parent=79 // pred_fallthru
        _
      %v1099 = vld [vmem:[#allocation2] sm:$0xf]
      %v1100 = vld [vmem:[#allocation2 + $0x4] sm:$0xf]
      %v1101 = vld [vmem:[#allocation2 + $0xc] sm:$0xf]
      %v1102 = vld [vmem:[#allocation2 + $0x10] sm:$0xf]
      %v1103 = vld [vmem:[#allocation2 + $0x18] sm:$0xf]
      %v1104 = vld [vmem:[#allocation2 + $0x1c] sm:$0xf]
      %v1105 = vld [vmem:[#allocation2 + $0x24] sm:$0xf]
      %v1106 = vld [vmem:[#allocation2 + $0x28] sm:$0xf]
      %v1107 = vld [vmem:[#allocation2 + $0x8] sm:$0x1]
      %v1108 = vld [vmem:[#allocation2 + $0x14] sm:$0x1]
      %v1109 = vld [vmem:[#allocation2 + $0x20] sm:$0x1]
      %v1110 = vld [vmem:[#allocation2 + $0x2c] sm:$0x1]
      %v1111 = vld [vmem:[#allocation2] sm:$0xe]
      %v1112 = vld [vmem:[#allocation2 + $0xc] sm:$0xe]
      %v1113 = vld [vmem:[#allocation2 + $0x18] sm:$0xe]
      %v1114 = vld [vmem:[#allocation2 + $0x24] sm:$0xe]
      %s1115 = scalar_lea.vmem [#allocation2], 12
      %v1116 = vld [vmem:[%s1115] sm:$0xf]
      %v1117 = vld [vmem:[%s1115 + $0x4] sm:$0xf]
      %v1118 = vld [vmem:[%s1115 + $0xc] sm:$0xf]
      %v1119 = vld [vmem:[%s1115 + $0x10] sm:$0xf]
      %v1120 = vld [vmem:[%s1115 + $0x18] sm:$0xf]
      %v1121 = vld [vmem:[%s1115 + $0x1c] sm:$0xf]
      %v1122 = vld [vmem:[%s1115 + $0x24] sm:$0xf]
      %v1123 = vld [vmem:[%s1115 + $0x28] sm:$0xf]
      %v1124 = vld [vmem:[%s1115 + $0x8] sm:$0x1]
      %v1125 = vld [vmem:[%s1115 + $0x14] sm:$0x1]
      %v1126 = vld [vmem:[%s1115 + $0x20] sm:$0x1]
      %v1127 = vld [vmem:[%s1115 + $0x2c] sm:$0x1]
      %v1128 = vld [vmem:[%s1115] sm:$0xe]
      %v1129 = vld [vmem:[%s1115 + $0xc] sm:$0xe]
      %v1130 = vld [vmem:[%s1115 + $0x18] sm:$0xe]
      %v1131 = vld [vmem:[%s1115 + $0x24] sm:$0xe]
      %s1132 = scalar_lea.vmem [#allocation2], 24
      %v1133 = vld [vmem:[%s1132] sm:$0xf]
      %v1134 = vld [vmem:[%s1132 + $0x4] sm:$0xf]
      %v1135 = vld [vmem:[%s1132 + $0xc] sm:$0xf]
      %v1136 = vld [vmem:[%s1132 + $0x10] sm:$0xf]
      %v1137 = vld [vmem:[%s1132 + $0x18] sm:$0xf]
      %v1138 = vld [vmem:[%s1132 + $0x1c] sm:$0xf]
      %v1139 = vld [vmem:[%s1132 + $0x24] sm:$0xf]
      %v1140 = vld [vmem:[%s1132 + $0x28] sm:$0xf]
      %v1141 = vld [vmem:[%s1132 + $0x8] sm:$0x1]
      %v1142 = vld [vmem:[%s1132 + $0x14] sm:$0x1]
      %v1143 = vld [vmem:[%s1132 + $0x20] sm:$0x1]
      %v1144 = vld [vmem:[%s1132 + $0x2c] sm:$0x1]
      %v1145 = vld [vmem:[%s1132] sm:$0xe]
      %v1146 = vld [vmem:[%s1132 + $0xc] sm:$0xe]
      %v1147 = vld [vmem:[%s1132 + $0x18] sm:$0xe]
      %v1148 = vld [vmem:[%s1132 + $0x24] sm:$0xe]
      %v1157 = vunpack.c.l.b16 %v1099
      %v1158 = vunpack.c.l.b16 %v1100
      %v1159 = vunpack.c.l.b16 %v1101
      %v1160 = vunpack.c.l.b16 %v1102
      %v1161 = vunpack.c.l.b16 %v1103
      %v1162 = vunpack.c.l.b16 %v1104
      %v1163 = vunpack.c.l.b16 %v1105
      %v1164 = vunpack.c.l.b16 %v1106
      %v1165 = vpack.c.b16 %v1158, %v1157
      %v1166 = vpack.c.b16 %v1160, %v1159
      %v1167 = vpack.c.b16 %v1162, %v1161
      %v1168 = vpack.c.b16 %v1164, %v1163
      %v1173 = vunpack.c.l.b16 %v1107
      %v1174 = vunpack.c.l.b16 %v1108
      %v1175 = vunpack.c.l.b16 %v1109
      %v1176 = vunpack.c.l.b16 %v1110
      %v1177 = vpack.c.b16 %v1173, %v1173
      %v1178 = vpack.c.b16 %v1174, %v1174
      %v1179 = vpack.c.b16 %v1175, %v1175
      %v1180 = vpack.c.b16 %v1176, %v1176
      %vm1181 = vsmask.f32 7424
      %v1183 = vshrl.u32 %v1165, 16
      %v1185 = vshll.u32 %v1165, 16
      %v1187 = vrot.slane %v1185, 1
      %v1188 = vor.u32 %v1183, %v1187
      %v1190 = vshll.u32 %v1177, 16
      %v1192 = vrot.slane %v1190, 1
      %v1193 = vsel %vm1181, %v1188, %v1192
      %v1195 = vshrl.u32 %v1166, 16
      %v1197 = vshll.u32 %v1166, 16
      %v1199 = vrot.slane %v1197, 1
      %v1200 = vor.u32 %v1195, %v1199
      %v1202 = vshll.u32 %v1178, 16
      %v1204 = vrot.slane %v1202, 1
      %v1205 = vsel %vm1181, %v1200, %v1204
      %v1207 = vshrl.u32 %v1167, 16
      %v1209 = vshll.u32 %v1167, 16
      %v1211 = vrot.slane %v1209, 1
      %v1212 = vor.u32 %v1207, %v1211
      %v1214 = vshll.u32 %v1179, 16
      %v1216 = vrot.slane %v1214, 1
      %v1217 = vsel %vm1181, %v1212, %v1216
      %v1219 = vshrl.u32 %v1168, 16
      %v1221 = vshll.u32 %v1168, 16
      %v1223 = vrot.slane %v1221, 1
      %v1224 = vor.u32 %v1219, %v1223
      %v1226 = vshll.u32 %v1180, 16
      %v1228 = vrot.slane %v1226, 1
      %v1229 = vsel %vm1181, %v1224, %v1228
      %1230 = vrot.lane.b32.xlu0 %v1193, 4
      %v1231 = vpop.permute.xlu0 %1230
      %1232 = vrot.lane.b32.xlu0 %v1205, 4
      %v1233 = vpop.permute.xlu0 %1232
      %1234 = vrot.lane.b32.xlu0 %v1217, 4
      %v1235 = vpop.permute.xlu0 %1234
      %1236 = vrot.lane.b32.xlu0 %v1229, 4
      %v1237 = vpop.permute.xlu0 %1236
      %v1242 = vunpack.c.l.b16 %v1111
      %v1243 = vunpack.c.l.b16 %v1112
      %v1244 = vunpack.c.l.b16 %v1113
      %v1245 = vunpack.c.l.b16 %v1114
      %v1246 = vpack.c.b16 %v1158, %v1242
      %v1247 = vpack.c.b16 %v1160, %v1243
      %v1248 = vpack.c.b16 %v1162, %v1244
      %v1249 = vpack.c.b16 %v1164, %v1245
      %vm1250 = vcmask 1046528
      %v1251 = vrot.slane %v1246, 1
      %v1252 = vrot.slane %v1177, 1
      %v1253 = vsel %vm1250, %v1251, %v1252
      %v1254 = vrot.slane %v1247, 1
      %v1255 = vrot.slane %v1178, 1
      %v1256 = vsel %vm1250, %v1254, %v1255
      %v1257 = vrot.slane %v1248, 1
      %v1258 = vrot.slane %v1179, 1
      %v1259 = vsel %vm1250, %v1257, %v1258
      %v1260 = vrot.slane %v1249, 1
      %v1261 = vrot.slane %v1180, 1
      %v1262 = vsel %vm1250, %v1260, %v1261
      %1263 = vrot.lane.b32.xlu0 %v1253, 8
      %v1264 = vpop.permute.xlu0 %1263
      %1265 = vrot.lane.b32.xlu0 %v1256, 8
      %v1266 = vpop.permute.xlu0 %1265
      %1267 = vrot.lane.b32.xlu0 %v1259, 8
      %v1268 = vpop.permute.xlu0 %1267
      %1269 = vrot.lane.b32.xlu0 %v1262, 8
      %v1270 = vpop.permute.xlu0 %1269
      %v1279 = vunpack.c.l.b16 %v1116
      %v1280 = vunpack.c.l.b16 %v1117
      %v1281 = vunpack.c.l.b16 %v1118
      %v1282 = vunpack.c.l.b16 %v1119
      %v1283 = vunpack.c.l.b16 %v1120
      %v1284 = vunpack.c.l.b16 %v1121
      %v1285 = vunpack.c.l.b16 %v1122
      %v1286 = vunpack.c.l.b16 %v1123
      %v1287 = vpack.c.b16 %v1280, %v1279
      %v1288 = vpack.c.b16 %v1282, %v1281
      %v1289 = vpack.c.b16 %v1284, %v1283
      %v1290 = vpack.c.b16 %v1286, %v1285
      %1291 = vrot.lane.b32.xlu0 %v1287, 12
      %v1292 = vpop.permute.xlu0 %1291
      %1293 = vrot.lane.b32.xlu0 %v1288, 12
      %v1294 = vpop.permute.xlu0 %1293
      %1295 = vrot.lane.b32.xlu0 %v1289, 12
      %v1296 = vpop.permute.xlu0 %1295
      %1297 = vrot.lane.b32.xlu0 %v1290, 12
      %v1298 = vpop.permute.xlu0 %1297
      %v1303 = vunpack.c.l.b16 %v1124
      %v1304 = vunpack.c.l.b16 %v1125
      %v1305 = vunpack.c.l.b16 %v1126
      %v1306 = vunpack.c.l.b16 %v1127
      %v1307 = vpack.c.b16 %v1303, %v1303
      %v1308 = vpack.c.b16 %v1304, %v1304
      %v1309 = vpack.c.b16 %v1305, %v1305
      %v1310 = vpack.c.b16 %v1306, %v1306
      %v1312 = vshrl.u32 %v1287, 16
      %v1314 = vshll.u32 %v1287, 16
      %v1316 = vrot.slane %v1314, 1
      %v1317 = vor.u32 %v1312, %v1316
      %v1319 = vshll.u32 %v1307, 16
      %v1321 = vrot.slane %v1319, 1
      %v1322 = vsel %vm1181, %v1317, %v1321
      %v1324 = vshrl.u32 %v1288, 16
      %v1326 = vshll.u32 %v1288, 16
      %v1328 = vrot.slane %v1326, 1
      %v1329 = vor.u32 %v1324, %v1328
      %v1331 = vshll.u32 %v1308, 16
      %v1333 = vrot.slane %v1331, 1
      %v1334 = vsel %vm1181, %v1329, %v1333
      %v1336 = vshrl.u32 %v1289, 16
      %v1338 = vshll.u32 %v1289, 16
      %v1340 = vrot.slane %v1338, 1
      %v1341 = vor.u32 %v1336, %v1340
      %v1343 = vshll.u32 %v1309, 16
      %v1345 = vrot.slane %v1343, 1
      %v1346 = vsel %vm1181, %v1341, %v1345
      %v1348 = vshrl.u32 %v1290, 16
      %v1350 = vshll.u32 %v1290, 16
      %v1352 = vrot.slane %v1350, 1
      %v1353 = vor.u32 %v1348, %v1352
      %v1355 = vshll.u32 %v1310, 16
      %v1357 = vrot.slane %v1355, 1
      %v1358 = vsel %vm1181, %v1353, %v1357
      %1359 = vrot.lane.b32.xlu0 %v1322, 16
      %v1360 = vpop.permute.xlu0 %1359
      %1361 = vrot.lane.b32.xlu0 %v1334, 16
      %v1362 = vpop.permute.xlu0 %1361
      %1363 = vrot.lane.b32.xlu0 %v1346, 16
      %v1364 = vpop.permute.xlu0 %1363
      %1365 = vrot.lane.b32.xlu0 %v1358, 16
      %v1366 = vpop.permute.xlu0 %1365
      %v1371 = vunpack.c.l.b16 %v1128
      %v1372 = vunpack.c.l.b16 %v1129
      %v1373 = vunpack.c.l.b16 %v1130
      %v1374 = vunpack.c.l.b16 %v1131
      %v1375 = vpack.c.b16 %v1280, %v1371
      %v1376 = vpack.c.b16 %v1282, %v1372
      %v1377 = vpack.c.b16 %v1284, %v1373
      %v1378 = vpack.c.b16 %v1286, %v1374
      %v1379 = vrot.slane %v1375, 1
      %v1380 = vrot.slane %v1307, 1
      %v1381 = vsel %vm1250, %v1379, %v1380
      %v1382 = vrot.slane %v1376, 1
      %v1383 = vrot.slane %v1308, 1
      %v1384 = vsel %vm1250, %v1382, %v1383
      %v1385 = vrot.slane %v1377, 1
      %v1386 = vrot.slane %v1309, 1
      %v1387 = vsel %vm1250, %v1385, %v1386
      %v1388 = vrot.slane %v1378, 1
      %v1389 = vrot.slane %v1310, 1
      %v1390 = vsel %vm1250, %v1388, %v1389
      %1391 = vrot.lane.b32.xlu0 %v1381, 20
      %v1392 = vpop.permute.xlu0 %1391
      %1393 = vrot.lane.b32.xlu0 %v1384, 20
      %v1394 = vpop.permute.xlu0 %1393
      %1395 = vrot.lane.b32.xlu0 %v1387, 20
      %v1396 = vpop.permute.xlu0 %1395
      %1397 = vrot.lane.b32.xlu0 %v1390, 20
      %v1398 = vpop.permute.xlu0 %1397
      %v1407 = vunpack.c.l.b16 %v1133
      %v1408 = vunpack.c.l.b16 %v1134
      %v1409 = vunpack.c.l.b16 %v1135
      %v1410 = vunpack.c.l.b16 %v1136
      %v1411 = vunpack.c.l.b16 %v1137
      %v1412 = vunpack.c.l.b16 %v1138
      %v1413 = vunpack.c.l.b16 %v1139
      %v1414 = vunpack.c.l.b16 %v1140
      %v1415 = vpack.c.b16 %v1408, %v1407
      %v1416 = vpack.c.b16 %v1410, %v1409
      %v1417 = vpack.c.b16 %v1412, %v1411
      %v1418 = vpack.c.b16 %v1414, %v1413
      %1419 = vrot.lane.b32.xlu0 %v1415, 24
      %v1420 = vpop.permute.xlu0 %1419
      %1421 = vrot.lane.b32.xlu0 %v1416, 24
      %v1422 = vpop.permute.xlu0 %1421
      %1423 = vrot.lane.b32.xlu0 %v1417, 24
      %v1424 = vpop.permute.xlu0 %1423
      %1425 = vrot.lane.b32.xlu0 %v1418, 24
      %v1426 = vpop.permute.xlu0 %1425
      %v1431 = vunpack.c.l.b16 %v1141
      %v1432 = vunpack.c.l.b16 %v1142
      %v1433 = vunpack.c.l.b16 %v1143
      %v1434 = vunpack.c.l.b16 %v1144
      %v1435 = vpack.c.b16 %v1431, %v1431
      %v1436 = vpack.c.b16 %v1432, %v1432
      %v1437 = vpack.c.b16 %v1433, %v1433
      %v1438 = vpack.c.b16 %v1434, %v1434
      %v1440 = vshrl.u32 %v1415, 16
      %v1442 = vshll.u32 %v1415, 16
      %v1444 = vrot.slane %v1442, 1
      %v1445 = vor.u32 %v1440, %v1444
      %v1447 = vshll.u32 %v1435, 16
      %v1449 = vrot.slane %v1447, 1
      %v1450 = vsel %vm1181, %v1445, %v1449
      %v1452 = vshrl.u32 %v1416, 16
      %v1454 = vshll.u32 %v1416, 16
      %v1456 = vrot.slane %v1454, 1
      %v1457 = vor.u32 %v1452, %v1456
      %v1459 = vshll.u32 %v1436, 16
      %v1461 = vrot.slane %v1459, 1
      %v1462 = vsel %vm1181, %v1457, %v1461
      %v1464 = vshrl.u32 %v1417, 16
      %v1466 = vshll.u32 %v1417, 16
      %v1468 = vrot.slane %v1466, 1
      %v1469 = vor.u32 %v1464, %v1468
      %v1471 = vshll.u32 %v1437, 16
      %v1473 = vrot.slane %v1471, 1
      %v1474 = vsel %vm1181, %v1469, %v1473
      %v1476 = vshrl.u32 %v1418, 16
      %v1478 = vshll.u32 %v1418, 16
      %v1480 = vrot.slane %v1478, 1
      %v1481 = vor.u32 %v1476, %v1480
      %v1483 = vshll.u32 %v1438, 16
      %v1485 = vrot.slane %v1483, 1
      %v1486 = vsel %vm1181, %v1481, %v1485
      %1487 = vrot.lane.b32.xlu0 %v1450, 28
      %v1488 = vpop.permute.xlu0 %1487
      %1489 = vrot.lane.b32.xlu0 %v1462, 28
      %v1490 = vpop.permute.xlu0 %1489
      %1491 = vrot.lane.b32.xlu0 %v1474, 28
      %v1492 = vpop.permute.xlu0 %1491
      %1493 = vrot.lane.b32.xlu0 %v1486, 28
      %v1494 = vpop.permute.xlu0 %1493
      %v1499 = vunpack.c.l.b16 %v1145
      %v1500 = vunpack.c.l.b16 %v1146
      %v1501 = vunpack.c.l.b16 %v1147
      %v1502 = vunpack.c.l.b16 %v1148
      %v1503 = vpack.c.b16 %v1408, %v1499
      %v1504 = vpack.c.b16 %v1410, %v1500
      %v1505 = vpack.c.b16 %v1412, %v1501
      %v1506 = vpack.c.b16 %v1414, %v1502
      %v1507 = vrot.slane %v1503, 1
      %v1508 = vrot.slane %v1435, 1
      %v1509 = vsel %vm1250, %v1507, %v1508
      %v1510 = vrot.slane %v1504, 1
      %v1511 = vrot.slane %v1436, 1
      %v1512 = vsel %vm1250, %v1510, %v1511
      %v1513 = vrot.slane %v1505, 1
      %v1514 = vrot.slane %v1437, 1
      %v1515 = vsel %vm1250, %v1513, %v1514
      %v1516 = vrot.slane %v1506, 1
      %v1517 = vrot.slane %v1438, 1
      %v1518 = vsel %vm1250, %v1516, %v1517
      %1519 = vrot.lane.b32.xlu0 %v1509, 32
      %v1520 = vpop.permute.xlu0 %1519
      %1521 = vrot.lane.b32.xlu0 %v1512, 32
      %v1522 = vpop.permute.xlu0 %1521
      %1523 = vrot.lane.b32.xlu0 %v1515, 32
      %v1524 = vpop.permute.xlu0 %1523
      %1525 = vrot.lane.b32.xlu0 %v1518, 32
      %v1526 = vpop.permute.xlu0 %1525
      %v1528 = vsel %vm756, %v1165, %v1231
      %v1530 = vsel %vm756, %v1166, %v1233
      %v1532 = vsel %vm756, %v1167, %v1235
      %v1534 = vsel %vm756, %v1168, %v1237
      %vm1535 = vcmask 64512
      %v1537 = vsel %vm1535, %v1528, %v1264
      %v1539 = vsel %vm1535, %v1530, %v1266
      %v1541 = vsel %vm1535, %v1532, %v1268
      %v1543 = vsel %vm1535, %v1534, %v1270
      %vm1544 = vcmask 97280
      %v1546 = vsel %vm1544, %v1537, %v1292
      %v1548 = vsel %vm1544, %v1539, %v1294
      %v1550 = vsel %vm1544, %v1541, %v1296
      %v1552 = vsel %vm1544, %v1543, %v1298
      %vm1553 = vcmask 130048
      %v1555 = vsel %vm1553, %v1546, %v1360
      %v1557 = vsel %vm1553, %v1548, %v1362
      %v1559 = vsel %vm1553, %v1550, %v1364
      %v1561 = vsel %vm1553, %v1552, %v1366
      %vm1562 = vcmask 162816
      %v1564 = vsel %vm1562, %v1555, %v1392
      %v1566 = vsel %vm1562, %v1557, %v1394
      %v1568 = vsel %vm1562, %v1559, %v1396
      %v1570 = vsel %vm1562, %v1561, %v1398
      %vm1571 = vcmask 195584
      %v1573 = vsel %vm1571, %v1564, %v1420
      %v1575 = vsel %vm1571, %v1566, %v1422
      %v1577 = vsel %vm1571, %v1568, %v1424
      %v1579 = vsel %vm1571, %v1570, %v1426
      %vm1580 = vcmask 228352
      %v1582 = vsel %vm1580, %v1573, %v1488
      %v1584 = vsel %vm1580, %v1575, %v1490
      %v1586 = vsel %vm1580, %v1577, %v1492
      %v1588 = vsel %vm1580, %v1579, %v1494
      %vm1589 = vcmask 261120
      %v1591 = vsel %vm1589, %v1582, %v1520
      %v1593 = vsel %vm1589, %v1584, %v1522
      %v1595 = vsel %vm1589, %v1586, %v1524
      %v1597 = vsel %vm1589, %v1588, %v1526
      %v1598 = vld [vmem:[%s6] sm:$0xf]
      %v1599 = vld [vmem:[%s6 + $0x4] sm:$0xf]
      %v1600 = vld [vmem:[%s6 + $0x8] sm:$0xf]
      %v1601 = vld [vmem:[%s6 + $0xc] sm:$0xf]
      %v1602 = vld [vmem:[%s6 + $0x10] sm:$0x3]
      %v1608 = vunpack.c.l.b16 %v1598
      %v1609 = vunpack.c.l.b16 %v1599
      %v1610 = vunpack.c.l.b16 %v1600
      %v1611 = vunpack.c.l.b16 %v1601
      %v1612 = vunpack.c.l.b16 %v1602
      %v1613 = vpack.c.b16 %v1609, %v1608
      %v1614 = vpack.c.b16 %v1611, %v1610
      %v1615 = vpack.c.b16 %v1612, %v1612
      %vm1618 = vcmask 293888
      %v1619 = vsel %vm1618, %v1591, 0
      %v1621 = vsel %vm1618, %v1593, 0
      %v1623 = vsel %vm1618, %v1595, 0
      %v1625 = vsel %vm1618, %v1597, 0
      %v1628 = vsel %vm775, %v1615, 0
      %1630 = vmatpush.bf16.msra.mxu0 0
      %1631 = vmatpush.bf16.msra.mxu0 0
      %1632 = vmatpush.bf16.msra.mxu0 0
      %1633 = vmatpush.bf16.msra.mxu0 0
      %1634 = vmatpush.bf16.msra.mxu0 0
      %1635 = vmatpush.bf16.msra.mxu0 %v1628
      %1636 = vmatpush.bf16.msra.mxu0 %v1614
      %1637 = vmatpush.bf16.msra.mxu0 %v1613
      %1638 = vmatmul.bf16.gmra.mxu0 %v1619
      %v1639 = vpop.f32.mrf.mxu0
      %v1640 = vadd.f32 0.0, %v1639
      %v1641 = vpop.f32.mrf.mxu0
      %v1642 = vadd.f32 0.0, %v1641
      %1643 = vmatmul.bf16.gmra.mxu0 %v1621
      %v1644 = vpop.f32.mrf.mxu0
      %v1645 = vadd.f32 0.0, %v1644
      %v1646 = vpop.f32.mrf.mxu0
      %v1647 = vadd.f32 0.0, %v1646
      %1648 = vmatmul.bf16.gmra.mxu0 %v1623
      %v1649 = vpop.f32.mrf.mxu0
      %v1650 = vadd.f32 0.0, %v1649
      %v1651 = vpop.f32.mrf.mxu0
      %v1652 = vadd.f32 0.0, %v1651
      %1653 = vmatmul.bf16.gmra.mxu0 %v1625
      %v1654 = vpop.f32.mrf.mxu0
      %v1655 = vadd.f32 0.0, %v1654
      %v1656 = vpop.f32.mrf.mxu0
      %v1657 = vadd.f32 0.0, %v1656
      %1658 = vdwg.mxu0
      %v1659 = vld [vmem:[%s7] sm:$0x1]
      %v1661 = vperm.slane %v1659, 0
      %v1663 = vmul.f32 %v1640, %v1661
      %v1664 = vmul.f32 %v1642, %v1661
      %v1665 = vmul.f32 %v1645, %v1661
      %v1666 = vmul.f32 %v1647, %v1661
      %v1667 = vmul.f32 %v1650, %v1661
      %v1668 = vmul.f32 %v1652, %v1661
      %v1669 = vmul.f32 %v1655, %v1661
      %v1670 = vmul.f32 %v1657, %v1661
      %v1671 = vld [vmem:[%s8] sm:$0x1]
      %v1673 = vperm.slane %v1671, 0
      %v1675 = vadd.f32 %v1663, %v1673
      %v1676 = vadd.f32 %v1664, %v1673
      %v1677 = vadd.f32 %v1665, %v1673
      %v1678 = vadd.f32 %v1666, %v1673
      %v1679 = vadd.f32 %v1667, %v1673
      %v1680 = vadd.f32 %v1668, %v1673
      %v1681 = vadd.f32 %v1669, %v1673
      %v1682 = vadd.f32 %v1670, %v1673
      %v1683 = vmax.f32 %v1675, 0.0
      %v1684 = vmax.f32 %v1676, 0.0
      %v1685 = vmax.f32 %v1677, 0.0
      %v1686 = vmax.f32 %v1678, 0.0
      %v1687 = vmax.f32 %v1679, 0.0
      %v1688 = vmax.f32 %v1680, 0.0
      %v1689 = vmax.f32 %v1681, 0.0
      %v1690 = vmax.f32 %v1682, 0.0
      %v1691 = vpack.c.bf16 %v1684, %v1683
      %v1692 = vpack.c.bf16 %v1686, %v1685
      %v1693 = vpack.c.bf16 %v1688, %v1687
      %v1694 = vpack.c.bf16 %v1690, %v1689
      %v1695 = vld [vmem:[%s9] sm:$0x3]
      %v1697 = vsel %vm756, %v1691, 0
      %v1700 = vsel %vm756, %v1692, 0
      %v1703 = vsel %vm756, %v1693, 0
      %v1706 = vsel %vm756, %v1694, 0
      %v1709 = vsel %vm775, %v1695, 0
      %1711 = vmatpush.bf16.msra.mxu0 0
      %1712 = vmatpush.bf16.msra.mxu0 0
      %1713 = vmatpush.bf16.msra.mxu0 0
      %1714 = vmatpush.bf16.msra.mxu0 0
      %1715 = vmatpush.bf16.msra.mxu0 0
      %1716 = vmatpush.bf16.msra.mxu0 0
      %1717 = vmatpush.bf16.msra.mxu0 0
      %1718 = vmatpush.bf16.msra.mxu0 %v1709
      %1719 = vmatmul.bf16.gmra.mxu0 %v1697
      %v1720 = vpop.f32.mrf.mxu0
      %v1721 = vadd.f32 0.0, %v1720
      %v1722 = vpop.f32.mrf.mxu0
      %v1723 = vadd.f32 0.0, %v1722
      %1724 = vmatmul.bf16.gmra.mxu0 %v1700
      %v1725 = vpop.f32.mrf.mxu0
      %v1726 = vadd.f32 0.0, %v1725
      %v1727 = vpop.f32.mrf.mxu0
      %v1728 = vadd.f32 0.0, %v1727
      %1729 = vmatmul.bf16.gmra.mxu0 %v1703
      %v1730 = vpop.f32.mrf.mxu0
      %v1731 = vadd.f32 0.0, %v1730
      %v1732 = vpop.f32.mrf.mxu0
      %v1733 = vadd.f32 0.0, %v1732
      %1734 = vmatmul.bf16.gmra.mxu0 %v1706
      %v1735 = vpop.f32.mrf.mxu0
      %v1736 = vadd.f32 0.0, %v1735
      %v1737 = vpop.f32.mrf.mxu0
      %v1738 = vadd.f32 0.0, %v1737
      %1739 = vdwg.mxu0
      %v1740 = vld [vmem:[%s10] sm:$0x1]
      %v1742 = vperm.slane %v1740, 0
      %v1744 = vmul.f32 %v1721, %v1742
      %v1745 = vmul.f32 %v1723, %v1742
      %v1746 = vmul.f32 %v1726, %v1742
      %v1747 = vmul.f32 %v1728, %v1742
      %v1748 = vmul.f32 %v1731, %v1742
      %v1749 = vmul.f32 %v1733, %v1742
      %v1750 = vmul.f32 %v1736, %v1742
      %v1751 = vmul.f32 %v1738, %v1742
      %v1752 = vld [vmem:[%s11] sm:$0x1]
      %v1754 = vperm.slane %v1752, 0
      %v1756 = vadd.f32 %v1744, %v1754
      %v1757 = vadd.f32 %v1745, %v1754
      %v1758 = vadd.f32 %v1746, %v1754
      %v1759 = vadd.f32 %v1747, %v1754
      %v1760 = vadd.f32 %v1748, %v1754
      %v1761 = vadd.f32 %v1749, %v1754
      %v1762 = vadd.f32 %v1750, %v1754
      %v1763 = vadd.f32 %v1751, %v1754
      %v1764 = vld [vmem:[%s12] sm:$0x3]
      %v1766 = vsel %vm775, %v1764, 0
      %1768 = vmatpush.bf16.msra.mxu0 0
      %1769 = vmatpush.bf16.msra.mxu0 0
      %1770 = vmatpush.bf16.msra.mxu0 0
      %1771 = vmatpush.bf16.msra.mxu0 0
      %1772 = vmatpush.bf16.msra.mxu0 0
      %1773 = vmatpush.bf16.msra.mxu0 0
      %1774 = vmatpush.bf16.msra.mxu0 0
      %1775 = vmatpush.bf16.msra.mxu0 %v1766
      %1776 = vmatmul.bf16.gmra.mxu0 %v761
      %v1777 = vpop.f32.mrf.mxu0
      %v1778 = vadd.f32 0.0, %v1777
      %v1779 = vpop.f32.mrf.mxu0
      %v1780 = vadd.f32 0.0, %v1779
      %1781 = vmatmul.bf16.gmra.mxu0 %v764
      %v1782 = vpop.f32.mrf.mxu0
      %v1783 = vadd.f32 0.0, %v1782
      %v1784 = vpop.f32.mrf.mxu0
      %v1785 = vadd.f32 0.0, %v1784
      %1786 = vmatmul.bf16.gmra.mxu0 %v767
      %v1787 = vpop.f32.mrf.mxu0
      %v1788 = vadd.f32 0.0, %v1787
      %v1789 = vpop.f32.mrf.mxu0
      %v1790 = vadd.f32 0.0, %v1789
      %1791 = vmatmul.bf16.gmra.mxu0 %v770
      %v1792 = vpop.f32.mrf.mxu0
      %v1793 = vadd.f32 0.0, %v1792
      %v1794 = vpop.f32.mrf.mxu0
      %v1795 = vadd.f32 0.0, %v1794
      %1796 = vdwg.mxu0
      %v1797 = vld [vmem:[%s13] sm:$0x1]
      %v1799 = vperm.slane %v1797, 0
      %v1801 = vmul.f32 %v1778, %v1799
      %v1802 = vmul.f32 %v1780, %v1799
      %v1803 = vmul.f32 %v1783, %v1799
      %v1804 = vmul.f32 %v1785, %v1799
      %v1805 = vmul.f32 %v1788, %v1799
      %v1806 = vmul.f32 %v1790, %v1799
      %v1807 = vmul.f32 %v1793, %v1799
      %v1808 = vmul.f32 %v1795, %v1799
      %v1809 = vld [vmem:[%s14] sm:$0x1]
      %v1811 = vperm.slane %v1809, 0
      %v1813 = vadd.f32 %v1801, %v1811
      %v1814 = vadd.f32 %v1802, %v1811
      %v1815 = vadd.f32 %v1803, %v1811
      %v1816 = vadd.f32 %v1804, %v1811
      %v1817 = vadd.f32 %v1805, %v1811
      %v1818 = vadd.f32 %v1806, %v1811
      %v1819 = vadd.f32 %v1807, %v1811
      %v1820 = vadd.f32 %v1808, %v1811
      %v1821 = vadd.f32 %v1756, %v1813
      %v1822 = vadd.f32 %v1757, %v1814
      %v1823 = vadd.f32 %v1758, %v1815
      %v1824 = vadd.f32 %v1759, %v1816
      %v1825 = vadd.f32 %v1760, %v1817
      %v1826 = vadd.f32 %v1761, %v1818
      %v1827 = vadd.f32 %v1762, %v1819
      %v1828 = vadd.f32 %v1763, %v1820
      %v1829 = vmax.f32 %v1821, 0.0
      %v1830 = vmax.f32 %v1822, 0.0
      %v1831 = vmax.f32 %v1823, 0.0
      %v1832 = vmax.f32 %v1824, 0.0
      %v1833 = vmax.f32 %v1825, 0.0
      %v1834 = vmax.f32 %v1826, 0.0
      %v1835 = vmax.f32 %v1827, 0.0
      %v1836 = vmax.f32 %v1828, 0.0
      %1837 = vst.msk [vmem:[%s700] sm:$0xff] %vm1553, %v1829
      %1838 = vst.msk [vmem:[%s700 + $0x8] sm:$0xff] %vm1553, %v1830
      %1839 = vst.msk [vmem:[%s700 + $0x10] sm:$0xff] %vm1553, %v1831
      %1840 = vst.msk [vmem:[%s700 + $0x18] sm:$0xff] %vm1553, %v1832
      %1841 = vst.msk [vmem:[%s700 + $0x20] sm:$0xff] %vm1553, %v1833
      %1842 = vst.msk [vmem:[%s700 + $0x28] sm:$0xff] %vm1553, %v1834
      %1843 = vst.msk [vmem:[%s700 + $0x30] sm:$0xff] %vm1553, %v1835
      %1844 = vst.msk [vmem:[%s700 + $0x38] sm:$0xff] %vm1553, %v1836
      %1845 = vst.msk [vmem:[%s710] sm:$0xff] %vm1553, %v1821
      %1846 = vst.msk [vmem:[%s710 + $0x8] sm:$0xff] %vm1553, %v1822
      %1847 = vst.msk [vmem:[%s710 + $0x10] sm:$0xff] %vm1553, %v1823
      %1848 = vst.msk [vmem:[%s710 + $0x18] sm:$0xff] %vm1553, %v1824
      %1849 = vst.msk [vmem:[%s710 + $0x20] sm:$0xff] %vm1553, %v1825
      %1850 = vst.msk [vmem:[%s710 + $0x28] sm:$0xff] %vm1553, %v1826
      %1851 = vst.msk [vmem:[%s710 + $0x30] sm:$0xff] %vm1553, %v1827
      %1852 = vst.msk [vmem:[%s710 + $0x38] sm:$0xff] %vm1553, %v1828
      %s1853 = smul.u32 8, %s33
      %p1854 = scmp.lt.s32.totalorder %s32, 1
      %s1855 = scalar_select %p1854, %s32, 1
      %p1856 = scmp.lt.s32.totalorder %s1853, 31
      %s1857 = scalar_select %p1856, %s1853, 31
      %s1858 = smul.addr %s1855, 32
      %s1859 = sadd.s32 %s1857, %s1858
      %s1860 = smul.addr %s1859, 8
      %s1861 = scalar_lea.vmem %s15, %s1860
      %s1862 = smul.u32 8, %s33
      %p1863 = scmp.lt.s32.totalorder %s32, 1
      %s1864 = scalar_select %p1863, %s32, 1
      %p1865 = scmp.lt.s32.totalorder %s1862, 31
      %s1866 = scalar_select %p1865, %s1862, 31
      %s1867 = smul.addr %s1864, 32
      %s1868 = sadd.s32 %s1866, %s1867
      %s1869 = smul.addr %s1868, 8
      %s1870 = scalar_lea.vmem %s16, %s1869
      // Predicated region
      $region89: #{tpu_custom_call.1} parent=79 // pred_check
        %p1871 = pneg %p412
      $region90: #{tpu_custom_call.1} parent=79 // pred_check_branch
        %1873 = sbr.rel (%p1871) target = $region92
      $region91: #{tpu_custom_call.1} parent=79 // pred_region
        %s1874 = smul.u32 8, %s33
      $region92: #{tpu_custom_call.1} parent=79 // pred_fallthru
        _
      // Predicated region
      $region93: #{tpu_custom_call.1} parent=79 // pred_check
        %p1875 = pneg %p440
      $region94: #{tpu_custom_call.1} parent=79 // pred_check_branch
        %1877 = sbr.rel (%p1875) target = $region96
      $region95: #{tpu_custom_call.1} parent=79 // pred_region
        %s1878 = smul.u32 8, %s33
      $region96: #{tpu_custom_call.1} parent=79 // pred_fallthru
        _
    $region80: #{tpu_custom_call.1} parent=5 // pred_fallthru
      _
    %p1879 = scmp.le.s32.totalorder 2, %s23
    // Predicated region
    $region97: #{tpu_custom_call.1} parent=5 // pred_check
      %p1880 = pneg %p1879
    $region98: #{tpu_custom_call.1} parent=5 // pred_check_branch
      %1882 = sbr.rel (%p1880) target = $region100
    $region99: #{tpu_custom_call.1} parent=5 // pred_region
      %s1883 = ssub.s32 %s23, 2
      // Predicated region
      $region101: #{tpu_custom_call.1} parent=99 // pred_check
        %p1884 = pneg %p418
      $region102: #{tpu_custom_call.1} parent=99 // pred_check_branch
        %1886 = sbr.rel (%p1884) target = $region104
      $region103: #{tpu_custom_call.1} parent=99 // pred_region
        %s1887 = smul.u32 8, %s35
        %p1888 = scmp.lt.s32.totalorder %s34, 1
        %s1889 = scalar_select %p1888, %s34, 1
        %p1890 = scmp.lt.s32.totalorder %s1887, 31
        %s1891 = scalar_select %p1890, %s1887, 31
        %s1892 = smul.addr %s1889, 32
        %s1893 = sadd.s32 %s1891, %s1892
        %s1894 = smul.addr %s1893, 8
        %s1895 = scalar_lea.vmem %s15, %s1894
      $region104: #{tpu_custom_call.1} parent=99 // pred_fallthru
        _
      // Predicated region
      $region105: #{tpu_custom_call.1} parent=99 // pred_check
        %p1896 = pneg %p446
      $region106: #{tpu_custom_call.1} parent=99 // pred_check_branch
        %1898 = sbr.rel (%p1896) target = $region108
      $region107: #{tpu_custom_call.1} parent=99 // pred_region
        %s1899 = smul.u32 8, %s35
        %p1900 = scmp.lt.s32.totalorder %s34, 1
        %s1901 = scalar_select %p1900, %s34, 1
        %p1902 = scmp.lt.s32.totalorder %s1899, 31
        %s1903 = scalar_select %p1902, %s1899, 31
        %s1904 = smul.addr %s1901, 32
        %s1905 = sadd.s32 %s1903, %s1904
        %s1906 = smul.addr %s1905, 8
        %s1907 = scalar_lea.vmem %s16, %s1906
      $region108: #{tpu_custom_call.1} parent=99 // pred_fallthru
        _
    $region100: #{tpu_custom_call.1} parent=5 // pred_fallthru
      _
  $region6: #{tpu_custom_call.1} parent=0 // loop_footer
    %s27 = sadd.s32 1, %s23
  $region7: #{tpu_custom_call.1} parent=0 // loop_footer_branch
    %22 = sbr.rel target = $region3
  $region8: #{tpu_custom_call.1} parent=0 // loop_exit
    _

// kernel: tpu_custom_call.1
$region0: #{tpu_custom_call.1}
  #allocation0 [shape = 'u32[]', space=smem, size = 0x4, offset = 0x4, fixed_abs, tag = 'smem constant byte address 0x4 - core index']
  #allocation1 [shape = 'u32[72,128]{1,0:T(1,128)}', space=vmem, size = 0x9000, scoped, tag = 'internal scratch']
  #allocation2 [shape = 'bf16[6,18,4]{2,1,0:T(8,128)(2,1)}', space=vmem, size = 0x9000, scoped, tag = 'scratch operand']
  %s0 = inlined_call_operand.vmem [shape: bf16[2,16,16,4], index: 0, kind: input, shape index: {}]
  %s1 = inlined_call_operand.vmem [shape: bf16[2,16,16,4], index: 1, kind: input, shape index: {}]
  %s2 = inlined_call_operand.vmem [shape: bf16[2,16,16,4], index: 2, kind: input, shape index: {}]
  %s3 = inlined_call_operand.vmem [shape: bf16[4,4], index: 3, kind: input, shape index: {}]
  %s4 = inlined_call_operand.vmem [shape: f32[1,4], index: 4, kind: input, shape index: {}]
  %s5 = inlined_call_operand.vmem [shape: f32[1,4], index: 5, kind: input, shape index: {}]
  %s6 = inlined_call_operand.vmem [shape: bf16[36,4], index: 6, kind: input, shape index: {}]
  %s7 = inlined_call_operand.vmem [shape: f32[1,4], index: 7, kind: input, shape index: {}]
  %s8 = inlined_call_operand.vmem [shape: f32[1,4], index: 8, kind: input, shape index: {}]
  %s9 = inlined_call_operand.vmem [shape: bf16[4,16], index: 9, kind: input, shape index: {}]
  %s10 = inlined_call_operand.vmem [shape: f32[1,16], index: 10, kind: input, shape index: {}]
  %s11 = inlined_call_operand.vmem [shape: f32[1,16], index: 11, kind: input, shape index: {}]
  %s12 = inlined_call_operand.vmem [shape: bf16[4,16], index: 12, kind: input, shape index: {}]
  %s13 = inlined_call_operand.vmem [shape: f32[1,16], index: 13, kind: input, shape index: {}]
  %s14 = inlined_call_operand.vmem [shape: f32[1,16], index: 14, kind: input, shape index: {}]
  %s15 = inlined_call_operand.vmem [shape: f32[2,256,16], index: 15, kind: output, shape index: {0}]
  %s16 = inlined_call_operand.vmem [shape: f32[2,256,16], index: 16, kind: output, shape index: {1}]
  %17 = xla_tuple %s15, %s16
  %s18 = sld [smem:[#allocation0]]
  $region109: #{tpu_custom_call.1} parent=0
    _
  %s20 = ssub.s32 1, %s18
  %s21 = scalar_select 0, %s20, %s18
  loop: start=0, step=1, limit=10
  $region2: #{tpu_custom_call.1} parent=0 // loop_pre_header
    _
  $region3: #{tpu_custom_call.1} parent=0 // loop_header
    %s23 = sphi 0, %s27
    %p24 = scmp.ge.s32.totalorder %s23, 10
    %s30 = sphi 0, %s42
    %s31 = sphi 0, %s38
    %s32 = sphi 0, %s30
    %s33 = sphi 0, %s31
    %s34 = sphi 0, %s32
    %s35 = sphi 0, %s33
    %s47 = sphi 0, %s49
    %s50 = sphi 0, %s47
    %s51 = sphi 0, %s50
    %s67 = sphi 0, %s51
    %s83 = sphi 0, %s85
    %s86 = sphi 0, %s83
    %s87 = sphi 0, %s86
    %s103 = sphi 0, %s87
    %s119 = sphi 0, %s121
    %s122 = sphi 0, %s119
    %s123 = sphi 0, %s122
    %s139 = sphi 0, %s123
    %s143 = sphi 0, %s143
    %s145 = sphi 0, %s143
    %s146 = sphi 0, %s145
    %s160 = sphi 0, %s146
    %s164 = sphi 0, %s164
    %s166 = sphi 0, %s164
    %s167 = sphi 0, %s166
    %s181 = sphi 0, %s167
    %s185 = sphi 0, %s185
    %s187 = sphi 0, %s185
    %s188 = sphi 0, %s187
    %s202 = sphi 0, %s188
    %s206 = sphi 0, %s206
    %s208 = sphi 0, %s206
    %s209 = sphi 0, %s208
    %s223 = sphi 0, %s209
    %s227 = sphi 0, %s227
    %s229 = sphi 0, %s227
    %s230 = sphi 0, %s229
    %s244 = sphi 0, %s230
    %s248 = sphi 0, %s248
    %s250 = sphi 0, %s248
    %s251 = sphi 0, %s250
    %s265 = sphi 0, %s251
    %s269 = sphi 0, %s269
    %s271 = sphi 0, %s269
    %s272 = sphi 0, %s271
    %s286 = sphi 0, %s272
    %s290 = sphi 0, %s290
    %s292 = sphi 0, %s290
    %s293 = sphi 0, %s292
    %s307 = sphi 0, %s293
    %s311 = sphi 0, %s311
    %s313 = sphi 0, %s311
    %s314 = sphi 0, %s313
    %s328 = sphi 0, %s314
    %s332 = sphi 0, %s332
    %s334 = sphi 0, %s332
    %s335 = sphi 0, %s334
    %s349 = sphi 0, %s335
    %s353 = sphi 0, %s353
    %s355 = sphi 0, %s353
    %s356 = sphi 0, %s355
    %s370 = sphi 0, %s356
    %s374 = sphi 0, %s374
    %s376 = sphi 0, %s374
    %s377 = sphi 0, %s376
    %s391 = sphi 0, %s377
    %s399 = sphi 0, %s401
    %s402 = sphi 0, %s399
    %s403 = sphi 0, %s402
    %s419 = sphi 0, %s403
    %s427 = sphi 0, %s429
    %s430 = sphi 0, %s427
    %s431 = sphi 0, %s430
    %s447 = sphi 0, %s431
  $region4: #{tpu_custom_call.1} parent=0 // loop_header_branch
    %26 = sbr.rel (%p24) target = $region8
  $region5: #{tpu_custom_call.1} parent=0 // loop_body
    %s28 = ssub.s32 %s23, 1
    %s29 = ssub.s32 %s23, 2
    %s36 = sadd.s32 1, %s31
    %p37 = scmp.ge.s32.totalorder %s36, 4
    %s38 = scalar_select %p37, 0, %s36
    %s39 = sadd.s32 1, %s30
    %s40 = scalar_select %p37, %s39, %s30
    %p41 = scmp.ge.s32.totalorder %s40, 2
    %s42 = scalar_select %p41, 0, %s40
    %s43 = ssub.s32 %s30, %s42
    %s44 = ssub.s32 %s31, %s38
    %s45 = sor.u32 %s43, %s44
    %p46 = scmp.eq.s32.totalorder %s45, 0
    %s48 = sadd.s32 %s47, 1
    %s49 = scalar_select %p46, %s47, %s48
    %p52 = pneg %p46
    %p53 = scmp.eq.s32.totalorder %s23, 7
    %p54 = por %p52, %p53
    %p55 = scmp.ne.s32.totalorder %s47, %s50
    %p56 = scmp.eq.s32.totalorder %s23, 0
    %p57 = por %p55, %p56
    %p58 = scmp.ne.s32.totalorder %s47, %s50
    %p59 = scmp.eq.s32.totalorder %s28, 7
    %p60 = por %p58, %p59
    %p61 = scmp.ne.s32.totalorder %s50, %s51
    %p62 = scmp.eq.s32.totalorder %s28, 0
    %p63 = por %p61, %p62
    %p64 = scmp.ne.s32.totalorder %s50, %s51
    %p65 = scmp.eq.s32.totalorder %s29, 7
    %p66 = por %p64, %p65
    %p68 = scmp.ne.s32.totalorder %s51, %s67
    %p69 = scmp.eq.s32.totalorder %s29, 0
    %p70 = por %p68, %p69
    %s71 = smul.u32 %s31, 4
    %s72 = ssub.s32 %s71, 1
    %p73 = scmp.gt.s32.totalorder %s72, 0
    %s74 = scalar_select %p73, %s72, 0
    %s75 = smul.u32 %s38, 4
    %s76 = ssub.s32 %s75, 1
    %p77 = scmp.gt.s32.totalorder %s76, 0
    %s78 = scalar_select %p77, %s76, 0
    %s79 = ssub.s32 %s30, %s42
    %s80 = ssub.s32 %s74, %s78
    %s81 = sor.u32 %s79, %s80
    %p82 = scmp.eq.s32.totalorder %s81, 0
    %s84 = sadd.s32 %s83, 1
    %s85 = scalar_select %p82, %s83, %s84
    %p88 = pneg %p82
    %p89 = scmp.eq.s32.totalorder %s23, 7
    %p90 = por %p88, %p89
    %p91 = scmp.ne.s32.totalorder %s83, %s86
    %p92 = scmp.eq.s32.totalorder %s23, 0
    %p93 = por %p91, %p92
    %p94 = scmp.ne.s32.totalorder %s83, %s86
    %p95 = scmp.eq.s32.totalorder %s28, 7
    %p96 = por %p94, %p95
    %p97 = scmp.ne.s32.totalorder %s86, %s87
    %p98 = scmp.eq.s32.totalorder %s28, 0
    %p99 = por %p97, %p98
    %p100 = scmp.ne.s32.totalorder %s86, %s87
    %p101 = scmp.eq.s32.totalorder %s29, 7
    %p102 = por %p100, %p101
    %p104 = scmp.ne.s32.totalorder %s87, %s103
    %p105 = scmp.eq.s32.totalorder %s29, 0
    %p106 = por %p104, %p105
    %s107 = sadd.s32 %s31, 1
    %s108 = smul.u32 %s107, 4
    %p109 = scmp.lt.s32.totalorder %s108, 15
    %s110 = scalar_select %p109, %s108, 15
    %s111 = sadd.s32 %s38, 1
    %s112 = smul.u32 %s111, 4
    %p113 = scmp.lt.s32.totalorder %s112, 15
    %s114 = scalar_select %p113, %s112, 15
    %s115 = ssub.s32 %s30, %s42
    %s116 = ssub.s32 %s110, %s114
    %s117 = sor.u32 %s115, %s116
    %p118 = scmp.eq.s32.totalorder %s117, 0
    %s120 = sadd.s32 %s119, 1
    %s121 = scalar_select %p118, %s119, %s120
    %p124 = pneg %p118
    %p125 = scmp.eq.s32.totalorder %s23, 7
    %p126 = por %p124, %p125
    %p127 = scmp.ne.s32.totalorder %s119, %s122
    %p128 = scmp.eq.s32.totalorder %s23, 0
    %p129 = por %p127, %p128
    %p130 = scmp.ne.s32.totalorder %s119, %s122
    %p131 = scmp.eq.s32.totalorder %s28, 7
    %p132 = por %p130, %p131
    %p133 = scmp.ne.s32.totalorder %s122, %s123
    %p134 = scmp.eq.s32.totalorder %s28, 0
    %p135 = por %p133, %p134
    %p136 = scmp.ne.s32.totalorder %s122, %s123
    %p137 = scmp.eq.s32.totalorder %s29, 7
    %p138 = por %p136, %p137
    %p140 = scmp.ne.s32.totalorder %s123, %s139
    %p141 = scmp.eq.s32.totalorder %s29, 0
    %p142 = por %p140, %p141
    %s144 = sadd.s32 %s143, 1
    %p147 = scmp.eq.s32.totalorder %s23, 7
    %p148 = scmp.ne.s32.totalorder %s143, %s145
    %p149 = scmp.eq.s32.totalorder %s23, 0
    %p150 = por %p148, %p149
    %p151 = scmp.ne.s32.totalorder %s143, %s145
    %p152 = scmp.eq.s32.totalorder %s28, 7
    %p153 = por %p151, %p152
    %p154 = scmp.ne.s32.totalorder %s145, %s146
    %p155 = scmp.eq.s32.totalorder %s28, 0
    %p156 = por %p154, %p155
    %p157 = scmp.ne.s32.totalorder %s145, %s146
    %p158 = scmp.eq.s32.totalorder %s29, 7
    %p159 = por %p157, %p158
    %p161 = scmp.ne.s32.totalorder %s146, %s160
    %p162 = scmp.eq.s32.totalorder %s29, 0
    %p163 = por %p161, %p162
    %s165 = sadd.s32 %s164, 1
    %p168 = scmp.eq.s32.totalorder %s23, 7
    %p169 = scmp.ne.s32.totalorder %s164, %s166
    %p170 = scmp.eq.s32.totalorder %s23, 0
    %p171 = por %p169, %p170
    %p172 = scmp.ne.s32.totalorder %s164, %s166
    %p173 = scmp.eq.s32.totalorder %s28, 7
    %p174 = por %p172, %p173
    %p175 = scmp.ne.s32.totalorder %s166, %s167
    %p176 = scmp.eq.s32.totalorder %s28, 0
    %p177 = por %p175, %p176
    %p178 = scmp.ne.s32.totalorder %s166, %s167
    %p179 = scmp.eq.s32.totalorder %s29, 7
    %p180 = por %p178, %p179
    %p182 = scmp.ne.s32.totalorder %s167, %s181
    %p183 = scmp.eq.s32.totalorder %s29, 0
    %p184 = por %p182, %p183
    %s186 = sadd.s32 %s185, 1
    %p189 = scmp.eq.s32.totalorder %s23, 7
    %p190 = scmp.ne.s32.totalorder %s185, %s187
    %p191 = scmp.eq.s32.totalorder %s23, 0
    %p192 = por %p190, %p191
    %p193 = scmp.ne.s32.totalorder %s185, %s187
    %p194 = scmp.eq.s32.totalorder %s28, 7
    %p195 = por %p193, %p194
    %p196 = scmp.ne.s32.totalorder %s187, %s188
    %p197 = scmp.eq.s32.totalorder %s28, 0
    %p198 = por %p196, %p197
    %p199 = scmp.ne.s32.totalorder %s187, %s188
    %p200 = scmp.eq.s32.totalorder %s29, 7
    %p201 = por %p199, %p200
    %p203 = scmp.ne.s32.totalorder %s188, %s202
    %p204 = scmp.eq.s32.totalorder %s29, 0
    %p205 = por %p203, %p204
    %s207 = sadd.s32 %s206, 1
    %p210 = scmp.eq.s32.totalorder %s23, 7
    %p211 = scmp.ne.s32.totalorder %s206, %s208
    %p212 = scmp.eq.s32.totalorder %s23, 0
    %p213 = por %p211, %p212
    %p214 = scmp.ne.s32.totalorder %s206, %s208
    %p215 = scmp.eq.s32.totalorder %s28, 7
    %p216 = por %p214, %p215
    %p217 = scmp.ne.s32.totalorder %s208, %s209
    %p218 = scmp.eq.s32.totalorder %s28, 0
    %p219 = por %p217, %p218
    %p220 = scmp.ne.s32.totalorder %s208, %s209
    %p221 = scmp.eq.s32.totalorder %s29, 7
    %p222 = por %p220, %p221
    %p224 = scmp.ne.s32.totalorder %s209, %s223
    %p225 = scmp.eq.s32.totalorder %s29, 0
    %p226 = por %p224, %p225
    %s228 = sadd.s32 %s227, 1
    %p231 = scmp.eq.s32.totalorder %s23, 7
    %p232 = scmp.ne.s32.totalorder %s227, %s229
    %p233 = scmp.eq.s32.totalorder %s23, 0
    %p234 = por %p232, %p233
    %p235 = scmp.ne.s32.totalorder %s227, %s229
    %p236 = scmp.eq.s32.totalorder %s28, 7
    %p237 = por %p235, %p236
    %p238 = scmp.ne.s32.totalorder %s229, %s230
    %p239 = scmp.eq.s32.totalorder %s28, 0
    %p240 = por %p238, %p239
    %p241 = scmp.ne.s32.totalorder %s229, %s230
    %p242 = scmp.eq.s32.totalorder %s29, 7
    %p243 = por %p241, %p242
    %p245 = scmp.ne.s32.totalorder %s230, %s244
    %p246 = scmp.eq.s32.totalorder %s29, 0
    %p247 = por %p245, %p246
    %s249 = sadd.s32 %s248, 1
    %p252 = scmp.eq.s32.totalorder %s23, 7
    %p253 = scmp.ne.s32.totalorder %s248, %s250
    %p254 = scmp.eq.s32.totalorder %s23, 0
    %p255 = por %p253, %p254
    %p256 = scmp.ne.s32.totalorder %s248, %s250
    %p257 = scmp.eq.s32.totalorder %s28, 7
    %p258 = por %p256, %p257
    %p259 = scmp.ne.s32.totalorder %s250, %s251
    %p260 = scmp.eq.s32.totalorder %s28, 0
    %p261 = por %p259, %p260
    %p262 = scmp.ne.s32.totalorder %s250, %s251
    %p263 = scmp.eq.s32.totalorder %s29, 7
    %p264 = por %p262, %p263
    %p266 = scmp.ne.s32.totalorder %s251, %s265
    %p267 = scmp.eq.s32.totalorder %s29, 0
    %p268 = por %p266, %p267
    %s270 = sadd.s32 %s269, 1
    %p273 = scmp.eq.s32.totalorder %s23, 7
    %p274 = scmp.ne.s32.totalorder %s269, %s271
    %p275 = scmp.eq.s32.totalorder %s23, 0
    %p276 = por %p274, %p275
    %p277 = scmp.ne.s32.totalorder %s269, %s271
    %p278 = scmp.eq.s32.totalorder %s28, 7
    %p279 = por %p277, %p278
    %p280 = scmp.ne.s32.totalorder %s271, %s272
    %p281 = scmp.eq.s32.totalorder %s28, 0
    %p282 = por %p280, %p281
    %p283 = scmp.ne.s32.totalorder %s271, %s272
    %p284 = scmp.eq.s32.totalorder %s29, 7
    %p285 = por %p283, %p284
    %p287 = scmp.ne.s32.totalorder %s272, %s286
    %p288 = scmp.eq.s32.totalorder %s29, 0
    %p289 = por %p287, %p288
    %s291 = sadd.s32 %s290, 1
    %p294 = scmp.eq.s32.totalorder %s23, 7
    %p295 = scmp.ne.s32.totalorder %s290, %s292
    %p296 = scmp.eq.s32.totalorder %s23, 0
    %p297 = por %p295, %p296
    %p298 = scmp.ne.s32.totalorder %s290, %s292
    %p299 = scmp.eq.s32.totalorder %s28, 7
    %p300 = por %p298, %p299
    %p301 = scmp.ne.s32.totalorder %s292, %s293
    %p302 = scmp.eq.s32.totalorder %s28, 0
    %p303 = por %p301, %p302
    %p304 = scmp.ne.s32.totalorder %s292, %s293
    %p305 = scmp.eq.s32.totalorder %s29, 7
    %p306 = por %p304, %p305
    %p308 = scmp.ne.s32.totalorder %s293, %s307
    %p309 = scmp.eq.s32.totalorder %s29, 0
    %p310 = por %p308, %p309
    %s312 = sadd.s32 %s311, 1
    %p315 = scmp.eq.s32.totalorder %s23, 7
    %p316 = scmp.ne.s32.totalorder %s311, %s313
    %p317 = scmp.eq.s32.totalorder %s23, 0
    %p318 = por %p316, %p317
    %p319 = scmp.ne.s32.totalorder %s311, %s313
    %p320 = scmp.eq.s32.totalorder %s28, 7
    %p321 = por %p319, %p320
    %p322 = scmp.ne.s32.totalorder %s313, %s314
    %p323 = scmp.eq.s32.totalorder %s28, 0
    %p324 = por %p322, %p323
    %p325 = scmp.ne.s32.totalorder %s313, %s314
    %p326 = scmp.eq.s32.totalorder %s29, 7
    %p327 = por %p325, %p326
    %p329 = scmp.ne.s32.totalorder %s314, %s328
    %p330 = scmp.eq.s32.totalorder %s29, 0
    %p331 = por %p329, %p330
    %s333 = sadd.s32 %s332, 1
    %p336 = scmp.eq.s32.totalorder %s23, 7
    %p337 = scmp.ne.s32.totalorder %s332, %s334
    %p338 = scmp.eq.s32.totalorder %s23, 0
    %p339 = por %p337, %p338
    %p340 = scmp.ne.s32.totalorder %s332, %s334
    %p341 = scmp.eq.s32.totalorder %s28, 7
    %p342 = por %p340, %p341
    %p343 = scmp.ne.s32.totalorder %s334, %s335
    %p344 = scmp.eq.s32.totalorder %s28, 0
    %p345 = por %p343, %p344
    %p346 = scmp.ne.s32.totalorder %s334, %s335
    %p347 = scmp.eq.s32.totalorder %s29, 7
    %p348 = por %p346, %p347
    %p350 = scmp.ne.s32.totalorder %s335, %s349
    %p351 = scmp.eq.s32.totalorder %s29, 0
    %p352 = por %p350, %p351
    %s354 = sadd.s32 %s353, 1
    %p357 = scmp.eq.s32.totalorder %s23, 7
    %p358 = scmp.ne.s32.totalorder %s353, %s355
    %p359 = scmp.eq.s32.totalorder %s23, 0
    %p360 = por %p358, %p359
    %p361 = scmp.ne.s32.totalorder %s353, %s355
    %p362 = scmp.eq.s32.totalorder %s28, 7
    %p363 = por %p361, %p362
    %p364 = scmp.ne.s32.totalorder %s355, %s356
    %p365 = scmp.eq.s32.totalorder %s28, 0
    %p366 = por %p364, %p365
    %p367 = scmp.ne.s32.totalorder %s355, %s356
    %p368 = scmp.eq.s32.totalorder %s29, 7
    %p369 = por %p367, %p368
    %p371 = scmp.ne.s32.totalorder %s356, %s370
    %p372 = scmp.eq.s32.totalorder %s29, 0
    %p373 = por %p371, %p372
    %s375 = sadd.s32 %s374, 1
    %p378 = scmp.eq.s32.totalorder %s23, 7
    %p379 = scmp.ne.s32.totalorder %s374, %s376
    %p380 = scmp.eq.s32.totalorder %s23, 0
    %p381 = por %p379, %p380
    %p382 = scmp.ne.s32.totalorder %s374, %s376
    %p383 = scmp.eq.s32.totalorder %s28, 7
    %p384 = por %p382, %p383
    %p385 = scmp.ne.s32.totalorder %s376, %s377
    %p386 = scmp.eq.s32.totalorder %s28, 0
    %p387 = por %p385, %p386
    %p388 = scmp.ne.s32.totalorder %s376, %s377
    %p389 = scmp.eq.s32.totalorder %s29, 7
    %p390 = por %p388, %p389
    %p392 = scmp.ne.s32.totalorder %s377, %s391
    %p393 = scmp.eq.s32.totalorder %s29, 0
    %p394 = por %p392, %p393
    %s395 = ssub.s32 %s30, %s42
    %s396 = ssub.s32 %s31, %s38
    %s397 = sor.u32 %s395, %s396
    %p398 = scmp.eq.s32.totalorder %s397, 0
    %s400 = sadd.s32 %s399, 1
    %s401 = scalar_select %p398, %s399, %s400
    %p404 = pneg %p398
    %p405 = scmp.eq.s32.totalorder %s23, 7
    %p406 = por %p404, %p405
    %p407 = scmp.ne.s32.totalorder %s399, %s402
    %p408 = scmp.eq.s32.totalorder %s23, 0
    %p409 = por %p407, %p408
    %p410 = scmp.ne.s32.totalorder %s399, %s402
    %p411 = scmp.eq.s32.totalorder %s28, 7
    %p412 = por %p410, %p411
    %p413 = scmp.ne.s32.totalorder %s402, %s403
    %p414 = scmp.eq.s32.totalorder %s28, 0
    %p415 = por %p413, %p414
    %p416 = scmp.ne.s32.totalorder %s402, %s403
    %p417 = scmp.eq.s32.totalorder %s29, 7
    %p418 = por %p416, %p417
    %p420 = scmp.ne.s32.totalorder %s403, %s419
    %p421 = scmp.eq.s32.totalorder %s29, 0
    %p422 = por %p420, %p421
    %s423 = ssub.s32 %s30, %s42
    %s424 = ssub.s32 %s31, %s38
    %s425 = sor.u32 %s423, %s424
    %p426 = scmp.eq.s32.totalorder %s425, 0
    %s428 = sadd.s32 %s427, 1
    %s429 = scalar_select %p426, %s427, %s428
    %p432 = pneg %p426
    %p433 = scmp.eq.s32.totalorder %s23, 7
    %p434 = por %p432, %p433
    %p435 = scmp.ne.s32.totalorder %s427, %s430
    %p436 = scmp.eq.s32.totalorder %s23, 0
    %p437 = por %p435, %p436
    %p438 = scmp.ne.s32.totalorder %s427, %s430
    %p439 = scmp.eq.s32.totalorder %s28, 7
    %p440 = por %p438, %p439
    %p441 = scmp.ne.s32.totalorder %s430, %s431
    %p442 = scmp.eq.s32.totalorder %s28, 0
    %p443 = por %p441, %p442
    %p444 = scmp.ne.s32.totalorder %s430, %s431
    %p445 = scmp.eq.s32.totalorder %s29, 7
    %p446 = por %p444, %p445
    %p448 = scmp.ne.s32.totalorder %s431, %s447
    %p449 = scmp.eq.s32.totalorder %s29, 0
    %p450 = por %p448, %p449
    %p451 = scmp.le.s32.totalorder 1, %s23
    %p452 = scmp.lt.s32.totalorder %s23, 9
    %p453 = pnand %p451, %p452
    %p454 = pneg %p453
    // Predicated region
    $region9: #{tpu_custom_call.1} parent=5 // pred_check
      _
    $region10: #{tpu_custom_call.1} parent=5 // pred_check_branch
      %456 = sbr.rel (%p453) target = $region12
    $region11: #{tpu_custom_call.1} parent=5 // pred_region
      %s457 = ssub.s32 %s23, 1
      // Predicated region
      $region13: #{tpu_custom_call.1} parent=11 // pred_check
        %p458 = pneg %p156
      $region14: #{tpu_custom_call.1} parent=11 // pred_check_branch
        %460 = sbr.rel (%p458) target = $region16
      $region15: #{tpu_custom_call.1} parent=11 // pred_region
        _
      $region16: #{tpu_custom_call.1} parent=11 // pred_fallthru
        _
      // Predicated region
      $region17: #{tpu_custom_call.1} parent=11 // pred_check
        %p461 = pneg %p177
      $region18: #{tpu_custom_call.1} parent=11 // pred_check_branch
        %463 = sbr.rel (%p461) target = $region20
      $region19: #{tpu_custom_call.1} parent=11 // pred_region
        _
      $region20: #{tpu_custom_call.1} parent=11 // pred_fallthru
        _
      // Predicated region
      $region21: #{tpu_custom_call.1} parent=11 // pred_check
        %p464 = pneg %p198
      $region22: #{tpu_custom_call.1} parent=11 // pred_check_branch
        %466 = sbr.rel (%p464) target = $region24
      $region23: #{tpu_custom_call.1} parent=11 // pred_region
        _
      $region24: #{tpu_custom_call.1} parent=11 // pred_fallthru
        _
      // Predicated region
      $region25: #{tpu_custom_call.1} parent=11 // pred_check
        %p467 = pneg %p219
      $region26: #{tpu_custom_call.1} parent=11 // pred_check_branch
        %469 = sbr.rel (%p467) target = $region28
      $region27: #{tpu_custom_call.1} parent=11 // pred_region
        _
      $region28: #{tpu_custom_call.1} parent=11 // pred_fallthru
        _
      // Predicated region
      $region29: #{tpu_custom_call.1} parent=11 // pred_check
        %p470 = pneg %p240
      $region30: #{tpu_custom_call.1} parent=11 // pred_check_branch
        %472 = sbr.rel (%p470) target = $region32
      $region31: #{tpu_custom_call.1} parent=11 // pred_region
        _
      $region32: #{tpu_custom_call.1} parent=11 // pred_fallthru
        _
      // Predicated region
      $region33: #{tpu_custom_call.1} parent=11 // pred_check
        %p473 = pneg %p261
      $region34: #{tpu_custom_call.1} parent=11 // pred_check_branch
        %475 = sbr.rel (%p473) target = $region36
      $region35: #{tpu_custom_call.1} parent=11 // pred_region
        _
      $region36: #{tpu_custom_call.1} parent=11 // pred_fallthru
        _
      // Predicated region
      $region37: #{tpu_custom_call.1} parent=11 // pred_check
        %p476 = pneg %p282
      $region38: #{tpu_custom_call.1} parent=11 // pred_check_branch
        %478 = sbr.rel (%p476) target = $region40
      $region39: #{tpu_custom_call.1} parent=11 // pred_region
        _
      $region40: #{tpu_custom_call.1} parent=11 // pred_fallthru
        _
      // Predicated region
      $region41: #{tpu_custom_call.1} parent=11 // pred_check
        %p479 = pneg %p303
      $region42: #{tpu_custom_call.1} parent=11 // pred_check_branch
        %481 = sbr.rel (%p479) target = $region44
      $region43: #{tpu_custom_call.1} parent=11 // pred_region
        _
      $region44: #{tpu_custom_call.1} parent=11 // pred_fallthru
        _
      // Predicated region
      $region45: #{tpu_custom_call.1} parent=11 // pred_check
        %p482 = pneg %p324
      $region46: #{tpu_custom_call.1} parent=11 // pred_check_branch
        %484 = sbr.rel (%p482) target = $region48
      $region47: #{tpu_custom_call.1} parent=11 // pred_region
        _
      $region48: #{tpu_custom_call.1} parent=11 // pred_fallthru
        _
      // Predicated region
      $region49: #{tpu_custom_call.1} parent=11 // pred_check
        %p485 = pneg %p345
      $region50: #{tpu_custom_call.1} parent=11 // pred_check_branch
        %487 = sbr.rel (%p485) target = $region52
      $region51: #{tpu_custom_call.1} parent=11 // pred_region
        _
      $region52: #{tpu_custom_call.1} parent=11 // pred_fallthru
        _
      // Predicated region
      $region53: #{tpu_custom_call.1} parent=11 // pred_check
        %p488 = pneg %p366
      $region54: #{tpu_custom_call.1} parent=11 // pred_check_branch
        %490 = sbr.rel (%p488) target = $region56
      $region55: #{tpu_custom_call.1} parent=11 // pred_region
        _
      $region56: #{tpu_custom_call.1} parent=11 // pred_fallthru
        _
      // Predicated region
      $region57: #{tpu_custom_call.1} parent=11 // pred_check
        %p491 = pneg %p387
      $region58: #{tpu_custom_call.1} parent=11 // pred_check_branch
        %493 = sbr.rel (%p491) target = $region60
      $region59: #{tpu_custom_call.1} parent=11 // pred_region
        _
      $region60: #{tpu_custom_call.1} parent=11 // pred_fallthru
        _
    $region12: #{tpu_custom_call.1} parent=5 // pred_fallthru
      _
    %p494 = scmp.lt.s32.totalorder %s23, 8
    // Predicated region
    $region61: #{tpu_custom_call.1} parent=5 // pred_check
      %p495 = pneg %p494
    $region62: #{tpu_custom_call.1} parent=5 // pred_check_branch
      %497 = sbr.rel (%p495) target = $region64
    $region63: #{tpu_custom_call.1} parent=5 // pred_region
      // Predicated region
      $region65: #{tpu_custom_call.1} parent=63 // pred_check
        %p498 = pneg %p57
      $region66: #{tpu_custom_call.1} parent=63 // pred_check_branch
        %500 = sbr.rel (%p498) target = $region68
      $region67: #{tpu_custom_call.1} parent=63 // pred_region
        %s501 = smul.u32 4, %s31
        %p502 = scmp.lt.s32.totalorder %s30, 1
        %s503 = scalar_select %p502, %s30, 1
        %p504 = scmp.lt.s32.totalorder %s501, 15
        %s505 = scalar_select %p504, %s501, 15
        %s506 = smul.addr %s505, 2
        %s507 = smul.addr %s503, 32
        %s508 = sadd.s32 %s506, %s507
        %s509 = smul.addr %s508, 4
        %s510 = scalar_lea.vmem %s0, %s509
        %s511 = smul.u32 4, %s31
      $region68: #{tpu_custom_call.1} parent=63 // pred_fallthru
        _
      // Predicated region
      $region69: #{tpu_custom_call.1} parent=63 // pred_check
        %p512 = pneg %p93
      $region70: #{tpu_custom_call.1} parent=63 // pred_check_branch
        %514 = sbr.rel (%p512) target = $region72
      $region71: #{tpu_custom_call.1} parent=63 // pred_region
        %s515 = smul.u32 %s31, 4
        %s516 = ssub.s32 %s515, 1
        %p517 = scmp.gt.s32.totalorder %s516, 0
        %s518 = scalar_select %p517, %s516, 0
        %p519 = scmp.lt.s32.totalorder %s30, 1
        %s520 = scalar_select %p519, %s30, 1
        %p521 = scmp.lt.s32.totalorder %s518, 15
        %s522 = scalar_select %p521, %s518, 15
        %s523 = smul.addr %s522, 2
        %s524 = smul.addr %s520, 32
        %s525 = sadd.s32 %s523, %s524
        %s526 = smul.addr %s525, 4
        %s527 = scalar_lea.vmem %s1, %s526
        %s528 = smul.u32 %s31, 4
        %s529 = ssub.s32 %s528, 1
        %p530 = scmp.gt.s32.totalorder %s529, 0
        %s531 = scalar_select %p530, %s529, 0
      $region72: #{tpu_custom_call.1} parent=63 // pred_fallthru
        _
      // Predicated region
      $region73: #{tpu_custom_call.1} parent=63 // pred_check
        %p532 = pneg %p129
      $region74: #{tpu_custom_call.1} parent=63 // pred_check_branch
        %534 = sbr.rel (%p532) target = $region76
      $region75: #{tpu_custom_call.1} parent=63 // pred_region
        %s535 = sadd.s32 %s31, 1
        %s536 = smul.u32 %s535, 4
        %p537 = scmp.lt.s32.totalorder %s536, 15
        %s538 = scalar_select %p537, %s536, 15
        %p539 = scmp.lt.s32.totalorder %s30, 1
        %s540 = scalar_select %p539, %s30, 1
        %p541 = scmp.lt.s32.totalorder %s538, 15
        %s542 = scalar_select %p541, %s538, 15
        %s543 = smul.addr %s542, 2
        %s544 = smul.addr %s540, 32
        %s545 = sadd.s32 %s543, %s544
        %s546 = smul.addr %s545, 4
        %s547 = scalar_lea.vmem %s2, %s546
        %s548 = sadd.s32 %s31, 1
        %s549 = smul.u32 %s548, 4
        %p550 = scmp.lt.s32.totalorder %s549, 15
        %s551 = scalar_select %p550, %s549, 15
      $region76: #{tpu_custom_call.1} parent=63 // pred_fallthru
        _
    $region64: #{tpu_custom_call.1} parent=5 // pred_fallthru
      _
    %p552 = scmp.le.s32.totalorder 1, %s23
    %p553 = scmp.lt.s32.totalorder %s23, 9
    %p554 = pnand %p552, %p553
    %p555 = pneg %p554
    // Predicated region
    $region77: #{tpu_custom_call.1} parent=5 // pred_check
      _
    $region78: #{tpu_custom_call.1} parent=5 // pred_check_branch
      %557 = sbr.rel (%p554) target = $region80
    $region79: #{tpu_custom_call.1} parent=5 // pred_region
      %s558 = ssub.s32 %s23, 1
      %s559 = smul.u32 4, %s33
      %p560 = scmp.lt.s32.totalorder %s32, 1
      %s561 = scalar_select %p560, %s32, 1
      %p562 = scmp.lt.s32.totalorder %s559, 15
      %s563 = scalar_select %p562, %s559, 15
      %s564 = smul.addr %s563, 2
      %s565 = smul.addr %s561, 32
      %s566 = sadd.s32 %s564, %s565
      %s567 = smul.addr %s566, 4
      %s568 = scalar_lea.vmem %s0, %s567
      %p569 = pneg %p63
      %p570 = pneg %p60
      %s571 = smul.u32 %s33, 4
      %s572 = ssub.s32 %s571, 1
      %p573 = scmp.gt.s32.totalorder %s572, 0
      %s574 = scalar_select %p573, %s572, 0
      %p575 = scmp.lt.s32.totalorder %s32, 1
      %s576 = scalar_select %p575, %s32, 1
      %p577 = scmp.lt.s32.totalorder %s574, 15
      %s578 = scalar_select %p577, %s574, 15
      %s579 = smul.addr %s578, 2
      %s580 = smul.addr %s576, 32
      %s581 = sadd.s32 %s579, %s580
      %s582 = smul.addr %s581, 4
      %s583 = scalar_lea.vmem %s1, %s582
      %p584 = pneg %p99
      %p585 = pneg %p96
      %s586 = sadd.s32 %s33, 1
      %s587 = smul.u32 %s586, 4
      %p588 = scmp.lt.s32.totalorder %s587, 15
      %s589 = scalar_select %p588, %s587, 15
      %p590 = scmp.lt.s32.totalorder %s32, 1
      %s591 = scalar_select %p590, %s32, 1
      %p592 = scmp.lt.s32.totalorder %s589, 15
      %s593 = scalar_select %p592, %s589, 15
      %s594 = smul.addr %s593, 2
      %s595 = smul.addr %s591, 32
      %s596 = sadd.s32 %s594, %s595
      %s597 = smul.addr %s596, 4
      %s598 = scalar_lea.vmem %s2, %s597
      %p599 = pneg %p135
      %p600 = pneg %p132
      %p601 = pneg %p156
      %p602 = pneg %p153
      %p603 = pneg %p177
      %p604 = pneg %p174
      %p605 = pneg %p198
      %p606 = pneg %p195
      %p607 = pneg %p219
      %p608 = pneg %p216
      %p609 = pneg %p240
      %p610 = pneg %p237
      %p611 = pneg %p261
      %p612 = pneg %p258
      %p613 = pneg %p282
      %p614 = pneg %p279
      %p615 = pneg %p303
      %p616 = pneg %p300
      %p617 = pneg %p324
      %p618 = pneg %p321
      %p619 = pneg %p345
      %p620 = pneg %p342
      %p621 = pneg %p366
      %p622 = pneg %p363
      %p623 = pneg %p387
      %p624 = pneg %p384
      %p625 = pneg %p415
      %p626 = pneg %p412
      %s627 = smul.u32 8, %s33
      %p628 = scmp.lt.s32.totalorder %s32, 1
      %s629 = scalar_select %p628, %s32, 1
      %p630 = scmp.lt.s32.totalorder %s627, 31
      %s631 = scalar_select %p630, %s627, 31
      %s632 = smul.addr %s629, 32
      %s633 = sadd.s32 %s631, %s632
      %s634 = smul.addr %s633, 8
      %s635 = scalar_lea.vmem %s15, %s634
      %p636 = pneg %p443
      %p637 = pneg %p440
      %s638 = smul.u32 8, %s33
      %p639 = scmp.lt.s32.totalorder %s32, 1
      %s640 = scalar_select %p639, %s32, 1
      %p641 = scmp.lt.s32.totalorder %s638, 31
      %s642 = scalar_select %p641, %s638, 31
      %s643 = smul.addr %s640, 32
      %s644 = sadd.s32 %s642, %s643
      %s645 = smul.addr %s644, 8
      %s646 = scalar_lea.vmem %s16, %s645
      %s647 = smul.u32 4, %s33
      %p648 = scmp.lt.s32.totalorder %s32, 1
      %s649 = scalar_select %p648, %s32, 1
      %p650 = scmp.lt.s32.totalorder %s647, 15
      %s651 = scalar_select %p650, %s647, 15
      %s652 = smul.addr %s651, 2
      %s653 = smul.addr %s649, 32
      %s654 = sadd.s32 %s652, %s653
      %s655 = smul.addr %s654, 4
      %s656 = scalar_lea.vmem %s0, %s655
      %s657 = smul.u32 4, %s33
      %s658 = smul.u32 %s33, 4
      %s659 = ssub.s32 %s658, 1
      %p660 = scmp.gt.s32.totalorder %s659, 0
      %s661 = scalar_select %p660, %s659, 0
      %p662 = scmp.lt.s32.totalorder %s32, 1
      %s663 = scalar_select %p662, %s32, 1
      %p664 = scmp.lt.s32.totalorder %s661, 15
      %s665 = scalar_select %p664, %s661, 15
      %s666 = smul.addr %s665, 2
      %s667 = smul.addr %s663, 32
      %s668 = sadd.s32 %s666, %s667
      %s669 = smul.addr %s668, 4
      %s670 = scalar_lea.vmem %s1, %s669
      %s671 = smul.u32 %s33, 4
      %s672 = ssub.s32 %s671, 1
      %p673 = scmp.gt.s32.totalorder %s672, 0
      %s674 = scalar_select %p673, %s672, 0
      %s675 = sadd.s32 %s33, 1
      %s676 = smul.u32 %s675, 4
      %p677 = scmp.lt.s32.totalorder %s676, 15
      %s678 = scalar_select %p677, %s676, 15
      %p679 = scmp.lt.s32.totalorder %s32, 1
      %s680 = scalar_select %p679, %s32, 1
      %p681 = scmp.lt.s32.totalorder %s678, 15
      %s682 = scalar_select %p681, %s678, 15
      %s683 = smul.addr %s682, 2
      %s684 = smul.addr %s680, 32
      %s685 = sadd.s32 %s683, %s684
      %s686 = smul.addr %s685, 4
      %s687 = scalar_lea.vmem %s2, %s686
      %s688 = sadd.s32 %s33, 1
      %s689 = smul.u32 %s688, 4
      %p690 = scmp.lt.s32.totalorder %s689, 15
      %s691 = scalar_select %p690, %s689, 15
      %s692 = smul.u32 8, %s33
      %p693 = scmp.lt.s32.totalorder %s32, 1
      %s694 = scalar_select %p693, %s32, 1
      %p695 = scmp.lt.s32.totalorder %s692, 31
      %s696 = scalar_select %p695, %s692, 31
      %s697 = smul.addr %s694, 32
      %s698 = sadd.s32 %s696, %s697
      %s699 = smul.addr %s698, 8
      %s700 = scalar_lea.vmem %s15, %s699
      %s701 = smul.u32 8, %s33
      %s702 = smul.u32 8, %s33
      %p703 = scmp.lt.s32.totalorder %s32, 1
      %s704 = scalar_select %p703, %s32, 1
      %p705 = scmp.lt.s32.totalorder %s702, 31
      %s706 = scalar_select %p705, %s702, 31
      %s707 = smul.addr %s704, 32
      %s708 = sadd.s32 %s706, %s707
      %s709 = smul.addr %s708, 8
      %s710 = scalar_lea.vmem %s16, %s709
      %s711 = smul.u32 8, %s33
      %v713 = vld [vmem:[%s656] sm:$0xf]
      %v714 = vld [vmem:[%s656 + $0x4] sm:$0xf]
      %v715 = vld [vmem:[%s656 + $0x8] sm:$0xf]
      %v716 = vld [vmem:[%s656 + $0xc] sm:$0xf]
      %v717 = vld [vmem:[%s656 + $0x10] sm:$0xf]
      %v718 = vld [vmem:[%s656 + $0x14] sm:$0xf]
      %v719 = vld [vmem:[%s656 + $0x18] sm:$0xf]
      %v720 = vld [vmem:[%s656 + $0x1c] sm:$0xf]
      %v721 = vld [vmem:[%s670] sm:$0xf]
      %v722 = vld [vmem:[%s670 + $0x4] sm:$0xf]
      %v723 = vld [vmem:[%s687] sm:$0xf]
      %v724 = vld [vmem:[%s687 + $0x4] sm:$0xf]
      %v725 = vld [vmem:[%s3] sm:$0x3]
      %v738 = vunpack.c.l.b16 %v721
      %v739 = vunpack.c.l.b16 %v722
      %v740 = vunpack.c.l.b16 %v713
      %v741 = vunpack.c.l.b16 %v714
      %v742 = vunpack.c.l.b16 %v715
      %v743 = vunpack.c.l.b16 %v716
      %v744 = vunpack.c.l.b16 %v717
      %v745 = vunpack.c.l.b16 %v718
      %v746 = vunpack.c.l.b16 %v719
      %v747 = vunpack.c.l.b16 %v720
      %v748 = vunpack.c.l.b16 %v723
      %v749 = vunpack.c.l.b16 %v724
      %v750 = vpack.c.b16 %v739, %v738
      %v751 = vpack.c.b16 %v741, %v740
      %v752 = vpack.c.b16 %v743, %v742
      %v753 = vpack.c.b16 %v745, %v744
      %v754 = vpack.c.b16 %v747, %v746
      %v755 = vpack.c.b16 %v749, %v748
      %vm756 = vcmask 31744
      %v758 = vsel %vm756, %v750, 0
      %v761 = vsel %vm756, %v751, 0
      %v764 = vsel %vm756, %v752, 0
      %v767 = vsel %vm756, %v753, 0
      %v770 = vsel %vm756, %v754, 0
      %v773 = vsel %vm756, %v755, 0
      %vm775 = vcmask 1041408
      %v777 = vsel %vm775, %v725, 0
      %779 = vmatpush.bf16.msra.mxu0 0
      %780 = vmatpush.bf16.msra.mxu0 0
      %781 = vmatpush.bf16.msra.mxu0 0
      %782 = vmatpush.bf16.msra.mxu0 0
      %783 = vmatpush.bf16.msra.mxu0 0
      %784 = vmatpush.bf16.msra.mxu0 0
      %785 = vmatpush.bf16.msra.mxu0 0
      %786 = vmatpush.bf16.msra.mxu0 %v777
      %787 = vmatmul.bf16.gmra.mxu0 %v758
      %v788 = vpop.f32.mrf.mxu0
      %v789 = vadd.f32 0.0, %v788
      %v790 = vpop.f32.mrf.mxu0
      %v791 = vadd.f32 0.0, %v790
      %792 = vmatmul.bf16.gmra.mxu0 %v761
      %v793 = vpop.f32.mrf.mxu0
      %v794 = vadd.f32 0.0, %v793
      %v795 = vpop.f32.mrf.mxu0
      %v796 = vadd.f32 0.0, %v795
      %797 = vmatmul.bf16.gmra.mxu0 %v764
      %v798 = vpop.f32.mrf.mxu0
      %v799 = vadd.f32 0.0, %v798
      %v800 = vpop.f32.mrf.mxu0
      %v801 = vadd.f32 0.0, %v800
      %802 = vmatmul.bf16.gmra.mxu0 %v767
      %v803 = vpop.f32.mrf.mxu0
      %v804 = vadd.f32 0.0, %v803
      %v805 = vpop.f32.mrf.mxu0
      %v806 = vadd.f32 0.0, %v805
      %807 = vmatmul.bf16.gmra.mxu0 %v770
      %v808 = vpop.f32.mrf.mxu0
      %v809 = vadd.f32 0.0, %v808
      %v810 = vpop.f32.mrf.mxu0
      %v811 = vadd.f32 0.0, %v810
      %812 = vmatmul.bf16.gmra.mxu0 %v773
      %v813 = vpop.f32.mrf.mxu0
      %v814 = vadd.f32 0.0, %v813
      %v815 = vpop.f32.mrf.mxu0
      %v816 = vadd.f32 0.0, %v815
      %817 = vdwg.mxu0
      %v818 = vld [vmem:[%s4] sm:$0x1]
      %v820 = vperm.slane %v818, 0
      %v822 = vmul.f32 %v789, %v820
      %v823 = vmul.f32 %v791, %v820
      %v824 = vmul.f32 %v794, %v820
      %v825 = vmul.f32 %v796, %v820
      %v826 = vmul.f32 %v799, %v820
      %v827 = vmul.f32 %v801, %v820
      %v828 = vmul.f32 %v804, %v820
      %v829 = vmul.f32 %v806, %v820
      %v830 = vmul.f32 %v809, %v820
      %v831 = vmul.f32 %v811, %v820
      %v832 = vmul.f32 %v814, %v820
      %v833 = vmul.f32 %v816, %v820
      %v834 = vld [vmem:[%s5] sm:$0x1]
      %v836 = vperm.slane %v834, 0
      %v838 = vadd.f32 %v822, %v836
      %v839 = vadd.f32 %v823, %v836
      %v840 = vadd.f32 %v824, %v836
      %v841 = vadd.f32 %v825, %v836
      %v842 = vadd.f32 %v826, %v836
      %v843 = vadd.f32 %v827, %v836
      %v844 = vadd.f32 %v828, %v836
      %v845 = vadd.f32 %v829, %v836
      %v846 = vadd.f32 %v830, %v836
      %v847 = vadd.f32 %v831, %v836
      %v848 = vadd.f32 %v832, %v836
      %v849 = vadd.f32 %v833, %v836
      %v850 = vmax.f32 %v838, 0.0
      %v851 = vmax.f32 %v839, 0.0
      %v852 = vmax.f32 %v840, 0.0
      %v853 = vmax.f32 %v841, 0.0
      %v854 = vmax.f32 %v842, 0.0
      %v855 = vmax.f32 %v843, 0.0
      %v856 = vmax.f32 %v844, 0.0
      %v857 = vmax.f32 %v845, 0.0
      %v858 = vmax.f32 %v846, 0.0
      %v859 = vmax.f32 %v847, 0.0
      %v860 = vmax.f32 %v848, 0.0
      %v861 = vmax.f32 %v849, 0.0
      %v862 = vpack.c.bf16 %v850, %v850
      %v863 = vpack.c.bf16 %v851, %v851
      %v864 = vpack.c.bf16 %v852, %v852
      %v865 = vpack.c.bf16 %v853, %v853
      %v866 = vpack.c.bf16 %v854, %v854
      %v867 = vpack.c.bf16 %v855, %v855
      %v868 = vpack.c.bf16 %v856, %v856
      %v869 = vpack.c.bf16 %v857, %v857
      %v870 = vpack.c.bf16 %v858, %v858
      %v871 = vpack.c.bf16 %v859, %v859
      %v872 = vpack.c.bf16 %v860, %v860
      %v873 = vpack.c.bf16 %v861, %v861
      %vm874 = vsmask.f32 256
      %vm875 = vsmask.f32 4368
      %vm876 = vmor %vm874, %vm875
      %v878 = vshrl.u32 %v862, 16
      %v880 = vrot.slane %v878, 7
      %v881 = vshll.u32 %v862, 16
      %v883 = vor.u32 %v880, %v881
      %v884 = vrot.slane %v880, 4
      %v886 = vshrl.u32 %v863, 16
      %v888 = vrot.slane %v886, 7
      %v889 = vshll.u32 %v863, 16
      %v891 = vor.u32 %v888, %v889
      %v892 = vsel %vm876, %v884, %v891
      %v893 = vrot.slane %v888, 4
      %v895 = vshrl.u32 %v864, 16
      %v897 = vrot.slane %v895, 7
      %v898 = vshll.u32 %v864, 16
      %v900 = vor.u32 %v897, %v898
      %v901 = vrot.slane %v897, 4
      %v903 = vshrl.u32 %v865, 16
      %v905 = vrot.slane %v903, 7
      %v906 = vshll.u32 %v865, 16
      %v908 = vor.u32 %v905, %v906
      %v909 = vsel %vm876, %v901, %v908
      %v910 = vrot.slane %v905, 4
      %v912 = vshrl.u32 %v866, 16
      %v914 = vrot.slane %v912, 7
      %v915 = vshll.u32 %v866, 16
      %v917 = vor.u32 %v914, %v915
      %v918 = vrot.slane %v914, 4
      %v920 = vshrl.u32 %v867, 16
      %v922 = vrot.slane %v920, 7
      %v923 = vshll.u32 %v867, 16
      %v925 = vor.u32 %v922, %v923
      %v926 = vsel %vm876, %v918, %v925
      %v927 = vrot.slane %v922, 4
      %v929 = vshrl.u32 %v868, 16
      %v931 = vrot.slane %v929, 7
      %v932 = vshll.u32 %v868, 16
      %v934 = vor.u32 %v931, %v932
      %v935 = vrot.slane %v931, 4
      %v937 = vshrl.u32 %v869, 16
      %v939 = vrot.slane %v937, 7
      %v940 = vshll.u32 %v869, 16
      %v942 = vor.u32 %v939, %v940
      %v943 = vsel %vm876, %v935, %v942
      %v944 = vrot.slane %v939, 4
      %v946 = vshrl.u32 %v870, 16
      %v948 = vrot.slane %v946, 7
      %v949 = vshll.u32 %v870, 16
      %v951 = vor.u32 %v948, %v949
      %v952 = vrot.slane %v948, 4
      %v954 = vshrl.u32 %v871, 16
      %v956 = vrot.slane %v954, 7
      %v957 = vshll.u32 %v871, 16
      %v959 = vor.u32 %v956, %v957
      %v960 = vsel %vm876, %v952, %v959
      %v961 = vrot.slane %v956, 4
      %v963 = vshrl.u32 %v872, 16
      %v965 = vrot.slane %v963, 7
      %v966 = vshll.u32 %v872, 16
      %v968 = vor.u32 %v965, %v966
      %v969 = vrot.slane %v965, 4
      %v971 = vshrl.u32 %v873, 16
      %v973 = vrot.slane %v971, 7
      %v974 = vshll.u32 %v873, 16
      %v976 = vor.u32 %v973, %v974
      %v977 = vsel %vm876, %v969, %v976
      %v978 = vrot.slane %v973, 4
      %vm997 = vcmask 27648
      %vm998 = vsmask.f32 7938
      %vm999 = vmand %vm997, %vm998
      %v1000 = vld [vmem:[#allocation2] sm:$0xf]
      %v1001 = vsel %vm999, %v883, %v1000
      %1002 = vst [vmem:[#allocation2] sm:$0xf] %v1001
      %vm1003 = vcmask 27648
      %1004 = vst.msk [vmem:[#allocation2 + $0x4] sm:$0xf] %vm1003, %v892
      %vm1005 = vcmask 24576
      %vm1006 = vmand %vm1005, %vm874
      %v1007 = vld [vmem:[#allocation2 + $0x8] sm:$0x1]
      %v1008 = vsel %vm1006, %v893, %v1007
      %1009 = vst [vmem:[#allocation2 + $0x8] sm:$0x1] %v1008
      %v1010 = vld [vmem:[#allocation2 + $0xc] sm:$0xf]
      %v1011 = vsel %vm999, %v900, %v1010
      %1012 = vst [vmem:[#allocation2 + $0xc] sm:$0xf] %v1011
      %1013 = vst.msk [vmem:[#allocation2 + $0x10] sm:$0xf] %vm1003, %v909
      %v1014 = vld [vmem:[#allocation2 + $0x14] sm:$0x1]
      %v1015 = vsel %vm1006, %v910, %v1014
      %1016 = vst [vmem:[#allocation2 + $0x14] sm:$0x1] %v1015
      %v1017 = vld [vmem:[#allocation2 + $0x18] sm:$0xf]
      %v1018 = vsel %vm999, %v917, %v1017
      %1019 = vst [vmem:[#allocation2 + $0x18] sm:$0xf] %v1018
      %1020 = vst.msk [vmem:[#allocation2 + $0x1c] sm:$0xf] %vm1003, %v926
      %v1021 = vld [vmem:[#allocation2 + $0x20] sm:$0x1]
      %v1022 = vsel %vm1006, %v927, %v1021
      %1023 = vst [vmem:[#allocation2 + $0x20] sm:$0x1] %v1022
      %v1024 = vld [vmem:[#allocation2 + $0x24] sm:$0xf]
      %v1025 = vsel %vm999, %v934, %v1024
      %1026 = vst [vmem:[#allocation2 + $0x24] sm:$0xf] %v1025
      %1027 = vst.msk [vmem:[#allocation2 + $0x28] sm:$0xf] %vm1003, %v943
      %v1028 = vld [vmem:[#allocation2 + $0x2c] sm:$0x1]
      %v1029 = vsel %vm1006, %v944, %v1028
      %1030 = vst [vmem:[#allocation2 + $0x2c] sm:$0x1] %v1029
      %v1031 = vld [vmem:[#allocation2 + $0x30] sm:$0xf]
      %v1032 = vsel %vm999, %v951, %v1031
      %1033 = vst [vmem:[#allocation2 + $0x30] sm:$0xf] %v1032
      %1034 = vst.msk [vmem:[#allocation2 + $0x34] sm:$0xf] %vm1003, %v960
      %v1035 = vld [vmem:[#allocation2 + $0x38] sm:$0x1]
      %v1036 = vsel %vm1006, %v961, %v1035
      %1037 = vst [vmem:[#allocation2 + $0x38] sm:$0x1] %v1036
      %v1038 = vld [vmem:[#allocation2 + $0x3c] sm:$0xf]
      %v1039 = vsel %vm999, %v968, %v1038
      %1040 = vst [vmem:[#allocation2 + $0x3c] sm:$0xf] %v1039
      %1041 = vst.msk [vmem:[#allocation2 + $0x40] sm:$0xf] %vm1003, %v977
      %v1042 = vld [vmem:[#allocation2 + $0x44] sm:$0x1]
      %v1043 = vsel %vm1006, %v978, %v1042
      %1044 = vst [vmem:[#allocation2 + $0x44] sm:$0x1] %v1043
      %v1045 = vld [vmem:[#allocation2] sm:$0x1]
      %v1046 = vsel %vm1006, 0, %v1045
      %1047 = vst [vmem:[#allocation2] sm:$0x1] %v1046
      %v1048 = vld [vmem:[#allocation2 + $0xc] sm:$0x1]
      %v1049 = vsel %vm1006, 0, %v1048
      %1050 = vst [vmem:[#allocation2 + $0xc] sm:$0x1] %v1049
      %v1051 = vld [vmem:[#allocation2 + $0x18] sm:$0x1]
      %v1052 = vsel %vm1006, 0, %v1051
      %1053 = vst [vmem:[#allocation2 + $0x18] sm:$0x1] %v1052
      %v1054 = vld [vmem:[#allocation2 + $0x24] sm:$0x1]
      %v1055 = vsel %vm1006, 0, %v1054
      %1056 = vst [vmem:[#allocation2 + $0x24] sm:$0x1] %v1055
      %v1057 = vld [vmem:[#allocation2 + $0x30] sm:$0x1]
      %v1058 = vsel %vm1006, 0, %v1057
      %1059 = vst [vmem:[#allocation2 + $0x30] sm:$0x1] %v1058
      %v1060 = vld [vmem:[#allocation2 + $0x3c] sm:$0x1]
      %v1061 = vsel %vm1006, 0, %v1060
      %1062 = vst [vmem:[#allocation2 + $0x3c] sm:$0x1] %v1061
      %vm1063 = vmand %vm1005, %vm998
      %v1064 = vld [vmem:[#allocation2 + $0x8] sm:$0x1]
      %v1065 = vsel %vm1063, 0, %v1064
      %1066 = vst [vmem:[#allocation2 + $0x8] sm:$0x1] %v1065
      %v1067 = vld [vmem:[#allocation2 + $0x14] sm:$0x1]
      %v1068 = vsel %vm1063, 0, %v1067
      %1069 = vst [vmem:[#allocation2 + $0x14] sm:$0x1] %v1068
      %v1070 = vld [vmem:[#allocation2 + $0x20] sm:$0x1]
      %v1071 = vsel %vm1063, 0, %v1070
      %1072 = vst [vmem:[#allocation2 + $0x20] sm:$0x1] %v1071
      %v1073 = vld [vmem:[#allocation2 + $0x2c] sm:$0x1]
      %v1074 = vsel %vm1063, 0, %v1073
      %1075 = vst [vmem:[#allocation2 + $0x2c] sm:$0x1] %v1074
      %v1076 = vld [vmem:[#allocation2 + $0x38] sm:$0x1]
      %v1077 = vsel %vm1063, 0, %v1076
      %1078 = vst [vmem:[#allocation2 + $0x38] sm:$0x1] %v1077
      %v1079 = vld [vmem:[#allocation2 + $0x44] sm:$0x1]
      %v1080 = vsel %vm1063, 0, %v1079
      %1081 = vst [vmem:[#allocation2 + $0x44] sm:$0x1] %v1080
      %p1082 = scmp.eq.s32.totalorder %s33, 0
      // Predicated region
      $region81: #{tpu_custom_call.1} parent=79 // pred_check
        %p1083 = pneg %p1082
      $region82: #{tpu_custom_call.1} parent=79 // pred_check_branch
        %1085 = sbr.rel (%p1083) target = $region84
      $region83: #{tpu_custom_call.1} parent=79 // pred_region
        %1086 = vst.msk [vmem:[#allocation2] sm:$0xf] %vm1003, 0
        %1087 = vst.msk [vmem:[#allocation2 + $0x4] sm:$0xf] %vm1003, 0
        %vm1088 = vcmask 24576
        %1089 = vst.msk [vmem:[#allocation2 + $0x8] sm:$0x1] %vm1088, 0
      $region84: #{tpu_custom_call.1} parent=79 // pred_fallthru
        _
      %p1090 = scmp.eq.s32.totalorder %s33, 3
      // Predicated region
      $region85: #{tpu_custom_call.1} parent=79 // pred_check
        %p1091 = pneg %p1090
      $region86: #{tpu_custom_call.1} parent=79 // pred_check_branch
        %1093 = sbr.rel (%p1091) target = $region88
      $region87: #{tpu_custom_call.1} parent=79 // pred_region
        %s1094 = scalar_lea.vmem [#allocation2], 60
        %1095 = vst.msk [vmem:[%s1094] sm:$0xf] %vm1003, 0
        %1096 = vst.msk [vmem:[%s1094 + $0x4] sm:$0xf] %vm1003, 0
        %vm1097 = vcmask 24576
        %1098 = vst.msk [vmem:[%s1094 + $0x8] sm:$0x1] %vm1097, 0
      $region88: #{tpu_custom_call.1} parent=79 // pred_fallthru
        _
      %v1099 = vld [vmem:[#allocation2] sm:$0xf]
      %v1100 = vld [vmem:[#allocation2 + $0x4] sm:$0xf]
      %v1101 = vld [vmem:[#allocation2 + $0xc] sm:$0xf]
      %v1102 = vld [vmem:[#allocation2 + $0x10] sm:$0xf]
      %v1103 = vld [vmem:[#allocation2 + $0x18] sm:$0xf]
      %v1104 = vld [vmem:[#allocation2 + $0x1c] sm:$0xf]
      %v1105 = vld [vmem:[#allocation2 + $0x24] sm:$0xf]
      %v1106 = vld [vmem:[#allocation2 + $0x28] sm:$0xf]
      %v1107 = vld [vmem:[#allocation2 + $0x8] sm:$0x1]
      %v1108 = vld [vmem:[#allocation2 + $0x14] sm:$0x1]
      %v1109 = vld [vmem:[#allocation2 + $0x20] sm:$0x1]
      %v1110 = vld [vmem:[#allocation2 + $0x2c] sm:$0x1]
      %v1111 = vld [vmem:[#allocation2] sm:$0xe]
      %v1112 = vld [vmem:[#allocation2 + $0xc] sm:$0xe]
      %v1113 = vld [vmem:[#allocation2 + $0x18] sm:$0xe]
      %v1114 = vld [vmem:[#allocation2 + $0x24] sm:$0xe]
      %s1115 = scalar_lea.vmem [#allocation2], 12
      %v1116 = vld [vmem:[%s1115] sm:$0xf]
      %v1117 = vld [vmem:[%s1115 + $0x4] sm:$0xf]
      %v1118 = vld [vmem:[%s1115 + $0xc] sm:$0xf]
      %v1119 = vld [vmem:[%s1115 + $0x10] sm:$0xf]
      %v1120 = vld [vmem:[%s1115 + $0x18] sm:$0xf]
      %v1121 = vld [vmem:[%s1115 + $0x1c] sm:$0xf]
      %v1122 = vld [vmem:[%s1115 + $0x24] sm:$0xf]
      %v1123 = vld [vmem:[%s1115 + $0x28] sm:$0xf]
      %v1124 = vld [vmem:[%s1115 + $0x8] sm:$0x1]
      %v1125 = vld [vmem:[%s1115 + $0x14] sm:$0x1]
      %v1126 = vld [vmem:[%s1115 + $0x20] sm:$0x1]
      %v1127 = vld [vmem:[%s1115 + $0x2c] sm:$0x1]
      %v1128 = vld [vmem:[%s1115] sm:$0xe]
      %v1129 = vld [vmem:[%s1115 + $0xc] sm:$0xe]
      %v1130 = vld [vmem:[%s1115 + $0x18] sm:$0xe]
      %v1131 = vld [vmem:[%s1115 + $0x24] sm:$0xe]
      %s1132 = scalar_lea.vmem [#allocation2], 24
      %v1133 = vld [vmem:[%s1132] sm:$0xf]
      %v1134 = vld [vmem:[%s1132 + $0x4] sm:$0xf]
      %v1135 = vld [vmem:[%s1132 + $0xc] sm:$0xf]
      %v1136 = vld [vmem:[%s1132 + $0x10] sm:$0xf]
      %v1137 = vld [vmem:[%s1132 + $0x18] sm:$0xf]
      %v1138 = vld [vmem:[%s1132 + $0x1c] sm:$0xf]
      %v1139 = vld [vmem:[%s1132 + $0x24] sm:$0xf]
      %v1140 = vld [vmem:[%s1132 + $0x28] sm:$0xf]
      %v1141 = vld [vmem:[%s1132 + $0x8] sm:$0x1]
      %v1142 = vld [vmem:[%s1132 + $0x14] sm:$0x1]
      %v1143 = vld [vmem:[%s1132 + $0x20] sm:$0x1]
      %v1144 = vld [vmem:[%s1132 + $0x2c] sm:$0x1]
      %v1145 = vld [vmem:[%s1132] sm:$0xe]
      %v1146 = vld [vmem:[%s1132 + $0xc] sm:$0xe]
      %v1147 = vld [vmem:[%s1132 + $0x18] sm:$0xe]
      %v1148 = vld [vmem:[%s1132 + $0x24] sm:$0xe]
      %v1157 = vunpack.c.l.b16 %v1099
      %v1158 = vunpack.c.l.b16 %v1100
      %v1159 = vunpack.c.l.b16 %v1101
      %v1160 = vunpack.c.l.b16 %v1102
      %v1161 = vunpack.c.l.b16 %v1103
      %v1162 = vunpack.c.l.b16 %v1104
      %v1163 = vunpack.c.l.b16 %v1105
      %v1164 = vunpack.c.l.b16 %v1106
      %v1165 = vpack.c.b16 %v1158, %v1157
      %v1166 = vpack.c.b16 %v1160, %v1159
      %v1167 = vpack.c.b16 %v1162, %v1161
      %v1168 = vpack.c.b16 %v1164, %v1163
      %v1173 = vunpack.c.l.b16 %v1107
      %v1174 = vunpack.c.l.b16 %v1108
      %v1175 = vunpack.c.l.b16 %v1109
      %v1176 = vunpack.c.l.b16 %v1110
      %v1177 = vpack.c.b16 %v1173, %v1173
      %v1178 = vpack.c.b16 %v1174, %v1174
      %v1179 = vpack.c.b16 %v1175, %v1175
      %v1180 = vpack.c.b16 %v1176, %v1176
      %vm1181 = vsmask.f32 7424
      %v1183 = vshrl.u32 %v1165, 16
      %v1185 = vshll.u32 %v1165, 16
      %v1187 = vrot.slane %v1185, 1
      %v1188 = vor.u32 %v1183, %v1187
      %v1190 = vshll.u32 %v1177, 16
      %v1192 = vrot.slane %v1190, 1
      %v1193 = vsel %vm1181, %v1188, %v1192
      %v1195 = vshrl.u32 %v1166, 16
      %v1197 = vshll.u32 %v1166, 16
      %v1199 = vrot.slane %v1197, 1
      %v1200 = vor.u32 %v1195, %v1199
      %v1202 = vshll.u32 %v1178, 16
      %v1204 = vrot.slane %v1202, 1
      %v1205 = vsel %vm1181, %v1200, %v1204
      %v1207 = vshrl.u32 %v1167, 16
      %v1209 = vshll.u32 %v1167, 16
      %v1211 = vrot.slane %v1209, 1
      %v1212 = vor.u32 %v1207, %v1211
      %v1214 = vshll.u32 %v1179, 16
      %v1216 = vrot.slane %v1214, 1
      %v1217 = vsel %vm1181, %v1212, %v1216
      %v1219 = vshrl.u32 %v1168, 16
      %v1221 = vshll.u32 %v1168, 16
      %v1223 = vrot.slane %v1221, 1
      %v1224 = vor.u32 %v1219, %v1223
      %v1226 = vshll.u32 %v1180, 16
      %v1228 = vrot.slane %v1226, 1
      %v1229 = vsel %vm1181, %v1224, %v1228
      %1230 = vrot.lane.b32.xlu0 %v1193, 4
      %v1231 = vpop.permute.xlu0 %1230
      %1232 = vrot.lane.b32.xlu0 %v1205, 4
      %v1233 = vpop.permute.xlu0 %1232
      %1234 = vrot.lane.b32.xlu0 %v1217, 4
      %v1235 = vpop.permute.xlu0 %1234
      %1236 = vrot.lane.b32.xlu0 %v1229, 4
      %v1237 = vpop.permute.xlu0 %1236
      %v1242 = vunpack.c.l.b16 %v1111
      %v1243 = vunpack.c.l.b16 %v1112
      %v1244 = vunpack.c.l.b16 %v1113
      %v1245 = vunpack.c.l.b16 %v1114
      %v1246 = vpack.c.b16 %v1158, %v1242
      %v1247 = vpack.c.b16 %v1160, %v1243
      %v1248 = vpack.c.b16 %v1162, %v1244
      %v1249 = vpack.c.b16 %v1164, %v1245
      %vm1250 = vcmask 1046528
      %v1251 = vrot.slane %v1246, 1
      %v1252 = vrot.slane %v1177, 1
      %v1253 = vsel %vm1250, %v1251, %v1252
      %v1254 = vrot.slane %v1247, 1
      %v1255 = vrot.slane %v1178, 1
      %v1256 = vsel %vm1250, %v1254, %v1255
      %v1257 = vrot.slane %v1248, 1
      %v1258 = vrot.slane %v1179, 1
      %v1259 = vsel %vm1250, %v1257, %v1258
      %v1260 = vrot.slane %v1249, 1
      %v1261 = vrot.slane %v1180, 1
      %v1262 = vsel %vm1250, %v1260, %v1261
      %1263 = vrot.lane.b32.xlu0 %v1253, 8
      %v1264 = vpop.permute.xlu0 %1263
      %1265 = vrot.lane.b32.xlu0 %v1256, 8
      %v1266 = vpop.permute.xlu0 %1265
      %1267 = vrot.lane.b32.xlu0 %v1259, 8
      %v1268 = vpop.permute.xlu0 %1267
      %1269 = vrot.lane.b32.xlu0 %v1262, 8
      %v1270 = vpop.permute.xlu0 %1269
      %v1279 = vunpack.c.l.b16 %v1116
      %v1280 = vunpack.c.l.b16 %v1117
      %v1281 = vunpack.c.l.b16 %v1118
      %v1282 = vunpack.c.l.b16 %v1119
      %v1283 = vunpack.c.l.b16 %v1120
      %v1284 = vunpack.c.l.b16 %v1121
      %v1285 = vunpack.c.l.b16 %v1122
      %v1286 = vunpack.c.l.b16 %v1123
      %v1287 = vpack.c.b16 %v1280, %v1279
      %v1288 = vpack.c.b16 %v1282, %v1281
      %v1289 = vpack.c.b16 %v1284, %v1283
      %v1290 = vpack.c.b16 %v1286, %v1285
      %1291 = vrot.lane.b32.xlu0 %v1287, 12
      %v1292 = vpop.permute.xlu0 %1291
      %1293 = vrot.lane.b32.xlu0 %v1288, 12
      %v1294 = vpop.permute.xlu0 %1293
      %1295 = vrot.lane.b32.xlu0 %v1289, 12
      %v1296 = vpop.permute.xlu0 %1295
      %1297 = vrot.lane.b32.xlu0 %v1290, 12
      %v1298 = vpop.permute.xlu0 %1297
      %v1303 = vunpack.c.l.b16 %v1124
      %v1304 = vunpack.c.l.b16 %v1125
      %v1305 = vunpack.c.l.b16 %v1126
      %v1306 = vunpack.c.l.b16 %v1127
      %v1307 = vpack.c.b16 %v1303, %v1303
      %v1308 = vpack.c.b16 %v1304, %v1304
      %v1309 = vpack.c.b16 %v1305, %v1305
      %v1310 = vpack.c.b16 %v1306, %v1306
      %v1312 = vshrl.u32 %v1287, 16
      %v1314 = vshll.u32 %v1287, 16
      %v1316 = vrot.slane %v1314, 1
      %v1317 = vor.u32 %v1312, %v1316
      %v1319 = vshll.u32 %v1307, 16
      %v1321 = vrot.slane %v1319, 1
      %v1322 = vsel %vm1181, %v1317, %v1321
      %v1324 = vshrl.u32 %v1288, 16
      %v1326 = vshll.u32 %v1288, 16
      %v1328 = vrot.slane %v1326, 1
      %v1329 = vor.u32 %v1324, %v1328
      %v1331 = vshll.u32 %v1308, 16
      %v1333 = vrot.slane %v1331, 1
      %v1334 = vsel %vm1181, %v1329, %v1333
      %v1336 = vshrl.u32 %v1289, 16
      %v1338 = vshll.u32 %v1289, 16
      %v1340 = vrot.slane %v1338, 1
      %v1341 = vor.u32 %v1336, %v1340
      %v1343 = vshll.u32 %v1309, 16
      %v1345 = vrot.slane %v1343, 1
      %v1346 = vsel %vm1181, %v1341, %v1345
      %v1348 = vshrl.u32 %v1290, 16
      %v1350 = vshll.u32 %v1290, 16
      %v1352 = vrot.slane %v1350, 1
      %v1353 = vor.u32 %v1348, %v1352
      %v1355 = vshll.u32 %v1310, 16
      %v1357 = vrot.slane %v1355, 1
      %v1358 = vsel %vm1181, %v1353, %v1357
      %1359 = vrot.lane.b32.xlu0 %v1322, 16
      %v1360 = vpop.permute.xlu0 %1359
      %1361 = vrot.lane.b32.xlu0 %v1334, 16
      %v1362 = vpop.permute.xlu0 %1361
      %1363 = vrot.lane.b32.xlu0 %v1346, 16
      %v1364 = vpop.permute.xlu0 %1363
      %1365 = vrot.lane.b32.xlu0 %v1358, 16
      %v1366 = vpop.permute.xlu0 %1365
      %v1371 = vunpack.c.l.b16 %v1128
      %v1372 = vunpack.c.l.b16 %v1129
      %v1373 = vunpack.c.l.b16 %v1130
      %v1374 = vunpack.c.l.b16 %v1131
      %v1375 = vpack.c.b16 %v1280, %v1371
      %v1376 = vpack.c.b16 %v1282, %v1372
      %v1377 = vpack.c.b16 %v1284, %v1373
      %v1378 = vpack.c.b16 %v1286, %v1374
      %v1379 = vrot.slane %v1375, 1
      %v1380 = vrot.slane %v1307, 1
      %v1381 = vsel %vm1250, %v1379, %v1380
      %v1382 = vrot.slane %v1376, 1
      %v1383 = vrot.slane %v1308, 1
      %v1384 = vsel %vm1250, %v1382, %v1383
      %v1385 = vrot.slane %v1377, 1
      %v1386 = vrot.slane %v1309, 1
      %v1387 = vsel %vm1250, %v1385, %v1386
      %v1388 = vrot.slane %v1378, 1
      %v1389 = vrot.slane %v1310, 1
      %v1390 = vsel %vm1250, %v1388, %v1389
      %1391 = vrot.lane.b32.xlu0 %v1381, 20
      %v1392 = vpop.permute.xlu0 %1391
      %1393 = vrot.lane.b32.xlu0 %v1384, 20
      %v1394 = vpop.permute.xlu0 %1393
      %1395 = vrot.lane.b32.xlu0 %v1387, 20
      %v1396 = vpop.permute.xlu0 %1395
      %1397 = vrot.lane.b32.xlu0 %v1390, 20
      %v1398 = vpop.permute.xlu0 %1397
      %v1407 = vunpack.c.l.b16 %v1133
      %v1408 = vunpack.c.l.b16 %v1134
      %v1409 = vunpack.c.l.b16 %v1135
      %v1410 = vunpack.c.l.b16 %v1136
      %v1411 = vunpack.c.l.b16 %v1137
      %v1412 = vunpack.c.l.b16 %v1138
      %v1413 = vunpack.c.l.b16 %v1139
      %v1414 = vunpack.c.l.b16 %v1140
      %v1415 = vpack.c.b16 %v1408, %v1407
      %v1416 = vpack.c.b16 %v1410, %v1409
      %v1417 = vpack.c.b16 %v1412, %v1411
      %v1418 = vpack.c.b16 %v1414, %v1413
      %1419 = vrot.lane.b32.xlu0 %v1415, 24
      %v1420 = vpop.permute.xlu0 %1419
      %1421 = vrot.lane.b32.xlu0 %v1416, 24
      %v1422 = vpop.permute.xlu0 %1421
      %1423 = vrot.lane.b32.xlu0 %v1417, 24
      %v1424 = vpop.permute.xlu0 %1423
      %1425 = vrot.lane.b32.xlu0 %v1418, 24
      %v1426 = vpop.permute.xlu0 %1425
      %v1431 = vunpack.c.l.b16 %v1141
      %v1432 = vunpack.c.l.b16 %v1142
      %v1433 = vunpack.c.l.b16 %v1143
      %v1434 = vunpack.c.l.b16 %v1144
      %v1435 = vpack.c.b16 %v1431, %v1431
      %v1436 = vpack.c.b16 %v1432, %v1432
      %v1437 = vpack.c.b16 %v1433, %v1433
      %v1438 = vpack.c.b16 %v1434, %v1434
      %v1440 = vshrl.u32 %v1415, 16
      %v1442 = vshll.u32 %v1415, 16
      %v1444 = vrot.slane %v1442, 1
      %v1445 = vor.u32 %v1440, %v1444
      %v1447 = vshll.u32 %v1435, 16
      %v1449 = vrot.slane %v1447, 1
      %v1450 = vsel %vm1181, %v1445, %v1449
      %v1452 = vshrl.u32 %v1416, 16
      %v1454 = vshll.u32 %v1416, 16
      %v1456 = vrot.slane %v1454, 1
      %v1457 = vor.u32 %v1452, %v1456
      %v1459 = vshll.u32 %v1436, 16
      %v1461 = vrot.slane %v1459, 1
      %v1462 = vsel %vm1181, %v1457, %v1461
      %v1464 = vshrl.u32 %v1417, 16
      %v1466 = vshll.u32 %v1417, 16
      %v1468 = vrot.slane %v1466, 1
      %v1469 = vor.u32 %v1464, %v1468
      %v1471 = vshll.u32 %v1437, 16
      %v1473 = vrot.slane %v1471, 1
      %v1474 = vsel %vm1181, %v1469, %v1473
      %v1476 = vshrl.u32 %v1418, 16
      %v1478 = vshll.u32 %v1418, 16
      %v1480 = vrot.slane %v1478, 1
      %v1481 = vor.u32 %v1476, %v1480
      %v1483 = vshll.u32 %v1438, 16
      %v1485 = vrot.slane %v1483, 1
      %v1486 = vsel %vm1181, %v1481, %v1485
      %1487 = vrot.lane.b32.xlu0 %v1450, 28
      %v1488 = vpop.permute.xlu0 %1487
      %1489 = vrot.lane.b32.xlu0 %v1462, 28
      %v1490 = vpop.permute.xlu0 %1489
      %1491 = vrot.lane.b32.xlu0 %v1474, 28
      %v1492 = vpop.permute.xlu0 %1491
      %1493 = vrot.lane.b32.xlu0 %v1486, 28
      %v1494 = vpop.permute.xlu0 %1493
      %v1499 = vunpack.c.l.b16 %v1145
      %v1500 = vunpack.c.l.b16 %v1146
      %v1501 = vunpack.c.l.b16 %v1147
      %v1502 = vunpack.c.l.b16 %v1148
      %v1503 = vpack.c.b16 %v1408, %v1499
      %v1504 = vpack.c.b16 %v1410, %v1500
      %v1505 = vpack.c.b16 %v1412, %v1501
      %v1506 = vpack.c.b16 %v1414, %v1502
      %v1507 = vrot.slane %v1503, 1
      %v1508 = vrot.slane %v1435, 1
      %v1509 = vsel %vm1250, %v1507, %v1508
      %v1510 = vrot.slane %v1504, 1
      %v1511 = vrot.slane %v1436, 1
      %v1512 = vsel %vm1250, %v1510, %v1511
      %v1513 = vrot.slane %v1505, 1
      %v1514 = vrot.slane %v1437, 1
      %v1515 = vsel %vm1250, %v1513, %v1514
      %v1516 = vrot.slane %v1506, 1
      %v1517 = vrot.slane %v1438, 1
      %v1518 = vsel %vm1250, %v1516, %v1517
      %1519 = vrot.lane.b32.xlu0 %v1509, 32
      %v1520 = vpop.permute.xlu0 %1519
      %1521 = vrot.lane.b32.xlu0 %v1512, 32
      %v1522 = vpop.permute.xlu0 %1521
      %1523 = vrot.lane.b32.xlu0 %v1515, 32
      %v1524 = vpop.permute.xlu0 %1523
      %1525 = vrot.lane.b32.xlu0 %v1518, 32
      %v1526 = vpop.permute.xlu0 %1525
      %v1528 = vsel %vm756, %v1165, %v1231
      %v1530 = vsel %vm756, %v1166, %v1233
      %v1532 = vsel %vm756, %v1167, %v1235
      %v1534 = vsel %vm756, %v1168, %v1237
      %vm1535 = vcmask 64512
      %v1537 = vsel %vm1535, %v1528, %v1264
      %v1539 = vsel %vm1535, %v1530, %v1266
      %v1541 = vsel %vm1535, %v1532, %v1268
      %v1543 = vsel %vm1535, %v1534, %v1270
      %vm1544 = vcmask 97280
      %v1546 = vsel %vm1544, %v1537, %v1292
      %v1548 = vsel %vm1544, %v1539, %v1294
      %v1550 = vsel %vm1544, %v1541, %v1296
      %v1552 = vsel %vm1544, %v1543, %v1298
      %vm1553 = vcmask 130048
      %v1555 = vsel %vm1553, %v1546, %v1360
      %v1557 = vsel %vm1553, %v1548, %v1362
      %v1559 = vsel %vm1553, %v1550, %v1364
      %v1561 = vsel %vm1553, %v1552, %v1366
      %vm1562 = vcmask 162816
      %v1564 = vsel %vm1562, %v1555, %v1392
      %v1566 = vsel %vm1562, %v1557, %v1394
      %v1568 = vsel %vm1562, %v1559, %v1396
      %v1570 = vsel %vm1562, %v1561, %v1398
      %vm1571 = vcmask 195584
      %v1573 = vsel %vm1571, %v1564, %v1420
      %v1575 = vsel %vm1571, %v1566, %v1422
      %v1577 = vsel %vm1571, %v1568, %v1424
      %v1579 = vsel %vm1571, %v1570, %v1426
      %vm1580 = vcmask 228352
      %v1582 = vsel %vm1580, %v1573, %v1488
      %v1584 = vsel %vm1580, %v1575, %v1490
      %v1586 = vsel %vm1580, %v1577, %v1492
      %v1588 = vsel %vm1580, %v1579, %v1494
      %vm1589 = vcmask 261120
      %v1591 = vsel %vm1589, %v1582, %v1520
      %v1593 = vsel %vm1589, %v1584, %v1522
      %v1595 = vsel %vm1589, %v1586, %v1524
      %v1597 = vsel %vm1589, %v1588, %v1526
      %v1598 = vld [vmem:[%s6] sm:$0xf]
      %v1599 = vld [vmem:[%s6 + $0x4] sm:$0xf]
      %v1600 = vld [vmem:[%s6 + $0x8] sm:$0xf]
      %v1601 = vld [vmem:[%s6 + $0xc] sm:$0xf]
      %v1602 = vld [vmem:[%s6 + $0x10] sm:$0x3]
      %v1608 = vunpack.c.l.b16 %v1598
      %v1609 = vunpack.c.l.b16 %v1599
      %v1610 = vunpack.c.l.b16 %v1600
      %v1611 = vunpack.c.l.b16 %v1601
      %v1612 = vunpack.c.l.b16 %v1602
      %v1613 = vpack.c.b16 %v1609, %v1608
      %v1614 = vpack.c.b16 %v1611, %v1610
      %v1615 = vpack.c.b16 %v1612, %v1612
      %vm1618 = vcmask 293888
      %v1619 = vsel %vm1618, %v1591, 0
      %v1621 = vsel %vm1618, %v1593, 0
      %v1623 = vsel %vm1618, %v1595, 0
      %v1625 = vsel %vm1618, %v1597, 0
      %v1628 = vsel %vm775, %v1615, 0
      %1630 = vmatpush.bf16.msra.mxu0 0
      %1631 = vmatpush.bf16.msra.mxu0 0
      %1632 = vmatpush.bf16.msra.mxu0 0
      %1633 = vmatpush.bf16.msra.mxu0 0
      %1634 = vmatpush.bf16.msra.mxu0 0
      %1635 = vmatpush.bf16.msra.mxu0 %v1628
      %1636 = vmatpush.bf16.msra.mxu0 %v1614
      %1637 = vmatpush.bf16.msra.mxu0 %v1613
      %1638 = vmatmul.bf16.gmra.mxu0 %v1619
      %v1639 = vpop.f32.mrf.mxu0
      %v1640 = vadd.f32 0.0, %v1639
      %v1641 = vpop.f32.mrf.mxu0
      %v1642 = vadd.f32 0.0, %v1641
      %1643 = vmatmul.bf16.gmra.mxu0 %v1621
      %v1644 = vpop.f32.mrf.mxu0
      %v1645 = vadd.f32 0.0, %v1644
      %v1646 = vpop.f32.mrf.mxu0
      %v1647 = vadd.f32 0.0, %v1646
      %1648 = vmatmul.bf16.gmra.mxu0 %v1623
      %v1649 = vpop.f32.mrf.mxu0
      %v1650 = vadd.f32 0.0, %v1649
      %v1651 = vpop.f32.mrf.mxu0
      %v1652 = vadd.f32 0.0, %v1651
      %1653 = vmatmul.bf16.gmra.mxu0 %v1625
      %v1654 = vpop.f32.mrf.mxu0
      %v1655 = vadd.f32 0.0, %v1654
      %v1656 = vpop.f32.mrf.mxu0
      %v1657 = vadd.f32 0.0, %v1656
      %1658 = vdwg.mxu0
      %v1659 = vld [vmem:[%s7] sm:$0x1]
      %v1661 = vperm.slane %v1659, 0
      %v1663 = vmul.f32 %v1640, %v1661
      %v1664 = vmul.f32 %v1642, %v1661
      %v1665 = vmul.f32 %v1645, %v1661
      %v1666 = vmul.f32 %v1647, %v1661
      %v1667 = vmul.f32 %v1650, %v1661
      %v1668 = vmul.f32 %v1652, %v1661
      %v1669 = vmul.f32 %v1655, %v1661
      %v1670 = vmul.f32 %v1657, %v1661
      %v1671 = vld [vmem:[%s8] sm:$0x1]
      %v1673 = vperm.slane %v1671, 0
      %v1675 = vadd.f32 %v1663, %v1673
      %v1676 = vadd.f32 %v1664, %v1673
      %v1677 = vadd.f32 %v1665, %v1673
      %v1678 = vadd.f32 %v1666, %v1673
      %v1679 = vadd.f32 %v1667, %v1673
      %v1680 = vadd.f32 %v1668, %v1673
      %v1681 = vadd.f32 %v1669, %v1673
      %v1682 = vadd.f32 %v1670, %v1673
      %v1683 = vmax.f32 %v1675, 0.0
      %v1684 = vmax.f32 %v1676, 0.0
      %v1685 = vmax.f32 %v1677, 0.0
      %v1686 = vmax.f32 %v1678, 0.0
      %v1687 = vmax.f32 %v1679, 0.0
      %v1688 = vmax.f32 %v1680, 0.0
      %v1689 = vmax.f32 %v1681, 0.0
      %v1690 = vmax.f32 %v1682, 0.0
      %v1691 = vpack.c.bf16 %v1684, %v1683
      %v1692 = vpack.c.bf16 %v1686, %v1685
      %v1693 = vpack.c.bf16 %v1688, %v1687
      %v1694 = vpack.c.bf16 %v1690, %v1689
      %v1695 = vld [vmem:[%s9] sm:$0x3]
      %v1697 = vsel %vm756, %v1691, 0
      %v1700 = vsel %vm756, %v1692, 0
      %v1703 = vsel %vm756, %v1693, 0
      %v1706 = vsel %vm756, %v1694, 0
      %v1709 = vsel %vm775, %v1695, 0
      %1711 = vmatpush.bf16.msra.mxu0 0
      %1712 = vmatpush.bf16.msra.mxu0 0
      %1713 = vmatpush.bf16.msra.mxu0 0
      %1714 = vmatpush.bf16.msra.mxu0 0
      %1715 = vmatpush.bf16.msra.mxu0 0
      %1716 = vmatpush.bf16.msra.mxu0 0
      %1717 = vmatpush.bf16.msra.mxu0 0
      %1718 = vmatpush.bf16.msra.mxu0 %v1709
      %1719 = vmatmul.bf16.gmra.mxu0 %v1697
      %v1720 = vpop.f32.mrf.mxu0
      %v1721 = vadd.f32 0.0, %v1720
      %v1722 = vpop.f32.mrf.mxu0
      %v1723 = vadd.f32 0.0, %v1722
      %1724 = vmatmul.bf16.gmra.mxu0 %v1700
      %v1725 = vpop.f32.mrf.mxu0
      %v1726 = vadd.f32 0.0, %v1725
      %v1727 = vpop.f32.mrf.mxu0
      %v1728 = vadd.f32 0.0, %v1727
      %1729 = vmatmul.bf16.gmra.mxu0 %v1703
      %v1730 = vpop.f32.mrf.mxu0
      %v1731 = vadd.f32 0.0, %v1730
      %v1732 = vpop.f32.mrf.mxu0
      %v1733 = vadd.f32 0.0, %v1732
      %1734 = vmatmul.bf16.gmra.mxu0 %v1706
      %v1735 = vpop.f32.mrf.mxu0
      %v1736 = vadd.f32 0.0, %v1735
      %v1737 = vpop.f32.mrf.mxu0
      %v1738 = vadd.f32 0.0, %v1737
      %1739 = vdwg.mxu0
      %v1740 = vld [vmem:[%s10] sm:$0x1]
      %v1742 = vperm.slane %v1740, 0
      %v1744 = vmul.f32 %v1721, %v1742
      %v1745 = vmul.f32 %v1723, %v1742
      %v1746 = vmul.f32 %v1726, %v1742
      %v1747 = vmul.f32 %v1728, %v1742
      %v1748 = vmul.f32 %v1731, %v1742
      %v1749 = vmul.f32 %v1733, %v1742
      %v1750 = vmul.f32 %v1736, %v1742
      %v1751 = vmul.f32 %v1738, %v1742
      %v1752 = vld [vmem:[%s11] sm:$0x1]
      %v1754 = vperm.slane %v1752, 0
      %v1756 = vadd.f32 %v1744, %v1754
      %v1757 = vadd.f32 %v1745, %v1754
      %v1758 = vadd.f32 %v1746, %v1754
      %v1759 = vadd.f32 %v1747, %v1754
      %v1760 = vadd.f32 %v1748, %v1754
      %v1761 = vadd.f32 %v1749, %v1754
      %v1762 = vadd.f32 %v1750, %v1754
      %v1763 = vadd.f32 %v1751, %v1754
      %v1764 = vld [vmem:[%s12] sm:$0x3]
      %v1766 = vsel %vm775, %v1764, 0
      %1768 = vmatpush.bf16.msra.mxu0 0
      %1769 = vmatpush.bf16.msra.mxu0 0
      %1770 = vmatpush.bf16.msra.mxu0 0
      %1771 = vmatpush.bf16.msra.mxu0 0
      %1772 = vmatpush.bf16.msra.mxu0 0
      %1773 = vmatpush.bf16.msra.mxu0 0
      %1774 = vmatpush.bf16.msra.mxu0 0
      %1775 = vmatpush.bf16.msra.mxu0 %v1766
      %1776 = vmatmul.bf16.gmra.mxu0 %v761
      %v1777 = vpop.f32.mrf.mxu0
      %v1778 = vadd.f32 0.0, %v1777
      %v1779 = vpop.f32.mrf.mxu0
      %v1780 = vadd.f32 0.0, %v1779
      %1781 = vmatmul.bf16.gmra.mxu0 %v764
      %v1782 = vpop.f32.mrf.mxu0
      %v1783 = vadd.f32 0.0, %v1782
      %v1784 = vpop.f32.mrf.mxu0
      %v1785 = vadd.f32 0.0, %v1784
      %1786 = vmatmul.bf16.gmra.mxu0 %v767
      %v1787 = vpop.f32.mrf.mxu0
      %v1788 = vadd.f32 0.0, %v1787
      %v1789 = vpop.f32.mrf.mxu0
      %v1790 = vadd.f32 0.0, %v1789
      %1791 = vmatmul.bf16.gmra.mxu0 %v770
      %v1792 = vpop.f32.mrf.mxu0
      %v1793 = vadd.f32 0.0, %v1792
      %v1794 = vpop.f32.mrf.mxu0
      %v1795 = vadd.f32 0.0, %v1794
      %1796 = vdwg.mxu0
      %v1797 = vld [vmem:[%s13] sm:$0x1]
      %v1799 = vperm.slane %v1797, 0
      %v1801 = vmul.f32 %v1778, %v1799
      %v1802 = vmul.f32 %v1780, %v1799
      %v1803 = vmul.f32 %v1783, %v1799
      %v1804 = vmul.f32 %v1785, %v1799
      %v1805 = vmul.f32 %v1788, %v1799
      %v1806 = vmul.f32 %v1790, %v1799
      %v1807 = vmul.f32 %v1793, %v1799
      %v1808 = vmul.f32 %v1795, %v1799
      %v1809 = vld [vmem:[%s14] sm:$0x1]
      %v1811 = vperm.slane %v1809, 0
      %v1813 = vadd.f32 %v1801, %v1811
      %v1814 = vadd.f32 %v1802, %v1811
      %v1815 = vadd.f32 %v1803, %v1811
      %v1816 = vadd.f32 %v1804, %v1811
      %v1817 = vadd.f32 %v1805, %v1811
      %v1818 = vadd.f32 %v1806, %v1811
      %v1819 = vadd.f32 %v1807, %v1811
      %v1820 = vadd.f32 %v1808, %v1811
      %v1821 = vadd.f32 %v1756, %v1813
      %v1822 = vadd.f32 %v1757, %v1814
      %v1823 = vadd.f32 %v1758, %v1815
      %v1824 = vadd.f32 %v1759, %v1816
      %v1825 = vadd.f32 %v1760, %v1817
      %v1826 = vadd.f32 %v1761, %v1818
      %v1827 = vadd.f32 %v1762, %v1819
      %v1828 = vadd.f32 %v1763, %v1820
      %v1829 = vmax.f32 %v1821, 0.0
      %v1830 = vmax.f32 %v1822, 0.0
      %v1831 = vmax.f32 %v1823, 0.0
      %v1832 = vmax.f32 %v1824, 0.0
      %v1833 = vmax.f32 %v1825, 0.0
      %v1834 = vmax.f32 %v1826, 0.0
      %v1835 = vmax.f32 %v1827, 0.0
      %v1836 = vmax.f32 %v1828, 0.0
      %1837 = vst.msk [vmem:[%s700] sm:$0xff] %vm1553, %v1829
      %1838 = vst.msk [vmem:[%s700 + $0x8] sm:$0xff] %vm1553, %v1830
      %1839 = vst.msk [vmem:[%s700 + $0x10] sm:$0xff] %vm1553, %v1831
      %1840 = vst.msk [vmem:[%s700 + $0x18] sm:$0xff] %vm1553, %v1832
      %1841 = vst.msk [vmem:[%s700 + $0x20] sm:$0xff] %vm1553, %v1833
      %1842 = vst.msk [vmem:[%s700 + $0x28] sm:$0xff] %vm1553, %v1834
      %1843 = vst.msk [vmem:[%s700 + $0x30] sm:$0xff] %vm1553, %v1835
      %1844 = vst.msk [vmem:[%s700 + $0x38] sm:$0xff] %vm1553, %v1836
      %1845 = vst.msk [vmem:[%s710] sm:$0xff] %vm1553, %v1821
      %1846 = vst.msk [vmem:[%s710 + $0x8] sm:$0xff] %vm1553, %v1822
      %1847 = vst.msk [vmem:[%s710 + $0x10] sm:$0xff] %vm1553, %v1823
      %1848 = vst.msk [vmem:[%s710 + $0x18] sm:$0xff] %vm1553, %v1824
      %1849 = vst.msk [vmem:[%s710 + $0x20] sm:$0xff] %vm1553, %v1825
      %1850 = vst.msk [vmem:[%s710 + $0x28] sm:$0xff] %vm1553, %v1826
      %1851 = vst.msk [vmem:[%s710 + $0x30] sm:$0xff] %vm1553, %v1827
      %1852 = vst.msk [vmem:[%s710 + $0x38] sm:$0xff] %vm1553, %v1828
      %s1853 = smul.u32 8, %s33
      %p1854 = scmp.lt.s32.totalorder %s32, 1
      %s1855 = scalar_select %p1854, %s32, 1
      %p1856 = scmp.lt.s32.totalorder %s1853, 31
      %s1857 = scalar_select %p1856, %s1853, 31
      %s1858 = smul.addr %s1855, 32
      %s1859 = sadd.s32 %s1857, %s1858
      %s1860 = smul.addr %s1859, 8
      %s1861 = scalar_lea.vmem %s15, %s1860
      %s1862 = smul.u32 8, %s33
      %p1863 = scmp.lt.s32.totalorder %s32, 1
      %s1864 = scalar_select %p1863, %s32, 1
      %p1865 = scmp.lt.s32.totalorder %s1862, 31
      %s1866 = scalar_select %p1865, %s1862, 31
      %s1867 = smul.addr %s1864, 32
      %s1868 = sadd.s32 %s1866, %s1867
      %s1869 = smul.addr %s1868, 8
      %s1870 = scalar_lea.vmem %s16, %s1869
      // Predicated region
      $region89: #{tpu_custom_call.1} parent=79 // pred_check
        %p1871 = pneg %p412
      $region90: #{tpu_custom_call.1} parent=79 // pred_check_branch
        %1873 = sbr.rel (%p1871) target = $region92
      $region91: #{tpu_custom_call.1} parent=79 // pred_region
        %s1874 = smul.u32 8, %s33
      $region92: #{tpu_custom_call.1} parent=79 // pred_fallthru
        _
      // Predicated region
      $region93: #{tpu_custom_call.1} parent=79 // pred_check
        %p1875 = pneg %p440
      $region94: #{tpu_custom_call.1} parent=79 // pred_check_branch
        %1877 = sbr.rel (%p1875) target = $region96
      $region95: #{tpu_custom_call.1} parent=79 // pred_region
        %s1878 = smul.u32 8, %s33
      $region96: #{tpu_custom_call.1} parent=79 // pred_fallthru
        _
    $region80: #{tpu_custom_call.1} parent=5 // pred_fallthru
      _
    %p1879 = scmp.le.s32.totalorder 2, %s23
    // Predicated region
    $region97: #{tpu_custom_call.1} parent=5 // pred_check
      %p1880 = pneg %p1879
    $region98: #{tpu_custom_call.1} parent=5 // pred_check_branch
      %1882 = sbr.rel (%p1880) target = $region100
    $region99: #{tpu_custom_call.1} parent=5 // pred_region
      %s1883 = ssub.s32 %s23, 2
      // Predicated region
      $region101: #{tpu_custom_call.1} parent=99 // pred_check
        %p1884 = pneg %p418
      $region102: #{tpu_custom_call.1} parent=99 // pred_check_branch
        %1886 = sbr.rel (%p1884) target = $region104
      $region103: #{tpu_custom_call.1} parent=99 // pred_region
        %s1887 = smul.u32 8, %s35
        %p1888 = scmp.lt.s32.totalorder %s34, 1
        %s1889 = scalar_select %p1888, %s34, 1
        %p1890 = scmp.lt.s32.totalorder %s1887, 31
        %s1891 = scalar_select %p1890, %s1887, 31
        %s1892 = smul.addr %s1889, 32
        %s1893 = sadd.s32 %s1891, %s1892
        %s1894 = smul.addr %s1893, 8
        %s1895 = scalar_lea.vmem %s15, %s1894
      $region104: #{tpu_custom_call.1} parent=99 // pred_fallthru
        _
      // Predicated region
      $region105: #{tpu_custom_call.1} parent=99 // pred_check
        %p1896 = pneg %p446
      $region106: #{tpu_custom_call.1} parent=99 // pred_check_branch
        %1898 = sbr.rel (%p1896) target = $region108
      $region107: #{tpu_custom_call.1} parent=99 // pred_region
        %s1899 = smul.u32 8, %s35
        %p1900 = scmp.lt.s32.totalorder %s34, 1
        %s1901 = scalar_select %p1900, %s34, 1
        %p1902 = scmp.lt.s32.totalorder %s1899, 31
        %s1903 = scalar_select %p1902, %s1899, 31
        %s1904 = smul.addr %s1901, 32
        %s1905 = sadd.s32 %s1903, %s1904
        %s1906 = smul.addr %s1905, 8
        %s1907 = scalar_lea.vmem %s16, %s1906
      $region108: #{tpu_custom_call.1} parent=99 // pred_fallthru
        _
    $region100: #{tpu_custom_call.1} parent=5 // pred_fallthru
      _
  $region6: #{tpu_custom_call.1} parent=0 // loop_footer
    %s27 = sadd.s32 1, %s23
  $region7: #{tpu_custom_call.1} parent=0 // loop_footer_branch
    %22 = sbr.rel target = $region3
  $region8: #{tpu_custom_call.1} parent=0 // loop_exit
    _

</llo_original>
